<compile_context>
chip_gen: v7x
topology: tpu7x:2x2x1
jax: 0.10.0
libtpu: 0.0.40
codegen_flags: <defaults>
</compile_context>

<pallas_src>
import functools

import jax
import jax.numpy as jnp
from jax.experimental import pallas as pl
from jax.experimental.pallas import tpu as pltpu

KH, KW = 5, 3   # fixed (5, 3) kernel of Conv2dD


# ----------------------------------------------------------------------------
# Fused 5-layer kernel (one grid step == one batch sample)
# ----------------------------------------------------------------------------
def _fused_kernel(x_ref, *refs, W, H0, specs):
    # refs = [w1, b1, ..., w5, b5,  o1..o5]
    n = len(specs)
    w_refs = [refs[2 * i] for i in range(n)]
    b_refs = [refs[2 * i + 1] for i in range(n)]
    o_refs = list(refs[2 * n:])

    cur = x_ref                      # (Cin, >= H_in*W + KW-1), lane-major activation
    H_in = H0
    for li, (Cin, Cout, SH, slope) in enumerate(specs):
        H_f = H_in - KH + 1          # stride-1 (full-rate) output rows
        M_f = H_f * W
        Ho = (H_in - KH) // SH + 1   # true (strided) output rows
        w_ref, b_ref = w_refs[li], b_refs[li]

        acc = None
        for kh in range(KH):
            w_kh = w_ref[kh]                                        # (Cout, KW*Cin)
            if Cin == 1:
                # Dense VPU outer products (taps are full (1, M_f) lane rows).
                contrib = None
                for kw in range(KW):
                    x_sl = cur[:, kh * W + kw: kh * W + kw + M_f]   # (1, M_f)
                    c = w_kh[:, kw:kw + 1] * x_sl                   # (Cout, M_f)
                    contrib = c if contrib is None else contrib + c
            else:
                # Width-im2col: K = KW*Cin GEMM per kh (sublane-aligned concat
                # since Cin is a multiple of 8 here).
                taps = jnp.concatenate(
                    [cur[:, kh * W + kw: kh * W + kw + M_f] for kw in range(KW)],
                    axis=0)                                         # (KW*Cin, M_f)
                contrib = jnp.dot(w_kh, taps,
                                  preferred_element_type=jnp.float32)
            acc = contrib if acc is None else acc + contrib

        acc = acc + b_ref[...]                     # (Cout, 1) broadcasts over lanes
        if slope is not None:                      # LeakyReLU(0.2)
            acc = jnp.where(acc >= 0, acc, slope * acc)

        o_ref = o_refs[li]
        if li < n - 1:
            if SH == 1:
                sub = acc                          # M_f == Ho*W
            else:
                # Vectorized row subsample: gather kept rows (runs of W lanes)
                # into one value, then a single lane-dense store.
                sub = jnp.concatenate(
                    [acc[:, SH * oh * W: SH * oh * W + W] for oh in range(Ho)],
                    axis=1)                        # (Cout, Ho*W)
            o_ref[:, :Ho * W] = sub.astype(o_ref.dtype)
            # Zero the single padded row so the next layer's (contained)
            # KW-1-lane tap overshoot reads finite data.
            o_ref[:, Ho * W:] = jnp.zeros((Cout, W), o_ref.dtype)
            cur = o_ref                            # out ref doubles as next input
            H_in = Ho
        else:
            o_ref[...] = acc.astype(o_ref.dtype)   # last layer: SH == 1


# ----------------------------------------------------------------------------
# Parameters (mirrors the PyTorch module structure; kaiming-normal-ish init)
# ----------------------------------------------------------------------------
def init_conv2dd_params(key, channels=8, kernel_size=(5, 3)):
    C = channels
    kh, kw = kernel_size
    layer_specs = [
        (1,     C,     (1, 1)),
        (C,     2 * C, (2, 1)),
        (2 * C, 4 * C, (2, 1)),
        (4 * C, 2 * C, (2, 1)),
        (2 * C, 1,     (1, 1)),
    ]
    params = []
    for cin, cout, stride in layer_specs:
        key, wk, bk = jax.random.split(key, 3)
        fan_in = cin * kh * kw
        std = (2.0 / fan_in) ** 0.5
        w = std * jax.random.normal(wk, (kh, kw, cin, cout), jnp.float32)
        bound = 1.0 / (fan_in ** 0.5)
        b = bound * jax.random.uniform(bk, (cout,), jnp.float32,
                                       minval=-1.0, maxval=1.0)
        params.append((w, b, stride))
    return params


# ----------------------------------------------------------------------------
# Forward wrapper (matches the PyTorch Conv2dD.forward interface/shapes)
# ----------------------------------------------------------------------------
def conv2dd_forward(x, params, last_sigmoid=False):
    """x: (B, T, D) float32.  Returns [outs] like the PyTorch module."""
    B, T, D = x.shape
    n = len(params)
    W = max(8, ((D + 7) // 8) * 8)          # padded width (row length in lanes)

    # Static per-layer geometry.
    specs, heights, vwidths = [], [], []
    H, V = T, D
    for i, (w, b, (sh, sw)) in enumerate(params):
        assert w.shape[0] == KH and w.shape[1] == KW, "Conv2dD kernel is (5, 3)"
        assert sw == 1, "Conv2dD uses stride 1 along the feature axis"
        cin, cout = w.shape[2], w.shape[3]
        slope = None if i == n - 1 else 0.2
        specs.append((cin, cout, sh, slope))
        H = (H - KH) // sh + 1
        V = V - (KW - 1)
        assert H > 0 and V > 0, "input too small for five VALID (5,3) convs"
        heights.append(H)
        vwidths.append(V)

    # Lane-major, width-padded, zero-tail-padded input: (B, 1, T*W + W).
    L0 = T * W + W
    xw = jnp.pad(x, ((0, 0), (0, 0), (0, W - D)))
    x_flat = jnp.pad(xw.reshape(B, T * W), ((0, 0), (0, W)))[:, None, :]

    flat_inputs = [x_flat]
    in_specs = [pl.BlockSpec((None, 1, L0), lambda b: (b, 0, 0))]
    for (w, bvec, _), (cin, cout, _, _) in zip(params, specs):
        # (KH, KW, Cin, Cout) -> (KH, Cout, KW*Cin): one (Cout, K) GEMM tile per
        # kh, K ordered kw-major / cin-minor to match the kernel's im2col concat.
        wp = jnp.transpose(w, (0, 3, 1, 2)).reshape(KH, cout, KW * cin)
        flat_inputs.append(wp)
        flat_inputs.append(bvec.reshape(cout, 1))
        in_specs.append(pl.BlockSpec((KH, cout, KW * cin), lambda b: (0, 0, 0)))
        in_specs.append(pl.BlockSpec((cout, 1), lambda b: (0, 0)))

    out_shapes, out_specs = [], []
    for i, ((cin, cout, _, _), Ho) in enumerate(zip(specs, heights)):
        L = (Ho + 1) * W if i < n - 1 else Ho * W   # +1 padded row (tap overshoot)
        out_shapes.append(jax.ShapeDtypeStruct((B, cout, L), x.dtype))
        out_specs.append(pl.BlockSpec((None, cout, L), lambda b: (b, 0, 0)))

    kern = functools.partial(_fused_kernel, W=W, H0=T, specs=tuple(specs))
    outs_flat = pl.pallas_call(
        kern,
        out_shape=tuple(out_shapes),
        grid=(B,),
        in_specs=in_specs,
        out_specs=tuple(out_specs),
        compiler_params=pltpu.CompilerParams(
            dimension_semantics=("parallel",)),
    )(*flat_inputs)

    # Crop to the valid width; (B, C, Ho, V) is already NCHW (no transpose).
    outs = []
    for i, (of, (cin, cout, _, _), Ho, V) in enumerate(
            zip(outs_flat, specs, heights, vwidths)):
        if i < n - 1:
            outs.append(of.reshape(B, cout, Ho + 1, W)[:, :, :Ho, :V])
        else:
            y = of.reshape(B, cout, Ho, W)[:, 0, :, :V]    # squeeze channel
            y = jax.nn.sigmoid(y) if last_sigmoid else y
            outs.append(y)
    return [outs]


# ----------------------------------------------------------------------------
# Pure-JAX reference (for self-check of the Pallas kernel)
# ----------------------------------------------------------------------------
def _ref_forward(x, params, last_sigmoid=False):
    h = x[..., None]
    outs = []
    n = len(params)
    for i, (w, b, (sh, sw)) in enumerate(params):
        h = jax.lax.conv_general_dilated(
            h, w, window_strides=(sh, sw), padding="VALID",
            dimension_numbers=("NHWC", "HWIO", "NHWC")) + b
        if i != n - 1:
            h = jnp.where(h >= 0, h, 0.2 * h)
            outs.append(jnp.transpose(h, (0, 3, 1, 2)))
    y = jax.nn.sigmoid(h) if last_sigmoid else h
    outs.append(y[..., 0])
    return [outs]


if __name__ == "__main__":
    key = jax.random.PRNGKey(0)
    k_x, k_p = jax.random.split(key)

    # Small shapes: batch=2, time T=80, feature dim D=16, channels=8.
    # T must survive four kernel-height-5 convs (3 of them strided).
    B, T, D = 2, 80, 16
    x = jax.random.normal(k_x, (B, T, D), jnp.float32)
    params = init_conv2dd_params(k_p, channels=8, kernel_size=(5, 3))

    outs = conv2dd_forward(x, params, last_sigmoid=False)
    jax.block_until_ready(outs)

    # Self-check against the pure-JAX reference.
    ref = _ref_forward(x, params, last_sigmoid=False)
    for got, want in zip(outs[0], ref[0]):
        assert got.shape == want.shape, (got.shape, want.shape)
        assert jnp.allclose(got, want, atol=1e-4, rtol=1e-4), \
            float(jnp.max(jnp.abs(got - want)))

    print("KERNEL_OK")
</pallas_src>

<mosaic_0001>
module attributes {stable_mosaic.version = 11 : i64} {
  func.func @_fused_kernel(%arg0: i32, %arg1: memref<1x1x1296xf32, #tpu.memory_space<vmem>>, %arg2: memref<5x8x3xf32, #tpu.memory_space<vmem>>, %arg3: memref<8x1xf32, #tpu.memory_space<vmem>>, %arg4: memref<5x16x24xf32, #tpu.memory_space<vmem>>, %arg5: memref<16x1xf32, #tpu.memory_space<vmem>>, %arg6: memref<5x32x48xf32, #tpu.memory_space<vmem>>, %arg7: memref<32x1xf32, #tpu.memory_space<vmem>>, %arg8: memref<5x16x96xf32, #tpu.memory_space<vmem>>, %arg9: memref<16x1xf32, #tpu.memory_space<vmem>>, %arg10: memref<5x1x48xf32, #tpu.memory_space<vmem>>, %arg11: memref<1x1xf32, #tpu.memory_space<vmem>>, %arg12: memref<1x8x1232xf32, #tpu.memory_space<vmem>>, %arg13: memref<1x16x592xf32, #tpu.memory_space<vmem>>, %arg14: memref<1x32x272xf32, #tpu.memory_space<vmem>>, %arg15: memref<1x16x112xf32, #tpu.memory_space<vmem>>, %arg16: memref<1x1x32xf32, #tpu.memory_space<vmem>>) attributes {dimension_semantics = [#tpu.dimension_semantics<parallel>], iteration_bounds = array<i64: 2>, scalar_prefetch = 0 : i64, scratch_operands = 0 : i64, tpu.core_type = #tpu.core_type<tc>, window_params = [{transform_indices = @transform_0, window_bounds = array<i64: 1, 1, 1296>}, {pipeline_mode = #tpu.pipeline_mode<synchronous>, transform_indices = @transform_1, window_bounds = array<i64: 5, 8, 3>}, {pipeline_mode = #tpu.pipeline_mode<synchronous>, transform_indices = @transform_2, window_bounds = array<i64: 8, 1>}, {pipeline_mode = #tpu.pipeline_mode<synchronous>, transform_indices = @transform_3, window_bounds = array<i64: 5, 16, 24>}, {pipeline_mode = #tpu.pipeline_mode<synchronous>, transform_indices = @transform_4, window_bounds = array<i64: 16, 1>}, {pipeline_mode = #tpu.pipeline_mode<synchronous>, transform_indices = @transform_5, window_bounds = array<i64: 5, 32, 48>}, {pipeline_mode = #tpu.pipeline_mode<synchronous>, transform_indices = @transform_6, window_bounds = array<i64: 32, 1>}, {pipeline_mode = #tpu.pipeline_mode<synchronous>, transform_indices = @transform_7, window_bounds = array<i64: 5, 16, 96>}, {pipeline_mode = #tpu.pipeline_mode<synchronous>, transform_indices = @transform_8, window_bounds = array<i64: 16, 1>}, {pipeline_mode = #tpu.pipeline_mode<synchronous>, transform_indices = @transform_9, window_bounds = array<i64: 5, 1, 48>}, {pipeline_mode = #tpu.pipeline_mode<synchronous>, transform_indices = @transform_10, window_bounds = array<i64: 1, 1>}, {transform_indices = @transform_11, window_bounds = array<i64: 1, 8, 1232>}, {transform_indices = @transform_12, window_bounds = array<i64: 1, 16, 592>}, {transform_indices = @transform_13, window_bounds = array<i64: 1, 32, 272>}, {transform_indices = @transform_14, window_bounds = array<i64: 1, 16, 112>}, {transform_indices = @transform_15, window_bounds = array<i64: 1, 1, 32>}]} {
    %c0 = arith.constant 0 : index
    %c0_0 = arith.constant 0 : index
    %c0_1 = arith.constant 0 : index
    %0 = vector.load %arg2[%c0, %c0_0, %c0_1] : memref<5x8x3xf32, #tpu.memory_space<vmem>>, vector<1x8x3xf32>
    %1 = vector.shape_cast %0 : vector<1x8x3xf32> to vector<8x3xf32>
    %c0_2 = arith.constant 0 : index
    %c0_3 = arith.constant 0 : index
    %c0_4 = arith.constant 0 : index
    %2 = vector.load %arg1[%c0_2, %c0_3, %c0_4] : memref<1x1x1296xf32, #tpu.memory_space<vmem>>, vector<1x1x1216xf32>
    %3 = vector.shape_cast %2 : vector<1x1x1216xf32> to vector<1x1216xf32>
    %4 = vector.extract_strided_slice %1 {offsets = [0, 0], sizes = [8, 1], strides = [1, 1]} : vector<8x3xf32> to vector<8x1xf32>
    %5 = vector.broadcast %4 : vector<8x1xf32> to vector<8x1216xf32>
    %6 = vector.broadcast %3 : vector<1x1216xf32> to vector<8x1216xf32>
    %7 = arith.mulf %5, %6 : vector<8x1216xf32>
    %c0_5 = arith.constant 0 : index
    %c0_6 = arith.constant 0 : index
    %c1 = arith.constant 1 : index
    %8 = vector.load %arg1[%c0_5, %c0_6, %c1] : memref<1x1x1296xf32, #tpu.memory_space<vmem>>, vector<1x1x1216xf32>
    %9 = vector.shape_cast %8 : vector<1x1x1216xf32> to vector<1x1216xf32>
    %10 = vector.extract_strided_slice %1 {offsets = [0, 1], sizes = [8, 1], strides = [1, 1]} : vector<8x3xf32> to vector<8x1xf32>
    %11 = vector.broadcast %10 : vector<8x1xf32> to vector<8x1216xf32>
    %12 = vector.broadcast %9 : vector<1x1216xf32> to vector<8x1216xf32>
    %13 = arith.mulf %11, %12 : vector<8x1216xf32>
    %14 = arith.addf %7, %13 : vector<8x1216xf32>
    %c0_7 = arith.constant 0 : index
    %c0_8 = arith.constant 0 : index
    %c2 = arith.constant 2 : index
    %15 = vector.load %arg1[%c0_7, %c0_8, %c2] : memref<1x1x1296xf32, #tpu.memory_space<vmem>>, vector<1x1x1216xf32>
    %16 = vector.shape_cast %15 : vector<1x1x1216xf32> to vector<1x1216xf32>
    %17 = vector.extract_strided_slice %1 {offsets = [0, 2], sizes = [8, 1], strides = [1, 1]} : vector<8x3xf32> to vector<8x1xf32>
    %18 = vector.broadcast %17 : vector<8x1xf32> to vector<8x1216xf32>
    %19 = vector.broadcast %16 : vector<1x1216xf32> to vector<8x1216xf32>
    %20 = arith.mulf %18, %19 : vector<8x1216xf32>
    %21 = arith.addf %14, %20 : vector<8x1216xf32>
    %c1_9 = arith.constant 1 : index
    %c0_10 = arith.constant 0 : index
    %c0_11 = arith.constant 0 : index
    %22 = vector.load %arg2[%c1_9, %c0_10, %c0_11] : memref<5x8x3xf32, #tpu.memory_space<vmem>>, vector<1x8x3xf32>
    %23 = vector.shape_cast %22 : vector<1x8x3xf32> to vector<8x3xf32>
    %c0_12 = arith.constant 0 : index
    %c0_13 = arith.constant 0 : index
    %c16 = arith.constant 16 : index
    %24 = vector.load %arg1[%c0_12, %c0_13, %c16] : memref<1x1x1296xf32, #tpu.memory_space<vmem>>, vector<1x1x1216xf32>
    %25 = vector.shape_cast %24 : vector<1x1x1216xf32> to vector<1x1216xf32>
    %26 = vector.extract_strided_slice %23 {offsets = [0, 0], sizes = [8, 1], strides = [1, 1]} : vector<8x3xf32> to vector<8x1xf32>
    %27 = vector.broadcast %26 : vector<8x1xf32> to vector<8x1216xf32>
    %28 = vector.broadcast %25 : vector<1x1216xf32> to vector<8x1216xf32>
    %29 = arith.mulf %27, %28 : vector<8x1216xf32>
    %c0_14 = arith.constant 0 : index
    %c0_15 = arith.constant 0 : index
    %c17 = arith.constant 17 : index
    %30 = vector.load %arg1[%c0_14, %c0_15, %c17] : memref<1x1x1296xf32, #tpu.memory_space<vmem>>, vector<1x1x1216xf32>
    %31 = vector.shape_cast %30 : vector<1x1x1216xf32> to vector<1x1216xf32>
    %32 = vector.extract_strided_slice %23 {offsets = [0, 1], sizes = [8, 1], strides = [1, 1]} : vector<8x3xf32> to vector<8x1xf32>
    %33 = vector.broadcast %32 : vector<8x1xf32> to vector<8x1216xf32>
    %34 = vector.broadcast %31 : vector<1x1216xf32> to vector<8x1216xf32>
    %35 = arith.mulf %33, %34 : vector<8x1216xf32>
    %36 = arith.addf %29, %35 : vector<8x1216xf32>
    %c0_16 = arith.constant 0 : index
    %c0_17 = arith.constant 0 : index
    %c18 = arith.constant 18 : index
    %37 = vector.load %arg1[%c0_16, %c0_17, %c18] : memref<1x1x1296xf32, #tpu.memory_space<vmem>>, vector<1x1x1216xf32>
    %38 = vector.shape_cast %37 : vector<1x1x1216xf32> to vector<1x1216xf32>
    %39 = vector.extract_strided_slice %23 {offsets = [0, 2], sizes = [8, 1], strides = [1, 1]} : vector<8x3xf32> to vector<8x1xf32>
    %40 = vector.broadcast %39 : vector<8x1xf32> to vector<8x1216xf32>
    %41 = vector.broadcast %38 : vector<1x1216xf32> to vector<8x1216xf32>
    %42 = arith.mulf %40, %41 : vector<8x1216xf32>
    %43 = arith.addf %36, %42 : vector<8x1216xf32>
    %44 = arith.addf %21, %43 : vector<8x1216xf32>
    %c2_18 = arith.constant 2 : index
    %c0_19 = arith.constant 0 : index
    %c0_20 = arith.constant 0 : index
    %45 = vector.load %arg2[%c2_18, %c0_19, %c0_20] : memref<5x8x3xf32, #tpu.memory_space<vmem>>, vector<1x8x3xf32>
    %46 = vector.shape_cast %45 : vector<1x8x3xf32> to vector<8x3xf32>
    %c0_21 = arith.constant 0 : index
    %c0_22 = arith.constant 0 : index
    %c32 = arith.constant 32 : index
    %47 = vector.load %arg1[%c0_21, %c0_22, %c32] : memref<1x1x1296xf32, #tpu.memory_space<vmem>>, vector<1x1x1216xf32>
    %48 = vector.shape_cast %47 : vector<1x1x1216xf32> to vector<1x1216xf32>
    %49 = vector.extract_strided_slice %46 {offsets = [0, 0], sizes = [8, 1], strides = [1, 1]} : vector<8x3xf32> to vector<8x1xf32>
    %50 = vector.broadcast %49 : vector<8x1xf32> to vector<8x1216xf32>
    %51 = vector.broadcast %48 : vector<1x1216xf32> to vector<8x1216xf32>
    %52 = arith.mulf %50, %51 : vector<8x1216xf32>
    %c0_23 = arith.constant 0 : index
    %c0_24 = arith.constant 0 : index
    %c33 = arith.constant 33 : index
    %53 = vector.load %arg1[%c0_23, %c0_24, %c33] : memref<1x1x1296xf32, #tpu.memory_space<vmem>>, vector<1x1x1216xf32>
    %54 = vector.shape_cast %53 : vector<1x1x1216xf32> to vector<1x1216xf32>
    %55 = vector.extract_strided_slice %46 {offsets = [0, 1], sizes = [8, 1], strides = [1, 1]} : vector<8x3xf32> to vector<8x1xf32>
    %56 = vector.broadcast %55 : vector<8x1xf32> to vector<8x1216xf32>
    %57 = vector.broadcast %54 : vector<1x1216xf32> to vector<8x1216xf32>
    %58 = arith.mulf %56, %57 : vector<8x1216xf32>
    %59 = arith.addf %52, %58 : vector<8x1216xf32>
    %c0_25 = arith.constant 0 : index
    %c0_26 = arith.constant 0 : index
    %c34 = arith.constant 34 : index
    %60 = vector.load %arg1[%c0_25, %c0_26, %c34] : memref<1x1x1296xf32, #tpu.memory_space<vmem>>, vector<1x1x1216xf32>
    %61 = vector.shape_cast %60 : vector<1x1x1216xf32> to vector<1x1216xf32>
    %62 = vector.extract_strided_slice %46 {offsets = [0, 2], sizes = [8, 1], strides = [1, 1]} : vector<8x3xf32> to vector<8x1xf32>
    %63 = vector.broadcast %62 : vector<8x1xf32> to vector<8x1216xf32>
    %64 = vector.broadcast %61 : vector<1x1216xf32> to vector<8x1216xf32>
    %65 = arith.mulf %63, %64 : vector<8x1216xf32>
    %66 = arith.addf %59, %65 : vector<8x1216xf32>
    %67 = arith.addf %44, %66 : vector<8x1216xf32>
    %c3 = arith.constant 3 : index
    %c0_27 = arith.constant 0 : index
    %c0_28 = arith.constant 0 : index
    %68 = vector.load %arg2[%c3, %c0_27, %c0_28] : memref<5x8x3xf32, #tpu.memory_space<vmem>>, vector<1x8x3xf32>
    %69 = vector.shape_cast %68 : vector<1x8x3xf32> to vector<8x3xf32>
    %c0_29 = arith.constant 0 : index
    %c0_30 = arith.constant 0 : index
    %c48 = arith.constant 48 : index
    %70 = vector.load %arg1[%c0_29, %c0_30, %c48] : memref<1x1x1296xf32, #tpu.memory_space<vmem>>, vector<1x1x1216xf32>
    %71 = vector.shape_cast %70 : vector<1x1x1216xf32> to vector<1x1216xf32>
    %72 = vector.extract_strided_slice %69 {offsets = [0, 0], sizes = [8, 1], strides = [1, 1]} : vector<8x3xf32> to vector<8x1xf32>
    %73 = vector.broadcast %72 : vector<8x1xf32> to vector<8x1216xf32>
    %74 = vector.broadcast %71 : vector<1x1216xf32> to vector<8x1216xf32>
    %75 = arith.mulf %73, %74 : vector<8x1216xf32>
    %c0_31 = arith.constant 0 : index
    %c0_32 = arith.constant 0 : index
    %c49 = arith.constant 49 : index
    %76 = vector.load %arg1[%c0_31, %c0_32, %c49] : memref<1x1x1296xf32, #tpu.memory_space<vmem>>, vector<1x1x1216xf32>
    %77 = vector.shape_cast %76 : vector<1x1x1216xf32> to vector<1x1216xf32>
    %78 = vector.extract_strided_slice %69 {offsets = [0, 1], sizes = [8, 1], strides = [1, 1]} : vector<8x3xf32> to vector<8x1xf32>
    %79 = vector.broadcast %78 : vector<8x1xf32> to vector<8x1216xf32>
    %80 = vector.broadcast %77 : vector<1x1216xf32> to vector<8x1216xf32>
    %81 = arith.mulf %79, %80 : vector<8x1216xf32>
    %82 = arith.addf %75, %81 : vector<8x1216xf32>
    %c0_33 = arith.constant 0 : index
    %c0_34 = arith.constant 0 : index
    %c50 = arith.constant 50 : index
    %83 = vector.load %arg1[%c0_33, %c0_34, %c50] : memref<1x1x1296xf32, #tpu.memory_space<vmem>>, vector<1x1x1216xf32>
    %84 = vector.shape_cast %83 : vector<1x1x1216xf32> to vector<1x1216xf32>
    %85 = vector.extract_strided_slice %69 {offsets = [0, 2], sizes = [8, 1], strides = [1, 1]} : vector<8x3xf32> to vector<8x1xf32>
    %86 = vector.broadcast %85 : vector<8x1xf32> to vector<8x1216xf32>
    %87 = vector.broadcast %84 : vector<1x1216xf32> to vector<8x1216xf32>
    %88 = arith.mulf %86, %87 : vector<8x1216xf32>
    %89 = arith.addf %82, %88 : vector<8x1216xf32>
    %90 = arith.addf %67, %89 : vector<8x1216xf32>
    %c4 = arith.constant 4 : index
    %c0_35 = arith.constant 0 : index
    %c0_36 = arith.constant 0 : index
    %91 = vector.load %arg2[%c4, %c0_35, %c0_36] : memref<5x8x3xf32, #tpu.memory_space<vmem>>, vector<1x8x3xf32>
    %92 = vector.shape_cast %91 : vector<1x8x3xf32> to vector<8x3xf32>
    %c0_37 = arith.constant 0 : index
    %c0_38 = arith.constant 0 : index
    %c64 = arith.constant 64 : index
    %93 = vector.load %arg1[%c0_37, %c0_38, %c64] : memref<1x1x1296xf32, #tpu.memory_space<vmem>>, vector<1x1x1216xf32>
    %94 = vector.shape_cast %93 : vector<1x1x1216xf32> to vector<1x1216xf32>
    %95 = vector.extract_strided_slice %92 {offsets = [0, 0], sizes = [8, 1], strides = [1, 1]} : vector<8x3xf32> to vector<8x1xf32>
    %96 = vector.broadcast %95 : vector<8x1xf32> to vector<8x1216xf32>
    %97 = vector.broadcast %94 : vector<1x1216xf32> to vector<8x1216xf32>
    %98 = arith.mulf %96, %97 : vector<8x1216xf32>
    %c0_39 = arith.constant 0 : index
    %c0_40 = arith.constant 0 : index
    %c65 = arith.constant 65 : index
    %99 = vector.load %arg1[%c0_39, %c0_40, %c65] : memref<1x1x1296xf32, #tpu.memory_space<vmem>>, vector<1x1x1216xf32>
    %100 = vector.shape_cast %99 : vector<1x1x1216xf32> to vector<1x1216xf32>
    %101 = vector.extract_strided_slice %92 {offsets = [0, 1], sizes = [8, 1], strides = [1, 1]} : vector<8x3xf32> to vector<8x1xf32>
    %102 = vector.broadcast %101 : vector<8x1xf32> to vector<8x1216xf32>
    %103 = vector.broadcast %100 : vector<1x1216xf32> to vector<8x1216xf32>
    %104 = arith.mulf %102, %103 : vector<8x1216xf32>
    %105 = arith.addf %98, %104 : vector<8x1216xf32>
    %c0_41 = arith.constant 0 : index
    %c0_42 = arith.constant 0 : index
    %c66 = arith.constant 66 : index
    %106 = vector.load %arg1[%c0_41, %c0_42, %c66] : memref<1x1x1296xf32, #tpu.memory_space<vmem>>, vector<1x1x1216xf32>
    %107 = vector.shape_cast %106 : vector<1x1x1216xf32> to vector<1x1216xf32>
    %108 = vector.extract_strided_slice %92 {offsets = [0, 2], sizes = [8, 1], strides = [1, 1]} : vector<8x3xf32> to vector<8x1xf32>
    %109 = vector.broadcast %108 : vector<8x1xf32> to vector<8x1216xf32>
    %110 = vector.broadcast %107 : vector<1x1216xf32> to vector<8x1216xf32>
    %111 = arith.mulf %109, %110 : vector<8x1216xf32>
    %112 = arith.addf %105, %111 : vector<8x1216xf32>
    %113 = arith.addf %90, %112 : vector<8x1216xf32>
    %c0_43 = arith.constant 0 : index
    %c0_44 = arith.constant 0 : index
    %114 = vector.load %arg3[%c0_43, %c0_44] : memref<8x1xf32, #tpu.memory_space<vmem>>, vector<8x1xf32>
    %115 = vector.broadcast %114 : vector<8x1xf32> to vector<8x1216xf32>
    %116 = arith.addf %113, %115 : vector<8x1216xf32>
    %cst = arith.constant 0.000000e+00 : f32
    %117 = vector.broadcast %cst : f32 to vector<8x1216xf32>
    %118 = arith.cmpf oge, %116, %117 : vector<8x1216xf32>
    %cst_45 = arith.constant 2.000000e-01 : f32
    %119 = vector.broadcast %cst_45 : f32 to vector<8x1216xf32>
    %120 = arith.mulf %119, %116 : vector<8x1216xf32>
    %121 = arith.select %118, %116, %120 : vector<8x1216xi1>, vector<8x1216xf32>
    %c0_46 = arith.constant 0 : index
    %c0_47 = arith.constant 0 : index
    %c0_48 = arith.constant 0 : index
    %122 = vector.load %arg12[%c0_46, %c0_47, %c0_48] : memref<1x8x1232xf32, #tpu.memory_space<vmem>>, vector<1x8x1216xf32>
    %123 = vector.shape_cast %122 : vector<1x8x1216xf32> to vector<8x1216xf32>
    %124 = vector.shape_cast %121 : vector<8x1216xf32> to vector<1x8x1216xf32>
    tpu.vector_store %arg12[%c0_46, %c0_47, %c0_48], %124 {strides = array<i32>} : memref<1x8x1232xf32, #tpu.memory_space<vmem>>, vector<1x8x1216xf32>,
    %cst_49 = arith.constant 0.000000e+00 : f32
    %125 = vector.broadcast %cst_49 : f32 to vector<8x16xf32>
    %c0_50 = arith.constant 0 : index
    %c0_51 = arith.constant 0 : index
    %c1216 = arith.constant 1216 : index
    %126 = vector.load %arg12[%c0_50, %c0_51, %c1216] : memref<1x8x1232xf32, #tpu.memory_space<vmem>>, vector<1x8x16xf32>
    %127 = vector.shape_cast %126 : vector<1x8x16xf32> to vector<8x16xf32>
    %128 = vector.shape_cast %125 : vector<8x16xf32> to vector<1x8x16xf32>
    tpu.vector_store %arg12[%c0_50, %c0_51, %c1216], %128 {strides = array<i32>} : memref<1x8x1232xf32, #tpu.memory_space<vmem>>, vector<1x8x16xf32>,
    %c0_52 = arith.constant 0 : index
    %c0_53 = arith.constant 0 : index
    %c0_54 = arith.constant 0 : index
    %129 = vector.load %arg4[%c0_52, %c0_53, %c0_54] : memref<5x16x24xf32, #tpu.memory_space<vmem>>, vector<1x16x24xf32>
    %130 = vector.shape_cast %129 : vector<1x16x24xf32> to vector<16x24xf32>
    %c0_55 = arith.constant 0 : index
    %c0_56 = arith.constant 0 : index
    %c0_57 = arith.constant 0 : index
    %131 = vector.load %arg12[%c0_55, %c0_56, %c0_57] : memref<1x8x1232xf32, #tpu.memory_space<vmem>>, vector<1x8x1152xf32>
    %132 = vector.shape_cast %131 : vector<1x8x1152xf32> to vector<8x1152xf32>
    %c0_58 = arith.constant 0 : index
    %c0_59 = arith.constant 0 : index
    %c1_60 = arith.constant 1 : index
    %133 = vector.load %arg12[%c0_58, %c0_59, %c1_60] : memref<1x8x1232xf32, #tpu.memory_space<vmem>>, vector<1x8x1152xf32>
    %134 = vector.shape_cast %133 : vector<1x8x1152xf32> to vector<8x1152xf32>
    %c0_61 = arith.constant 0 : index
    %c0_62 = arith.constant 0 : index
    %c2_63 = arith.constant 2 : index
    %135 = vector.load %arg12[%c0_61, %c0_62, %c2_63] : memref<1x8x1232xf32, #tpu.memory_space<vmem>>, vector<1x8x1152xf32>
    %136 = vector.shape_cast %135 : vector<1x8x1152xf32> to vector<8x1152xf32>
    %137 = tpu.concatenate %132, %134, %136 in 0 : vector<8x1152xf32>, vector<8x1152xf32>, vector<8x1152xf32> -> vector<24x1152xf32>
    %cst_64 = arith.constant dense<0.000000e+00> : vector<16x1152xf32>
    %138 = tpu.matmul %130, %137, %cst_64 {dimension_numbers = #tpu.dot_dimension_numbers<[1], [0], [0], [1], [0, 0, 1, 1], [], []>} : vector<16x24xf32>, vector<24x1152xf32>, vector<16x1152xf32> -> vector<16x1152xf32>
    %c1_65 = arith.constant 1 : index
    %c0_66 = arith.constant 0 : index
    %c0_67 = arith.constant 0 : index
    %139 = vector.load %arg4[%c1_65, %c0_66, %c0_67] : memref<5x16x24xf32, #tpu.memory_space<vmem>>, vector<1x16x24xf32>
    %140 = vector.shape_cast %139 : vector<1x16x24xf32> to vector<16x24xf32>
    %c0_68 = arith.constant 0 : index
    %c0_69 = arith.constant 0 : index
    %c16_70 = arith.constant 16 : index
    %141 = vector.load %arg12[%c0_68, %c0_69, %c16_70] : memref<1x8x1232xf32, #tpu.memory_space<vmem>>, vector<1x8x1152xf32>
    %142 = vector.shape_cast %141 : vector<1x8x1152xf32> to vector<8x1152xf32>
    %c0_71 = arith.constant 0 : index
    %c0_72 = arith.constant 0 : index
    %c17_73 = arith.constant 17 : index
    %143 = vector.load %arg12[%c0_71, %c0_72, %c17_73] : memref<1x8x1232xf32, #tpu.memory_space<vmem>>, vector<1x8x1152xf32>
    %144 = vector.shape_cast %143 : vector<1x8x1152xf32> to vector<8x1152xf32>
    %c0_74 = arith.constant 0 : index
    %c0_75 = arith.constant 0 : index
    %c18_76 = arith.constant 18 : index
    %145 = vector.load %arg12[%c0_74, %c0_75, %c18_76] : memref<1x8x1232xf32, #tpu.memory_space<vmem>>, vector<1x8x1152xf32>
    %146 = vector.shape_cast %145 : vector<1x8x1152xf32> to vector<8x1152xf32>
    %147 = tpu.concatenate %142, %144, %146 in 0 : vector<8x1152xf32>, vector<8x1152xf32>, vector<8x1152xf32> -> vector<24x1152xf32>
    %cst_77 = arith.constant dense<0.000000e+00> : vector<16x1152xf32>
    %148 = tpu.matmul %140, %147, %cst_77 {dimension_numbers = #tpu.dot_dimension_numbers<[1], [0], [0], [1], [0, 0, 1, 1], [], []>} : vector<16x24xf32>, vector<24x1152xf32>, vector<16x1152xf32> -> vector<16x1152xf32>
    %149 = arith.addf %138, %148 : vector<16x1152xf32>
    %c2_78 = arith.constant 2 : index
    %c0_79 = arith.constant 0 : index
    %c0_80 = arith.constant 0 : index
    %150 = vector.load %arg4[%c2_78, %c0_79, %c0_80] : memref<5x16x24xf32, #tpu.memory_space<vmem>>, vector<1x16x24xf32>
    %151 = vector.shape_cast %150 : vector<1x16x24xf32> to vector<16x24xf32>
    %c0_81 = arith.constant 0 : index
    %c0_82 = arith.constant 0 : index
    %c32_83 = arith.constant 32 : index
    %152 = vector.load %arg12[%c0_81, %c0_82, %c32_83] : memref<1x8x1232xf32, #tpu.memory_space<vmem>>, vector<1x8x1152xf32>
    %153 = vector.shape_cast %152 : vector<1x8x1152xf32> to vector<8x1152xf32>
    %c0_84 = arith.constant 0 : index
    %c0_85 = arith.constant 0 : index
    %c33_86 = arith.constant 33 : index
    %154 = vector.load %arg12[%c0_84, %c0_85, %c33_86] : memref<1x8x1232xf32, #tpu.memory_space<vmem>>, vector<1x8x1152xf32>
    %155 = vector.shape_cast %154 : vector<1x8x1152xf32> to vector<8x1152xf32>
    %c0_87 = arith.constant 0 : index
    %c0_88 = arith.constant 0 : index
    %c34_89 = arith.constant 34 : index
    %156 = vector.load %arg12[%c0_87, %c0_88, %c34_89] : memref<1x8x1232xf32, #tpu.memory_space<vmem>>, vector<1x8x1152xf32>
    %157 = vector.shape_cast %156 : vector<1x8x1152xf32> to vector<8x1152xf32>
    %158 = tpu.concatenate %153, %155, %157 in 0 : vector<8x1152xf32>, vector<8x1152xf32>, vector<8x1152xf32> -> vector<24x1152xf32>
    %cst_90 = arith.constant dense<0.000000e+00> : vector<16x1152xf32>
    %159 = tpu.matmul %151, %158, %cst_90 {dimension_numbers = #tpu.dot_dimension_numbers<[1], [0], [0], [1], [0, 0, 1, 1], [], []>} : vector<16x24xf32>, vector<24x1152xf32>, vector<16x1152xf32> -> vector<16x1152xf32>
    %160 = arith.addf %149, %159 : vector<16x1152xf32>
    %c3_91 = arith.constant 3 : index
    %c0_92 = arith.constant 0 : index
    %c0_93 = arith.constant 0 : index
    %161 = vector.load %arg4[%c3_91, %c0_92, %c0_93] : memref<5x16x24xf32, #tpu.memory_space<vmem>>, vector<1x16x24xf32>
    %162 = vector.shape_cast %161 : vector<1x16x24xf32> to vector<16x24xf32>
    %c0_94 = arith.constant 0 : index
    %c0_95 = arith.constant 0 : index
    %c48_96 = arith.constant 48 : index
    %163 = vector.load %arg12[%c0_94, %c0_95, %c48_96] : memref<1x8x1232xf32, #tpu.memory_space<vmem>>, vector<1x8x1152xf32>
    %164 = vector.shape_cast %163 : vector<1x8x1152xf32> to vector<8x1152xf32>
    %c0_97 = arith.constant 0 : index
    %c0_98 = arith.constant 0 : index
    %c49_99 = arith.constant 49 : index
    %165 = vector.load %arg12[%c0_97, %c0_98, %c49_99] : memref<1x8x1232xf32, #tpu.memory_space<vmem>>, vector<1x8x1152xf32>
    %166 = vector.shape_cast %165 : vector<1x8x1152xf32> to vector<8x1152xf32>
    %c0_100 = arith.constant 0 : index
    %c0_101 = arith.constant 0 : index
    %c50_102 = arith.constant 50 : index
    %167 = vector.load %arg12[%c0_100, %c0_101, %c50_102] : memref<1x8x1232xf32, #tpu.memory_space<vmem>>, vector<1x8x1152xf32>
    %168 = vector.shape_cast %167 : vector<1x8x1152xf32> to vector<8x1152xf32>
    %169 = tpu.concatenate %164, %166, %168 in 0 : vector<8x1152xf32>, vector<8x1152xf32>, vector<8x1152xf32> -> vector<24x1152xf32>
    %cst_103 = arith.constant dense<0.000000e+00> : vector<16x1152xf32>
    %170 = tpu.matmul %162, %169, %cst_103 {dimension_numbers = #tpu.dot_dimension_numbers<[1], [0], [0], [1], [0, 0, 1, 1], [], []>} : vector<16x24xf32>, vector<24x1152xf32>, vector<16x1152xf32> -> vector<16x1152xf32>
    %171 = arith.addf %160, %170 : vector<16x1152xf32>
    %c4_104 = arith.constant 4 : index
    %c0_105 = arith.constant 0 : index
    %c0_106 = arith.constant 0 : index
    %172 = vector.load %arg4[%c4_104, %c0_105, %c0_106] : memref<5x16x24xf32, #tpu.memory_space<vmem>>, vector<1x16x24xf32>
    %173 = vector.shape_cast %172 : vector<1x16x24xf32> to vector<16x24xf32>
    %c0_107 = arith.constant 0 : index
    %c0_108 = arith.constant 0 : index
    %c64_109 = arith.constant 64 : index
    %174 = vector.load %arg12[%c0_107, %c0_108, %c64_109] : memref<1x8x1232xf32, #tpu.memory_space<vmem>>, vector<1x8x1152xf32>
    %175 = vector.shape_cast %174 : vector<1x8x1152xf32> to vector<8x1152xf32>
    %c0_110 = arith.constant 0 : index
    %c0_111 = arith.constant 0 : index
    %c65_112 = arith.constant 65 : index
    %176 = vector.load %arg12[%c0_110, %c0_111, %c65_112] : memref<1x8x1232xf32, #tpu.memory_space<vmem>>, vector<1x8x1152xf32>
    %177 = vector.shape_cast %176 : vector<1x8x1152xf32> to vector<8x1152xf32>
    %c0_113 = arith.constant 0 : index
    %c0_114 = arith.constant 0 : index
    %c66_115 = arith.constant 66 : index
    %178 = vector.load %arg12[%c0_113, %c0_114, %c66_115] : memref<1x8x1232xf32, #tpu.memory_space<vmem>>, vector<1x8x1152xf32>
    %179 = vector.shape_cast %178 : vector<1x8x1152xf32> to vector<8x1152xf32>
    %180 = tpu.concatenate %175, %177, %179 in 0 : vector<8x1152xf32>, vector<8x1152xf32>, vector<8x1152xf32> -> vector<24x1152xf32>
    %cst_116 = arith.constant dense<0.000000e+00> : vector<16x1152xf32>
    %181 = tpu.matmul %173, %180, %cst_116 {dimension_numbers = #tpu.dot_dimension_numbers<[1], [0], [0], [1], [0, 0, 1, 1], [], []>} : vector<16x24xf32>, vector<24x1152xf32>, vector<16x1152xf32> -> vector<16x1152xf32>
    %182 = arith.addf %171, %181 : vector<16x1152xf32>
    %c0_117 = arith.constant 0 : index
    %c0_118 = arith.constant 0 : index
    %183 = vector.load %arg5[%c0_117, %c0_118] : memref<16x1xf32, #tpu.memory_space<vmem>>, vector<16x1xf32>
    %184 = vector.broadcast %183 : vector<16x1xf32> to vector<16x1152xf32>
    %185 = arith.addf %182, %184 : vector<16x1152xf32>
    %cst_119 = arith.constant 0.000000e+00 : f32
    %186 = vector.broadcast %cst_119 : f32 to vector<16x1152xf32>
    %187 = arith.cmpf oge, %185, %186 : vector<16x1152xf32>
    %cst_120 = arith.constant 2.000000e-01 : f32
    %188 = vector.broadcast %cst_120 : f32 to vector<16x1152xf32>
    %189 = arith.mulf %188, %185 : vector<16x1152xf32>
    %190 = arith.select %187, %185, %189 : vector<16x1152xi1>, vector<16x1152xf32>
    %191 = vector.extract_strided_slice %190 {offsets = [0, 0], sizes = [16, 16], strides = [1, 1]} : vector<16x1152xf32> to vector<16x16xf32>
    %192 = vector.extract_strided_slice %190 {offsets = [0, 32], sizes = [16, 16], strides = [1, 1]} : vector<16x1152xf32> to vector<16x16xf32>
    %193 = vector.extract_strided_slice %190 {offsets = [0, 64], sizes = [16, 16], strides = [1, 1]} : vector<16x1152xf32> to vector<16x16xf32>
    %194 = vector.extract_strided_slice %190 {offsets = [0, 96], sizes = [16, 16], strides = [1, 1]} : vector<16x1152xf32> to vector<16x16xf32>
    %195 = vector.extract_strided_slice %190 {offsets = [0, 128], sizes = [16, 16], strides = [1, 1]} : vector<16x1152xf32> to vector<16x16xf32>
    %196 = vector.extract_strided_slice %190 {offsets = [0, 160], sizes = [16, 16], strides = [1, 1]} : vector<16x1152xf32> to vector<16x16xf32>
    %197 = vector.extract_strided_slice %190 {offsets = [0, 192], sizes = [16, 16], strides = [1, 1]} : vector<16x1152xf32> to vector<16x16xf32>
    %198 = vector.extract_strided_slice %190 {offsets = [0, 224], sizes = [16, 16], strides = [1, 1]} : vector<16x1152xf32> to vector<16x16xf32>
    %199 = vector.extract_strided_slice %190 {offsets = [0, 256], sizes = [16, 16], strides = [1, 1]} : vector<16x1152xf32> to vector<16x16xf32>
    %200 = vector.extract_strided_slice %190 {offsets = [0, 288], sizes = [16, 16], strides = [1, 1]} : vector<16x1152xf32> to vector<16x16xf32>
    %201 = vector.extract_strided_slice %190 {offsets = [0, 320], sizes = [16, 16], strides = [1, 1]} : vector<16x1152xf32> to vector<16x16xf32>
    %202 = vector.extract_strided_slice %190 {offsets = [0, 352], sizes = [16, 16], strides = [1, 1]} : vector<16x1152xf32> to vector<16x16xf32>
    %203 = vector.extract_strided_slice %190 {offsets = [0, 384], sizes = [16, 16], strides = [1, 1]} : vector<16x1152xf32> to vector<16x16xf32>
    %204 = vector.extract_strided_slice %190 {offsets = [0, 416], sizes = [16, 16], strides = [1, 1]} : vector<16x1152xf32> to vector<16x16xf32>
    %205 = vector.extract_strided_slice %190 {offsets = [0, 448], sizes = [16, 16], strides = [1, 1]} : vector<16x1152xf32> to vector<16x16xf32>
    %206 = vector.extract_strided_slice %190 {offsets = [0, 480], sizes = [16, 16], strides = [1, 1]} : vector<16x1152xf32> to vector<16x16xf32>
    %207 = vector.extract_strided_slice %190 {offsets = [0, 512], sizes = [16, 16], strides = [1, 1]} : vector<16x1152xf32> to vector<16x16xf32>
    %208 = vector.extract_strided_slice %190 {offsets = [0, 544], sizes = [16, 16], strides = [1, 1]} : vector<16x1152xf32> to vector<16x16xf32>
    %209 = vector.extract_strided_slice %190 {offsets = [0, 576], sizes = [16, 16], strides = [1, 1]} : vector<16x1152xf32> to vector<16x16xf32>
    %210 = vector.extract_strided_slice %190 {offsets = [0, 608], sizes = [16, 16], strides = [1, 1]} : vector<16x1152xf32> to vector<16x16xf32>
    %211 = vector.extract_strided_slice %190 {offsets = [0, 640], sizes = [16, 16], strides = [1, 1]} : vector<16x1152xf32> to vector<16x16xf32>
    %212 = vector.extract_strided_slice %190 {offsets = [0, 672], sizes = [16, 16], strides = [1, 1]} : vector<16x1152xf32> to vector<16x16xf32>
    %213 = vector.extract_strided_slice %190 {offsets = [0, 704], sizes = [16, 16], strides = [1, 1]} : vector<16x1152xf32> to vector<16x16xf32>
    %214 = vector.extract_strided_slice %190 {offsets = [0, 736], sizes = [16, 16], strides = [1, 1]} : vector<16x1152xf32> to vector<16x16xf32>
    %215 = vector.extract_strided_slice %190 {offsets = [0, 768], sizes = [16, 16], strides = [1, 1]} : vector<16x1152xf32> to vector<16x16xf32>
    %216 = vector.extract_strided_slice %190 {offsets = [0, 800], sizes = [16, 16], strides = [1, 1]} : vector<16x1152xf32> to vector<16x16xf32>
    %217 = vector.extract_strided_slice %190 {offsets = [0, 832], sizes = [16, 16], strides = [1, 1]} : vector<16x1152xf32> to vector<16x16xf32>
    %218 = vector.extract_strided_slice %190 {offsets = [0, 864], sizes = [16, 16], strides = [1, 1]} : vector<16x1152xf32> to vector<16x16xf32>
    %219 = vector.extract_strided_slice %190 {offsets = [0, 896], sizes = [16, 16], strides = [1, 1]} : vector<16x1152xf32> to vector<16x16xf32>
    %220 = vector.extract_strided_slice %190 {offsets = [0, 928], sizes = [16, 16], strides = [1, 1]} : vector<16x1152xf32> to vector<16x16xf32>
    %221 = vector.extract_strided_slice %190 {offsets = [0, 960], sizes = [16, 16], strides = [1, 1]} : vector<16x1152xf32> to vector<16x16xf32>
    %222 = vector.extract_strided_slice %190 {offsets = [0, 992], sizes = [16, 16], strides = [1, 1]} : vector<16x1152xf32> to vector<16x16xf32>
    %223 = vector.extract_strided_slice %190 {offsets = [0, 1024], sizes = [16, 16], strides = [1, 1]} : vector<16x1152xf32> to vector<16x16xf32>
    %224 = vector.extract_strided_slice %190 {offsets = [0, 1056], sizes = [16, 16], strides = [1, 1]} : vector<16x1152xf32> to vector<16x16xf32>
    %225 = vector.extract_strided_slice %190 {offsets = [0, 1088], sizes = [16, 16], strides = [1, 1]} : vector<16x1152xf32> to vector<16x16xf32>
    %226 = vector.extract_strided_slice %190 {offsets = [0, 1120], sizes = [16, 16], strides = [1, 1]} : vector<16x1152xf32> to vector<16x16xf32>
    %227 = tpu.concatenate %191, %192, %193, %194, %195, %196, %197, %198, %199, %200, %201, %202, %203, %204, %205, %206 in 1 : vector<16x16xf32>, vector<16x16xf32>, vector<16x16xf32>, vector<16x16xf32>, vector<16x16xf32>, vector<16x16xf32>, vector<16x16xf32>, vector<16x16xf32>, vector<16x16xf32>, vector<16x16xf32>, vector<16x16xf32>, vector<16x16xf32>, vector<16x16xf32>, vector<16x16xf32>, vector<16x16xf32>, vector<16x16xf32> -> vector<16x256xf32>
    %228 = tpu.concatenate %207, %208, %209, %210, %211, %212, %213, %214, %215, %216, %217, %218, %219, %220, %221, %222 in 1 : vector<16x16xf32>, vector<16x16xf32>, vector<16x16xf32>, vector<16x16xf32>, vector<16x16xf32>, vector<16x16xf32>, vector<16x16xf32>, vector<16x16xf32>, vector<16x16xf32>, vector<16x16xf32>, vector<16x16xf32>, vector<16x16xf32>, vector<16x16xf32>, vector<16x16xf32>, vector<16x16xf32>, vector<16x16xf32> -> vector<16x256xf32>
    %229 = tpu.concatenate %223, %224, %225, %226 in 1 : vector<16x16xf32>, vector<16x16xf32>, vector<16x16xf32>, vector<16x16xf32> -> vector<16x64xf32>
    %230 = tpu.concatenate %227, %228, %229 in 1 : vector<16x256xf32>, vector<16x256xf32>, vector<16x64xf32> -> vector<16x576xf32>
    %c0_121 = arith.constant 0 : index
    %c0_122 = arith.constant 0 : index
    %c0_123 = arith.constant 0 : index
    %231 = vector.load %arg13[%c0_121, %c0_122, %c0_123] : memref<1x16x592xf32, #tpu.memory_space<vmem>>, vector<1x16x576xf32>
    %232 = vector.shape_cast %231 : vector<1x16x576xf32> to vector<16x576xf32>
    %233 = vector.shape_cast %230 : vector<16x576xf32> to vector<1x16x576xf32>
    tpu.vector_store %arg13[%c0_121, %c0_122, %c0_123], %233 {strides = array<i32>} : memref<1x16x592xf32, #tpu.memory_space<vmem>>, vector<1x16x576xf32>,
    %cst_124 = arith.constant 0.000000e+00 : f32
    %234 = vector.broadcast %cst_124 : f32 to vector<16x16xf32>
    %c0_125 = arith.constant 0 : index
    %c0_126 = arith.constant 0 : index
    %c576 = arith.constant 576 : index
    %235 = vector.load %arg13[%c0_125, %c0_126, %c576] : memref<1x16x592xf32, #tpu.memory_space<vmem>>, vector<1x16x16xf32>
    %236 = vector.shape_cast %235 : vector<1x16x16xf32> to vector<16x16xf32>
    %237 = vector.shape_cast %234 : vector<16x16xf32> to vector<1x16x16xf32>
    tpu.vector_store %arg13[%c0_125, %c0_126, %c576], %237 {strides = array<i32>} : memref<1x16x592xf32, #tpu.memory_space<vmem>>, vector<1x16x16xf32>,
    %c0_127 = arith.constant 0 : index
    %c0_128 = arith.constant 0 : index
    %c0_129 = arith.constant 0 : index
    %238 = vector.load %arg6[%c0_127, %c0_128, %c0_129] : memref<5x32x48xf32, #tpu.memory_space<vmem>>, vector<1x32x48xf32>
    %239 = vector.shape_cast %238 : vector<1x32x48xf32> to vector<32x48xf32>
    %c0_130 = arith.constant 0 : index
    %c0_131 = arith.constant 0 : index
    %c0_132 = arith.constant 0 : index
    %240 = vector.load %arg13[%c0_130, %c0_131, %c0_132] : memref<1x16x592xf32, #tpu.memory_space<vmem>>, vector<1x16x512xf32>
    %241 = vector.shape_cast %240 : vector<1x16x512xf32> to vector<16x512xf32>
    %c0_133 = arith.constant 0 : index
    %c0_134 = arith.constant 0 : index
    %c1_135 = arith.constant 1 : index
    %242 = vector.load %arg13[%c0_133, %c0_134, %c1_135] : memref<1x16x592xf32, #tpu.memory_space<vmem>>, vector<1x16x512xf32>
    %243 = vector.shape_cast %242 : vector<1x16x512xf32> to vector<16x512xf32>
    %c0_136 = arith.constant 0 : index
    %c0_137 = arith.constant 0 : index
    %c2_138 = arith.constant 2 : index
    %244 = vector.load %arg13[%c0_136, %c0_137, %c2_138] : memref<1x16x592xf32, #tpu.memory_space<vmem>>, vector<1x16x512xf32>
    %245 = vector.shape_cast %244 : vector<1x16x512xf32> to vector<16x512xf32>
    %246 = tpu.concatenate %241, %243, %245 in 0 : vector<16x512xf32>, vector<16x512xf32>, vector<16x512xf32> -> vector<48x512xf32>
    %cst_139 = arith.constant dense<0.000000e+00> : vector<32x512xf32>
    %247 = tpu.matmul %239, %246, %cst_139 {dimension_numbers = #tpu.dot_dimension_numbers<[1], [0], [0], [1], [0, 0, 1, 1], [], []>} : vector<32x48xf32>, vector<48x512xf32>, vector<32x512xf32> -> vector<32x512xf32>
    %c1_140 = arith.constant 1 : index
    %c0_141 = arith.constant 0 : index
    %c0_142 = arith.constant 0 : index
    %248 = vector.load %arg6[%c1_140, %c0_141, %c0_142] : memref<5x32x48xf32, #tpu.memory_space<vmem>>, vector<1x32x48xf32>
    %249 = vector.shape_cast %248 : vector<1x32x48xf32> to vector<32x48xf32>
    %c0_143 = arith.constant 0 : index
    %c0_144 = arith.constant 0 : index
    %c16_145 = arith.constant 16 : index
    %250 = vector.load %arg13[%c0_143, %c0_144, %c16_145] : memref<1x16x592xf32, #tpu.memory_space<vmem>>, vector<1x16x512xf32>
    %251 = vector.shape_cast %250 : vector<1x16x512xf32> to vector<16x512xf32>
    %c0_146 = arith.constant 0 : index
    %c0_147 = arith.constant 0 : index
    %c17_148 = arith.constant 17 : index
    %252 = vector.load %arg13[%c0_146, %c0_147, %c17_148] : memref<1x16x592xf32, #tpu.memory_space<vmem>>, vector<1x16x512xf32>
    %253 = vector.shape_cast %252 : vector<1x16x512xf32> to vector<16x512xf32>
    %c0_149 = arith.constant 0 : index
    %c0_150 = arith.constant 0 : index
    %c18_151 = arith.constant 18 : index
    %254 = vector.load %arg13[%c0_149, %c0_150, %c18_151] : memref<1x16x592xf32, #tpu.memory_space<vmem>>, vector<1x16x512xf32>
    %255 = vector.shape_cast %254 : vector<1x16x512xf32> to vector<16x512xf32>
    %256 = tpu.concatenate %251, %253, %255 in 0 : vector<16x512xf32>, vector<16x512xf32>, vector<16x512xf32> -> vector<48x512xf32>
    %cst_152 = arith.constant dense<0.000000e+00> : vector<32x512xf32>
    %257 = tpu.matmul %249, %256, %cst_152 {dimension_numbers = #tpu.dot_dimension_numbers<[1], [0], [0], [1], [0, 0, 1, 1], [], []>} : vector<32x48xf32>, vector<48x512xf32>, vector<32x512xf32> -> vector<32x512xf32>
    %258 = arith.addf %247, %257 : vector<32x512xf32>
    %c2_153 = arith.constant 2 : index
    %c0_154 = arith.constant 0 : index
    %c0_155 = arith.constant 0 : index
    %259 = vector.load %arg6[%c2_153, %c0_154, %c0_155] : memref<5x32x48xf32, #tpu.memory_space<vmem>>, vector<1x32x48xf32>
    %260 = vector.shape_cast %259 : vector<1x32x48xf32> to vector<32x48xf32>
    %c0_156 = arith.constant 0 : index
    %c0_157 = arith.constant 0 : index
    %c32_158 = arith.constant 32 : index
    %261 = vector.load %arg13[%c0_156, %c0_157, %c32_158] : memref<1x16x592xf32, #tpu.memory_space<vmem>>, vector<1x16x512xf32>
    %262 = vector.shape_cast %261 : vector<1x16x512xf32> to vector<16x512xf32>
    %c0_159 = arith.constant 0 : index
    %c0_160 = arith.constant 0 : index
    %c33_161 = arith.constant 33 : index
    %263 = vector.load %arg13[%c0_159, %c0_160, %c33_161] : memref<1x16x592xf32, #tpu.memory_space<vmem>>, vector<1x16x512xf32>
    %264 = vector.shape_cast %263 : vector<1x16x512xf32> to vector<16x512xf32>
    %c0_162 = arith.constant 0 : index
    %c0_163 = arith.constant 0 : index
    %c34_164 = arith.constant 34 : index
    %265 = vector.load %arg13[%c0_162, %c0_163, %c34_164] : memref<1x16x592xf32, #tpu.memory_space<vmem>>, vector<1x16x512xf32>
    %266 = vector.shape_cast %265 : vector<1x16x512xf32> to vector<16x512xf32>
    %267 = tpu.concatenate %262, %264, %266 in 0 : vector<16x512xf32>, vector<16x512xf32>, vector<16x512xf32> -> vector<48x512xf32>
    %cst_165 = arith.constant dense<0.000000e+00> : vector<32x512xf32>
    %268 = tpu.matmul %260, %267, %cst_165 {dimension_numbers = #tpu.dot_dimension_numbers<[1], [0], [0], [1], [0, 0, 1, 1], [], []>} : vector<32x48xf32>, vector<48x512xf32>, vector<32x512xf32> -> vector<32x512xf32>
    %269 = arith.addf %258, %268 : vector<32x512xf32>
    %c3_166 = arith.constant 3 : index
    %c0_167 = arith.constant 0 : index
    %c0_168 = arith.constant 0 : index
    %270 = vector.load %arg6[%c3_166, %c0_167, %c0_168] : memref<5x32x48xf32, #tpu.memory_space<vmem>>, vector<1x32x48xf32>
    %271 = vector.shape_cast %270 : vector<1x32x48xf32> to vector<32x48xf32>
    %c0_169 = arith.constant 0 : index
    %c0_170 = arith.constant 0 : index
    %c48_171 = arith.constant 48 : index
    %272 = vector.load %arg13[%c0_169, %c0_170, %c48_171] : memref<1x16x592xf32, #tpu.memory_space<vmem>>, vector<1x16x512xf32>
    %273 = vector.shape_cast %272 : vector<1x16x512xf32> to vector<16x512xf32>
    %c0_172 = arith.constant 0 : index
    %c0_173 = arith.constant 0 : index
    %c49_174 = arith.constant 49 : index
    %274 = vector.load %arg13[%c0_172, %c0_173, %c49_174] : memref<1x16x592xf32, #tpu.memory_space<vmem>>, vector<1x16x512xf32>
    %275 = vector.shape_cast %274 : vector<1x16x512xf32> to vector<16x512xf32>
    %c0_175 = arith.constant 0 : index
    %c0_176 = arith.constant 0 : index
    %c50_177 = arith.constant 50 : index
    %276 = vector.load %arg13[%c0_175, %c0_176, %c50_177] : memref<1x16x592xf32, #tpu.memory_space<vmem>>, vector<1x16x512xf32>
    %277 = vector.shape_cast %276 : vector<1x16x512xf32> to vector<16x512xf32>
    %278 = tpu.concatenate %273, %275, %277 in 0 : vector<16x512xf32>, vector<16x512xf32>, vector<16x512xf32> -> vector<48x512xf32>
    %cst_178 = arith.constant dense<0.000000e+00> : vector<32x512xf32>
    %279 = tpu.matmul %271, %278, %cst_178 {dimension_numbers = #tpu.dot_dimension_numbers<[1], [0], [0], [1], [0, 0, 1, 1], [], []>} : vector<32x48xf32>, vector<48x512xf32>, vector<32x512xf32> -> vector<32x512xf32>
    %280 = arith.addf %269, %279 : vector<32x512xf32>
    %c4_179 = arith.constant 4 : index
    %c0_180 = arith.constant 0 : index
    %c0_181 = arith.constant 0 : index
    %281 = vector.load %arg6[%c4_179, %c0_180, %c0_181] : memref<5x32x48xf32, #tpu.memory_space<vmem>>, vector<1x32x48xf32>
    %282 = vector.shape_cast %281 : vector<1x32x48xf32> to vector<32x48xf32>
    %c0_182 = arith.constant 0 : index
    %c0_183 = arith.constant 0 : index
    %c64_184 = arith.constant 64 : index
    %283 = vector.load %arg13[%c0_182, %c0_183, %c64_184] : memref<1x16x592xf32, #tpu.memory_space<vmem>>, vector<1x16x512xf32>
    %284 = vector.shape_cast %283 : vector<1x16x512xf32> to vector<16x512xf32>
    %c0_185 = arith.constant 0 : index
    %c0_186 = arith.constant 0 : index
    %c65_187 = arith.constant 65 : index
    %285 = vector.load %arg13[%c0_185, %c0_186, %c65_187] : memref<1x16x592xf32, #tpu.memory_space<vmem>>, vector<1x16x512xf32>
    %286 = vector.shape_cast %285 : vector<1x16x512xf32> to vector<16x512xf32>
    %c0_188 = arith.constant 0 : index
    %c0_189 = arith.constant 0 : index
    %c66_190 = arith.constant 66 : index
    %287 = vector.load %arg13[%c0_188, %c0_189, %c66_190] : memref<1x16x592xf32, #tpu.memory_space<vmem>>, vector<1x16x512xf32>
    %288 = vector.shape_cast %287 : vector<1x16x512xf32> to vector<16x512xf32>
    %289 = tpu.concatenate %284, %286, %288 in 0 : vector<16x512xf32>, vector<16x512xf32>, vector<16x512xf32> -> vector<48x512xf32>
    %cst_191 = arith.constant dense<0.000000e+00> : vector<32x512xf32>
    %290 = tpu.matmul %282, %289, %cst_191 {dimension_numbers = #tpu.dot_dimension_numbers<[1], [0], [0], [1], [0, 0, 1, 1], [], []>} : vector<32x48xf32>, vector<48x512xf32>, vector<32x512xf32> -> vector<32x512xf32>
    %291 = arith.addf %280, %290 : vector<32x512xf32>
    %c0_192 = arith.constant 0 : index
    %c0_193 = arith.constant 0 : index
    %292 = vector.load %arg7[%c0_192, %c0_193] : memref<32x1xf32, #tpu.memory_space<vmem>>, vector<32x1xf32>
    %293 = vector.broadcast %292 : vector<32x1xf32> to vector<32x512xf32>
    %294 = arith.addf %291, %293 : vector<32x512xf32>
    %cst_194 = arith.constant 0.000000e+00 : f32
    %295 = vector.broadcast %cst_194 : f32 to vector<32x512xf32>
    %296 = arith.cmpf oge, %294, %295 : vector<32x512xf32>
    %cst_195 = arith.constant 2.000000e-01 : f32
    %297 = vector.broadcast %cst_195 : f32 to vector<32x512xf32>
    %298 = arith.mulf %297, %294 : vector<32x512xf32>
    %299 = arith.select %296, %294, %298 : vector<32x512xi1>, vector<32x512xf32>
    %300 = vector.extract_strided_slice %299 {offsets = [0, 0], sizes = [32, 16], strides = [1, 1]} : vector<32x512xf32> to vector<32x16xf32>
    %301 = vector.extract_strided_slice %299 {offsets = [0, 32], sizes = [32, 16], strides = [1, 1]} : vector<32x512xf32> to vector<32x16xf32>
    %302 = vector.extract_strided_slice %299 {offsets = [0, 64], sizes = [32, 16], strides = [1, 1]} : vector<32x512xf32> to vector<32x16xf32>
    %303 = vector.extract_strided_slice %299 {offsets = [0, 96], sizes = [32, 16], strides = [1, 1]} : vector<32x512xf32> to vector<32x16xf32>
    %304 = vector.extract_strided_slice %299 {offsets = [0, 128], sizes = [32, 16], strides = [1, 1]} : vector<32x512xf32> to vector<32x16xf32>
    %305 = vector.extract_strided_slice %299 {offsets = [0, 160], sizes = [32, 16], strides = [1, 1]} : vector<32x512xf32> to vector<32x16xf32>
    %306 = vector.extract_strided_slice %299 {offsets = [0, 192], sizes = [32, 16], strides = [1, 1]} : vector<32x512xf32> to vector<32x16xf32>
    %307 = vector.extract_strided_slice %299 {offsets = [0, 224], sizes = [32, 16], strides = [1, 1]} : vector<32x512xf32> to vector<32x16xf32>
    %308 = vector.extract_strided_slice %299 {offsets = [0, 256], sizes = [32, 16], strides = [1, 1]} : vector<32x512xf32> to vector<32x16xf32>
    %309 = vector.extract_strided_slice %299 {offsets = [0, 288], sizes = [32, 16], strides = [1, 1]} : vector<32x512xf32> to vector<32x16xf32>
    %310 = vector.extract_strided_slice %299 {offsets = [0, 320], sizes = [32, 16], strides = [1, 1]} : vector<32x512xf32> to vector<32x16xf32>
    %311 = vector.extract_strided_slice %299 {offsets = [0, 352], sizes = [32, 16], strides = [1, 1]} : vector<32x512xf32> to vector<32x16xf32>
    %312 = vector.extract_strided_slice %299 {offsets = [0, 384], sizes = [32, 16], strides = [1, 1]} : vector<32x512xf32> to vector<32x16xf32>
    %313 = vector.extract_strided_slice %299 {offsets = [0, 416], sizes = [32, 16], strides = [1, 1]} : vector<32x512xf32> to vector<32x16xf32>
    %314 = vector.extract_strided_slice %299 {offsets = [0, 448], sizes = [32, 16], strides = [1, 1]} : vector<32x512xf32> to vector<32x16xf32>
    %315 = vector.extract_strided_slice %299 {offsets = [0, 480], sizes = [32, 16], strides = [1, 1]} : vector<32x512xf32> to vector<32x16xf32>
    %316 = tpu.concatenate %300, %301, %302, %303, %304, %305, %306, %307, %308, %309, %310, %311, %312, %313, %314, %315 in 1 : vector<32x16xf32>, vector<32x16xf32>, vector<32x16xf32>, vector<32x16xf32>, vector<32x16xf32>, vector<32x16xf32>, vector<32x16xf32>, vector<32x16xf32>, vector<32x16xf32>, vector<32x16xf32>, vector<32x16xf32>, vector<32x16xf32>, vector<32x16xf32>, vector<32x16xf32>, vector<32x16xf32>, vector<32x16xf32> -> vector<32x256xf32>
    %c0_196 = arith.constant 0 : index
    %c0_197 = arith.constant 0 : index
    %c0_198 = arith.constant 0 : index
    %317 = vector.load %arg14[%c0_196, %c0_197, %c0_198] : memref<1x32x272xf32, #tpu.memory_space<vmem>>, vector<1x32x256xf32>
    %318 = vector.shape_cast %317 : vector<1x32x256xf32> to vector<32x256xf32>
    %319 = vector.shape_cast %316 : vector<32x256xf32> to vector<1x32x256xf32>
    tpu.vector_store %arg14[%c0_196, %c0_197, %c0_198], %319 {strides = array<i32>} : memref<1x32x272xf32, #tpu.memory_space<vmem>>, vector<1x32x256xf32>,
    %cst_199 = arith.constant 0.000000e+00 : f32
    %320 = vector.broadcast %cst_199 : f32 to vector<32x16xf32>
    %c0_200 = arith.constant 0 : index
    %c0_201 = arith.constant 0 : index
    %c256 = arith.constant 256 : index
    %321 = vector.load %arg14[%c0_200, %c0_201, %c256] : memref<1x32x272xf32, #tpu.memory_space<vmem>>, vector<1x32x16xf32>
    %322 = vector.shape_cast %321 : vector<1x32x16xf32> to vector<32x16xf32>
    %323 = vector.shape_cast %320 : vector<32x16xf32> to vector<1x32x16xf32>
    tpu.vector_store %arg14[%c0_200, %c0_201, %c256], %323 {strides = array<i32>} : memref<1x32x272xf32, #tpu.memory_space<vmem>>, vector<1x32x16xf32>,
    %c0_202 = arith.constant 0 : index
    %c0_203 = arith.constant 0 : index
    %c0_204 = arith.constant 0 : index
    %324 = vector.load %arg8[%c0_202, %c0_203, %c0_204] : memref<5x16x96xf32, #tpu.memory_space<vmem>>, vector<1x16x96xf32>
    %325 = vector.shape_cast %324 : vector<1x16x96xf32> to vector<16x96xf32>
    %c0_205 = arith.constant 0 : index
    %c0_206 = arith.constant 0 : index
    %c0_207 = arith.constant 0 : index
    %326 = vector.load %arg14[%c0_205, %c0_206, %c0_207] : memref<1x32x272xf32, #tpu.memory_space<vmem>>, vector<1x32x192xf32>
    %327 = vector.shape_cast %326 : vector<1x32x192xf32> to vector<32x192xf32>
    %c0_208 = arith.constant 0 : index
    %c0_209 = arith.constant 0 : index
    %c1_210 = arith.constant 1 : index
    %328 = vector.load %arg14[%c0_208, %c0_209, %c1_210] : memref<1x32x272xf32, #tpu.memory_space<vmem>>, vector<1x32x192xf32>
    %329 = vector.shape_cast %328 : vector<1x32x192xf32> to vector<32x192xf32>
    %c0_211 = arith.constant 0 : index
    %c0_212 = arith.constant 0 : index
    %c2_213 = arith.constant 2 : index
    %330 = vector.load %arg14[%c0_211, %c0_212, %c2_213] : memref<1x32x272xf32, #tpu.memory_space<vmem>>, vector<1x32x192xf32>
    %331 = vector.shape_cast %330 : vector<1x32x192xf32> to vector<32x192xf32>
    %332 = tpu.concatenate %327, %329, %331 in 0 : vector<32x192xf32>, vector<32x192xf32>, vector<32x192xf32> -> vector<96x192xf32>
    %cst_214 = arith.constant dense<0.000000e+00> : vector<16x192xf32>
    %333 = tpu.matmul %325, %332, %cst_214 {dimension_numbers = #tpu.dot_dimension_numbers<[1], [0], [0], [1], [0, 0, 1, 1], [], []>} : vector<16x96xf32>, vector<96x192xf32>, vector<16x192xf32> -> vector<16x192xf32>
    %c1_215 = arith.constant 1 : index
    %c0_216 = arith.constant 0 : index
    %c0_217 = arith.constant 0 : index
    %334 = vector.load %arg8[%c1_215, %c0_216, %c0_217] : memref<5x16x96xf32, #tpu.memory_space<vmem>>, vector<1x16x96xf32>
    %335 = vector.shape_cast %334 : vector<1x16x96xf32> to vector<16x96xf32>
    %c0_218 = arith.constant 0 : index
    %c0_219 = arith.constant 0 : index
    %c16_220 = arith.constant 16 : index
    %336 = vector.load %arg14[%c0_218, %c0_219, %c16_220] : memref<1x32x272xf32, #tpu.memory_space<vmem>>, vector<1x32x192xf32>
    %337 = vector.shape_cast %336 : vector<1x32x192xf32> to vector<32x192xf32>
    %c0_221 = arith.constant 0 : index
    %c0_222 = arith.constant 0 : index
    %c17_223 = arith.constant 17 : index
    %338 = vector.load %arg14[%c0_221, %c0_222, %c17_223] : memref<1x32x272xf32, #tpu.memory_space<vmem>>, vector<1x32x192xf32>
    %339 = vector.shape_cast %338 : vector<1x32x192xf32> to vector<32x192xf32>
    %c0_224 = arith.constant 0 : index
    %c0_225 = arith.constant 0 : index
    %c18_226 = arith.constant 18 : index
    %340 = vector.load %arg14[%c0_224, %c0_225, %c18_226] : memref<1x32x272xf32, #tpu.memory_space<vmem>>, vector<1x32x192xf32>
    %341 = vector.shape_cast %340 : vector<1x32x192xf32> to vector<32x192xf32>
    %342 = tpu.concatenate %337, %339, %341 in 0 : vector<32x192xf32>, vector<32x192xf32>, vector<32x192xf32> -> vector<96x192xf32>
    %cst_227 = arith.constant dense<0.000000e+00> : vector<16x192xf32>
    %343 = tpu.matmul %335, %342, %cst_227 {dimension_numbers = #tpu.dot_dimension_numbers<[1], [0], [0], [1], [0, 0, 1, 1], [], []>} : vector<16x96xf32>, vector<96x192xf32>, vector<16x192xf32> -> vector<16x192xf32>
    %344 = arith.addf %333, %343 : vector<16x192xf32>
    %c2_228 = arith.constant 2 : index
    %c0_229 = arith.constant 0 : index
    %c0_230 = arith.constant 0 : index
    %345 = vector.load %arg8[%c2_228, %c0_229, %c0_230] : memref<5x16x96xf32, #tpu.memory_space<vmem>>, vector<1x16x96xf32>
    %346 = vector.shape_cast %345 : vector<1x16x96xf32> to vector<16x96xf32>
    %c0_231 = arith.constant 0 : index
    %c0_232 = arith.constant 0 : index
    %c32_233 = arith.constant 32 : index
    %347 = vector.load %arg14[%c0_231, %c0_232, %c32_233] : memref<1x32x272xf32, #tpu.memory_space<vmem>>, vector<1x32x192xf32>
    %348 = vector.shape_cast %347 : vector<1x32x192xf32> to vector<32x192xf32>
    %c0_234 = arith.constant 0 : index
    %c0_235 = arith.constant 0 : index
    %c33_236 = arith.constant 33 : index
    %349 = vector.load %arg14[%c0_234, %c0_235, %c33_236] : memref<1x32x272xf32, #tpu.memory_space<vmem>>, vector<1x32x192xf32>
    %350 = vector.shape_cast %349 : vector<1x32x192xf32> to vector<32x192xf32>
    %c0_237 = arith.constant 0 : index
    %c0_238 = arith.constant 0 : index
    %c34_239 = arith.constant 34 : index
    %351 = vector.load %arg14[%c0_237, %c0_238, %c34_239] : memref<1x32x272xf32, #tpu.memory_space<vmem>>, vector<1x32x192xf32>
    %352 = vector.shape_cast %351 : vector<1x32x192xf32> to vector<32x192xf32>
    %353 = tpu.concatenate %348, %350, %352 in 0 : vector<32x192xf32>, vector<32x192xf32>, vector<32x192xf32> -> vector<96x192xf32>
    %cst_240 = arith.constant dense<0.000000e+00> : vector<16x192xf32>
    %354 = tpu.matmul %346, %353, %cst_240 {dimension_numbers = #tpu.dot_dimension_numbers<[1], [0], [0], [1], [0, 0, 1, 1], [], []>} : vector<16x96xf32>, vector<96x192xf32>, vector<16x192xf32> -> vector<16x192xf32>
    %355 = arith.addf %344, %354 : vector<16x192xf32>
    %c3_241 = arith.constant 3 : index
    %c0_242 = arith.constant 0 : index
    %c0_243 = arith.constant 0 : index
    %356 = vector.load %arg8[%c3_241, %c0_242, %c0_243] : memref<5x16x96xf32, #tpu.memory_space<vmem>>, vector<1x16x96xf32>
    %357 = vector.shape_cast %356 : vector<1x16x96xf32> to vector<16x96xf32>
    %c0_244 = arith.constant 0 : index
    %c0_245 = arith.constant 0 : index
    %c48_246 = arith.constant 48 : index
    %358 = vector.load %arg14[%c0_244, %c0_245, %c48_246] : memref<1x32x272xf32, #tpu.memory_space<vmem>>, vector<1x32x192xf32>
    %359 = vector.shape_cast %358 : vector<1x32x192xf32> to vector<32x192xf32>
    %c0_247 = arith.constant 0 : index
    %c0_248 = arith.constant 0 : index
    %c49_249 = arith.constant 49 : index
    %360 = vector.load %arg14[%c0_247, %c0_248, %c49_249] : memref<1x32x272xf32, #tpu.memory_space<vmem>>, vector<1x32x192xf32>
    %361 = vector.shape_cast %360 : vector<1x32x192xf32> to vector<32x192xf32>
    %c0_250 = arith.constant 0 : index
    %c0_251 = arith.constant 0 : index
    %c50_252 = arith.constant 50 : index
    %362 = vector.load %arg14[%c0_250, %c0_251, %c50_252] : memref<1x32x272xf32, #tpu.memory_space<vmem>>, vector<1x32x192xf32>
    %363 = vector.shape_cast %362 : vector<1x32x192xf32> to vector<32x192xf32>
    %364 = tpu.concatenate %359, %361, %363 in 0 : vector<32x192xf32>, vector<32x192xf32>, vector<32x192xf32> -> vector<96x192xf32>
    %cst_253 = arith.constant dense<0.000000e+00> : vector<16x192xf32>
    %365 = tpu.matmul %357, %364, %cst_253 {dimension_numbers = #tpu.dot_dimension_numbers<[1], [0], [0], [1], [0, 0, 1, 1], [], []>} : vector<16x96xf32>, vector<96x192xf32>, vector<16x192xf32> -> vector<16x192xf32>
    %366 = arith.addf %355, %365 : vector<16x192xf32>
    %c4_254 = arith.constant 4 : index
    %c0_255 = arith.constant 0 : index
    %c0_256 = arith.constant 0 : index
    %367 = vector.load %arg8[%c4_254, %c0_255, %c0_256] : memref<5x16x96xf32, #tpu.memory_space<vmem>>, vector<1x16x96xf32>
    %368 = vector.shape_cast %367 : vector<1x16x96xf32> to vector<16x96xf32>
    %c0_257 = arith.constant 0 : index
    %c0_258 = arith.constant 0 : index
    %c64_259 = arith.constant 64 : index
    %369 = vector.load %arg14[%c0_257, %c0_258, %c64_259] : memref<1x32x272xf32, #tpu.memory_space<vmem>>, vector<1x32x192xf32>
    %370 = vector.shape_cast %369 : vector<1x32x192xf32> to vector<32x192xf32>
    %c0_260 = arith.constant 0 : index
    %c0_261 = arith.constant 0 : index
    %c65_262 = arith.constant 65 : index
    %371 = vector.load %arg14[%c0_260, %c0_261, %c65_262] : memref<1x32x272xf32, #tpu.memory_space<vmem>>, vector<1x32x192xf32>
    %372 = vector.shape_cast %371 : vector<1x32x192xf32> to vector<32x192xf32>
    %c0_263 = arith.constant 0 : index
    %c0_264 = arith.constant 0 : index
    %c66_265 = arith.constant 66 : index
    %373 = vector.load %arg14[%c0_263, %c0_264, %c66_265] : memref<1x32x272xf32, #tpu.memory_space<vmem>>, vector<1x32x192xf32>
    %374 = vector.shape_cast %373 : vector<1x32x192xf32> to vector<32x192xf32>
    %375 = tpu.concatenate %370, %372, %374 in 0 : vector<32x192xf32>, vector<32x192xf32>, vector<32x192xf32> -> vector<96x192xf32>
    %cst_266 = arith.constant dense<0.000000e+00> : vector<16x192xf32>
    %376 = tpu.matmul %368, %375, %cst_266 {dimension_numbers = #tpu.dot_dimension_numbers<[1], [0], [0], [1], [0, 0, 1, 1], [], []>} : vector<16x96xf32>, vector<96x192xf32>, vector<16x192xf32> -> vector<16x192xf32>
    %377 = arith.addf %366, %376 : vector<16x192xf32>
    %c0_267 = arith.constant 0 : index
    %c0_268 = arith.constant 0 : index
    %378 = vector.load %arg9[%c0_267, %c0_268] : memref<16x1xf32, #tpu.memory_space<vmem>>, vector<16x1xf32>
    %379 = vector.broadcast %378 : vector<16x1xf32> to vector<16x192xf32>
    %380 = arith.addf %377, %379 : vector<16x192xf32>
    %cst_269 = arith.constant 0.000000e+00 : f32
    %381 = vector.broadcast %cst_269 : f32 to vector<16x192xf32>
    %382 = arith.cmpf oge, %380, %381 : vector<16x192xf32>
    %cst_270 = arith.constant 2.000000e-01 : f32
    %383 = vector.broadcast %cst_270 : f32 to vector<16x192xf32>
    %384 = arith.mulf %383, %380 : vector<16x192xf32>
    %385 = arith.select %382, %380, %384 : vector<16x192xi1>, vector<16x192xf32>
    %386 = vector.extract_strided_slice %385 {offsets = [0, 0], sizes = [16, 16], strides = [1, 1]} : vector<16x192xf32> to vector<16x16xf32>
    %387 = vector.extract_strided_slice %385 {offsets = [0, 32], sizes = [16, 16], strides = [1, 1]} : vector<16x192xf32> to vector<16x16xf32>
    %388 = vector.extract_strided_slice %385 {offsets = [0, 64], sizes = [16, 16], strides = [1, 1]} : vector<16x192xf32> to vector<16x16xf32>
    %389 = vector.extract_strided_slice %385 {offsets = [0, 96], sizes = [16, 16], strides = [1, 1]} : vector<16x192xf32> to vector<16x16xf32>
    %390 = vector.extract_strided_slice %385 {offsets = [0, 128], sizes = [16, 16], strides = [1, 1]} : vector<16x192xf32> to vector<16x16xf32>
    %391 = vector.extract_strided_slice %385 {offsets = [0, 160], sizes = [16, 16], strides = [1, 1]} : vector<16x192xf32> to vector<16x16xf32>
    %392 = tpu.concatenate %386, %387, %388, %389, %390, %391 in 1 : vector<16x16xf32>, vector<16x16xf32>, vector<16x16xf32>, vector<16x16xf32>, vector<16x16xf32>, vector<16x16xf32> -> vector<16x96xf32>
    %c0_271 = arith.constant 0 : index
    %c0_272 = arith.constant 0 : index
    %c0_273 = arith.constant 0 : index
    %393 = vector.load %arg15[%c0_271, %c0_272, %c0_273] : memref<1x16x112xf32, #tpu.memory_space<vmem>>, vector<1x16x96xf32>
    %394 = vector.shape_cast %393 : vector<1x16x96xf32> to vector<16x96xf32>
    %395 = vector.shape_cast %392 : vector<16x96xf32> to vector<1x16x96xf32>
    tpu.vector_store %arg15[%c0_271, %c0_272, %c0_273], %395 {strides = array<i32>} : memref<1x16x112xf32, #tpu.memory_space<vmem>>, vector<1x16x96xf32>,
    %cst_274 = arith.constant 0.000000e+00 : f32
    %396 = vector.broadcast %cst_274 : f32 to vector<16x16xf32>
    %c0_275 = arith.constant 0 : index
    %c0_276 = arith.constant 0 : index
    %c96 = arith.constant 96 : index
    %397 = vector.load %arg15[%c0_275, %c0_276, %c96] : memref<1x16x112xf32, #tpu.memory_space<vmem>>, vector<1x16x16xf32>
    %398 = vector.shape_cast %397 : vector<1x16x16xf32> to vector<16x16xf32>
    %399 = vector.shape_cast %396 : vector<16x16xf32> to vector<1x16x16xf32>
    tpu.vector_store %arg15[%c0_275, %c0_276, %c96], %399 {strides = array<i32>} : memref<1x16x112xf32, #tpu.memory_space<vmem>>, vector<1x16x16xf32>,
    %c0_277 = arith.constant 0 : index
    %c0_278 = arith.constant 0 : index
    %c0_279 = arith.constant 0 : index
    %400 = vector.load %arg10[%c0_277, %c0_278, %c0_279] : memref<5x1x48xf32, #tpu.memory_space<vmem>>, vector<1x1x48xf32>
    %401 = vector.shape_cast %400 : vector<1x1x48xf32> to vector<1x48xf32>
    %c0_280 = arith.constant 0 : index
    %c0_281 = arith.constant 0 : index
    %c0_282 = arith.constant 0 : index
    %402 = vector.load %arg15[%c0_280, %c0_281, %c0_282] : memref<1x16x112xf32, #tpu.memory_space<vmem>>, vector<1x16x32xf32>
    %403 = vector.shape_cast %402 : vector<1x16x32xf32> to vector<16x32xf32>
    %c0_283 = arith.constant 0 : index
    %c0_284 = arith.constant 0 : index
    %c1_285 = arith.constant 1 : index
    %404 = vector.load %arg15[%c0_283, %c0_284, %c1_285] : memref<1x16x112xf32, #tpu.memory_space<vmem>>, vector<1x16x32xf32>
    %405 = vector.shape_cast %404 : vector<1x16x32xf32> to vector<16x32xf32>
    %c0_286 = arith.constant 0 : index
    %c0_287 = arith.constant 0 : index
    %c2_288 = arith.constant 2 : index
    %406 = vector.load %arg15[%c0_286, %c0_287, %c2_288] : memref<1x16x112xf32, #tpu.memory_space<vmem>>, vector<1x16x32xf32>
    %407 = vector.shape_cast %406 : vector<1x16x32xf32> to vector<16x32xf32>
    %408 = tpu.concatenate %403, %405, %407 in 0 : vector<16x32xf32>, vector<16x32xf32>, vector<16x32xf32> -> vector<48x32xf32>
    %cst_289 = arith.constant dense<0.000000e+00> : vector<1x32xf32>
    %409 = tpu.matmul %401, %408, %cst_289 {dimension_numbers = #tpu.dot_dimension_numbers<[1], [0], [0], [1], [0, 0, 1, 1], [], []>} : vector<1x48xf32>, vector<48x32xf32>, vector<1x32xf32> -> vector<1x32xf32>
    %c1_290 = arith.constant 1 : index
    %c0_291 = arith.constant 0 : index
    %c0_292 = arith.constant 0 : index
    %410 = vector.load %arg10[%c1_290, %c0_291, %c0_292] : memref<5x1x48xf32, #tpu.memory_space<vmem>>, vector<1x1x48xf32>
    %411 = vector.shape_cast %410 : vector<1x1x48xf32> to vector<1x48xf32>
    %c0_293 = arith.constant 0 : index
    %c0_294 = arith.constant 0 : index
    %c16_295 = arith.constant 16 : index
    %412 = vector.load %arg15[%c0_293, %c0_294, %c16_295] : memref<1x16x112xf32, #tpu.memory_space<vmem>>, vector<1x16x32xf32>
    %413 = vector.shape_cast %412 : vector<1x16x32xf32> to vector<16x32xf32>
    %c0_296 = arith.constant 0 : index
    %c0_297 = arith.constant 0 : index
    %c17_298 = arith.constant 17 : index
    %414 = vector.load %arg15[%c0_296, %c0_297, %c17_298] : memref<1x16x112xf32, #tpu.memory_space<vmem>>, vector<1x16x32xf32>
    %415 = vector.shape_cast %414 : vector<1x16x32xf32> to vector<16x32xf32>
    %c0_299 = arith.constant 0 : index
    %c0_300 = arith.constant 0 : index
    %c18_301 = arith.constant 18 : index
    %416 = vector.load %arg15[%c0_299, %c0_300, %c18_301] : memref<1x16x112xf32, #tpu.memory_space<vmem>>, vector<1x16x32xf32>
    %417 = vector.shape_cast %416 : vector<1x16x32xf32> to vector<16x32xf32>
    %418 = tpu.concatenate %413, %415, %417 in 0 : vector<16x32xf32>, vector<16x32xf32>, vector<16x32xf32> -> vector<48x32xf32>
    %cst_302 = arith.constant dense<0.000000e+00> : vector<1x32xf32>
    %419 = tpu.matmul %411, %418, %cst_302 {dimension_numbers = #tpu.dot_dimension_numbers<[1], [0], [0], [1], [0, 0, 1, 1], [], []>} : vector<1x48xf32>, vector<48x32xf32>, vector<1x32xf32> -> vector<1x32xf32>
    %420 = arith.addf %409, %419 : vector<1x32xf32>
    %c2_303 = arith.constant 2 : index
    %c0_304 = arith.constant 0 : index
    %c0_305 = arith.constant 0 : index
    %421 = vector.load %arg10[%c2_303, %c0_304, %c0_305] : memref<5x1x48xf32, #tpu.memory_space<vmem>>, vector<1x1x48xf32>
    %422 = vector.shape_cast %421 : vector<1x1x48xf32> to vector<1x48xf32>
    %c0_306 = arith.constant 0 : index
    %c0_307 = arith.constant 0 : index
    %c32_308 = arith.constant 32 : index
    %423 = vector.load %arg15[%c0_306, %c0_307, %c32_308] : memref<1x16x112xf32, #tpu.memory_space<vmem>>, vector<1x16x32xf32>
    %424 = vector.shape_cast %423 : vector<1x16x32xf32> to vector<16x32xf32>
    %c0_309 = arith.constant 0 : index
    %c0_310 = arith.constant 0 : index
    %c33_311 = arith.constant 33 : index
    %425 = vector.load %arg15[%c0_309, %c0_310, %c33_311] : memref<1x16x112xf32, #tpu.memory_space<vmem>>, vector<1x16x32xf32>
    %426 = vector.shape_cast %425 : vector<1x16x32xf32> to vector<16x32xf32>
    %c0_312 = arith.constant 0 : index
    %c0_313 = arith.constant 0 : index
    %c34_314 = arith.constant 34 : index
    %427 = vector.load %arg15[%c0_312, %c0_313, %c34_314] : memref<1x16x112xf32, #tpu.memory_space<vmem>>, vector<1x16x32xf32>
    %428 = vector.shape_cast %427 : vector<1x16x32xf32> to vector<16x32xf32>
    %429 = tpu.concatenate %424, %426, %428 in 0 : vector<16x32xf32>, vector<16x32xf32>, vector<16x32xf32> -> vector<48x32xf32>
    %cst_315 = arith.constant dense<0.000000e+00> : vector<1x32xf32>
    %430 = tpu.matmul %422, %429, %cst_315 {dimension_numbers = #tpu.dot_dimension_numbers<[1], [0], [0], [1], [0, 0, 1, 1], [], []>} : vector<1x48xf32>, vector<48x32xf32>, vector<1x32xf32> -> vector<1x32xf32>
    %431 = arith.addf %420, %430 : vector<1x32xf32>
    %c3_316 = arith.constant 3 : index
    %c0_317 = arith.constant 0 : index
    %c0_318 = arith.constant 0 : index
    %432 = vector.load %arg10[%c3_316, %c0_317, %c0_318] : memref<5x1x48xf32, #tpu.memory_space<vmem>>, vector<1x1x48xf32>
    %433 = vector.shape_cast %432 : vector<1x1x48xf32> to vector<1x48xf32>
    %c0_319 = arith.constant 0 : index
    %c0_320 = arith.constant 0 : index
    %c48_321 = arith.constant 48 : index
    %434 = vector.load %arg15[%c0_319, %c0_320, %c48_321] : memref<1x16x112xf32, #tpu.memory_space<vmem>>, vector<1x16x32xf32>
    %435 = vector.shape_cast %434 : vector<1x16x32xf32> to vector<16x32xf32>
    %c0_322 = arith.constant 0 : index
    %c0_323 = arith.constant 0 : index
    %c49_324 = arith.constant 49 : index
    %436 = vector.load %arg15[%c0_322, %c0_323, %c49_324] : memref<1x16x112xf32, #tpu.memory_space<vmem>>, vector<1x16x32xf32>
    %437 = vector.shape_cast %436 : vector<1x16x32xf32> to vector<16x32xf32>
    %c0_325 = arith.constant 0 : index
    %c0_326 = arith.constant 0 : index
    %c50_327 = arith.constant 50 : index
    %438 = vector.load %arg15[%c0_325, %c0_326, %c50_327] : memref<1x16x112xf32, #tpu.memory_space<vmem>>, vector<1x16x32xf32>
    %439 = vector.shape_cast %438 : vector<1x16x32xf32> to vector<16x32xf32>
    %440 = tpu.concatenate %435, %437, %439 in 0 : vector<16x32xf32>, vector<16x32xf32>, vector<16x32xf32> -> vector<48x32xf32>
    %cst_328 = arith.constant dense<0.000000e+00> : vector<1x32xf32>
    %441 = tpu.matmul %433, %440, %cst_328 {dimension_numbers = #tpu.dot_dimension_numbers<[1], [0], [0], [1], [0, 0, 1, 1], [], []>} : vector<1x48xf32>, vector<48x32xf32>, vector<1x32xf32> -> vector<1x32xf32>
    %442 = arith.addf %431, %441 : vector<1x32xf32>
    %c4_329 = arith.constant 4 : index
    %c0_330 = arith.constant 0 : index
    %c0_331 = arith.constant 0 : index
    %443 = vector.load %arg10[%c4_329, %c0_330, %c0_331] : memref<5x1x48xf32, #tpu.memory_space<vmem>>, vector<1x1x48xf32>
    %444 = vector.shape_cast %443 : vector<1x1x48xf32> to vector<1x48xf32>
    %c0_332 = arith.constant 0 : index
    %c0_333 = arith.constant 0 : index
    %c64_334 = arith.constant 64 : index
    %445 = vector.load %arg15[%c0_332, %c0_333, %c64_334] : memref<1x16x112xf32, #tpu.memory_space<vmem>>, vector<1x16x32xf32>
    %446 = vector.shape_cast %445 : vector<1x16x32xf32> to vector<16x32xf32>
    %c0_335 = arith.constant 0 : index
    %c0_336 = arith.constant 0 : index
    %c65_337 = arith.constant 65 : index
    %447 = vector.load %arg15[%c0_335, %c0_336, %c65_337] : memref<1x16x112xf32, #tpu.memory_space<vmem>>, vector<1x16x32xf32>
    %448 = vector.shape_cast %447 : vector<1x16x32xf32> to vector<16x32xf32>
    %c0_338 = arith.constant 0 : index
    %c0_339 = arith.constant 0 : index
    %c66_340 = arith.constant 66 : index
    %449 = vector.load %arg15[%c0_338, %c0_339, %c66_340] : memref<1x16x112xf32, #tpu.memory_space<vmem>>, vector<1x16x32xf32>
    %450 = vector.shape_cast %449 : vector<1x16x32xf32> to vector<16x32xf32>
    %451 = tpu.concatenate %446, %448, %450 in 0 : vector<16x32xf32>, vector<16x32xf32>, vector<16x32xf32> -> vector<48x32xf32>
    %cst_341 = arith.constant dense<0.000000e+00> : vector<1x32xf32>
    %452 = tpu.matmul %444, %451, %cst_341 {dimension_numbers = #tpu.dot_dimension_numbers<[1], [0], [0], [1], [0, 0, 1, 1], [], []>} : vector<1x48xf32>, vector<48x32xf32>, vector<1x32xf32> -> vector<1x32xf32>
    %453 = arith.addf %442, %452 : vector<1x32xf32>
    %c0_342 = arith.constant 0 : index
    %c0_343 = arith.constant 0 : index
    %454 = vector.load %arg11[%c0_342, %c0_343] : memref<1x1xf32, #tpu.memory_space<vmem>>, vector<1x1xf32>
    %455 = vector.broadcast %454 : vector<1x1xf32> to vector<1x32xf32>
    %456 = arith.addf %453, %455 : vector<1x32xf32>
    %c0_344 = arith.constant 0 : index
    %c0_345 = arith.constant 0 : index
    %c0_346 = arith.constant 0 : index
    %457 = vector.load %arg16[%c0_344, %c0_345, %c0_346] : memref<1x1x32xf32, #tpu.memory_space<vmem>>, vector<1x1x32xf32>
    %458 = vector.shape_cast %457 : vector<1x1x32xf32> to vector<1x32xf32>
    %459 = vector.shape_cast %456 : vector<1x32xf32> to vector<1x1x32xf32>
    tpu.vector_store %arg16[%c0_344, %c0_345, %c0_346], %459 {strides = array<i32>} : memref<1x1x32xf32, #tpu.memory_space<vmem>>, vector<1x1x32xf32>,
    return
  }
  func.func @transform_0(%arg0: i32) -> (i32, i32, i32) {
    %c0_i32 = arith.constant 0 : i32
    %c0_i32_0 = arith.constant 0 : i32
    %c0_i32_1 = arith.constant 0 : i32
    return %arg0, %c0_i32, %c0_i32_0 : i32, i32, i32
  }
  func.func @transform_1(%arg0: i32) -> (i32, i32, i32) {
    %c0_i32 = arith.constant 0 : i32
    %c0_i32_0 = arith.constant 0 : i32
    %c0_i32_1 = arith.constant 0 : i32
    %c0_i32_2 = arith.constant 0 : i32
    return %c0_i32, %c0_i32_0, %c0_i32_1 : i32, i32, i32
  }
  func.func @transform_2(%arg0: i32) -> (i32, i32) {
    %c0_i32 = arith.constant 0 : i32
    %c0_i32_0 = arith.constant 0 : i32
    %c0_i32_1 = arith.constant 0 : i32
    return %c0_i32, %c0_i32_0 : i32, i32
  }
  func.func @transform_3(%arg0: i32) -> (i32, i32, i32) {
    %c0_i32 = arith.constant 0 : i32
    %c0_i32_0 = arith.constant 0 : i32
    %c0_i32_1 = arith.constant 0 : i32
    %c0_i32_2 = arith.constant 0 : i32
    return %c0_i32, %c0_i32_0, %c0_i32_1 : i32, i32, i32
  }
  func.func @transform_4(%arg0: i32) -> (i32, i32) {
    %c0_i32 = arith.constant 0 : i32
    %c0_i32_0 = arith.constant 0 : i32
    %c0_i32_1 = arith.constant 0 : i32
    return %c0_i32, %c0_i32_0 : i32, i32
  }
  func.func @transform_5(%arg0: i32) -> (i32, i32, i32) {
    %c0_i32 = arith.constant 0 : i32
    %c0_i32_0 = arith.constant 0 : i32
    %c0_i32_1 = arith.constant 0 : i32
    %c0_i32_2 = arith.constant 0 : i32
    return %c0_i32, %c0_i32_0, %c0_i32_1 : i32, i32, i32
  }
  func.func @transform_6(%arg0: i32) -> (i32, i32) {
    %c0_i32 = arith.constant 0 : i32
    %c0_i32_0 = arith.constant 0 : i32
    %c0_i32_1 = arith.constant 0 : i32
    return %c0_i32, %c0_i32_0 : i32, i32
  }
  func.func @transform_7(%arg0: i32) -> (i32, i32, i32) {
    %c0_i32 = arith.constant 0 : i32
    %c0_i32_0 = arith.constant 0 : i32
    %c0_i32_1 = arith.constant 0 : i32
    %c0_i32_2 = arith.constant 0 : i32
    return %c0_i32, %c0_i32_0, %c0_i32_1 : i32, i32, i32
  }
  func.func @transform_8(%arg0: i32) -> (i32, i32) {
    %c0_i32 = arith.constant 0 : i32
    %c0_i32_0 = arith.constant 0 : i32
    %c0_i32_1 = arith.constant 0 : i32
    return %c0_i32, %c0_i32_0 : i32, i32
  }
  func.func @transform_9(%arg0: i32) -> (i32, i32, i32) {
    %c0_i32 = arith.constant 0 : i32
    %c0_i32_0 = arith.constant 0 : i32
    %c0_i32_1 = arith.constant 0 : i32
    %c0_i32_2 = arith.constant 0 : i32
    return %c0_i32, %c0_i32_0, %c0_i32_1 : i32, i32, i32
  }
  func.func @transform_10(%arg0: i32) -> (i32, i32) {
    %c0_i32 = arith.constant 0 : i32
    %c0_i32_0 = arith.constant 0 : i32
    %c0_i32_1 = arith.constant 0 : i32
    return %c0_i32, %c0_i32_0 : i32, i32
  }
  func.func @transform_11(%arg0: i32) -> (i32, i32, i32) {
    %c0_i32 = arith.constant 0 : i32
    %c0_i32_0 = arith.constant 0 : i32
    %c0_i32_1 = arith.constant 0 : i32
    return %arg0, %c0_i32, %c0_i32_0 : i32, i32, i32
  }
  func.func @transform_12(%arg0: i32) -> (i32, i32, i32) {
    %c0_i32 = arith.constant 0 : i32
    %c0_i32_0 = arith.constant 0 : i32
    %c0_i32_1 = arith.constant 0 : i32
    return %arg0, %c0_i32, %c0_i32_0 : i32, i32, i32
  }
  func.func @transform_13(%arg0: i32) -> (i32, i32, i32) {
    %c0_i32 = arith.constant 0 : i32
    %c0_i32_0 = arith.constant 0 : i32
    %c0_i32_1 = arith.constant 0 : i32
    return %arg0, %c0_i32, %c0_i32_0 : i32, i32, i32
  }
  func.func @transform_14(%arg0: i32) -> (i32, i32, i32) {
    %c0_i32 = arith.constant 0 : i32
    %c0_i32_0 = arith.constant 0 : i32
    %c0_i32_1 = arith.constant 0 : i32
    return %arg0, %c0_i32, %c0_i32_0 : i32, i32, i32
  }
  func.func @transform_15(%arg0: i32) -> (i32, i32, i32) {
    %c0_i32 = arith.constant 0 : i32
    %c0_i32_0 = arith.constant 0 : i32
    %c0_i32_1 = arith.constant 0 : i32
    return %arg0, %c0_i32, %c0_i32_0 : i32, i32, i32
  }
}

</mosaic_0001>

<llo_original>
// kernel: tpu_custom_call.1
$region0: #{tpu_custom_call.1}
  #allocation0 [shape = 'u32[]', space=smem, size = 0x4, offset = 0x4, fixed_abs, tag = 'smem constant byte address 0x4 - core index']
  #allocation1 [shape = 'u32[144,128]{1,0:T(1,128)}', space=vmem, size = 0x12000, scoped, tag = 'internal scratch']
  #allocation2 [shape = 'f32[1,1]{1,0:T(1,128)S(1)}', space=vmem, size = 0x200, scoped, tag = 'scoped memory for tpu_custom_call.1']
  %s0 = inlined_call_operand.hbm [shape: f32[2,1,1296], index: 0, kind: input, shape index: {}]
  %s1 = inlined_call_operand.vmem [shape: f32[5,8,3], index: 1, kind: input, shape index: {}]
  %s2 = inlined_call_operand.vmem [shape: f32[8,1], index: 2, kind: input, shape index: {}]
  %s3 = inlined_call_operand.vmem [shape: f32[5,16,24], index: 3, kind: input, shape index: {}]
  %s4 = inlined_call_operand.vmem [shape: f32[16,1], index: 4, kind: input, shape index: {}]
  %s5 = inlined_call_operand.hbm [shape: f32[5,32,48], index: 5, kind: input, shape index: {}]
  %s6 = inlined_call_operand.vmem [shape: f32[32,1], index: 6, kind: input, shape index: {}]
  %s7 = inlined_call_operand.vmem [shape: f32[5,16,96], index: 7, kind: input, shape index: {}]
  %s8 = inlined_call_operand.vmem [shape: f32[16,1], index: 8, kind: input, shape index: {}]
  %s9 = inlined_call_operand.vmem [shape: f32[5,1,48], index: 9, kind: input, shape index: {}]
  %s10 = inlined_call_operand.<no memory space> [shape: f32[1,1], index: 10, kind: input, shape index: {}]
  %s11 = inlined_call_operand.hbm [shape: f32[2,8,1232], index: 11, kind: output, shape index: {0}]
  %s12 = inlined_call_operand.hbm [shape: f32[2,16,592], index: 12, kind: output, shape index: {1}]
  %s13 = inlined_call_operand.hbm [shape: f32[2,32,272], index: 13, kind: output, shape index: {2}]
  %s14 = inlined_call_operand.hbm [shape: f32[2,16,112], index: 14, kind: output, shape index: {3}]
  %s15 = inlined_call_operand.hbm [shape: f32[2,1,32], index: 15, kind: output, shape index: {4}]
  %16 = xla_tuple %s11, %s12, %s13, %s14, %s15
  %s17 = sld [smem:[#allocation0]]
  $region117: #{tpu_custom_call.1} parent=0
    _
  %s19 = ssub.s32 1, %s17
  %s20 = scalar_select 0, %s19, %s17
  %v21 = vstv %s10
  %22 = vst [vmem:[#allocation2] sm:$0x1] %v21
  $region1: #{tpu_custom_call.1} parent=0
    #allocation3 [shape = 'u8[11264]{0}', space=vmem, size = 0x2c00, scoped, tag = 'input window, operand 0']
    #allocation4 [shape = 's32[2]{0}', space=sflag, size = 0x8, scoped, tag = 'scoped memory for tpu_custom_call.1']
    #allocation5 [shape = 's32[2]{0}', space=sflag, size = 0x8, scoped, tag = 'scoped memory for tpu_custom_call.1']
    #allocation6 [shape = 'u8[81920]{0}', space=vmem, size = 0x14000, scoped, tag = 'input window, operand 5, single buffered']
    #allocation7 [shape = 's32[1]{0}', space=sflag, size = 0x4, scoped, tag = 'scoped memory for tpu_custom_call.1']
    #allocation8 [shape = 'u8[81920]{0}', space=vmem, size = 0x14000, scoped, tag = 'output window, operand 0']
    #allocation9 [shape = 'u8[81920]{0}', space=vmem, size = 0x14000, scoped, tag = 'output window, operand 1']
    #allocation10 [shape = 's32[2]{0}', space=sflag, size = 0x8, scoped, tag = 'scoped memory for tpu_custom_call.1']
    #allocation11 [shape = 'u8[98304]{0}', space=vmem, size = 0x18000, scoped, tag = 'output window, operand 2']
    #allocation12 [shape = 'u8[16384]{0}', space=vmem, size = 0x4000, scoped, tag = 'output window, operand 3']
    #allocation13 [shape = 's32[2]{0}', space=sflag, size = 0x8, scoped, tag = 'scoped memory for tpu_custom_call.1']
    #allocation14 [shape = 'u8[1024]{0}', space=vmem, size = 0x400, scoped, tag = 'output window, operand 4']
    %23 = vsyncpa [#allocation4], 0
    %s24 = scalar_lea.sflag [#allocation4], 1
    %25 = vsyncpa %s24, 0
    %26 = vsyncpa [#allocation7], 0
    %27 = vsyncpa [#allocation5], 0
    %s28 = scalar_lea.sflag [#allocation5], 1
    %29 = vsyncpa %s28, 0
    %30 = vsyncpa [#allocation10], 0
    %s31 = scalar_lea.sflag [#allocation10], 1
    %32 = vsyncpa %s31, 0
    %33 = vsyncpa [#allocation13], 0
    %s34 = scalar_lea.sflag [#allocation13], 1
    %35 = vsyncpa %s34, 0
    loop: start=0, step=1, limit=4
    $region2: #{tpu_custom_call.1} parent=1 // loop_pre_header
      _
    $region3: #{tpu_custom_call.1} parent=1 // loop_header
      %s37 = sphi 0, %s41
      %p38 = scmp.ge.s32.totalorder %s37, 4
      %s47 = sphi 0, %s49
      %s50 = sphi 0, %s47
      %s51 = sphi 0, %s50
      %s67 = sphi 0, %s51
      %s71 = sphi 0, %s71
      %s73 = sphi 0, %s71
      %s74 = sphi 0, %s73
      %s88 = sphi 0, %s74
      %s92 = sphi 0, %s92
      %s94 = sphi 0, %s92
      %s95 = sphi 0, %s94
      %s109 = sphi 0, %s95
      %s113 = sphi 0, %s113
      %s115 = sphi 0, %s113
      %s116 = sphi 0, %s115
      %s130 = sphi 0, %s116
      %s134 = sphi 0, %s134
      %s136 = sphi 0, %s134
      %s137 = sphi 0, %s136
      %s151 = sphi 0, %s137
      %s155 = sphi 0, %s155
      %s157 = sphi 0, %s155
      %s158 = sphi 0, %s157
      %s172 = sphi 0, %s158
      %s176 = sphi 0, %s176
      %s178 = sphi 0, %s176
      %s179 = sphi 0, %s178
      %s193 = sphi 0, %s179
      %s197 = sphi 0, %s197
      %s199 = sphi 0, %s197
      %s200 = sphi 0, %s199
      %s214 = sphi 0, %s200
      %s218 = sphi 0, %s218
      %s220 = sphi 0, %s218
      %s221 = sphi 0, %s220
      %s235 = sphi 0, %s221
      %s239 = sphi 0, %s239
      %s241 = sphi 0, %s239
      %s242 = sphi 0, %s241
      %s256 = sphi 0, %s242
      %s260 = sphi 0, %s260
      %s262 = sphi 0, %s260
      %s263 = sphi 0, %s262
      %s277 = sphi 0, %s263
      %s283 = sphi 0, %s285
      %s286 = sphi 0, %s283
      %s287 = sphi 0, %s286
      %s303 = sphi 0, %s287
      %s309 = sphi 0, %s311
      %s312 = sphi 0, %s309
      %s313 = sphi 0, %s312
      %s329 = sphi 0, %s313
      %s335 = sphi 0, %s337
      %s338 = sphi 0, %s335
      %s339 = sphi 0, %s338
      %s355 = sphi 0, %s339
      %s361 = sphi 0, %s363
      %s364 = sphi 0, %s361
      %s365 = sphi 0, %s364
      %s381 = sphi 0, %s365
      %s387 = sphi 0, %s389
      %s390 = sphi 0, %s387
      %s391 = sphi 0, %s390
      %s407 = sphi 0, %s391
    $region4: #{tpu_custom_call.1} parent=1 // loop_header_branch
      %40 = sbr.rel (%p38) target = $region8
    $region5: #{tpu_custom_call.1} parent=1 // loop_body
      %s42 = ssub.s32 %s37, 1
      %s43 = ssub.s32 %s37, 2
      %s44 = sadd.s32 %s37, 1
      %s45 = ssub.s32 %s37, %s44
      %p46 = scmp.eq.s32.totalorder %s45, 0
      %s48 = sadd.s32 %s47, 1
      %s49 = scalar_select %p46, %s47, %s48
      %p52 = pneg %p46
      %p53 = scmp.eq.s32.totalorder %s37, 1
      %p54 = por %p52, %p53
      %p55 = scmp.ne.s32.totalorder %s47, %s50
      %p56 = scmp.eq.s32.totalorder %s37, 0
      %p57 = por %p55, %p56
      %p58 = scmp.ne.s32.totalorder %s47, %s50
      %p59 = scmp.eq.s32.totalorder %s42, 1
      %p60 = por %p58, %p59
      %p61 = scmp.ne.s32.totalorder %s50, %s51
      %p62 = scmp.eq.s32.totalorder %s42, 0
      %p63 = por %p61, %p62
      %p64 = scmp.ne.s32.totalorder %s50, %s51
      %p65 = scmp.eq.s32.totalorder %s43, 1
      %p66 = por %p64, %p65
      %p68 = scmp.ne.s32.totalorder %s51, %s67
      %p69 = scmp.eq.s32.totalorder %s43, 0
      %p70 = por %p68, %p69
      %s72 = sadd.s32 %s71, 1
      %p75 = scmp.eq.s32.totalorder %s37, 1
      %p76 = scmp.ne.s32.totalorder %s71, %s73
      %p77 = scmp.eq.s32.totalorder %s37, 0
      %p78 = por %p76, %p77
      %p79 = scmp.ne.s32.totalorder %s71, %s73
      %p80 = scmp.eq.s32.totalorder %s42, 1
      %p81 = por %p79, %p80
      %p82 = scmp.ne.s32.totalorder %s73, %s74
      %p83 = scmp.eq.s32.totalorder %s42, 0
      %p84 = por %p82, %p83
      %p85 = scmp.ne.s32.totalorder %s73, %s74
      %p86 = scmp.eq.s32.totalorder %s43, 1
      %p87 = por %p85, %p86
      %p89 = scmp.ne.s32.totalorder %s74, %s88
      %p90 = scmp.eq.s32.totalorder %s43, 0
      %p91 = por %p89, %p90
      %s93 = sadd.s32 %s92, 1
      %p96 = scmp.eq.s32.totalorder %s37, 1
      %p97 = scmp.ne.s32.totalorder %s92, %s94
      %p98 = scmp.eq.s32.totalorder %s37, 0
      %p99 = por %p97, %p98
      %p100 = scmp.ne.s32.totalorder %s92, %s94
      %p101 = scmp.eq.s32.totalorder %s42, 1
      %p102 = por %p100, %p101
      %p103 = scmp.ne.s32.totalorder %s94, %s95
      %p104 = scmp.eq.s32.totalorder %s42, 0
      %p105 = por %p103, %p104
      %p106 = scmp.ne.s32.totalorder %s94, %s95
      %p107 = scmp.eq.s32.totalorder %s43, 1
      %p108 = por %p106, %p107
      %p110 = scmp.ne.s32.totalorder %s95, %s109
      %p111 = scmp.eq.s32.totalorder %s43, 0
      %p112 = por %p110, %p111
      %s114 = sadd.s32 %s113, 1
      %p117 = scmp.eq.s32.totalorder %s37, 1
      %p118 = scmp.ne.s32.totalorder %s113, %s115
      %p119 = scmp.eq.s32.totalorder %s37, 0
      %p120 = por %p118, %p119
      %p121 = scmp.ne.s32.totalorder %s113, %s115
      %p122 = scmp.eq.s32.totalorder %s42, 1
      %p123 = por %p121, %p122
      %p124 = scmp.ne.s32.totalorder %s115, %s116
      %p125 = scmp.eq.s32.totalorder %s42, 0
      %p126 = por %p124, %p125
      %p127 = scmp.ne.s32.totalorder %s115, %s116
      %p128 = scmp.eq.s32.totalorder %s43, 1
      %p129 = por %p127, %p128
      %p131 = scmp.ne.s32.totalorder %s116, %s130
      %p132 = scmp.eq.s32.totalorder %s43, 0
      %p133 = por %p131, %p132
      %s135 = sadd.s32 %s134, 1
      %p138 = scmp.eq.s32.totalorder %s37, 1
      %p139 = scmp.ne.s32.totalorder %s134, %s136
      %p140 = scmp.eq.s32.totalorder %s37, 0
      %p141 = por %p139, %p140
      %p142 = scmp.ne.s32.totalorder %s134, %s136
      %p143 = scmp.eq.s32.totalorder %s42, 1
      %p144 = por %p142, %p143
      %p145 = scmp.ne.s32.totalorder %s136, %s137
      %p146 = scmp.eq.s32.totalorder %s42, 0
      %p147 = por %p145, %p146
      %p148 = scmp.ne.s32.totalorder %s136, %s137
      %p149 = scmp.eq.s32.totalorder %s43, 1
      %p150 = por %p148, %p149
      %p152 = scmp.ne.s32.totalorder %s137, %s151
      %p153 = scmp.eq.s32.totalorder %s43, 0
      %p154 = por %p152, %p153
      %s156 = sadd.s32 %s155, 1
      %p159 = scmp.eq.s32.totalorder %s37, 1
      %p160 = scmp.ne.s32.totalorder %s155, %s157
      %p161 = scmp.eq.s32.totalorder %s37, 0
      %p162 = por %p160, %p161
      %p163 = scmp.ne.s32.totalorder %s155, %s157
      %p164 = scmp.eq.s32.totalorder %s42, 1
      %p165 = por %p163, %p164
      %p166 = scmp.ne.s32.totalorder %s157, %s158
      %p167 = scmp.eq.s32.totalorder %s42, 0
      %p168 = por %p166, %p167
      %p169 = scmp.ne.s32.totalorder %s157, %s158
      %p170 = scmp.eq.s32.totalorder %s43, 1
      %p171 = por %p169, %p170
      %p173 = scmp.ne.s32.totalorder %s158, %s172
      %p174 = scmp.eq.s32.totalorder %s43, 0
      %p175 = por %p173, %p174
      %s177 = sadd.s32 %s176, 1
      %p180 = scmp.eq.s32.totalorder %s37, 1
      %p181 = scmp.ne.s32.totalorder %s176, %s178
      %p182 = scmp.eq.s32.totalorder %s37, 0
      %p183 = por %p181, %p182
      %p184 = scmp.ne.s32.totalorder %s176, %s178
      %p185 = scmp.eq.s32.totalorder %s42, 1
      %p186 = por %p184, %p185
      %p187 = scmp.ne.s32.totalorder %s178, %s179
      %p188 = scmp.eq.s32.totalorder %s42, 0
      %p189 = por %p187, %p188
      %p190 = scmp.ne.s32.totalorder %s178, %s179
      %p191 = scmp.eq.s32.totalorder %s43, 1
      %p192 = por %p190, %p191
      %p194 = scmp.ne.s32.totalorder %s179, %s193
      %p195 = scmp.eq.s32.totalorder %s43, 0
      %p196 = por %p194, %p195
      %s198 = sadd.s32 %s197, 1
      %p201 = scmp.eq.s32.totalorder %s37, 1
      %p202 = scmp.ne.s32.totalorder %s197, %s199
      %p203 = scmp.eq.s32.totalorder %s37, 0
      %p204 = por %p202, %p203
      %p205 = scmp.ne.s32.totalorder %s197, %s199
      %p206 = scmp.eq.s32.totalorder %s42, 1
      %p207 = por %p205, %p206
      %p208 = scmp.ne.s32.totalorder %s199, %s200
      %p209 = scmp.eq.s32.totalorder %s42, 0
      %p210 = por %p208, %p209
      %p211 = scmp.ne.s32.totalorder %s199, %s200
      %p212 = scmp.eq.s32.totalorder %s43, 1
      %p213 = por %p211, %p212
      %p215 = scmp.ne.s32.totalorder %s200, %s214
      %p216 = scmp.eq.s32.totalorder %s43, 0
      %p217 = por %p215, %p216
      %s219 = sadd.s32 %s218, 1
      %p222 = scmp.eq.s32.totalorder %s37, 1
      %p223 = scmp.ne.s32.totalorder %s218, %s220
      %p224 = scmp.eq.s32.totalorder %s37, 0
      %p225 = por %p223, %p224
      %p226 = scmp.ne.s32.totalorder %s218, %s220
      %p227 = scmp.eq.s32.totalorder %s42, 1
      %p228 = por %p226, %p227
      %p229 = scmp.ne.s32.totalorder %s220, %s221
      %p230 = scmp.eq.s32.totalorder %s42, 0
      %p231 = por %p229, %p230
      %p232 = scmp.ne.s32.totalorder %s220, %s221
      %p233 = scmp.eq.s32.totalorder %s43, 1
      %p234 = por %p232, %p233
      %p236 = scmp.ne.s32.totalorder %s221, %s235
      %p237 = scmp.eq.s32.totalorder %s43, 0
      %p238 = por %p236, %p237
      %s240 = sadd.s32 %s239, 1
      %p243 = scmp.eq.s32.totalorder %s37, 1
      %p244 = scmp.ne.s32.totalorder %s239, %s241
      %p245 = scmp.eq.s32.totalorder %s37, 0
      %p246 = por %p244, %p245
      %p247 = scmp.ne.s32.totalorder %s239, %s241
      %p248 = scmp.eq.s32.totalorder %s42, 1
      %p249 = por %p247, %p248
      %p250 = scmp.ne.s32.totalorder %s241, %s242
      %p251 = scmp.eq.s32.totalorder %s42, 0
      %p252 = por %p250, %p251
      %p253 = scmp.ne.s32.totalorder %s241, %s242
      %p254 = scmp.eq.s32.totalorder %s43, 1
      %p255 = por %p253, %p254
      %p257 = scmp.ne.s32.totalorder %s242, %s256
      %p258 = scmp.eq.s32.totalorder %s43, 0
      %p259 = por %p257, %p258
      %s261 = sadd.s32 %s260, 1
      %p264 = scmp.eq.s32.totalorder %s37, 1
      %p265 = scmp.ne.s32.totalorder %s260, %s262
      %p266 = scmp.eq.s32.totalorder %s37, 0
      %p267 = por %p265, %p266
      %p268 = scmp.ne.s32.totalorder %s260, %s262
      %p269 = scmp.eq.s32.totalorder %s42, 1
      %p270 = por %p268, %p269
      %p271 = scmp.ne.s32.totalorder %s262, %s263
      %p272 = scmp.eq.s32.totalorder %s42, 0
      %p273 = por %p271, %p272
      %p274 = scmp.ne.s32.totalorder %s262, %s263
      %p275 = scmp.eq.s32.totalorder %s43, 1
      %p276 = por %p274, %p275
      %p278 = scmp.ne.s32.totalorder %s263, %s277
      %p279 = scmp.eq.s32.totalorder %s43, 0
      %p280 = por %p278, %p279
      %s281 = ssub.s32 %s37, %s44
      %p282 = scmp.eq.s32.totalorder %s281, 0
      %s284 = sadd.s32 %s283, 1
      %s285 = scalar_select %p282, %s283, %s284
      %p288 = pneg %p282
      %p289 = scmp.eq.s32.totalorder %s37, 1
      %p290 = por %p288, %p289
      %p291 = scmp.ne.s32.totalorder %s283, %s286
      %p292 = scmp.eq.s32.totalorder %s37, 0
      %p293 = por %p291, %p292
      %p294 = scmp.ne.s32.totalorder %s283, %s286
      %p295 = scmp.eq.s32.totalorder %s42, 1
      %p296 = por %p294, %p295
      %p297 = scmp.ne.s32.totalorder %s286, %s287
      %p298 = scmp.eq.s32.totalorder %s42, 0
      %p299 = por %p297, %p298
      %p300 = scmp.ne.s32.totalorder %s286, %s287
      %p301 = scmp.eq.s32.totalorder %s43, 1
      %p302 = por %p300, %p301
      %p304 = scmp.ne.s32.totalorder %s287, %s303
      %p305 = scmp.eq.s32.totalorder %s43, 0
      %p306 = por %p304, %p305
      %s307 = ssub.s32 %s37, %s44
      %p308 = scmp.eq.s32.totalorder %s307, 0
      %s310 = sadd.s32 %s309, 1
      %s311 = scalar_select %p308, %s309, %s310
      %p314 = pneg %p308
      %p315 = scmp.eq.s32.totalorder %s37, 1
      %p316 = por %p314, %p315
      %p317 = scmp.ne.s32.totalorder %s309, %s312
      %p318 = scmp.eq.s32.totalorder %s37, 0
      %p319 = por %p317, %p318
      %p320 = scmp.ne.s32.totalorder %s309, %s312
      %p321 = scmp.eq.s32.totalorder %s42, 1
      %p322 = por %p320, %p321
      %p323 = scmp.ne.s32.totalorder %s312, %s313
      %p324 = scmp.eq.s32.totalorder %s42, 0
      %p325 = por %p323, %p324
      %p326 = scmp.ne.s32.totalorder %s312, %s313
      %p327 = scmp.eq.s32.totalorder %s43, 1
      %p328 = por %p326, %p327
      %p330 = scmp.ne.s32.totalorder %s313, %s329
      %p331 = scmp.eq.s32.totalorder %s43, 0
      %p332 = por %p330, %p331
      %s333 = ssub.s32 %s37, %s44
      %p334 = scmp.eq.s32.totalorder %s333, 0
      %s336 = sadd.s32 %s335, 1
      %s337 = scalar_select %p334, %s335, %s336
      %p340 = pneg %p334
      %p341 = scmp.eq.s32.totalorder %s37, 1
      %p342 = por %p340, %p341
      %p343 = scmp.ne.s32.totalorder %s335, %s338
      %p344 = scmp.eq.s32.totalorder %s37, 0
      %p345 = por %p343, %p344
      %p346 = scmp.ne.s32.totalorder %s335, %s338
      %p347 = scmp.eq.s32.totalorder %s42, 1
      %p348 = por %p346, %p347
      %p349 = scmp.ne.s32.totalorder %s338, %s339
      %p350 = scmp.eq.s32.totalorder %s42, 0
      %p351 = por %p349, %p350
      %p352 = scmp.ne.s32.totalorder %s338, %s339
      %p353 = scmp.eq.s32.totalorder %s43, 1
      %p354 = por %p352, %p353
      %p356 = scmp.ne.s32.totalorder %s339, %s355
      %p357 = scmp.eq.s32.totalorder %s43, 0
      %p358 = por %p356, %p357
      %s359 = ssub.s32 %s37, %s44
      %p360 = scmp.eq.s32.totalorder %s359, 0
      %s362 = sadd.s32 %s361, 1
      %s363 = scalar_select %p360, %s361, %s362
      %p366 = pneg %p360
      %p367 = scmp.eq.s32.totalorder %s37, 1
      %p368 = por %p366, %p367
      %p369 = scmp.ne.s32.totalorder %s361, %s364
      %p370 = scmp.eq.s32.totalorder %s37, 0
      %p371 = por %p369, %p370
      %p372 = scmp.ne.s32.totalorder %s361, %s364
      %p373 = scmp.eq.s32.totalorder %s42, 1
      %p374 = por %p372, %p373
      %p375 = scmp.ne.s32.totalorder %s364, %s365
      %p376 = scmp.eq.s32.totalorder %s42, 0
      %p377 = por %p375, %p376
      %p378 = scmp.ne.s32.totalorder %s364, %s365
      %p379 = scmp.eq.s32.totalorder %s43, 1
      %p380 = por %p378, %p379
      %p382 = scmp.ne.s32.totalorder %s365, %s381
      %p383 = scmp.eq.s32.totalorder %s43, 0
      %p384 = por %p382, %p383
      %s385 = ssub.s32 %s37, %s44
      %p386 = scmp.eq.s32.totalorder %s385, 0
      %s388 = sadd.s32 %s387, 1
      %s389 = scalar_select %p386, %s387, %s388
      %p392 = pneg %p386
      %p393 = scmp.eq.s32.totalorder %s37, 1
      %p394 = por %p392, %p393
      %p395 = scmp.ne.s32.totalorder %s387, %s390
      %p396 = scmp.eq.s32.totalorder %s37, 0
      %p397 = por %p395, %p396
      %p398 = scmp.ne.s32.totalorder %s387, %s390
      %p399 = scmp.eq.s32.totalorder %s42, 1
      %p400 = por %p398, %p399
      %p401 = scmp.ne.s32.totalorder %s390, %s391
      %p402 = scmp.eq.s32.totalorder %s42, 0
      %p403 = por %p401, %p402
      %p404 = scmp.ne.s32.totalorder %s390, %s391
      %p405 = scmp.eq.s32.totalorder %s43, 1
      %p406 = por %p404, %p405
      %p408 = scmp.ne.s32.totalorder %s391, %s407
      %p409 = scmp.eq.s32.totalorder %s43, 0
      %p410 = por %p408, %p409
      %p411 = scmp.le.s32.totalorder 1, %s37
      %p412 = scmp.lt.s32.totalorder %s37, 3
      %p413 = pnand %p411, %p412
      %p414 = pneg %p413
      // Predicated region
      $region9: #{tpu_custom_call.1} parent=5 // pred_check
        _
      $region10: #{tpu_custom_call.1} parent=5 // pred_check_branch
        %416 = sbr.rel (%p413) target = $region12
      $region11: #{tpu_custom_call.1} parent=5 // pred_region
        %s417 = ssub.s32 %s37, 1
        // Predicated region
        $region13: #{tpu_custom_call.1} parent=11 // pred_check
          %p418 = pneg %p84
        $region14: #{tpu_custom_call.1} parent=11 // pred_check_branch
          %420 = sbr.rel (%p418) target = $region16
        $region15: #{tpu_custom_call.1} parent=11 // pred_region
          _
        $region16: #{tpu_custom_call.1} parent=11 // pred_fallthru
          _
        // Predicated region
        $region17: #{tpu_custom_call.1} parent=11 // pred_check
          %p421 = pneg %p105
        $region18: #{tpu_custom_call.1} parent=11 // pred_check_branch
          %423 = sbr.rel (%p421) target = $region20
        $region19: #{tpu_custom_call.1} parent=11 // pred_region
          _
        $region20: #{tpu_custom_call.1} parent=11 // pred_fallthru
          _
        // Predicated region
        $region21: #{tpu_custom_call.1} parent=11 // pred_check
          %p424 = pneg %p126
        $region22: #{tpu_custom_call.1} parent=11 // pred_check_branch
          %426 = sbr.rel (%p424) target = $region24
        $region23: #{tpu_custom_call.1} parent=11 // pred_region
          _
        $region24: #{tpu_custom_call.1} parent=11 // pred_fallthru
          _
        // Predicated region
        $region25: #{tpu_custom_call.1} parent=11 // pred_check
          %p427 = pneg %p147
        $region26: #{tpu_custom_call.1} parent=11 // pred_check_branch
          %429 = sbr.rel (%p427) target = $region28
        $region27: #{tpu_custom_call.1} parent=11 // pred_region
          _
        $region28: #{tpu_custom_call.1} parent=11 // pred_fallthru
          _
        // Predicated region
        $region29: #{tpu_custom_call.1} parent=11 // pred_check
          %p430 = pneg %p168
        $region30: #{tpu_custom_call.1} parent=11 // pred_check_branch
          %432 = sbr.rel (%p430) target = $region32
        $region31: #{tpu_custom_call.1} parent=11 // pred_region
          %s434 = ssub.s32 2560, 2560
          %435 = vsyncadd [#allocation7], %s434
          %s436 = sshll.u32 [#allocation6], 4
          %s437 = int_to_ptr.vmem [resolvable:$true] %s436
          %442 = dma.hbm_to_vmem [thread:$0]  %s5, 2560, %s437, [#allocation7], 128, 128, 8
        $region32: #{tpu_custom_call.1} parent=11 // pred_fallthru
          _
        // Predicated region
        $region33: #{tpu_custom_call.1} parent=11 // pred_check
          %p443 = pneg %p189
        $region34: #{tpu_custom_call.1} parent=11 // pred_check_branch
          %445 = sbr.rel (%p443) target = $region36
        $region35: #{tpu_custom_call.1} parent=11 // pred_region
          _
        $region36: #{tpu_custom_call.1} parent=11 // pred_fallthru
          _
        // Predicated region
        $region37: #{tpu_custom_call.1} parent=11 // pred_check
          %p446 = pneg %p210
        $region38: #{tpu_custom_call.1} parent=11 // pred_check_branch
          %448 = sbr.rel (%p446) target = $region40
        $region39: #{tpu_custom_call.1} parent=11 // pred_region
          _
        $region40: #{tpu_custom_call.1} parent=11 // pred_fallthru
          _
        // Predicated region
        $region41: #{tpu_custom_call.1} parent=11 // pred_check
          %p449 = pneg %p231
        $region42: #{tpu_custom_call.1} parent=11 // pred_check_branch
          %451 = sbr.rel (%p449) target = $region44
        $region43: #{tpu_custom_call.1} parent=11 // pred_region
          _
        $region44: #{tpu_custom_call.1} parent=11 // pred_fallthru
          _
        // Predicated region
        $region45: #{tpu_custom_call.1} parent=11 // pred_check
          %p452 = pneg %p252
        $region46: #{tpu_custom_call.1} parent=11 // pred_check_branch
          %454 = sbr.rel (%p452) target = $region48
        $region47: #{tpu_custom_call.1} parent=11 // pred_region
          _
        $region48: #{tpu_custom_call.1} parent=11 // pred_fallthru
          _
        // Predicated region
        $region49: #{tpu_custom_call.1} parent=11 // pred_check
          %p455 = pneg %p273
        $region50: #{tpu_custom_call.1} parent=11 // pred_check_branch
          %457 = sbr.rel (%p455) target = $region52
        $region51: #{tpu_custom_call.1} parent=11 // pred_region
          _
        $region52: #{tpu_custom_call.1} parent=11 // pred_fallthru
          _
      $region12: #{tpu_custom_call.1} parent=5 // pred_fallthru
        _
      %p458 = scmp.lt.s32.totalorder %s37, 2
      // Predicated region
      $region53: #{tpu_custom_call.1} parent=5 // pred_check
        %p459 = pneg %p458
      $region54: #{tpu_custom_call.1} parent=5 // pred_check_branch
        %461 = sbr.rel (%p459) target = $region56
      $region55: #{tpu_custom_call.1} parent=5 // pred_region
        // Predicated region
        $region57: #{tpu_custom_call.1} parent=55 // pred_check
          %p462 = pneg %p57
        $region58: #{tpu_custom_call.1} parent=55 // pred_check_branch
          %464 = sbr.rel (%p462) target = $region60
        $region59: #{tpu_custom_call.1} parent=55 // pred_region
          %s465 = sand.u32 %s47, 1
          %s466 = scalar_lea.sflag [#allocation4], %s465
          %s467 = sand.u32 %s47, 1
          %s468 = smul.addr %s467, 11
          %s469 = scalar_lea.vmem [#allocation3], %s468
          %s471 = ssub.s32 176, 176
          %472 = vsyncadd %s466, %s471
          %s473 = smul.addr %s37, 11
          %s474 = smul.addr %s473, 16
          %s475 = scalar_lea.hbm %s0, %s474
          %s477 = sshll.u32 %s469, 4
          %s478 = int_to_ptr.vmem [resolvable:$true] %s477
          %480 = dma.hbm_to_vmem [thread:$0]  %s475, 176, %s478, %s466
        $region60: #{tpu_custom_call.1} parent=55 // pred_fallthru
          _
      $region56: #{tpu_custom_call.1} parent=5 // pred_fallthru
        _
      %p481 = scmp.le.s32.totalorder 1, %s37
      %p482 = scmp.lt.s32.totalorder %s37, 3
      %p483 = pnand %p481, %p482
      %p484 = pneg %p483
      // Predicated region
      $region61: #{tpu_custom_call.1} parent=5 // pred_check
        _
      $region62: #{tpu_custom_call.1} parent=5 // pred_check_branch
        %486 = sbr.rel (%p483) target = $region64
      $region63: #{tpu_custom_call.1} parent=5 // pred_region
        %s487 = ssub.s32 %s37, 1
        %s488 = sand.u32 %s50, 1
        %s489 = scalar_lea.sflag [#allocation4], %s488
        %s490 = sand.u32 %s50, 1
        %s491 = smul.addr %s490, 11
        %s492 = scalar_lea.vmem [#allocation3], %s491
        // Predicated region
        $region65: #{tpu_custom_call.1} parent=63 // pred_check
          %p493 = pneg %p63
        $region66: #{tpu_custom_call.1} parent=63 // pred_check_branch
          %495 = sbr.rel (%p493) target = $region68
        $region67: #{tpu_custom_call.1} parent=63 // pred_region
          %496 = dma.done %s489, 176
        $region68: #{tpu_custom_call.1} parent=63 // pred_fallthru
          _
        // Predicated region
        $region69: #{tpu_custom_call.1} parent=63 // pred_check
          %p497 = pneg %p168
        $region70: #{tpu_custom_call.1} parent=63 // pred_check_branch
          %499 = sbr.rel (%p497) target = $region72
        $region71: #{tpu_custom_call.1} parent=63 // pred_region
          %500 = dma.done [#allocation7], 2560
        $region72: #{tpu_custom_call.1} parent=63 // pred_fallthru
          _
        %s501 = sand.u32 %s50, 1
        %s502 = scalar_lea.sflag [#allocation4], %s501
        %s503 = sand.u32 %s50, 1
        %s504 = smul.addr %s503, 11
        %s505 = scalar_lea.vmem [#allocation3], %s504
        %p506 = pneg %p63
        %p507 = pneg %p60
        %p508 = pneg %p84
        %p509 = pneg %p81
        %p510 = pneg %p105
        %p511 = pneg %p102
        %p512 = pneg %p126
        %p513 = pneg %p123
        %p514 = pneg %p147
        %p515 = pneg %p144
        %p516 = pneg %p168
        %p517 = pneg %p165
        %p518 = pneg %p189
        %p519 = pneg %p186
        %p520 = pneg %p210
        %p521 = pneg %p207
        %p522 = pneg %p231
        %p523 = pneg %p228
        %p524 = pneg %p252
        %p525 = pneg %p249
        %p526 = pneg %p273
        %p527 = pneg %p270
        %p528 = pneg %p299
        %p529 = pneg %p296
        %s530 = sand.u32 %s286, 1
        %s531 = scalar_lea.sflag [#allocation5], %s530
        %s532 = sand.u32 %s286, 1
        %s533 = smul.addr %s532, 80
        %s534 = scalar_lea.vmem [#allocation8], %s533
        %p535 = pneg %p325
        %p536 = pneg %p322
        %s537 = sand.u32 %s42, 1
        %s538 = scalar_lea.sflag [#allocation10], %s537
        %s539 = sand.u32 %s312, 1
        %s540 = smul.addr %s539, 80
        %s541 = scalar_lea.vmem [#allocation9], %s540
        %p542 = pneg %p351
        %p543 = pneg %p348
        %s544 = sand.u32 %s42, 1
        %s545 = scalar_lea.sflag [#allocation10], %s544
        %s546 = sand.u32 %s338, 1
        %s547 = smul.addr %s546, 96
        %s548 = scalar_lea.vmem [#allocation11], %s547
        %p549 = pneg %p377
        %p550 = pneg %p374
        %s551 = sand.u32 %s42, 1
        %s552 = scalar_lea.sflag [#allocation13], %s551
        %s553 = sand.u32 %s364, 1
        %s554 = smul.addr %s553, 16
        %s555 = scalar_lea.vmem [#allocation12], %s554
        %p556 = pneg %p403
        %p557 = pneg %p400
        %s558 = sand.u32 %s42, 1
        %s559 = scalar_lea.sflag [#allocation13], %s558
        %s560 = sand.u32 %s390, 1
        %s561 = scalar_lea.vmem [#allocation14], %s560
        %v562 = vld [vmem:[%s1] sm:$0xff]
        %v563 = vld [vmem:[%s492] sm:$0xff]
        %v564 = vld [vmem:[%s492 + $0x8] sm:$0x3]
        %566 = vset.pattern.permute.xlu0 0
        %567 = vperm.xlu0 %566, %v562
        %v568 = vpop.permute.xlu0 %567
        %v572 = vlaneseq
        %v573 = vshrl.u32 %v572, 7
        %v574 = vsub.s32 0, %v573
        %v575 = vrot.slane %v563, %v574
        %v576 = vlaneseq
        %v577 = vshrl.u32 %v576, 7
        %v578 = vsub.s32 1, %v577
        %v579 = vrot.slane %v563, %v578
        %v580 = vlaneseq
        %v581 = vshrl.u32 %v580, 7
        %v582 = vsub.s32 2, %v581
        %v583 = vrot.slane %v563, %v582
        %v584 = vlaneseq
        %v585 = vshrl.u32 %v584, 7
        %v586 = vsub.s32 3, %v585
        %v587 = vrot.slane %v563, %v586
        %v588 = vlaneseq
        %v589 = vshrl.u32 %v588, 7
        %v590 = vsub.s32 4, %v589
        %v591 = vrot.slane %v563, %v590
        %v592 = vlaneseq
        %v593 = vshrl.u32 %v592, 7
        %v594 = vsub.s32 5, %v593
        %v595 = vrot.slane %v563, %v594
        %v596 = vlaneseq
        %v597 = vshrl.u32 %v596, 7
        %v598 = vsub.s32 6, %v597
        %v599 = vrot.slane %v563, %v598
        %v600 = vlaneseq
        %v601 = vshrl.u32 %v600, 7
        %v602 = vsub.s32 7, %v601
        %v603 = vrot.slane %v563, %v602
        %v604 = vlaneseq
        %v605 = vshrl.u32 %v604, 7
        %v606 = vsub.s32 0, %v605
        %v607 = vrot.slane %v564, %v606
        %v608 = vlaneseq
        %v609 = vshrl.u32 %v608, 7
        %v610 = vsub.s32 1, %v609
        %v611 = vrot.slane %v564, %v610
        %v622 = vmul.f32 %v568, %v575
        %v623 = vmul.f32 %v568, %v579
        %v624 = vmul.f32 %v568, %v583
        %v625 = vmul.f32 %v568, %v587
        %v626 = vmul.f32 %v568, %v591
        %v627 = vmul.f32 %v568, %v595
        %v628 = vmul.f32 %v568, %v599
        %v629 = vmul.f32 %v568, %v603
        %v630 = vmul.f32 %v568, %v607
        %v631 = vmul.f32 %v568, %v611
        %632 = vset.pattern.permute.xlu0 1
        %633 = vperm.xlu0 %632, %v562
        %v634 = vpop.permute.xlu0 %633
        %v636 = vmul.f32 %v634, %v575
        %v637 = vmul.f32 %v634, %v579
        %v638 = vmul.f32 %v634, %v583
        %v639 = vmul.f32 %v634, %v587
        %v640 = vmul.f32 %v634, %v591
        %v641 = vmul.f32 %v634, %v595
        %v642 = vmul.f32 %v634, %v599
        %v643 = vmul.f32 %v634, %v603
        %v644 = vmul.f32 %v634, %v607
        %v645 = vmul.f32 %v634, %v611
        %656 = vrot.lane.b32.xlu0 %v636, 127
        %v657 = vpop.permute.xlu0 %656
        %658 = vrot.lane.b32.xlu0 %v637, 127
        %v659 = vpop.permute.xlu0 %658
        %660 = vrot.lane.b32.xlu0 %v638, 127
        %v661 = vpop.permute.xlu0 %660
        %662 = vrot.lane.b32.xlu0 %v639, 127
        %v663 = vpop.permute.xlu0 %662
        %664 = vrot.lane.b32.xlu0 %v640, 127
        %v665 = vpop.permute.xlu0 %664
        %666 = vrot.lane.b32.xlu0 %v641, 127
        %v667 = vpop.permute.xlu0 %666
        %668 = vrot.lane.b32.xlu0 %v642, 127
        %v669 = vpop.permute.xlu0 %668
        %670 = vrot.lane.b32.xlu0 %v643, 127
        %v671 = vpop.permute.xlu0 %670
        %672 = vrot.lane.b32.xlu0 %v644, 127
        %v673 = vpop.permute.xlu0 %672
        %674 = vrot.lane.b32.xlu0 %v645, 127
        %v675 = vpop.permute.xlu0 %674
        %vm676 = vcmask 1039360
        %v677 = vsel %vm676, %v657, %v659
        %v678 = vsel %vm676, %v659, %v661
        %v679 = vsel %vm676, %v661, %v663
        %v680 = vsel %vm676, %v663, %v665
        %v681 = vsel %vm676, %v665, %v667
        %v682 = vsel %vm676, %v667, %v669
        %v683 = vsel %vm676, %v669, %v671
        %v684 = vsel %vm676, %v671, %v673
        %v685 = vsel %vm676, %v673, %v675
        %v696 = vadd.f32 %v622, %v677
        %v697 = vadd.f32 %v623, %v678
        %v698 = vadd.f32 %v624, %v679
        %v699 = vadd.f32 %v625, %v680
        %v700 = vadd.f32 %v626, %v681
        %v701 = vadd.f32 %v627, %v682
        %v702 = vadd.f32 %v628, %v683
        %v703 = vadd.f32 %v629, %v684
        %v704 = vadd.f32 %v630, %v685
        %v705 = vadd.f32 %v631, %v675
        %706 = vset.pattern.permute.xlu0 2
        %707 = vperm.xlu0 %706, %v562
        %v708 = vpop.permute.xlu0 %707
        %v710 = vmul.f32 %v708, %v575
        %v711 = vmul.f32 %v708, %v579
        %v712 = vmul.f32 %v708, %v583
        %v713 = vmul.f32 %v708, %v587
        %v714 = vmul.f32 %v708, %v591
        %v715 = vmul.f32 %v708, %v595
        %v716 = vmul.f32 %v708, %v599
        %v717 = vmul.f32 %v708, %v603
        %v718 = vmul.f32 %v708, %v607
        %v719 = vmul.f32 %v708, %v611
        %730 = vrot.lane.b32.xlu0 %v710, 126
        %v731 = vpop.permute.xlu0 %730
        %732 = vrot.lane.b32.xlu0 %v711, 126
        %v733 = vpop.permute.xlu0 %732
        %734 = vrot.lane.b32.xlu0 %v712, 126
        %v735 = vpop.permute.xlu0 %734
        %736 = vrot.lane.b32.xlu0 %v713, 126
        %v737 = vpop.permute.xlu0 %736
        %738 = vrot.lane.b32.xlu0 %v714, 126
        %v739 = vpop.permute.xlu0 %738
        %740 = vrot.lane.b32.xlu0 %v715, 126
        %v741 = vpop.permute.xlu0 %740
        %742 = vrot.lane.b32.xlu0 %v716, 126
        %v743 = vpop.permute.xlu0 %742
        %744 = vrot.lane.b32.xlu0 %v717, 126
        %v745 = vpop.permute.xlu0 %744
        %746 = vrot.lane.b32.xlu0 %v718, 126
        %v747 = vpop.permute.xlu0 %746
        %748 = vrot.lane.b32.xlu0 %v719, 126
        %v749 = vpop.permute.xlu0 %748
        %vm750 = vcmask 1031168
        %v751 = vsel %vm750, %v731, %v733
        %v752 = vsel %vm750, %v733, %v735
        %v753 = vsel %vm750, %v735, %v737
        %v754 = vsel %vm750, %v737, %v739
        %v755 = vsel %vm750, %v739, %v741
        %v756 = vsel %vm750, %v741, %v743
        %v757 = vsel %vm750, %v743, %v745
        %v758 = vsel %vm750, %v745, %v747
        %v759 = vsel %vm750, %v747, %v749
        %v770 = vadd.f32 %v696, %v751
        %v771 = vadd.f32 %v697, %v752
        %v772 = vadd.f32 %v698, %v753
        %v773 = vadd.f32 %v699, %v754
        %v774 = vadd.f32 %v700, %v755
        %v775 = vadd.f32 %v701, %v756
        %v776 = vadd.f32 %v702, %v757
        %v777 = vadd.f32 %v703, %v758
        %v778 = vadd.f32 %v704, %v759
        %v779 = vadd.f32 %v705, %v749
        %s780 = scalar_lea.vmem %s1, 8
        %v781 = vld [vmem:[%s780] sm:$0xff]
        %783 = vset.pattern.permute.xlu0 0
        %784 = vperm.xlu0 %783, %v781
        %v785 = vpop.permute.xlu0 %784
        %v787 = vmul.f32 %v785, %v575
        %v788 = vmul.f32 %v785, %v579
        %v789 = vmul.f32 %v785, %v583
        %v790 = vmul.f32 %v785, %v587
        %v791 = vmul.f32 %v785, %v591
        %v792 = vmul.f32 %v785, %v595
        %v793 = vmul.f32 %v785, %v599
        %v794 = vmul.f32 %v785, %v603
        %v795 = vmul.f32 %v785, %v607
        %v796 = vmul.f32 %v785, %v611
        %797 = vset.pattern.permute.xlu0 1
        %798 = vperm.xlu0 %797, %v781
        %v799 = vpop.permute.xlu0 %798
        %v801 = vmul.f32 %v799, %v575
        %v802 = vmul.f32 %v799, %v579
        %v803 = vmul.f32 %v799, %v583
        %v804 = vmul.f32 %v799, %v587
        %v805 = vmul.f32 %v799, %v591
        %v806 = vmul.f32 %v799, %v595
        %v807 = vmul.f32 %v799, %v599
        %v808 = vmul.f32 %v799, %v603
        %v809 = vmul.f32 %v799, %v607
        %v810 = vmul.f32 %v799, %v611
        %821 = vrot.lane.b32.xlu0 %v801, 127
        %v822 = vpop.permute.xlu0 %821
        %823 = vrot.lane.b32.xlu0 %v802, 127
        %v824 = vpop.permute.xlu0 %823
        %825 = vrot.lane.b32.xlu0 %v803, 127
        %v826 = vpop.permute.xlu0 %825
        %827 = vrot.lane.b32.xlu0 %v804, 127
        %v828 = vpop.permute.xlu0 %827
        %829 = vrot.lane.b32.xlu0 %v805, 127
        %v830 = vpop.permute.xlu0 %829
        %831 = vrot.lane.b32.xlu0 %v806, 127
        %v832 = vpop.permute.xlu0 %831
        %833 = vrot.lane.b32.xlu0 %v807, 127
        %v834 = vpop.permute.xlu0 %833
        %835 = vrot.lane.b32.xlu0 %v808, 127
        %v836 = vpop.permute.xlu0 %835
        %837 = vrot.lane.b32.xlu0 %v809, 127
        %v838 = vpop.permute.xlu0 %837
        %839 = vrot.lane.b32.xlu0 %v810, 127
        %v840 = vpop.permute.xlu0 %839
        %v841 = vsel %vm676, %v822, %v824
        %v842 = vsel %vm676, %v824, %v826
        %v843 = vsel %vm676, %v826, %v828
        %v844 = vsel %vm676, %v828, %v830
        %v845 = vsel %vm676, %v830, %v832
        %v846 = vsel %vm676, %v832, %v834
        %v847 = vsel %vm676, %v834, %v836
        %v848 = vsel %vm676, %v836, %v838
        %v849 = vsel %vm676, %v838, %v840
        %v860 = vadd.f32 %v787, %v841
        %v861 = vadd.f32 %v788, %v842
        %v862 = vadd.f32 %v789, %v843
        %v863 = vadd.f32 %v790, %v844
        %v864 = vadd.f32 %v791, %v845
        %v865 = vadd.f32 %v792, %v846
        %v866 = vadd.f32 %v793, %v847
        %v867 = vadd.f32 %v794, %v848
        %v868 = vadd.f32 %v795, %v849
        %v869 = vadd.f32 %v796, %v840
        %870 = vset.pattern.permute.xlu0 2
        %871 = vperm.xlu0 %870, %v781
        %v872 = vpop.permute.xlu0 %871
        %v874 = vmul.f32 %v872, %v575
        %v875 = vmul.f32 %v872, %v579
        %v876 = vmul.f32 %v872, %v583
        %v877 = vmul.f32 %v872, %v587
        %v878 = vmul.f32 %v872, %v591
        %v879 = vmul.f32 %v872, %v595
        %v880 = vmul.f32 %v872, %v599
        %v881 = vmul.f32 %v872, %v603
        %v882 = vmul.f32 %v872, %v607
        %v883 = vmul.f32 %v872, %v611
        %894 = vrot.lane.b32.xlu0 %v874, 126
        %v895 = vpop.permute.xlu0 %894
        %896 = vrot.lane.b32.xlu0 %v875, 126
        %v897 = vpop.permute.xlu0 %896
        %898 = vrot.lane.b32.xlu0 %v876, 126
        %v899 = vpop.permute.xlu0 %898
        %900 = vrot.lane.b32.xlu0 %v877, 126
        %v901 = vpop.permute.xlu0 %900
        %902 = vrot.lane.b32.xlu0 %v878, 126
        %v903 = vpop.permute.xlu0 %902
        %904 = vrot.lane.b32.xlu0 %v879, 126
        %v905 = vpop.permute.xlu0 %904
        %906 = vrot.lane.b32.xlu0 %v880, 126
        %v907 = vpop.permute.xlu0 %906
        %908 = vrot.lane.b32.xlu0 %v881, 126
        %v909 = vpop.permute.xlu0 %908
        %910 = vrot.lane.b32.xlu0 %v882, 126
        %v911 = vpop.permute.xlu0 %910
        %912 = vrot.lane.b32.xlu0 %v883, 126
        %v913 = vpop.permute.xlu0 %912
        %v914 = vsel %vm750, %v895, %v897
        %v915 = vsel %vm750, %v897, %v899
        %v916 = vsel %vm750, %v899, %v901
        %v917 = vsel %vm750, %v901, %v903
        %v918 = vsel %vm750, %v903, %v905
        %v919 = vsel %vm750, %v905, %v907
        %v920 = vsel %vm750, %v907, %v909
        %v921 = vsel %vm750, %v909, %v911
        %v922 = vsel %vm750, %v911, %v913
        %v933 = vadd.f32 %v860, %v914
        %v934 = vadd.f32 %v861, %v915
        %v935 = vadd.f32 %v862, %v916
        %v936 = vadd.f32 %v863, %v917
        %v937 = vadd.f32 %v864, %v918
        %v938 = vadd.f32 %v865, %v919
        %v939 = vadd.f32 %v866, %v920
        %v940 = vadd.f32 %v867, %v921
        %v941 = vadd.f32 %v868, %v922
        %v942 = vadd.f32 %v869, %v913
        %953 = vrot.lane.b32.xlu0 %v933, 112
        %v954 = vpop.permute.xlu0 %953
        %955 = vrot.lane.b32.xlu0 %v934, 112
        %v956 = vpop.permute.xlu0 %955
        %957 = vrot.lane.b32.xlu0 %v935, 112
        %v958 = vpop.permute.xlu0 %957
        %959 = vrot.lane.b32.xlu0 %v936, 112
        %v960 = vpop.permute.xlu0 %959
        %961 = vrot.lane.b32.xlu0 %v937, 112
        %v962 = vpop.permute.xlu0 %961
        %963 = vrot.lane.b32.xlu0 %v938, 112
        %v964 = vpop.permute.xlu0 %963
        %965 = vrot.lane.b32.xlu0 %v939, 112
        %v966 = vpop.permute.xlu0 %965
        %967 = vrot.lane.b32.xlu0 %v940, 112
        %v968 = vpop.permute.xlu0 %967
        %969 = vrot.lane.b32.xlu0 %v941, 112
        %v970 = vpop.permute.xlu0 %969
        %971 = vrot.lane.b32.xlu0 %v942, 112
        %v972 = vpop.permute.xlu0 %971
        %vm973 = vcmask 916480
        %v974 = vsel %vm973, %v954, %v956
        %v975 = vsel %vm973, %v956, %v958
        %v976 = vsel %vm973, %v958, %v960
        %v977 = vsel %vm973, %v960, %v962
        %v978 = vsel %vm973, %v962, %v964
        %v979 = vsel %vm973, %v964, %v966
        %v980 = vsel %vm973, %v966, %v968
        %v981 = vsel %vm973, %v968, %v970
        %v982 = vsel %vm973, %v970, %v972
        %v993 = vadd.f32 %v770, %v974
        %v994 = vadd.f32 %v771, %v975
        %v995 = vadd.f32 %v772, %v976
        %v996 = vadd.f32 %v773, %v977
        %v997 = vadd.f32 %v774, %v978
        %v998 = vadd.f32 %v775, %v979
        %v999 = vadd.f32 %v776, %v980
        %v1000 = vadd.f32 %v777, %v981
        %v1001 = vadd.f32 %v778, %v982
        %v1002 = vadd.f32 %v779, %v972
        %s1003 = scalar_lea.vmem %s1, 16
        %v1004 = vld [vmem:[%s1003] sm:$0xff]
        %1006 = vset.pattern.permute.xlu0 0
        %1007 = vperm.xlu0 %1006, %v1004
        %v1008 = vpop.permute.xlu0 %1007
        %v1010 = vmul.f32 %v1008, %v575
        %v1011 = vmul.f32 %v1008, %v579
        %v1012 = vmul.f32 %v1008, %v583
        %v1013 = vmul.f32 %v1008, %v587
        %v1014 = vmul.f32 %v1008, %v591
        %v1015 = vmul.f32 %v1008, %v595
        %v1016 = vmul.f32 %v1008, %v599
        %v1017 = vmul.f32 %v1008, %v603
        %v1018 = vmul.f32 %v1008, %v607
        %v1019 = vmul.f32 %v1008, %v611
        %1020 = vset.pattern.permute.xlu0 1
        %1021 = vperm.xlu0 %1020, %v1004
        %v1022 = vpop.permute.xlu0 %1021
        %v1024 = vmul.f32 %v1022, %v575
        %v1025 = vmul.f32 %v1022, %v579
        %v1026 = vmul.f32 %v1022, %v583
        %v1027 = vmul.f32 %v1022, %v587
        %v1028 = vmul.f32 %v1022, %v591
        %v1029 = vmul.f32 %v1022, %v595
        %v1030 = vmul.f32 %v1022, %v599
        %v1031 = vmul.f32 %v1022, %v603
        %v1032 = vmul.f32 %v1022, %v607
        %v1033 = vmul.f32 %v1022, %v611
        %1044 = vrot.lane.b32.xlu0 %v1024, 127
        %v1045 = vpop.permute.xlu0 %1044
        %1046 = vrot.lane.b32.xlu0 %v1025, 127
        %v1047 = vpop.permute.xlu0 %1046
        %1048 = vrot.lane.b32.xlu0 %v1026, 127
        %v1049 = vpop.permute.xlu0 %1048
        %1050 = vrot.lane.b32.xlu0 %v1027, 127
        %v1051 = vpop.permute.xlu0 %1050
        %1052 = vrot.lane.b32.xlu0 %v1028, 127
        %v1053 = vpop.permute.xlu0 %1052
        %1054 = vrot.lane.b32.xlu0 %v1029, 127
        %v1055 = vpop.permute.xlu0 %1054
        %1056 = vrot.lane.b32.xlu0 %v1030, 127
        %v1057 = vpop.permute.xlu0 %1056
        %1058 = vrot.lane.b32.xlu0 %v1031, 127
        %v1059 = vpop.permute.xlu0 %1058
        %1060 = vrot.lane.b32.xlu0 %v1032, 127
        %v1061 = vpop.permute.xlu0 %1060
        %1062 = vrot.lane.b32.xlu0 %v1033, 127
        %v1063 = vpop.permute.xlu0 %1062
        %v1064 = vsel %vm676, %v1045, %v1047
        %v1065 = vsel %vm676, %v1047, %v1049
        %v1066 = vsel %vm676, %v1049, %v1051
        %v1067 = vsel %vm676, %v1051, %v1053
        %v1068 = vsel %vm676, %v1053, %v1055
        %v1069 = vsel %vm676, %v1055, %v1057
        %v1070 = vsel %vm676, %v1057, %v1059
        %v1071 = vsel %vm676, %v1059, %v1061
        %v1072 = vsel %vm676, %v1061, %v1063
        %v1083 = vadd.f32 %v1010, %v1064
        %v1084 = vadd.f32 %v1011, %v1065
        %v1085 = vadd.f32 %v1012, %v1066
        %v1086 = vadd.f32 %v1013, %v1067
        %v1087 = vadd.f32 %v1014, %v1068
        %v1088 = vadd.f32 %v1015, %v1069
        %v1089 = vadd.f32 %v1016, %v1070
        %v1090 = vadd.f32 %v1017, %v1071
        %v1091 = vadd.f32 %v1018, %v1072
        %v1092 = vadd.f32 %v1019, %v1063
        %1093 = vset.pattern.permute.xlu0 2
        %1094 = vperm.xlu0 %1093, %v1004
        %v1095 = vpop.permute.xlu0 %1094
        %v1097 = vmul.f32 %v1095, %v575
        %v1098 = vmul.f32 %v1095, %v579
        %v1099 = vmul.f32 %v1095, %v583
        %v1100 = vmul.f32 %v1095, %v587
        %v1101 = vmul.f32 %v1095, %v591
        %v1102 = vmul.f32 %v1095, %v595
        %v1103 = vmul.f32 %v1095, %v599
        %v1104 = vmul.f32 %v1095, %v603
        %v1105 = vmul.f32 %v1095, %v607
        %v1106 = vmul.f32 %v1095, %v611
        %1117 = vrot.lane.b32.xlu0 %v1097, 126
        %v1118 = vpop.permute.xlu0 %1117
        %1119 = vrot.lane.b32.xlu0 %v1098, 126
        %v1120 = vpop.permute.xlu0 %1119
        %1121 = vrot.lane.b32.xlu0 %v1099, 126
        %v1122 = vpop.permute.xlu0 %1121
        %1123 = vrot.lane.b32.xlu0 %v1100, 126
        %v1124 = vpop.permute.xlu0 %1123
        %1125 = vrot.lane.b32.xlu0 %v1101, 126
        %v1126 = vpop.permute.xlu0 %1125
        %1127 = vrot.lane.b32.xlu0 %v1102, 126
        %v1128 = vpop.permute.xlu0 %1127
        %1129 = vrot.lane.b32.xlu0 %v1103, 126
        %v1130 = vpop.permute.xlu0 %1129
        %1131 = vrot.lane.b32.xlu0 %v1104, 126
        %v1132 = vpop.permute.xlu0 %1131
        %1133 = vrot.lane.b32.xlu0 %v1105, 126
        %v1134 = vpop.permute.xlu0 %1133
        %1135 = vrot.lane.b32.xlu0 %v1106, 126
        %v1136 = vpop.permute.xlu0 %1135
        %v1137 = vsel %vm750, %v1118, %v1120
        %v1138 = vsel %vm750, %v1120, %v1122
        %v1139 = vsel %vm750, %v1122, %v1124
        %v1140 = vsel %vm750, %v1124, %v1126
        %v1141 = vsel %vm750, %v1126, %v1128
        %v1142 = vsel %vm750, %v1128, %v1130
        %v1143 = vsel %vm750, %v1130, %v1132
        %v1144 = vsel %vm750, %v1132, %v1134
        %v1145 = vsel %vm750, %v1134, %v1136
        %v1156 = vadd.f32 %v1083, %v1137
        %v1157 = vadd.f32 %v1084, %v1138
        %v1158 = vadd.f32 %v1085, %v1139
        %v1159 = vadd.f32 %v1086, %v1140
        %v1160 = vadd.f32 %v1087, %v1141
        %v1161 = vadd.f32 %v1088, %v1142
        %v1162 = vadd.f32 %v1089, %v1143
        %v1163 = vadd.f32 %v1090, %v1144
        %v1164 = vadd.f32 %v1091, %v1145
        %v1165 = vadd.f32 %v1092, %v1136
        %1176 = vrot.lane.b32.xlu0 %v1156, 96
        %v1177 = vpop.permute.xlu0 %1176
        %1178 = vrot.lane.b32.xlu0 %v1157, 96
        %v1179 = vpop.permute.xlu0 %1178
        %1180 = vrot.lane.b32.xlu0 %v1158, 96
        %v1181 = vpop.permute.xlu0 %1180
        %1182 = vrot.lane.b32.xlu0 %v1159, 96
        %v1183 = vpop.permute.xlu0 %1182
        %1184 = vrot.lane.b32.xlu0 %v1160, 96
        %v1185 = vpop.permute.xlu0 %1184
        %1186 = vrot.lane.b32.xlu0 %v1161, 96
        %v1187 = vpop.permute.xlu0 %1186
        %1188 = vrot.lane.b32.xlu0 %v1162, 96
        %v1189 = vpop.permute.xlu0 %1188
        %1190 = vrot.lane.b32.xlu0 %v1163, 96
        %v1191 = vpop.permute.xlu0 %1190
        %1192 = vrot.lane.b32.xlu0 %v1164, 96
        %v1193 = vpop.permute.xlu0 %1192
        %1194 = vrot.lane.b32.xlu0 %v1165, 96
        %v1195 = vpop.permute.xlu0 %1194
        %vm1196 = vcmask 785408
        %v1197 = vsel %vm1196, %v1177, %v1179
        %v1198 = vsel %vm1196, %v1179, %v1181
        %v1199 = vsel %vm1196, %v1181, %v1183
        %v1200 = vsel %vm1196, %v1183, %v1185
        %v1201 = vsel %vm1196, %v1185, %v1187
        %v1202 = vsel %vm1196, %v1187, %v1189
        %v1203 = vsel %vm1196, %v1189, %v1191
        %v1204 = vsel %vm1196, %v1191, %v1193
        %v1205 = vsel %vm1196, %v1193, %v1195
        %v1216 = vadd.f32 %v993, %v1197
        %v1217 = vadd.f32 %v994, %v1198
        %v1218 = vadd.f32 %v995, %v1199
        %v1219 = vadd.f32 %v996, %v1200
        %v1220 = vadd.f32 %v997, %v1201
        %v1221 = vadd.f32 %v998, %v1202
        %v1222 = vadd.f32 %v999, %v1203
        %v1223 = vadd.f32 %v1000, %v1204
        %v1224 = vadd.f32 %v1001, %v1205
        %v1225 = vadd.f32 %v1002, %v1195
        %s1226 = scalar_lea.vmem %s1, 24
        %v1227 = vld [vmem:[%s1226] sm:$0xff]
        %1229 = vset.pattern.permute.xlu0 0
        %1230 = vperm.xlu0 %1229, %v1227
        %v1231 = vpop.permute.xlu0 %1230
        %v1233 = vmul.f32 %v1231, %v575
        %v1234 = vmul.f32 %v1231, %v579
        %v1235 = vmul.f32 %v1231, %v583
        %v1236 = vmul.f32 %v1231, %v587
        %v1237 = vmul.f32 %v1231, %v591
        %v1238 = vmul.f32 %v1231, %v595
        %v1239 = vmul.f32 %v1231, %v599
        %v1240 = vmul.f32 %v1231, %v603
        %v1241 = vmul.f32 %v1231, %v607
        %v1242 = vmul.f32 %v1231, %v611
        %1243 = vset.pattern.permute.xlu0 1
        %1244 = vperm.xlu0 %1243, %v1227
        %v1245 = vpop.permute.xlu0 %1244
        %v1247 = vmul.f32 %v1245, %v575
        %v1248 = vmul.f32 %v1245, %v579
        %v1249 = vmul.f32 %v1245, %v583
        %v1250 = vmul.f32 %v1245, %v587
        %v1251 = vmul.f32 %v1245, %v591
        %v1252 = vmul.f32 %v1245, %v595
        %v1253 = vmul.f32 %v1245, %v599
        %v1254 = vmul.f32 %v1245, %v603
        %v1255 = vmul.f32 %v1245, %v607
        %v1256 = vmul.f32 %v1245, %v611
        %1267 = vrot.lane.b32.xlu0 %v1247, 127
        %v1268 = vpop.permute.xlu0 %1267
        %1269 = vrot.lane.b32.xlu0 %v1248, 127
        %v1270 = vpop.permute.xlu0 %1269
        %1271 = vrot.lane.b32.xlu0 %v1249, 127
        %v1272 = vpop.permute.xlu0 %1271
        %1273 = vrot.lane.b32.xlu0 %v1250, 127
        %v1274 = vpop.permute.xlu0 %1273
        %1275 = vrot.lane.b32.xlu0 %v1251, 127
        %v1276 = vpop.permute.xlu0 %1275
        %1277 = vrot.lane.b32.xlu0 %v1252, 127
        %v1278 = vpop.permute.xlu0 %1277
        %1279 = vrot.lane.b32.xlu0 %v1253, 127
        %v1280 = vpop.permute.xlu0 %1279
        %1281 = vrot.lane.b32.xlu0 %v1254, 127
        %v1282 = vpop.permute.xlu0 %1281
        %1283 = vrot.lane.b32.xlu0 %v1255, 127
        %v1284 = vpop.permute.xlu0 %1283
        %1285 = vrot.lane.b32.xlu0 %v1256, 127
        %v1286 = vpop.permute.xlu0 %1285
        %v1287 = vsel %vm676, %v1268, %v1270
        %v1288 = vsel %vm676, %v1270, %v1272
        %v1289 = vsel %vm676, %v1272, %v1274
        %v1290 = vsel %vm676, %v1274, %v1276
        %v1291 = vsel %vm676, %v1276, %v1278
        %v1292 = vsel %vm676, %v1278, %v1280
        %v1293 = vsel %vm676, %v1280, %v1282
        %v1294 = vsel %vm676, %v1282, %v1284
        %v1295 = vsel %vm676, %v1284, %v1286
        %v1306 = vadd.f32 %v1233, %v1287
        %v1307 = vadd.f32 %v1234, %v1288
        %v1308 = vadd.f32 %v1235, %v1289
        %v1309 = vadd.f32 %v1236, %v1290
        %v1310 = vadd.f32 %v1237, %v1291
        %v1311 = vadd.f32 %v1238, %v1292
        %v1312 = vadd.f32 %v1239, %v1293
        %v1313 = vadd.f32 %v1240, %v1294
        %v1314 = vadd.f32 %v1241, %v1295
        %v1315 = vadd.f32 %v1242, %v1286
        %1316 = vset.pattern.permute.xlu0 2
        %1317 = vperm.xlu0 %1316, %v1227
        %v1318 = vpop.permute.xlu0 %1317
        %v1320 = vmul.f32 %v1318, %v575
        %v1321 = vmul.f32 %v1318, %v579
        %v1322 = vmul.f32 %v1318, %v583
        %v1323 = vmul.f32 %v1318, %v587
        %v1324 = vmul.f32 %v1318, %v591
        %v1325 = vmul.f32 %v1318, %v595
        %v1326 = vmul.f32 %v1318, %v599
        %v1327 = vmul.f32 %v1318, %v603
        %v1328 = vmul.f32 %v1318, %v607
        %v1329 = vmul.f32 %v1318, %v611
        %1340 = vrot.lane.b32.xlu0 %v1320, 126
        %v1341 = vpop.permute.xlu0 %1340
        %1342 = vrot.lane.b32.xlu0 %v1321, 126
        %v1343 = vpop.permute.xlu0 %1342
        %1344 = vrot.lane.b32.xlu0 %v1322, 126
        %v1345 = vpop.permute.xlu0 %1344
        %1346 = vrot.lane.b32.xlu0 %v1323, 126
        %v1347 = vpop.permute.xlu0 %1346
        %1348 = vrot.lane.b32.xlu0 %v1324, 126
        %v1349 = vpop.permute.xlu0 %1348
        %1350 = vrot.lane.b32.xlu0 %v1325, 126
        %v1351 = vpop.permute.xlu0 %1350
        %1352 = vrot.lane.b32.xlu0 %v1326, 126
        %v1353 = vpop.permute.xlu0 %1352
        %1354 = vrot.lane.b32.xlu0 %v1327, 126
        %v1355 = vpop.permute.xlu0 %1354
        %1356 = vrot.lane.b32.xlu0 %v1328, 126
        %v1357 = vpop.permute.xlu0 %1356
        %1358 = vrot.lane.b32.xlu0 %v1329, 126
        %v1359 = vpop.permute.xlu0 %1358
        %v1360 = vsel %vm750, %v1341, %v1343
        %v1361 = vsel %vm750, %v1343, %v1345
        %v1362 = vsel %vm750, %v1345, %v1347
        %v1363 = vsel %vm750, %v1347, %v1349
        %v1364 = vsel %vm750, %v1349, %v1351
        %v1365 = vsel %vm750, %v1351, %v1353
        %v1366 = vsel %vm750, %v1353, %v1355
        %v1367 = vsel %vm750, %v1355, %v1357
        %v1368 = vsel %vm750, %v1357, %v1359
        %v1379 = vadd.f32 %v1306, %v1360
        %v1380 = vadd.f32 %v1307, %v1361
        %v1381 = vadd.f32 %v1308, %v1362
        %v1382 = vadd.f32 %v1309, %v1363
        %v1383 = vadd.f32 %v1310, %v1364
        %v1384 = vadd.f32 %v1311, %v1365
        %v1385 = vadd.f32 %v1312, %v1366
        %v1386 = vadd.f32 %v1313, %v1367
        %v1387 = vadd.f32 %v1314, %v1368
        %v1388 = vadd.f32 %v1315, %v1359
        %1399 = vrot.lane.b32.xlu0 %v1379, 80
        %v1400 = vpop.permute.xlu0 %1399
        %1401 = vrot.lane.b32.xlu0 %v1380, 80
        %v1402 = vpop.permute.xlu0 %1401
        %1403 = vrot.lane.b32.xlu0 %v1381, 80
        %v1404 = vpop.permute.xlu0 %1403
        %1405 = vrot.lane.b32.xlu0 %v1382, 80
        %v1406 = vpop.permute.xlu0 %1405
        %1407 = vrot.lane.b32.xlu0 %v1383, 80
        %v1408 = vpop.permute.xlu0 %1407
        %1409 = vrot.lane.b32.xlu0 %v1384, 80
        %v1410 = vpop.permute.xlu0 %1409
        %1411 = vrot.lane.b32.xlu0 %v1385, 80
        %v1412 = vpop.permute.xlu0 %1411
        %1413 = vrot.lane.b32.xlu0 %v1386, 80
        %v1414 = vpop.permute.xlu0 %1413
        %1415 = vrot.lane.b32.xlu0 %v1387, 80
        %v1416 = vpop.permute.xlu0 %1415
        %1417 = vrot.lane.b32.xlu0 %v1388, 80
        %v1418 = vpop.permute.xlu0 %1417
        %vm1419 = vcmask 654336
        %v1420 = vsel %vm1419, %v1400, %v1402
        %v1421 = vsel %vm1419, %v1402, %v1404
        %v1422 = vsel %vm1419, %v1404, %v1406
        %v1423 = vsel %vm1419, %v1406, %v1408
        %v1424 = vsel %vm1419, %v1408, %v1410
        %v1425 = vsel %vm1419, %v1410, %v1412
        %v1426 = vsel %vm1419, %v1412, %v1414
        %v1427 = vsel %vm1419, %v1414, %v1416
        %v1428 = vsel %vm1419, %v1416, %v1418
        %v1439 = vadd.f32 %v1216, %v1420
        %v1440 = vadd.f32 %v1217, %v1421
        %v1441 = vadd.f32 %v1218, %v1422
        %v1442 = vadd.f32 %v1219, %v1423
        %v1443 = vadd.f32 %v1220, %v1424
        %v1444 = vadd.f32 %v1221, %v1425
        %v1445 = vadd.f32 %v1222, %v1426
        %v1446 = vadd.f32 %v1223, %v1427
        %v1447 = vadd.f32 %v1224, %v1428
        %v1448 = vadd.f32 %v1225, %v1418
        %s1449 = scalar_lea.vmem %s1, 32
        %v1450 = vld [vmem:[%s1449] sm:$0xff]
        %1452 = vset.pattern.permute.xlu0 0
        %1453 = vperm.xlu0 %1452, %v1450
        %v1454 = vpop.permute.xlu0 %1453
        %v1456 = vmul.f32 %v1454, %v575
        %v1457 = vmul.f32 %v1454, %v579
        %v1458 = vmul.f32 %v1454, %v583
        %v1459 = vmul.f32 %v1454, %v587
        %v1460 = vmul.f32 %v1454, %v591
        %v1461 = vmul.f32 %v1454, %v595
        %v1462 = vmul.f32 %v1454, %v599
        %v1463 = vmul.f32 %v1454, %v603
        %v1464 = vmul.f32 %v1454, %v607
        %v1465 = vmul.f32 %v1454, %v611
        %v1466 = vld [vmem:[%s492] sm:$0xff]
        %v1467 = vld [vmem:[%s492 + $0x8] sm:$0x7]
        %1468 = vset.pattern.permute.xlu0 1
        %1469 = vperm.xlu0 %1468, %v1450
        %v1470 = vpop.permute.xlu0 %1469
        %v1474 = vlaneseq
        %v1475 = vshrl.u32 %v1474, 7
        %v1476 = vsub.s32 0, %v1475
        %v1477 = vrot.slane %v1466, %v1476
        %v1478 = vlaneseq
        %v1479 = vshrl.u32 %v1478, 7
        %v1480 = vsub.s32 1, %v1479
        %v1481 = vrot.slane %v1466, %v1480
        %v1482 = vlaneseq
        %v1483 = vshrl.u32 %v1482, 7
        %v1484 = vsub.s32 2, %v1483
        %v1485 = vrot.slane %v1466, %v1484
        %v1486 = vlaneseq
        %v1487 = vshrl.u32 %v1486, 7
        %v1488 = vsub.s32 3, %v1487
        %v1489 = vrot.slane %v1466, %v1488
        %v1490 = vlaneseq
        %v1491 = vshrl.u32 %v1490, 7
        %v1492 = vsub.s32 4, %v1491
        %v1493 = vrot.slane %v1466, %v1492
        %v1494 = vlaneseq
        %v1495 = vshrl.u32 %v1494, 7
        %v1496 = vsub.s32 5, %v1495
        %v1497 = vrot.slane %v1466, %v1496
        %v1498 = vlaneseq
        %v1499 = vshrl.u32 %v1498, 7
        %v1500 = vsub.s32 6, %v1499
        %v1501 = vrot.slane %v1466, %v1500
        %v1502 = vlaneseq
        %v1503 = vshrl.u32 %v1502, 7
        %v1504 = vsub.s32 7, %v1503
        %v1505 = vrot.slane %v1466, %v1504
        %v1506 = vlaneseq
        %v1507 = vshrl.u32 %v1506, 7
        %v1508 = vsub.s32 0, %v1507
        %v1509 = vrot.slane %v1467, %v1508
        %v1510 = vlaneseq
        %v1511 = vshrl.u32 %v1510, 7
        %v1512 = vsub.s32 1, %v1511
        %v1513 = vrot.slane %v1467, %v1512
        %v1514 = vlaneseq
        %v1515 = vshrl.u32 %v1514, 7
        %v1516 = vsub.s32 2, %v1515
        %v1517 = vrot.slane %v1467, %v1516
        %v1529 = vmul.f32 %v1470, %v1477
        %v1530 = vmul.f32 %v1470, %v1481
        %v1531 = vmul.f32 %v1470, %v1485
        %v1532 = vmul.f32 %v1470, %v1489
        %v1533 = vmul.f32 %v1470, %v1493
        %v1534 = vmul.f32 %v1470, %v1497
        %v1535 = vmul.f32 %v1470, %v1501
        %v1536 = vmul.f32 %v1470, %v1505
        %v1537 = vmul.f32 %v1470, %v1509
        %v1538 = vmul.f32 %v1470, %v1513
        %v1539 = vmul.f32 %v1470, %v1517
        %1551 = vrot.lane.b32.xlu0 %v1529, 127
        %v1552 = vpop.permute.xlu0 %1551
        %1553 = vrot.lane.b32.xlu0 %v1530, 127
        %v1554 = vpop.permute.xlu0 %1553
        %1555 = vrot.lane.b32.xlu0 %v1531, 127
        %v1556 = vpop.permute.xlu0 %1555
        %1557 = vrot.lane.b32.xlu0 %v1532, 127
        %v1558 = vpop.permute.xlu0 %1557
        %1559 = vrot.lane.b32.xlu0 %v1533, 127
        %v1560 = vpop.permute.xlu0 %1559
        %1561 = vrot.lane.b32.xlu0 %v1534, 127
        %v1562 = vpop.permute.xlu0 %1561
        %1563 = vrot.lane.b32.xlu0 %v1535, 127
        %v1564 = vpop.permute.xlu0 %1563
        %1565 = vrot.lane.b32.xlu0 %v1536, 127
        %v1566 = vpop.permute.xlu0 %1565
        %1567 = vrot.lane.b32.xlu0 %v1537, 127
        %v1568 = vpop.permute.xlu0 %1567
        %1569 = vrot.lane.b32.xlu0 %v1538, 127
        %v1570 = vpop.permute.xlu0 %1569
        %1571 = vrot.lane.b32.xlu0 %v1539, 127
        %v1572 = vpop.permute.xlu0 %1571
        %v1573 = vsel %vm676, %v1552, %v1554
        %v1574 = vsel %vm676, %v1554, %v1556
        %v1575 = vsel %vm676, %v1556, %v1558
        %v1576 = vsel %vm676, %v1558, %v1560
        %v1577 = vsel %vm676, %v1560, %v1562
        %v1578 = vsel %vm676, %v1562, %v1564
        %v1579 = vsel %vm676, %v1564, %v1566
        %v1580 = vsel %vm676, %v1566, %v1568
        %v1581 = vsel %vm676, %v1568, %v1570
        %v1582 = vsel %vm676, %v1570, %v1572
        %v1593 = vadd.f32 %v1456, %v1573
        %v1594 = vadd.f32 %v1457, %v1574
        %v1595 = vadd.f32 %v1458, %v1575
        %v1596 = vadd.f32 %v1459, %v1576
        %v1597 = vadd.f32 %v1460, %v1577
        %v1598 = vadd.f32 %v1461, %v1578
        %v1599 = vadd.f32 %v1462, %v1579
        %v1600 = vadd.f32 %v1463, %v1580
        %v1601 = vadd.f32 %v1464, %v1581
        %v1602 = vadd.f32 %v1465, %v1582
        %1603 = vset.pattern.permute.xlu0 2
        %1604 = vperm.xlu0 %1603, %v1450
        %v1605 = vpop.permute.xlu0 %1604
        %v1607 = vmul.f32 %v1605, %v1477
        %v1608 = vmul.f32 %v1605, %v1481
        %v1609 = vmul.f32 %v1605, %v1485
        %v1610 = vmul.f32 %v1605, %v1489
        %v1611 = vmul.f32 %v1605, %v1493
        %v1612 = vmul.f32 %v1605, %v1497
        %v1613 = vmul.f32 %v1605, %v1501
        %v1614 = vmul.f32 %v1605, %v1505
        %v1615 = vmul.f32 %v1605, %v1509
        %v1616 = vmul.f32 %v1605, %v1513
        %v1617 = vmul.f32 %v1605, %v1517
        %1629 = vrot.lane.b32.xlu0 %v1607, 126
        %v1630 = vpop.permute.xlu0 %1629
        %1631 = vrot.lane.b32.xlu0 %v1608, 126
        %v1632 = vpop.permute.xlu0 %1631
        %1633 = vrot.lane.b32.xlu0 %v1609, 126
        %v1634 = vpop.permute.xlu0 %1633
        %1635 = vrot.lane.b32.xlu0 %v1610, 126
        %v1636 = vpop.permute.xlu0 %1635
        %1637 = vrot.lane.b32.xlu0 %v1611, 126
        %v1638 = vpop.permute.xlu0 %1637
        %1639 = vrot.lane.b32.xlu0 %v1612, 126
        %v1640 = vpop.permute.xlu0 %1639
        %1641 = vrot.lane.b32.xlu0 %v1613, 126
        %v1642 = vpop.permute.xlu0 %1641
        %1643 = vrot.lane.b32.xlu0 %v1614, 126
        %v1644 = vpop.permute.xlu0 %1643
        %1645 = vrot.lane.b32.xlu0 %v1615, 126
        %v1646 = vpop.permute.xlu0 %1645
        %1647 = vrot.lane.b32.xlu0 %v1616, 126
        %v1648 = vpop.permute.xlu0 %1647
        %1649 = vrot.lane.b32.xlu0 %v1617, 126
        %v1650 = vpop.permute.xlu0 %1649
        %v1651 = vsel %vm750, %v1630, %v1632
        %v1652 = vsel %vm750, %v1632, %v1634
        %v1653 = vsel %vm750, %v1634, %v1636
        %v1654 = vsel %vm750, %v1636, %v1638
        %v1655 = vsel %vm750, %v1638, %v1640
        %v1656 = vsel %vm750, %v1640, %v1642
        %v1657 = vsel %vm750, %v1642, %v1644
        %v1658 = vsel %vm750, %v1644, %v1646
        %v1659 = vsel %vm750, %v1646, %v1648
        %v1660 = vsel %vm750, %v1648, %v1650
        %v1671 = vadd.f32 %v1593, %v1651
        %v1672 = vadd.f32 %v1594, %v1652
        %v1673 = vadd.f32 %v1595, %v1653
        %v1674 = vadd.f32 %v1596, %v1654
        %v1675 = vadd.f32 %v1597, %v1655
        %v1676 = vadd.f32 %v1598, %v1656
        %v1677 = vadd.f32 %v1599, %v1657
        %v1678 = vadd.f32 %v1600, %v1658
        %v1679 = vadd.f32 %v1601, %v1659
        %v1680 = vadd.f32 %v1602, %v1660
        %1691 = vrot.lane.b32.xlu0 %v1671, 64
        %v1692 = vpop.permute.xlu0 %1691
        %1693 = vrot.lane.b32.xlu0 %v1672, 64
        %v1694 = vpop.permute.xlu0 %1693
        %1695 = vrot.lane.b32.xlu0 %v1673, 64
        %v1696 = vpop.permute.xlu0 %1695
        %1697 = vrot.lane.b32.xlu0 %v1674, 64
        %v1698 = vpop.permute.xlu0 %1697
        %1699 = vrot.lane.b32.xlu0 %v1675, 64
        %v1700 = vpop.permute.xlu0 %1699
        %1701 = vrot.lane.b32.xlu0 %v1676, 64
        %v1702 = vpop.permute.xlu0 %1701
        %1703 = vrot.lane.b32.xlu0 %v1677, 64
        %v1704 = vpop.permute.xlu0 %1703
        %1705 = vrot.lane.b32.xlu0 %v1678, 64
        %v1706 = vpop.permute.xlu0 %1705
        %1707 = vrot.lane.b32.xlu0 %v1679, 64
        %v1708 = vpop.permute.xlu0 %1707
        %1709 = vrot.lane.b32.xlu0 %v1680, 64
        %v1710 = vpop.permute.xlu0 %1709
        %vm1711 = vcmask 523264
        %v1712 = vsel %vm1711, %v1692, %v1694
        %v1713 = vsel %vm1711, %v1694, %v1696
        %v1714 = vsel %vm1711, %v1696, %v1698
        %v1715 = vsel %vm1711, %v1698, %v1700
        %v1716 = vsel %vm1711, %v1700, %v1702
        %v1717 = vsel %vm1711, %v1702, %v1704
        %v1718 = vsel %vm1711, %v1704, %v1706
        %v1719 = vsel %vm1711, %v1706, %v1708
        %v1720 = vsel %vm1711, %v1708, %v1710
        %v1731 = vadd.f32 %v1439, %v1712
        %v1732 = vadd.f32 %v1440, %v1713
        %v1733 = vadd.f32 %v1441, %v1714
        %v1734 = vadd.f32 %v1442, %v1715
        %v1735 = vadd.f32 %v1443, %v1716
        %v1736 = vadd.f32 %v1444, %v1717
        %v1737 = vadd.f32 %v1445, %v1718
        %v1738 = vadd.f32 %v1446, %v1719
        %v1739 = vadd.f32 %v1447, %v1720
        %v1740 = vadd.f32 %v1448, %v1710
        %v1741 = vld [vmem:[%s2] sm:$0xff]
        %1743 = vset.pattern.permute.xlu0 0
        %1744 = vperm.xlu0 %1743, %v1741
        %v1745 = vpop.permute.xlu0 %1744
        %v1747 = vadd.f32 %v1731, %v1745
        %v1748 = vadd.f32 %v1732, %v1745
        %v1749 = vadd.f32 %v1733, %v1745
        %v1750 = vadd.f32 %v1734, %v1745
        %v1751 = vadd.f32 %v1735, %v1745
        %v1752 = vadd.f32 %v1736, %v1745
        %v1753 = vadd.f32 %v1737, %v1745
        %v1754 = vadd.f32 %v1738, %v1745
        %v1755 = vadd.f32 %v1739, %v1745
        %v1756 = vadd.f32 %v1740, %v1745
        %vm1757 = vcmp.ge.f32.partialorder %v1747, 0.0
        %vm1758 = vcmp.ge.f32.partialorder %v1748, 0.0
        %vm1759 = vcmp.ge.f32.partialorder %v1749, 0.0
        %vm1760 = vcmp.ge.f32.partialorder %v1750, 0.0
        %vm1761 = vcmp.ge.f32.partialorder %v1751, 0.0
        %vm1762 = vcmp.ge.f32.partialorder %v1752, 0.0
        %vm1763 = vcmp.ge.f32.partialorder %v1753, 0.0
        %vm1764 = vcmp.ge.f32.partialorder %v1754, 0.0
        %vm1765 = vcmp.ge.f32.partialorder %v1755, 0.0
        %vm1766 = vcmp.ge.f32.partialorder %v1756, 0.0
        %v1767 = vmul.f32 %v1747, 0.2
        %v1768 = vmul.f32 %v1748, 0.2
        %v1769 = vmul.f32 %v1749, 0.2
        %v1770 = vmul.f32 %v1750, 0.2
        %v1771 = vmul.f32 %v1751, 0.2
        %v1772 = vmul.f32 %v1752, 0.2
        %v1773 = vmul.f32 %v1753, 0.2
        %v1774 = vmul.f32 %v1754, 0.2
        %v1775 = vmul.f32 %v1755, 0.2
        %v1776 = vmul.f32 %v1756, 0.2
        %v1777 = vsel %vm1757, %v1747, %v1767
        %v1778 = vsel %vm1758, %v1748, %v1768
        %v1779 = vsel %vm1759, %v1749, %v1769
        %v1780 = vsel %vm1760, %v1750, %v1770
        %v1781 = vsel %vm1761, %v1751, %v1771
        %v1782 = vsel %vm1762, %v1752, %v1772
        %v1783 = vsel %vm1763, %v1753, %v1773
        %v1784 = vsel %vm1764, %v1754, %v1774
        %v1785 = vsel %vm1765, %v1755, %v1775
        %v1786 = vsel %vm1766, %v1756, %v1776
        %1787 = vst [vmem:[%s534] sm:$0xff] %v1777
        %1788 = vst [vmem:[%s534 + $0x8] sm:$0xff] %v1778
        %1789 = vst [vmem:[%s534 + $0x10] sm:$0xff] %v1779
        %1790 = vst [vmem:[%s534 + $0x18] sm:$0xff] %v1780
        %1791 = vst [vmem:[%s534 + $0x20] sm:$0xff] %v1781
        %1792 = vst [vmem:[%s534 + $0x28] sm:$0xff] %v1782
        %1793 = vst [vmem:[%s534 + $0x30] sm:$0xff] %v1783
        %1794 = vst [vmem:[%s534 + $0x38] sm:$0xff] %v1784
        %1795 = vst [vmem:[%s534 + $0x40] sm:$0xff] %v1785
        %1796 = vst.msk [vmem:[%s534 + $0x48] sm:$0xff] %vm1711, %v1786
        %vm1797 = vcmask 654848
        %1798 = vst.msk [vmem:[%s534 + $0x48] sm:$0xff] %vm1797, 0.0
        %v1799 = vld [vmem:[%s3] sm:$0xff]
        %v1800 = vld [vmem:[%s3 + $0x8] sm:$0xff]
        %v1801 = vld [vmem:[%s534] sm:$0xff]
        %v1802 = vld [vmem:[%s534 + $0x8] sm:$0xff]
        %v1803 = vld [vmem:[%s534 + $0x10] sm:$0xff]
        %v1804 = vld [vmem:[%s534 + $0x18] sm:$0xff]
        %v1805 = vld [vmem:[%s534 + $0x20] sm:$0xff]
        %v1806 = vld [vmem:[%s534 + $0x28] sm:$0xff]
        %v1807 = vld [vmem:[%s534 + $0x30] sm:$0xff]
        %v1808 = vld [vmem:[%s534 + $0x38] sm:$0xff]
        %v1809 = vld [vmem:[%s534 + $0x40] sm:$0xff]
        %v1810 = vld [vmem:[%s534 + $0x48] sm:$0xff]
        %1821 = vrot.lane.b32.xlu0 %v1801, 127
        %v1822 = vpop.permute.xlu0 %1821
        %1823 = vrot.lane.b32.xlu0 %v1802, 127
        %v1824 = vpop.permute.xlu0 %1823
        %1825 = vrot.lane.b32.xlu0 %v1803, 127
        %v1826 = vpop.permute.xlu0 %1825
        %1827 = vrot.lane.b32.xlu0 %v1804, 127
        %v1828 = vpop.permute.xlu0 %1827
        %1829 = vrot.lane.b32.xlu0 %v1805, 127
        %v1830 = vpop.permute.xlu0 %1829
        %1831 = vrot.lane.b32.xlu0 %v1806, 127
        %v1832 = vpop.permute.xlu0 %1831
        %1833 = vrot.lane.b32.xlu0 %v1807, 127
        %v1834 = vpop.permute.xlu0 %1833
        %1835 = vrot.lane.b32.xlu0 %v1808, 127
        %v1836 = vpop.permute.xlu0 %1835
        %1837 = vrot.lane.b32.xlu0 %v1809, 127
        %v1838 = vpop.permute.xlu0 %1837
        %1839 = vrot.lane.b32.xlu0 %v1810, 127
        %v1840 = vpop.permute.xlu0 %1839
        %v1841 = vsel %vm676, %v1822, %v1824
        %v1842 = vsel %vm676, %v1824, %v1826
        %v1843 = vsel %vm676, %v1826, %v1828
        %v1844 = vsel %vm676, %v1828, %v1830
        %v1845 = vsel %vm676, %v1830, %v1832
        %v1846 = vsel %vm676, %v1832, %v1834
        %v1847 = vsel %vm676, %v1834, %v1836
        %v1848 = vsel %vm676, %v1836, %v1838
        %v1849 = vsel %vm676, %v1838, %v1840
        %1859 = vrot.lane.b32.xlu0 %v1801, 126
        %v1860 = vpop.permute.xlu0 %1859
        %1861 = vrot.lane.b32.xlu0 %v1802, 126
        %v1862 = vpop.permute.xlu0 %1861
        %1863 = vrot.lane.b32.xlu0 %v1803, 126
        %v1864 = vpop.permute.xlu0 %1863
        %1865 = vrot.lane.b32.xlu0 %v1804, 126
        %v1866 = vpop.permute.xlu0 %1865
        %1867 = vrot.lane.b32.xlu0 %v1805, 126
        %v1868 = vpop.permute.xlu0 %1867
        %1869 = vrot.lane.b32.xlu0 %v1806, 126
        %v1870 = vpop.permute.xlu0 %1869
        %1871 = vrot.lane.b32.xlu0 %v1807, 126
        %v1872 = vpop.permute.xlu0 %1871
        %1873 = vrot.lane.b32.xlu0 %v1808, 126
        %v1874 = vpop.permute.xlu0 %1873
        %1875 = vrot.lane.b32.xlu0 %v1809, 126
        %v1876 = vpop.permute.xlu0 %1875
        %1877 = vrot.lane.b32.xlu0 %v1810, 126
        %v1878 = vpop.permute.xlu0 %1877
        %v1879 = vsel %vm750, %v1860, %v1862
        %v1880 = vsel %vm750, %v1862, %v1864
        %v1881 = vsel %vm750, %v1864, %v1866
        %v1882 = vsel %vm750, %v1866, %v1868
        %v1883 = vsel %vm750, %v1868, %v1870
        %v1884 = vsel %vm750, %v1870, %v1872
        %v1885 = vsel %vm750, %v1872, %v1874
        %v1886 = vsel %vm750, %v1874, %v1876
        %v1887 = vsel %vm750, %v1876, %v1878
        %s1897 = scalar_lea.vmem %s3, 16
        %v1898 = vld [vmem:[%s1897] sm:$0xff]
        %v1899 = vld [vmem:[%s1897 + $0x8] sm:$0xff]
        %1900 = vrot.lane.b32.xlu0 %v1801, 112
        %v1901 = vpop.permute.xlu0 %1900
        %1902 = vrot.lane.b32.xlu0 %v1802, 112
        %v1903 = vpop.permute.xlu0 %1902
        %1904 = vrot.lane.b32.xlu0 %v1803, 112
        %v1905 = vpop.permute.xlu0 %1904
        %1906 = vrot.lane.b32.xlu0 %v1804, 112
        %v1907 = vpop.permute.xlu0 %1906
        %1908 = vrot.lane.b32.xlu0 %v1805, 112
        %v1909 = vpop.permute.xlu0 %1908
        %1910 = vrot.lane.b32.xlu0 %v1806, 112
        %v1911 = vpop.permute.xlu0 %1910
        %1912 = vrot.lane.b32.xlu0 %v1807, 112
        %v1913 = vpop.permute.xlu0 %1912
        %1914 = vrot.lane.b32.xlu0 %v1808, 112
        %v1915 = vpop.permute.xlu0 %1914
        %1916 = vrot.lane.b32.xlu0 %v1809, 112
        %v1917 = vpop.permute.xlu0 %1916
        %1918 = vrot.lane.b32.xlu0 %v1810, 112
        %v1919 = vpop.permute.xlu0 %1918
        %1920 = vrot.lane.b32.xlu0 %v1841, 112
        %v1921 = vpop.permute.xlu0 %1920
        %1922 = vrot.lane.b32.xlu0 %v1842, 112
        %v1923 = vpop.permute.xlu0 %1922
        %1924 = vrot.lane.b32.xlu0 %v1843, 112
        %v1925 = vpop.permute.xlu0 %1924
        %1926 = vrot.lane.b32.xlu0 %v1844, 112
        %v1927 = vpop.permute.xlu0 %1926
        %1928 = vrot.lane.b32.xlu0 %v1845, 112
        %v1929 = vpop.permute.xlu0 %1928
        %1930 = vrot.lane.b32.xlu0 %v1846, 112
        %v1931 = vpop.permute.xlu0 %1930
        %1932 = vrot.lane.b32.xlu0 %v1847, 112
        %v1933 = vpop.permute.xlu0 %1932
        %1934 = vrot.lane.b32.xlu0 %v1848, 112
        %v1935 = vpop.permute.xlu0 %1934
        %1936 = vrot.lane.b32.xlu0 %v1849, 112
        %v1937 = vpop.permute.xlu0 %1936
        %1938 = vrot.lane.b32.xlu0 %v1840, 112
        %v1939 = vpop.permute.xlu0 %1938
        %1940 = vrot.lane.b32.xlu0 %v1879, 112
        %v1941 = vpop.permute.xlu0 %1940
        %1942 = vrot.lane.b32.xlu0 %v1880, 112
        %v1943 = vpop.permute.xlu0 %1942
        %1944 = vrot.lane.b32.xlu0 %v1881, 112
        %v1945 = vpop.permute.xlu0 %1944
        %1946 = vrot.lane.b32.xlu0 %v1882, 112
        %v1947 = vpop.permute.xlu0 %1946
        %1948 = vrot.lane.b32.xlu0 %v1883, 112
        %v1949 = vpop.permute.xlu0 %1948
        %1950 = vrot.lane.b32.xlu0 %v1884, 112
        %v1951 = vpop.permute.xlu0 %1950
        %1952 = vrot.lane.b32.xlu0 %v1885, 112
        %v1953 = vpop.permute.xlu0 %1952
        %1954 = vrot.lane.b32.xlu0 %v1886, 112
        %v1955 = vpop.permute.xlu0 %1954
        %1956 = vrot.lane.b32.xlu0 %v1887, 112
        %v1957 = vpop.permute.xlu0 %1956
        %1958 = vrot.lane.b32.xlu0 %v1878, 112
        %v1959 = vpop.permute.xlu0 %1958
        %v1960 = vsel %vm973, %v1901, %v1903
        %v1961 = vsel %vm973, %v1903, %v1905
        %v1962 = vsel %vm973, %v1905, %v1907
        %v1963 = vsel %vm973, %v1907, %v1909
        %v1964 = vsel %vm973, %v1909, %v1911
        %v1965 = vsel %vm973, %v1911, %v1913
        %v1966 = vsel %vm973, %v1913, %v1915
        %v1967 = vsel %vm973, %v1915, %v1917
        %v1968 = vsel %vm973, %v1917, %v1919
        %v1969 = vsel %vm973, %v1921, %v1923
        %v1970 = vsel %vm973, %v1923, %v1925
        %v1971 = vsel %vm973, %v1925, %v1927
        %v1972 = vsel %vm973, %v1927, %v1929
        %v1973 = vsel %vm973, %v1929, %v1931
        %v1974 = vsel %vm973, %v1931, %v1933
        %v1975 = vsel %vm973, %v1933, %v1935
        %v1976 = vsel %vm973, %v1935, %v1937
        %v1977 = vsel %vm973, %v1937, %v1939
        %v1978 = vsel %vm973, %v1941, %v1943
        %v1979 = vsel %vm973, %v1943, %v1945
        %v1980 = vsel %vm973, %v1945, %v1947
        %v1981 = vsel %vm973, %v1947, %v1949
        %v1982 = vsel %vm973, %v1949, %v1951
        %v1983 = vsel %vm973, %v1951, %v1953
        %v1984 = vsel %vm973, %v1953, %v1955
        %v1985 = vsel %vm973, %v1955, %v1957
        %v1986 = vsel %vm973, %v1957, %v1959
        %vm2014 = vcmask 195584
        %v2016 = vsel %vm2014, %v1898, 0
        %v2019 = vsel %vm2014, %v1899, 0
        %2021 = vmatprep.subr.mxu0 %v1961
        %2022 = vmatpush1.msra.mxu0 %v1960
        %2023 = vmatprep.subr.mxu0 %v1970
        %2024 = vmatpush1.msra.mxu0 %v1969
        %2025 = vmatprep.subr.mxu0 %v1979
        %2026 = vmatpush1.msra.mxu0 %v1978
        %2027 = vmatprep.subr.mxu0 0.0
        %2028 = vmatpush1.msra.mxu0 0.0
        %2029 = vmatprep.subr.mxu0 0.0
        %2030 = vmatpush1.msra.mxu0 0.0
        %2031 = vmatprep.subr.mxu0 0.0
        %2032 = vmatpush1.msra.mxu0 0.0
        %2033 = vmatprep.subr.mxu0 0.0
        %2034 = vmatpush1.msra.mxu0 0.0
        %2035 = vmatprep.subr.mxu0 0.0
        %2036 = vmatpush1.msra.mxu0 0.0
        %2037 = vmatprep.subr.mxu0 0.0
        %2038 = vmatpush1.msra.mxu0 0.0
        %2039 = vmatprep.subr.mxu0 0.0
        %2040 = vmatpush1.msra.mxu0 0.0
        %2041 = vmatprep.subr.mxu0 0.0
        %2042 = vmatpush1.msra.mxu0 0.0
        %2043 = vmatprep.subr.mxu0 0.0
        %2044 = vmatpush1.msra.mxu0 0.0
        %2045 = vmatprep.subr.mxu0 0.0
        %2046 = vmatpush1.msra.mxu0 0.0
        %2047 = vmatprep.subr.mxu0 0.0
        %2048 = vmatpush1.msra.mxu0 0.0
        %2049 = vmatprep.subr.mxu0 0.0
        %2050 = vmatpush1.msra.mxu0 0.0
        %2051 = vmatprep.subr.mxu0 0.0
        %2052 = vmatpush1.msra.mxu0 0.0
        %2053 = vmatprep.subr.mxu0 0.0
        %2054 = vmatpush1.msra.mxu0 0.0
        %2055 = vmatprep.subr.mxu0 0.0
        %2056 = vmatpush1.msra.mxu0 0.0
        %2057 = vmatprep.subr.mxu0 0.0
        %2058 = vmatpush1.msra.mxu0 0.0
        %2059 = vmatprep.subr.mxu0 0.0
        %2060 = vmatpush1.msra.mxu0 0.0
        %2061 = vmatprep.subr.mxu0 0.0
        %2062 = vmatpush1.msra.mxu0 0.0
        %2063 = vmatprep.subr.mxu0 0.0
        %2064 = vmatpush1.msra.mxu0 0.0
        %2065 = vmatprep.subr.mxu0 0.0
        %2066 = vmatpush1.msra.mxu0 0.0
        %2067 = vmatprep.subr.mxu0 0.0
        %2068 = vmatpush1.msra.mxu0 0.0
        %2069 = vmatprep.subr.mxu0 0.0
        %2070 = vmatpush1.msra.mxu0 0.0
        %2071 = vmatprep.subr.mxu0 0.0
        %2072 = vmatpush1.msra.mxu0 0.0
        %2073 = vmatprep.subr.mxu0 0.0
        %2074 = vmatpush1.msra.mxu0 0.0
        %2075 = vmatprep.subr.mxu0 0.0
        %2076 = vmatpush1.msra.mxu0 0.0
        %2077 = vmatprep.subr.mxu0 0.0
        %2078 = vmatpush1.msra.mxu0 0.0
        %2079 = vmatprep.subr.mxu0 0.0
        %2080 = vmatpush1.msra.mxu0 0.0
        %2081 = vmatprep.subr.mxu0 0.0
        %2082 = vmatpush1.msra.mxu0 0.0
        %2083 = vmatprep.subr.mxu0 0.0
        %2084 = vmatpush1.msra.mxu0 0.0
        %2085 = vmatprep.mubr.f32.mxu0 0.0
        %2086 = vmatmul.mubr.f32.gmra.mrb[0].mxu0 %v2016
        %v2087 = vpop.f32.mrb[0].mxu0
        %v2088 = vadd.f32 0.0, %v2087
        %v2089 = vpop.f32.mrb[0].mxu0
        %v2090 = vadd.f32 0.0, %v2089
        %2091 = vmatprep.mubr.f32.mxu0 0.0
        %2092 = vmatmul.mubr.f32.gmra.mrb[0].mxu0 %v2019
        %v2093 = vpop.f32.mrb[0].mxu0
        %v2094 = vadd.f32 0.0, %v2093
        %v2095 = vpop.f32.mrb[0].mxu0
        %v2096 = vadd.f32 0.0, %v2095
        %2097 = vdwg.mxu0
        %2098 = vmatprep.subr.mxu0 %v1963
        %2099 = vmatpush1.msra.mxu0 %v1962
        %2100 = vmatprep.subr.mxu0 %v1972
        %2101 = vmatpush1.msra.mxu0 %v1971
        %2102 = vmatprep.subr.mxu0 %v1981
        %2103 = vmatpush1.msra.mxu0 %v1980
        %2104 = vmatprep.subr.mxu0 0.0
        %2105 = vmatpush1.msra.mxu0 0.0
        %2106 = vmatprep.subr.mxu0 0.0
        %2107 = vmatpush1.msra.mxu0 0.0
        %2108 = vmatprep.subr.mxu0 0.0
        %2109 = vmatpush1.msra.mxu0 0.0
        %2110 = vmatprep.subr.mxu0 0.0
        %2111 = vmatpush1.msra.mxu0 0.0
        %2112 = vmatprep.subr.mxu0 0.0
        %2113 = vmatpush1.msra.mxu0 0.0
        %2114 = vmatprep.subr.mxu0 0.0
        %2115 = vmatpush1.msra.mxu0 0.0
        %2116 = vmatprep.subr.mxu0 0.0
        %2117 = vmatpush1.msra.mxu0 0.0
        %2118 = vmatprep.subr.mxu0 0.0
        %2119 = vmatpush1.msra.mxu0 0.0
        %2120 = vmatprep.subr.mxu0 0.0
        %2121 = vmatpush1.msra.mxu0 0.0
        %2122 = vmatprep.subr.mxu0 0.0
        %2123 = vmatpush1.msra.mxu0 0.0
        %2124 = vmatprep.subr.mxu0 0.0
        %2125 = vmatpush1.msra.mxu0 0.0
        %2126 = vmatprep.subr.mxu0 0.0
        %2127 = vmatpush1.msra.mxu0 0.0
        %2128 = vmatprep.subr.mxu0 0.0
        %2129 = vmatpush1.msra.mxu0 0.0
        %2130 = vmatprep.subr.mxu0 0.0
        %2131 = vmatpush1.msra.mxu0 0.0
        %2132 = vmatprep.subr.mxu0 0.0
        %2133 = vmatpush1.msra.mxu0 0.0
        %2134 = vmatprep.subr.mxu0 0.0
        %2135 = vmatpush1.msra.mxu0 0.0
        %2136 = vmatprep.subr.mxu0 0.0
        %2137 = vmatpush1.msra.mxu0 0.0
        %2138 = vmatprep.subr.mxu0 0.0
        %2139 = vmatpush1.msra.mxu0 0.0
        %2140 = vmatprep.subr.mxu0 0.0
        %2141 = vmatpush1.msra.mxu0 0.0
        %2142 = vmatprep.subr.mxu0 0.0
        %2143 = vmatpush1.msra.mxu0 0.0
        %2144 = vmatprep.subr.mxu0 0.0
        %2145 = vmatpush1.msra.mxu0 0.0
        %2146 = vmatprep.subr.mxu0 0.0
        %2147 = vmatpush1.msra.mxu0 0.0
        %2148 = vmatprep.subr.mxu0 0.0
        %2149 = vmatpush1.msra.mxu0 0.0
        %2150 = vmatprep.subr.mxu0 0.0
        %2151 = vmatpush1.msra.mxu0 0.0
        %2152 = vmatprep.subr.mxu0 0.0
        %2153 = vmatpush1.msra.mxu0 0.0
        %2154 = vmatprep.subr.mxu0 0.0
        %2155 = vmatpush1.msra.mxu0 0.0
        %2156 = vmatprep.subr.mxu0 0.0
        %2157 = vmatpush1.msra.mxu0 0.0
        %2158 = vmatprep.subr.mxu0 0.0
        %2159 = vmatpush1.msra.mxu0 0.0
        %2160 = vmatprep.subr.mxu0 0.0
        %2161 = vmatpush1.msra.mxu0 0.0
        %2162 = vmatprep.mubr.f32.mxu0 0.0
        %2163 = vmatmul.mubr.f32.gmra.mrb[0].mxu0 %v2016
        %v2164 = vpop.f32.mrb[0].mxu0
        %v2165 = vadd.f32 0.0, %v2164
        %v2166 = vpop.f32.mrb[0].mxu0
        %v2167 = vadd.f32 0.0, %v2166
        %2168 = vmatprep.mubr.f32.mxu0 0.0
        %2169 = vmatmul.mubr.f32.gmra.mrb[0].mxu0 %v2019
        %v2170 = vpop.f32.mrb[0].mxu0
        %v2171 = vadd.f32 0.0, %v2170
        %v2172 = vpop.f32.mrb[0].mxu0
        %v2173 = vadd.f32 0.0, %v2172
        %2174 = vdwg.mxu0
        %2175 = vmatprep.subr.mxu0 %v1965
        %2176 = vmatpush1.msra.mxu0 %v1964
        %2177 = vmatprep.subr.mxu0 %v1974
        %2178 = vmatpush1.msra.mxu0 %v1973
        %2179 = vmatprep.subr.mxu0 %v1983
        %2180 = vmatpush1.msra.mxu0 %v1982
        %2181 = vmatprep.subr.mxu0 0.0
        %2182 = vmatpush1.msra.mxu0 0.0
        %2183 = vmatprep.subr.mxu0 0.0
        %2184 = vmatpush1.msra.mxu0 0.0
        %2185 = vmatprep.subr.mxu0 0.0
        %2186 = vmatpush1.msra.mxu0 0.0
        %2187 = vmatprep.subr.mxu0 0.0
        %2188 = vmatpush1.msra.mxu0 0.0
        %2189 = vmatprep.subr.mxu0 0.0
        %2190 = vmatpush1.msra.mxu0 0.0
        %2191 = vmatprep.subr.mxu0 0.0
        %2192 = vmatpush1.msra.mxu0 0.0
        %2193 = vmatprep.subr.mxu0 0.0
        %2194 = vmatpush1.msra.mxu0 0.0
        %2195 = vmatprep.subr.mxu0 0.0
        %2196 = vmatpush1.msra.mxu0 0.0
        %2197 = vmatprep.subr.mxu0 0.0
        %2198 = vmatpush1.msra.mxu0 0.0
        %2199 = vmatprep.subr.mxu0 0.0
        %2200 = vmatpush1.msra.mxu0 0.0
        %2201 = vmatprep.subr.mxu0 0.0
        %2202 = vmatpush1.msra.mxu0 0.0
        %2203 = vmatprep.subr.mxu0 0.0
        %2204 = vmatpush1.msra.mxu0 0.0
        %2205 = vmatprep.subr.mxu0 0.0
        %2206 = vmatpush1.msra.mxu0 0.0
        %2207 = vmatprep.subr.mxu0 0.0
        %2208 = vmatpush1.msra.mxu0 0.0
        %2209 = vmatprep.subr.mxu0 0.0
        %2210 = vmatpush1.msra.mxu0 0.0
        %2211 = vmatprep.subr.mxu0 0.0
        %2212 = vmatpush1.msra.mxu0 0.0
        %2213 = vmatprep.subr.mxu0 0.0
        %2214 = vmatpush1.msra.mxu0 0.0
        %2215 = vmatprep.subr.mxu0 0.0
        %2216 = vmatpush1.msra.mxu0 0.0
        %2217 = vmatprep.subr.mxu0 0.0
        %2218 = vmatpush1.msra.mxu0 0.0
        %2219 = vmatprep.subr.mxu0 0.0
        %2220 = vmatpush1.msra.mxu0 0.0
        %2221 = vmatprep.subr.mxu0 0.0
        %2222 = vmatpush1.msra.mxu0 0.0
        %2223 = vmatprep.subr.mxu0 0.0
        %2224 = vmatpush1.msra.mxu0 0.0
        %2225 = vmatprep.subr.mxu0 0.0
        %2226 = vmatpush1.msra.mxu0 0.0
        %2227 = vmatprep.subr.mxu0 0.0
        %2228 = vmatpush1.msra.mxu0 0.0
        %2229 = vmatprep.subr.mxu0 0.0
        %2230 = vmatpush1.msra.mxu0 0.0
        %2231 = vmatprep.subr.mxu0 0.0
        %2232 = vmatpush1.msra.mxu0 0.0
        %2233 = vmatprep.subr.mxu0 0.0
        %2234 = vmatpush1.msra.mxu0 0.0
        %2235 = vmatprep.subr.mxu0 0.0
        %2236 = vmatpush1.msra.mxu0 0.0
        %2237 = vmatprep.subr.mxu0 0.0
        %2238 = vmatpush1.msra.mxu0 0.0
        %2239 = vmatprep.mubr.f32.mxu0 0.0
        %2240 = vmatmul.mubr.f32.gmra.mrb[0].mxu0 %v2016
        %v2241 = vpop.f32.mrb[0].mxu0
        %v2242 = vadd.f32 0.0, %v2241
        %v2243 = vpop.f32.mrb[0].mxu0
        %v2244 = vadd.f32 0.0, %v2243
        %2245 = vmatprep.mubr.f32.mxu0 0.0
        %2246 = vmatmul.mubr.f32.gmra.mrb[0].mxu0 %v2019
        %v2247 = vpop.f32.mrb[0].mxu0
        %v2248 = vadd.f32 0.0, %v2247
        %v2249 = vpop.f32.mrb[0].mxu0
        %v2250 = vadd.f32 0.0, %v2249
        %2251 = vdwg.mxu0
        %2252 = vmatprep.subr.mxu0 %v1967
        %2253 = vmatpush1.msra.mxu0 %v1966
        %2254 = vmatprep.subr.mxu0 %v1976
        %2255 = vmatpush1.msra.mxu0 %v1975
        %2256 = vmatprep.subr.mxu0 %v1985
        %2257 = vmatpush1.msra.mxu0 %v1984
        %2258 = vmatprep.subr.mxu0 0.0
        %2259 = vmatpush1.msra.mxu0 0.0
        %2260 = vmatprep.subr.mxu0 0.0
        %2261 = vmatpush1.msra.mxu0 0.0
        %2262 = vmatprep.subr.mxu0 0.0
        %2263 = vmatpush1.msra.mxu0 0.0
        %2264 = vmatprep.subr.mxu0 0.0
        %2265 = vmatpush1.msra.mxu0 0.0
        %2266 = vmatprep.subr.mxu0 0.0
        %2267 = vmatpush1.msra.mxu0 0.0
        %2268 = vmatprep.subr.mxu0 0.0
        %2269 = vmatpush1.msra.mxu0 0.0
        %2270 = vmatprep.subr.mxu0 0.0
        %2271 = vmatpush1.msra.mxu0 0.0
        %2272 = vmatprep.subr.mxu0 0.0
        %2273 = vmatpush1.msra.mxu0 0.0
        %2274 = vmatprep.subr.mxu0 0.0
        %2275 = vmatpush1.msra.mxu0 0.0
        %2276 = vmatprep.subr.mxu0 0.0
        %2277 = vmatpush1.msra.mxu0 0.0
        %2278 = vmatprep.subr.mxu0 0.0
        %2279 = vmatpush1.msra.mxu0 0.0
        %2280 = vmatprep.subr.mxu0 0.0
        %2281 = vmatpush1.msra.mxu0 0.0
        %2282 = vmatprep.subr.mxu0 0.0
        %2283 = vmatpush1.msra.mxu0 0.0
        %2284 = vmatprep.subr.mxu0 0.0
        %2285 = vmatpush1.msra.mxu0 0.0
        %2286 = vmatprep.subr.mxu0 0.0
        %2287 = vmatpush1.msra.mxu0 0.0
        %2288 = vmatprep.subr.mxu0 0.0
        %2289 = vmatpush1.msra.mxu0 0.0
        %2290 = vmatprep.subr.mxu0 0.0
        %2291 = vmatpush1.msra.mxu0 0.0
        %2292 = vmatprep.subr.mxu0 0.0
        %2293 = vmatpush1.msra.mxu0 0.0
        %2294 = vmatprep.subr.mxu0 0.0
        %2295 = vmatpush1.msra.mxu0 0.0
        %2296 = vmatprep.subr.mxu0 0.0
        %2297 = vmatpush1.msra.mxu0 0.0
        %2298 = vmatprep.subr.mxu0 0.0
        %2299 = vmatpush1.msra.mxu0 0.0
        %2300 = vmatprep.subr.mxu0 0.0
        %2301 = vmatpush1.msra.mxu0 0.0
        %2302 = vmatprep.subr.mxu0 0.0
        %2303 = vmatpush1.msra.mxu0 0.0
        %2304 = vmatprep.subr.mxu0 0.0
        %2305 = vmatpush1.msra.mxu0 0.0
        %2306 = vmatprep.subr.mxu0 0.0
        %2307 = vmatpush1.msra.mxu0 0.0
        %2308 = vmatprep.subr.mxu0 0.0
        %2309 = vmatpush1.msra.mxu0 0.0
        %2310 = vmatprep.subr.mxu0 0.0
        %2311 = vmatpush1.msra.mxu0 0.0
        %2312 = vmatprep.subr.mxu0 0.0
        %2313 = vmatpush1.msra.mxu0 0.0
        %2314 = vmatprep.subr.mxu0 0.0
        %2315 = vmatpush1.msra.mxu0 0.0
        %2316 = vmatprep.mubr.f32.mxu0 0.0
        %2317 = vmatmul.mubr.f32.gmra.mrb[0].mxu0 %v2016
        %v2318 = vpop.f32.mrb[0].mxu0
        %v2319 = vadd.f32 0.0, %v2318
        %v2320 = vpop.f32.mrb[0].mxu0
        %v2321 = vadd.f32 0.0, %v2320
        %2322 = vmatprep.mubr.f32.mxu0 0.0
        %2323 = vmatmul.mubr.f32.gmra.mrb[0].mxu0 %v2019
        %v2324 = vpop.f32.mrb[0].mxu0
        %v2325 = vadd.f32 0.0, %v2324
        %v2326 = vpop.f32.mrb[0].mxu0
        %v2327 = vadd.f32 0.0, %v2326
        %2328 = vdwg.mxu0
        %2329 = vmatprep.subr.mxu0 0.0
        %2330 = vmatpush1.msra.mxu0 %v1968
        %2331 = vmatprep.subr.mxu0 0.0
        %2332 = vmatpush1.msra.mxu0 %v1977
        %2333 = vmatprep.subr.mxu0 0.0
        %2334 = vmatpush1.msra.mxu0 %v1986
        %2335 = vmatprep.subr.mxu0 0.0
        %2336 = vmatpush1.msra.mxu0 0.0
        %2337 = vmatprep.subr.mxu0 0.0
        %2338 = vmatpush1.msra.mxu0 0.0
        %2339 = vmatprep.subr.mxu0 0.0
        %2340 = vmatpush1.msra.mxu0 0.0
        %2341 = vmatprep.subr.mxu0 0.0
        %2342 = vmatpush1.msra.mxu0 0.0
        %2343 = vmatprep.subr.mxu0 0.0
        %2344 = vmatpush1.msra.mxu0 0.0
        %2345 = vmatprep.subr.mxu0 0.0
        %2346 = vmatpush1.msra.mxu0 0.0
        %2347 = vmatprep.subr.mxu0 0.0
        %2348 = vmatpush1.msra.mxu0 0.0
        %2349 = vmatprep.subr.mxu0 0.0
        %2350 = vmatpush1.msra.mxu0 0.0
        %2351 = vmatprep.subr.mxu0 0.0
        %2352 = vmatpush1.msra.mxu0 0.0
        %2353 = vmatprep.subr.mxu0 0.0
        %2354 = vmatpush1.msra.mxu0 0.0
        %2355 = vmatprep.subr.mxu0 0.0
        %2356 = vmatpush1.msra.mxu0 0.0
        %2357 = vmatprep.subr.mxu0 0.0
        %2358 = vmatpush1.msra.mxu0 0.0
        %2359 = vmatprep.subr.mxu0 0.0
        %2360 = vmatpush1.msra.mxu0 0.0
        %2361 = vmatprep.subr.mxu0 0.0
        %2362 = vmatpush1.msra.mxu0 0.0
        %2363 = vmatprep.subr.mxu0 0.0
        %2364 = vmatpush1.msra.mxu0 0.0
        %2365 = vmatprep.subr.mxu0 0.0
        %2366 = vmatpush1.msra.mxu0 0.0
        %2367 = vmatprep.subr.mxu0 0.0
        %2368 = vmatpush1.msra.mxu0 0.0
        %2369 = vmatprep.subr.mxu0 0.0
        %2370 = vmatpush1.msra.mxu0 0.0
        %2371 = vmatprep.subr.mxu0 0.0
        %2372 = vmatpush1.msra.mxu0 0.0
        %2373 = vmatprep.subr.mxu0 0.0
        %2374 = vmatpush1.msra.mxu0 0.0
        %2375 = vmatprep.subr.mxu0 0.0
        %2376 = vmatpush1.msra.mxu0 0.0
        %2377 = vmatprep.subr.mxu0 0.0
        %2378 = vmatpush1.msra.mxu0 0.0
        %2379 = vmatprep.subr.mxu0 0.0
        %2380 = vmatpush1.msra.mxu0 0.0
        %2381 = vmatprep.subr.mxu0 0.0
        %2382 = vmatpush1.msra.mxu0 0.0
        %2383 = vmatprep.subr.mxu0 0.0
        %2384 = vmatpush1.msra.mxu0 0.0
        %2385 = vmatprep.subr.mxu0 0.0
        %2386 = vmatpush1.msra.mxu0 0.0
        %2387 = vmatprep.subr.mxu0 0.0
        %2388 = vmatpush1.msra.mxu0 0.0
        %2389 = vmatprep.subr.mxu0 0.0
        %2390 = vmatpush1.msra.mxu0 0.0
        %2391 = vmatprep.subr.mxu0 0.0
        %2392 = vmatpush1.msra.mxu0 0.0
        %2393 = vmatprep.mubr.f32.mxu0 0.0
        %2394 = vmatmul.mubr.f32.gmra.mrb[0].mxu0 %v2016
        %v2395 = vpop.f32.mrb[0].mxu0
        %v2396 = vadd.f32 0.0, %v2395
        %v2397 = vpop.f32.mrb[0].mxu0
        %2398 = vmatprep.mubr.f32.mxu0 0.0
        %2399 = vmatmul.mubr.f32.gmra.mrb[0].mxu0 %v2019
        %v2400 = vpop.f32.mrb[0].mxu0
        %v2401 = vadd.f32 0.0, %v2400
        %v2402 = vpop.f32.mrb[0].mxu0
        %2403 = vdwg.mxu0
        %v2405 = vsel %vm2014, %v1799, 0
        %v2408 = vsel %vm2014, %v1800, 0
        %2410 = vmatprep.subr.mxu0 %v1802
        %2411 = vmatpush1.msra.mxu0 %v1801
        %2412 = vmatprep.subr.mxu0 %v1842
        %2413 = vmatpush1.msra.mxu0 %v1841
        %2414 = vmatprep.subr.mxu0 %v1880
        %2415 = vmatpush1.msra.mxu0 %v1879
        %2416 = vmatprep.subr.mxu0 0.0
        %2417 = vmatpush1.msra.mxu0 0.0
        %2418 = vmatprep.subr.mxu0 0.0
        %2419 = vmatpush1.msra.mxu0 0.0
        %2420 = vmatprep.subr.mxu0 0.0
        %2421 = vmatpush1.msra.mxu0 0.0
        %2422 = vmatprep.subr.mxu0 0.0
        %2423 = vmatpush1.msra.mxu0 0.0
        %2424 = vmatprep.subr.mxu0 0.0
        %2425 = vmatpush1.msra.mxu0 0.0
        %2426 = vmatprep.subr.mxu0 0.0
        %2427 = vmatpush1.msra.mxu0 0.0
        %2428 = vmatprep.subr.mxu0 0.0
        %2429 = vmatpush1.msra.mxu0 0.0
        %2430 = vmatprep.subr.mxu0 0.0
        %2431 = vmatpush1.msra.mxu0 0.0
        %2432 = vmatprep.subr.mxu0 0.0
        %2433 = vmatpush1.msra.mxu0 0.0
        %2434 = vmatprep.subr.mxu0 0.0
        %2435 = vmatpush1.msra.mxu0 0.0
        %2436 = vmatprep.subr.mxu0 0.0
        %2437 = vmatpush1.msra.mxu0 0.0
        %2438 = vmatprep.subr.mxu0 0.0
        %2439 = vmatpush1.msra.mxu0 0.0
        %2440 = vmatprep.subr.mxu0 0.0
        %2441 = vmatpush1.msra.mxu0 0.0
        %2442 = vmatprep.subr.mxu0 0.0
        %2443 = vmatpush1.msra.mxu0 0.0
        %2444 = vmatprep.subr.mxu0 0.0
        %2445 = vmatpush1.msra.mxu0 0.0
        %2446 = vmatprep.subr.mxu0 0.0
        %2447 = vmatpush1.msra.mxu0 0.0
        %2448 = vmatprep.subr.mxu0 0.0
        %2449 = vmatpush1.msra.mxu0 0.0
        %2450 = vmatprep.subr.mxu0 0.0
        %2451 = vmatpush1.msra.mxu0 0.0
        %2452 = vmatprep.subr.mxu0 0.0
        %2453 = vmatpush1.msra.mxu0 0.0
        %2454 = vmatprep.subr.mxu0 0.0
        %2455 = vmatpush1.msra.mxu0 0.0
        %2456 = vmatprep.subr.mxu0 0.0
        %2457 = vmatpush1.msra.mxu0 0.0
        %2458 = vmatprep.subr.mxu0 0.0
        %2459 = vmatpush1.msra.mxu0 0.0
        %2460 = vmatprep.subr.mxu0 0.0
        %2461 = vmatpush1.msra.mxu0 0.0
        %2462 = vmatprep.subr.mxu0 0.0
        %2463 = vmatpush1.msra.mxu0 0.0
        %2464 = vmatprep.subr.mxu0 0.0
        %2465 = vmatpush1.msra.mxu0 0.0
        %2466 = vmatprep.subr.mxu0 0.0
        %2467 = vmatpush1.msra.mxu0 0.0
        %2468 = vmatprep.subr.mxu0 0.0
        %2469 = vmatpush1.msra.mxu0 0.0
        %2470 = vmatprep.subr.mxu0 0.0
        %2471 = vmatpush1.msra.mxu0 0.0
        %2472 = vmatprep.subr.mxu0 0.0
        %2473 = vmatpush1.msra.mxu0 0.0
        %2474 = vmatprep.mubr.f32.mxu0 0.0
        %2475 = vmatmul.mubr.f32.gmra.mrb[0].mxu0 %v2405
        %v2476 = vpop.f32.mrb[0].mxu0
        %v2477 = vadd.f32 %v2088, %v2476
        %v2478 = vpop.f32.mrb[0].mxu0
        %v2479 = vadd.f32 %v2090, %v2478
        %2480 = vmatprep.mubr.f32.mxu0 0.0
        %2481 = vmatmul.mubr.f32.gmra.mrb[0].mxu0 %v2408
        %v2482 = vpop.f32.mrb[0].mxu0
        %v2483 = vadd.f32 %v2094, %v2482
        %v2484 = vpop.f32.mrb[0].mxu0
        %v2485 = vadd.f32 %v2096, %v2484
        %2486 = vdwg.mxu0
        %2487 = vmatprep.subr.mxu0 %v1804
        %2488 = vmatpush1.msra.mxu0 %v1803
        %2489 = vmatprep.subr.mxu0 %v1844
        %2490 = vmatpush1.msra.mxu0 %v1843
        %2491 = vmatprep.subr.mxu0 %v1882
        %2492 = vmatpush1.msra.mxu0 %v1881
        %2493 = vmatprep.subr.mxu0 0.0
        %2494 = vmatpush1.msra.mxu0 0.0
        %2495 = vmatprep.subr.mxu0 0.0
        %2496 = vmatpush1.msra.mxu0 0.0
        %2497 = vmatprep.subr.mxu0 0.0
        %2498 = vmatpush1.msra.mxu0 0.0
        %2499 = vmatprep.subr.mxu0 0.0
        %2500 = vmatpush1.msra.mxu0 0.0
        %2501 = vmatprep.subr.mxu0 0.0
        %2502 = vmatpush1.msra.mxu0 0.0
        %2503 = vmatprep.subr.mxu0 0.0
        %2504 = vmatpush1.msra.mxu0 0.0
        %2505 = vmatprep.subr.mxu0 0.0
        %2506 = vmatpush1.msra.mxu0 0.0
        %2507 = vmatprep.subr.mxu0 0.0
        %2508 = vmatpush1.msra.mxu0 0.0
        %2509 = vmatprep.subr.mxu0 0.0
        %2510 = vmatpush1.msra.mxu0 0.0
        %2511 = vmatprep.subr.mxu0 0.0
        %2512 = vmatpush1.msra.mxu0 0.0
        %2513 = vmatprep.subr.mxu0 0.0
        %2514 = vmatpush1.msra.mxu0 0.0
        %2515 = vmatprep.subr.mxu0 0.0
        %2516 = vmatpush1.msra.mxu0 0.0
        %2517 = vmatprep.subr.mxu0 0.0
        %2518 = vmatpush1.msra.mxu0 0.0
        %2519 = vmatprep.subr.mxu0 0.0
        %2520 = vmatpush1.msra.mxu0 0.0
        %2521 = vmatprep.subr.mxu0 0.0
        %2522 = vmatpush1.msra.mxu0 0.0
        %2523 = vmatprep.subr.mxu0 0.0
        %2524 = vmatpush1.msra.mxu0 0.0
        %2525 = vmatprep.subr.mxu0 0.0
        %2526 = vmatpush1.msra.mxu0 0.0
        %2527 = vmatprep.subr.mxu0 0.0
        %2528 = vmatpush1.msra.mxu0 0.0
        %2529 = vmatprep.subr.mxu0 0.0
        %2530 = vmatpush1.msra.mxu0 0.0
        %2531 = vmatprep.subr.mxu0 0.0
        %2532 = vmatpush1.msra.mxu0 0.0
        %2533 = vmatprep.subr.mxu0 0.0
        %2534 = vmatpush1.msra.mxu0 0.0
        %2535 = vmatprep.subr.mxu0 0.0
        %2536 = vmatpush1.msra.mxu0 0.0
        %2537 = vmatprep.subr.mxu0 0.0
        %2538 = vmatpush1.msra.mxu0 0.0
        %2539 = vmatprep.subr.mxu0 0.0
        %2540 = vmatpush1.msra.mxu0 0.0
        %2541 = vmatprep.subr.mxu0 0.0
        %2542 = vmatpush1.msra.mxu0 0.0
        %2543 = vmatprep.subr.mxu0 0.0
        %2544 = vmatpush1.msra.mxu0 0.0
        %2545 = vmatprep.subr.mxu0 0.0
        %2546 = vmatpush1.msra.mxu0 0.0
        %2547 = vmatprep.subr.mxu0 0.0
        %2548 = vmatpush1.msra.mxu0 0.0
        %2549 = vmatprep.subr.mxu0 0.0
        %2550 = vmatpush1.msra.mxu0 0.0
        %2551 = vmatprep.mubr.f32.mxu0 0.0
        %2552 = vmatmul.mubr.f32.gmra.mrb[0].mxu0 %v2405
        %v2553 = vpop.f32.mrb[0].mxu0
        %v2554 = vadd.f32 %v2165, %v2553
        %v2555 = vpop.f32.mrb[0].mxu0
        %v2556 = vadd.f32 %v2167, %v2555
        %2557 = vmatprep.mubr.f32.mxu0 0.0
        %2558 = vmatmul.mubr.f32.gmra.mrb[0].mxu0 %v2408
        %v2559 = vpop.f32.mrb[0].mxu0
        %v2560 = vadd.f32 %v2171, %v2559
        %v2561 = vpop.f32.mrb[0].mxu0
        %v2562 = vadd.f32 %v2173, %v2561
        %2563 = vdwg.mxu0
        %2564 = vmatprep.subr.mxu0 %v1806
        %2565 = vmatpush1.msra.mxu0 %v1805
        %2566 = vmatprep.subr.mxu0 %v1846
        %2567 = vmatpush1.msra.mxu0 %v1845
        %2568 = vmatprep.subr.mxu0 %v1884
        %2569 = vmatpush1.msra.mxu0 %v1883
        %2570 = vmatprep.subr.mxu0 0.0
        %2571 = vmatpush1.msra.mxu0 0.0
        %2572 = vmatprep.subr.mxu0 0.0
        %2573 = vmatpush1.msra.mxu0 0.0
        %2574 = vmatprep.subr.mxu0 0.0
        %2575 = vmatpush1.msra.mxu0 0.0
        %2576 = vmatprep.subr.mxu0 0.0
        %2577 = vmatpush1.msra.mxu0 0.0
        %2578 = vmatprep.subr.mxu0 0.0
        %2579 = vmatpush1.msra.mxu0 0.0
        %2580 = vmatprep.subr.mxu0 0.0
        %2581 = vmatpush1.msra.mxu0 0.0
        %2582 = vmatprep.subr.mxu0 0.0
        %2583 = vmatpush1.msra.mxu0 0.0
        %2584 = vmatprep.subr.mxu0 0.0
        %2585 = vmatpush1.msra.mxu0 0.0
        %2586 = vmatprep.subr.mxu0 0.0
        %2587 = vmatpush1.msra.mxu0 0.0
        %2588 = vmatprep.subr.mxu0 0.0
        %2589 = vmatpush1.msra.mxu0 0.0
        %2590 = vmatprep.subr.mxu0 0.0
        %2591 = vmatpush1.msra.mxu0 0.0
        %2592 = vmatprep.subr.mxu0 0.0
        %2593 = vmatpush1.msra.mxu0 0.0
        %2594 = vmatprep.subr.mxu0 0.0
        %2595 = vmatpush1.msra.mxu0 0.0
        %2596 = vmatprep.subr.mxu0 0.0
        %2597 = vmatpush1.msra.mxu0 0.0
        %2598 = vmatprep.subr.mxu0 0.0
        %2599 = vmatpush1.msra.mxu0 0.0
        %2600 = vmatprep.subr.mxu0 0.0
        %2601 = vmatpush1.msra.mxu0 0.0
        %2602 = vmatprep.subr.mxu0 0.0
        %2603 = vmatpush1.msra.mxu0 0.0
        %2604 = vmatprep.subr.mxu0 0.0
        %2605 = vmatpush1.msra.mxu0 0.0
        %2606 = vmatprep.subr.mxu0 0.0
        %2607 = vmatpush1.msra.mxu0 0.0
        %2608 = vmatprep.subr.mxu0 0.0
        %2609 = vmatpush1.msra.mxu0 0.0
        %2610 = vmatprep.subr.mxu0 0.0
        %2611 = vmatpush1.msra.mxu0 0.0
        %2612 = vmatprep.subr.mxu0 0.0
        %2613 = vmatpush1.msra.mxu0 0.0
        %2614 = vmatprep.subr.mxu0 0.0
        %2615 = vmatpush1.msra.mxu0 0.0
        %2616 = vmatprep.subr.mxu0 0.0
        %2617 = vmatpush1.msra.mxu0 0.0
        %2618 = vmatprep.subr.mxu0 0.0
        %2619 = vmatpush1.msra.mxu0 0.0
        %2620 = vmatprep.subr.mxu0 0.0
        %2621 = vmatpush1.msra.mxu0 0.0
        %2622 = vmatprep.subr.mxu0 0.0
        %2623 = vmatpush1.msra.mxu0 0.0
        %2624 = vmatprep.subr.mxu0 0.0
        %2625 = vmatpush1.msra.mxu0 0.0
        %2626 = vmatprep.subr.mxu0 0.0
        %2627 = vmatpush1.msra.mxu0 0.0
        %2628 = vmatprep.mubr.f32.mxu0 0.0
        %2629 = vmatmul.mubr.f32.gmra.mrb[0].mxu0 %v2405
        %v2630 = vpop.f32.mrb[0].mxu0
        %v2631 = vadd.f32 %v2242, %v2630
        %v2632 = vpop.f32.mrb[0].mxu0
        %v2633 = vadd.f32 %v2244, %v2632
        %2634 = vmatprep.mubr.f32.mxu0 0.0
        %2635 = vmatmul.mubr.f32.gmra.mrb[0].mxu0 %v2408
        %v2636 = vpop.f32.mrb[0].mxu0
        %v2637 = vadd.f32 %v2248, %v2636
        %v2638 = vpop.f32.mrb[0].mxu0
        %v2639 = vadd.f32 %v2250, %v2638
        %2640 = vdwg.mxu0
        %2641 = vmatprep.subr.mxu0 %v1808
        %2642 = vmatpush1.msra.mxu0 %v1807
        %2643 = vmatprep.subr.mxu0 %v1848
        %2644 = vmatpush1.msra.mxu0 %v1847
        %2645 = vmatprep.subr.mxu0 %v1886
        %2646 = vmatpush1.msra.mxu0 %v1885
        %2647 = vmatprep.subr.mxu0 0.0
        %2648 = vmatpush1.msra.mxu0 0.0
        %2649 = vmatprep.subr.mxu0 0.0
        %2650 = vmatpush1.msra.mxu0 0.0
        %2651 = vmatprep.subr.mxu0 0.0
        %2652 = vmatpush1.msra.mxu0 0.0
        %2653 = vmatprep.subr.mxu0 0.0
        %2654 = vmatpush1.msra.mxu0 0.0
        %2655 = vmatprep.subr.mxu0 0.0
        %2656 = vmatpush1.msra.mxu0 0.0
        %2657 = vmatprep.subr.mxu0 0.0
        %2658 = vmatpush1.msra.mxu0 0.0
        %2659 = vmatprep.subr.mxu0 0.0
        %2660 = vmatpush1.msra.mxu0 0.0
        %2661 = vmatprep.subr.mxu0 0.0
        %2662 = vmatpush1.msra.mxu0 0.0
        %2663 = vmatprep.subr.mxu0 0.0
        %2664 = vmatpush1.msra.mxu0 0.0
        %2665 = vmatprep.subr.mxu0 0.0
        %2666 = vmatpush1.msra.mxu0 0.0
        %2667 = vmatprep.subr.mxu0 0.0
        %2668 = vmatpush1.msra.mxu0 0.0
        %2669 = vmatprep.subr.mxu0 0.0
        %2670 = vmatpush1.msra.mxu0 0.0
        %2671 = vmatprep.subr.mxu0 0.0
        %2672 = vmatpush1.msra.mxu0 0.0
        %2673 = vmatprep.subr.mxu0 0.0
        %2674 = vmatpush1.msra.mxu0 0.0
        %2675 = vmatprep.subr.mxu0 0.0
        %2676 = vmatpush1.msra.mxu0 0.0
        %2677 = vmatprep.subr.mxu0 0.0
        %2678 = vmatpush1.msra.mxu0 0.0
        %2679 = vmatprep.subr.mxu0 0.0
        %2680 = vmatpush1.msra.mxu0 0.0
        %2681 = vmatprep.subr.mxu0 0.0
        %2682 = vmatpush1.msra.mxu0 0.0
        %2683 = vmatprep.subr.mxu0 0.0
        %2684 = vmatpush1.msra.mxu0 0.0
        %2685 = vmatprep.subr.mxu0 0.0
        %2686 = vmatpush1.msra.mxu0 0.0
        %2687 = vmatprep.subr.mxu0 0.0
        %2688 = vmatpush1.msra.mxu0 0.0
        %2689 = vmatprep.subr.mxu0 0.0
        %2690 = vmatpush1.msra.mxu0 0.0
        %2691 = vmatprep.subr.mxu0 0.0
        %2692 = vmatpush1.msra.mxu0 0.0
        %2693 = vmatprep.subr.mxu0 0.0
        %2694 = vmatpush1.msra.mxu0 0.0
        %2695 = vmatprep.subr.mxu0 0.0
        %2696 = vmatpush1.msra.mxu0 0.0
        %2697 = vmatprep.subr.mxu0 0.0
        %2698 = vmatpush1.msra.mxu0 0.0
        %2699 = vmatprep.subr.mxu0 0.0
        %2700 = vmatpush1.msra.mxu0 0.0
        %2701 = vmatprep.subr.mxu0 0.0
        %2702 = vmatpush1.msra.mxu0 0.0
        %2703 = vmatprep.subr.mxu0 0.0
        %2704 = vmatpush1.msra.mxu0 0.0
        %2705 = vmatprep.mubr.f32.mxu0 0.0
        %2706 = vmatmul.mubr.f32.gmra.mrb[0].mxu0 %v2405
        %v2707 = vpop.f32.mrb[0].mxu0
        %v2708 = vadd.f32 %v2319, %v2707
        %v2709 = vpop.f32.mrb[0].mxu0
        %v2710 = vadd.f32 %v2321, %v2709
        %2711 = vmatprep.mubr.f32.mxu0 0.0
        %2712 = vmatmul.mubr.f32.gmra.mrb[0].mxu0 %v2408
        %v2713 = vpop.f32.mrb[0].mxu0
        %v2714 = vadd.f32 %v2325, %v2713
        %v2715 = vpop.f32.mrb[0].mxu0
        %v2716 = vadd.f32 %v2327, %v2715
        %2717 = vdwg.mxu0
        %2718 = vmatprep.subr.mxu0 0.0
        %2719 = vmatpush1.msra.mxu0 %v1809
        %2720 = vmatprep.subr.mxu0 0.0
        %2721 = vmatpush1.msra.mxu0 %v1849
        %2722 = vmatprep.subr.mxu0 0.0
        %2723 = vmatpush1.msra.mxu0 %v1887
        %2724 = vmatprep.subr.mxu0 0.0
        %2725 = vmatpush1.msra.mxu0 0.0
        %2726 = vmatprep.subr.mxu0 0.0
        %2727 = vmatpush1.msra.mxu0 0.0
        %2728 = vmatprep.subr.mxu0 0.0
        %2729 = vmatpush1.msra.mxu0 0.0
        %2730 = vmatprep.subr.mxu0 0.0
        %2731 = vmatpush1.msra.mxu0 0.0
        %2732 = vmatprep.subr.mxu0 0.0
        %2733 = vmatpush1.msra.mxu0 0.0
        %2734 = vmatprep.subr.mxu0 0.0
        %2735 = vmatpush1.msra.mxu0 0.0
        %2736 = vmatprep.subr.mxu0 0.0
        %2737 = vmatpush1.msra.mxu0 0.0
        %2738 = vmatprep.subr.mxu0 0.0
        %2739 = vmatpush1.msra.mxu0 0.0
        %2740 = vmatprep.subr.mxu0 0.0
        %2741 = vmatpush1.msra.mxu0 0.0
        %2742 = vmatprep.subr.mxu0 0.0
        %2743 = vmatpush1.msra.mxu0 0.0
        %2744 = vmatprep.subr.mxu0 0.0
        %2745 = vmatpush1.msra.mxu0 0.0
        %2746 = vmatprep.subr.mxu0 0.0
        %2747 = vmatpush1.msra.mxu0 0.0
        %2748 = vmatprep.subr.mxu0 0.0
        %2749 = vmatpush1.msra.mxu0 0.0
        %2750 = vmatprep.subr.mxu0 0.0
        %2751 = vmatpush1.msra.mxu0 0.0
        %2752 = vmatprep.subr.mxu0 0.0
        %2753 = vmatpush1.msra.mxu0 0.0
        %2754 = vmatprep.subr.mxu0 0.0
        %2755 = vmatpush1.msra.mxu0 0.0
        %2756 = vmatprep.subr.mxu0 0.0
        %2757 = vmatpush1.msra.mxu0 0.0
        %2758 = vmatprep.subr.mxu0 0.0
        %2759 = vmatpush1.msra.mxu0 0.0
        %2760 = vmatprep.subr.mxu0 0.0
        %2761 = vmatpush1.msra.mxu0 0.0
        %2762 = vmatprep.subr.mxu0 0.0
        %2763 = vmatpush1.msra.mxu0 0.0
        %2764 = vmatprep.subr.mxu0 0.0
        %2765 = vmatpush1.msra.mxu0 0.0
        %2766 = vmatprep.subr.mxu0 0.0
        %2767 = vmatpush1.msra.mxu0 0.0
        %2768 = vmatprep.subr.mxu0 0.0
        %2769 = vmatpush1.msra.mxu0 0.0
        %2770 = vmatprep.subr.mxu0 0.0
        %2771 = vmatpush1.msra.mxu0 0.0
        %2772 = vmatprep.subr.mxu0 0.0
        %2773 = vmatpush1.msra.mxu0 0.0
        %2774 = vmatprep.subr.mxu0 0.0
        %2775 = vmatpush1.msra.mxu0 0.0
        %2776 = vmatprep.subr.mxu0 0.0
        %2777 = vmatpush1.msra.mxu0 0.0
        %2778 = vmatprep.subr.mxu0 0.0
        %2779 = vmatpush1.msra.mxu0 0.0
        %2780 = vmatprep.subr.mxu0 0.0
        %2781 = vmatpush1.msra.mxu0 0.0
        %2782 = vmatprep.mubr.f32.mxu0 0.0
        %2783 = vmatmul.mubr.f32.gmra.mrb[0].mxu0 %v2405
        %v2784 = vpop.f32.mrb[0].mxu0
        %v2785 = vadd.f32 %v2396, %v2784
        %v2786 = vpop.f32.mrb[0].mxu0
        %2787 = vmatprep.mubr.f32.mxu0 0.0
        %2788 = vmatmul.mubr.f32.gmra.mrb[0].mxu0 %v2408
        %v2789 = vpop.f32.mrb[0].mxu0
        %v2790 = vadd.f32 %v2401, %v2789
        %v2791 = vpop.f32.mrb[0].mxu0
        %2792 = vdwg.mxu0
        %s2793 = scalar_lea.vmem %s3, 32
        %v2794 = vld [vmem:[%s2793] sm:$0xff]
        %v2795 = vld [vmem:[%s2793 + $0x8] sm:$0xff]
        %2796 = vrot.lane.b32.xlu0 %v1801, 96
        %v2797 = vpop.permute.xlu0 %2796
        %2798 = vrot.lane.b32.xlu0 %v1802, 96
        %v2799 = vpop.permute.xlu0 %2798
        %2800 = vrot.lane.b32.xlu0 %v1803, 96
        %v2801 = vpop.permute.xlu0 %2800
        %2802 = vrot.lane.b32.xlu0 %v1804, 96
        %v2803 = vpop.permute.xlu0 %2802
        %2804 = vrot.lane.b32.xlu0 %v1805, 96
        %v2805 = vpop.permute.xlu0 %2804
        %2806 = vrot.lane.b32.xlu0 %v1806, 96
        %v2807 = vpop.permute.xlu0 %2806
        %2808 = vrot.lane.b32.xlu0 %v1807, 96
        %v2809 = vpop.permute.xlu0 %2808
        %2810 = vrot.lane.b32.xlu0 %v1808, 96
        %v2811 = vpop.permute.xlu0 %2810
        %2812 = vrot.lane.b32.xlu0 %v1809, 96
        %v2813 = vpop.permute.xlu0 %2812
        %2814 = vrot.lane.b32.xlu0 %v1810, 96
        %v2815 = vpop.permute.xlu0 %2814
        %2816 = vrot.lane.b32.xlu0 %v1841, 96
        %v2817 = vpop.permute.xlu0 %2816
        %2818 = vrot.lane.b32.xlu0 %v1842, 96
        %v2819 = vpop.permute.xlu0 %2818
        %2820 = vrot.lane.b32.xlu0 %v1843, 96
        %v2821 = vpop.permute.xlu0 %2820
        %2822 = vrot.lane.b32.xlu0 %v1844, 96
        %v2823 = vpop.permute.xlu0 %2822
        %2824 = vrot.lane.b32.xlu0 %v1845, 96
        %v2825 = vpop.permute.xlu0 %2824
        %2826 = vrot.lane.b32.xlu0 %v1846, 96
        %v2827 = vpop.permute.xlu0 %2826
        %2828 = vrot.lane.b32.xlu0 %v1847, 96
        %v2829 = vpop.permute.xlu0 %2828
        %2830 = vrot.lane.b32.xlu0 %v1848, 96
        %v2831 = vpop.permute.xlu0 %2830
        %2832 = vrot.lane.b32.xlu0 %v1849, 96
        %v2833 = vpop.permute.xlu0 %2832
        %2834 = vrot.lane.b32.xlu0 %v1840, 96
        %v2835 = vpop.permute.xlu0 %2834
        %2836 = vrot.lane.b32.xlu0 %v1879, 96
        %v2837 = vpop.permute.xlu0 %2836
        %2838 = vrot.lane.b32.xlu0 %v1880, 96
        %v2839 = vpop.permute.xlu0 %2838
        %2840 = vrot.lane.b32.xlu0 %v1881, 96
        %v2841 = vpop.permute.xlu0 %2840
        %2842 = vrot.lane.b32.xlu0 %v1882, 96
        %v2843 = vpop.permute.xlu0 %2842
        %2844 = vrot.lane.b32.xlu0 %v1883, 96
        %v2845 = vpop.permute.xlu0 %2844
        %2846 = vrot.lane.b32.xlu0 %v1884, 96
        %v2847 = vpop.permute.xlu0 %2846
        %2848 = vrot.lane.b32.xlu0 %v1885, 96
        %v2849 = vpop.permute.xlu0 %2848
        %2850 = vrot.lane.b32.xlu0 %v1886, 96
        %v2851 = vpop.permute.xlu0 %2850
        %2852 = vrot.lane.b32.xlu0 %v1887, 96
        %v2853 = vpop.permute.xlu0 %2852
        %2854 = vrot.lane.b32.xlu0 %v1878, 96
        %v2855 = vpop.permute.xlu0 %2854
        %v2856 = vsel %vm1196, %v2797, %v2799
        %v2857 = vsel %vm1196, %v2799, %v2801
        %v2858 = vsel %vm1196, %v2801, %v2803
        %v2859 = vsel %vm1196, %v2803, %v2805
        %v2860 = vsel %vm1196, %v2805, %v2807
        %v2861 = vsel %vm1196, %v2807, %v2809
        %v2862 = vsel %vm1196, %v2809, %v2811
        %v2863 = vsel %vm1196, %v2811, %v2813
        %v2864 = vsel %vm1196, %v2813, %v2815
        %v2865 = vsel %vm1196, %v2817, %v2819
        %v2866 = vsel %vm1196, %v2819, %v2821
        %v2867 = vsel %vm1196, %v2821, %v2823
        %v2868 = vsel %vm1196, %v2823, %v2825
        %v2869 = vsel %vm1196, %v2825, %v2827
        %v2870 = vsel %vm1196, %v2827, %v2829
        %v2871 = vsel %vm1196, %v2829, %v2831
        %v2872 = vsel %vm1196, %v2831, %v2833
        %v2873 = vsel %vm1196, %v2833, %v2835
        %v2874 = vsel %vm1196, %v2837, %v2839
        %v2875 = vsel %vm1196, %v2839, %v2841
        %v2876 = vsel %vm1196, %v2841, %v2843
        %v2877 = vsel %vm1196, %v2843, %v2845
        %v2878 = vsel %vm1196, %v2845, %v2847
        %v2879 = vsel %vm1196, %v2847, %v2849
        %v2880 = vsel %vm1196, %v2849, %v2851
        %v2881 = vsel %vm1196, %v2851, %v2853
        %v2882 = vsel %vm1196, %v2853, %v2855
        %v2911 = vsel %vm2014, %v2794, 0
        %v2914 = vsel %vm2014, %v2795, 0
        %2916 = vmatprep.subr.mxu0 %v2857
        %2917 = vmatpush1.msra.mxu0 %v2856
        %2918 = vmatprep.subr.mxu0 %v2866
        %2919 = vmatpush1.msra.mxu0 %v2865
        %2920 = vmatprep.subr.mxu0 %v2875
        %2921 = vmatpush1.msra.mxu0 %v2874
        %2922 = vmatprep.subr.mxu0 0.0
        %2923 = vmatpush1.msra.mxu0 0.0
        %2924 = vmatprep.subr.mxu0 0.0
        %2925 = vmatpush1.msra.mxu0 0.0
        %2926 = vmatprep.subr.mxu0 0.0
        %2927 = vmatpush1.msra.mxu0 0.0
        %2928 = vmatprep.subr.mxu0 0.0
        %2929 = vmatpush1.msra.mxu0 0.0
        %2930 = vmatprep.subr.mxu0 0.0
        %2931 = vmatpush1.msra.mxu0 0.0
        %2932 = vmatprep.subr.mxu0 0.0
        %2933 = vmatpush1.msra.mxu0 0.0
        %2934 = vmatprep.subr.mxu0 0.0
        %2935 = vmatpush1.msra.mxu0 0.0
        %2936 = vmatprep.subr.mxu0 0.0
        %2937 = vmatpush1.msra.mxu0 0.0
        %2938 = vmatprep.subr.mxu0 0.0
        %2939 = vmatpush1.msra.mxu0 0.0
        %2940 = vmatprep.subr.mxu0 0.0
        %2941 = vmatpush1.msra.mxu0 0.0
        %2942 = vmatprep.subr.mxu0 0.0
        %2943 = vmatpush1.msra.mxu0 0.0
        %2944 = vmatprep.subr.mxu0 0.0
        %2945 = vmatpush1.msra.mxu0 0.0
        %2946 = vmatprep.subr.mxu0 0.0
        %2947 = vmatpush1.msra.mxu0 0.0
        %2948 = vmatprep.subr.mxu0 0.0
        %2949 = vmatpush1.msra.mxu0 0.0
        %2950 = vmatprep.subr.mxu0 0.0
        %2951 = vmatpush1.msra.mxu0 0.0
        %2952 = vmatprep.subr.mxu0 0.0
        %2953 = vmatpush1.msra.mxu0 0.0
        %2954 = vmatprep.subr.mxu0 0.0
        %2955 = vmatpush1.msra.mxu0 0.0
        %2956 = vmatprep.subr.mxu0 0.0
        %2957 = vmatpush1.msra.mxu0 0.0
        %2958 = vmatprep.subr.mxu0 0.0
        %2959 = vmatpush1.msra.mxu0 0.0
        %2960 = vmatprep.subr.mxu0 0.0
        %2961 = vmatpush1.msra.mxu0 0.0
        %2962 = vmatprep.subr.mxu0 0.0
        %2963 = vmatpush1.msra.mxu0 0.0
        %2964 = vmatprep.subr.mxu0 0.0
        %2965 = vmatpush1.msra.mxu0 0.0
        %2966 = vmatprep.subr.mxu0 0.0
        %2967 = vmatpush1.msra.mxu0 0.0
        %2968 = vmatprep.subr.mxu0 0.0
        %2969 = vmatpush1.msra.mxu0 0.0
        %2970 = vmatprep.subr.mxu0 0.0
        %2971 = vmatpush1.msra.mxu0 0.0
        %2972 = vmatprep.subr.mxu0 0.0
        %2973 = vmatpush1.msra.mxu0 0.0
        %2974 = vmatprep.subr.mxu0 0.0
        %2975 = vmatpush1.msra.mxu0 0.0
        %2976 = vmatprep.subr.mxu0 0.0
        %2977 = vmatpush1.msra.mxu0 0.0
        %2978 = vmatprep.subr.mxu0 0.0
        %2979 = vmatpush1.msra.mxu0 0.0
        %2980 = vmatprep.mubr.f32.mxu0 0.0
        %2981 = vmatmul.mubr.f32.gmra.mrb[0].mxu0 %v2911
        %v2982 = vpop.f32.mrb[0].mxu0
        %v2983 = vadd.f32 0.0, %v2982
        %v2984 = vpop.f32.mrb[0].mxu0
        %v2985 = vadd.f32 0.0, %v2984
        %2986 = vmatprep.mubr.f32.mxu0 0.0
        %2987 = vmatmul.mubr.f32.gmra.mrb[0].mxu0 %v2914
        %v2988 = vpop.f32.mrb[0].mxu0
        %v2989 = vadd.f32 0.0, %v2988
        %v2990 = vpop.f32.mrb[0].mxu0
        %v2991 = vadd.f32 0.0, %v2990
        %2992 = vdwg.mxu0
        %2993 = vmatprep.subr.mxu0 %v2859
        %2994 = vmatpush1.msra.mxu0 %v2858
        %2995 = vmatprep.subr.mxu0 %v2868
        %2996 = vmatpush1.msra.mxu0 %v2867
        %2997 = vmatprep.subr.mxu0 %v2877
        %2998 = vmatpush1.msra.mxu0 %v2876
        %2999 = vmatprep.subr.mxu0 0.0
        %3000 = vmatpush1.msra.mxu0 0.0
        %3001 = vmatprep.subr.mxu0 0.0
        %3002 = vmatpush1.msra.mxu0 0.0
        %3003 = vmatprep.subr.mxu0 0.0
        %3004 = vmatpush1.msra.mxu0 0.0
        %3005 = vmatprep.subr.mxu0 0.0
        %3006 = vmatpush1.msra.mxu0 0.0
        %3007 = vmatprep.subr.mxu0 0.0
        %3008 = vmatpush1.msra.mxu0 0.0
        %3009 = vmatprep.subr.mxu0 0.0
        %3010 = vmatpush1.msra.mxu0 0.0
        %3011 = vmatprep.subr.mxu0 0.0
        %3012 = vmatpush1.msra.mxu0 0.0
        %3013 = vmatprep.subr.mxu0 0.0
        %3014 = vmatpush1.msra.mxu0 0.0
        %3015 = vmatprep.subr.mxu0 0.0
        %3016 = vmatpush1.msra.mxu0 0.0
        %3017 = vmatprep.subr.mxu0 0.0
        %3018 = vmatpush1.msra.mxu0 0.0
        %3019 = vmatprep.subr.mxu0 0.0
        %3020 = vmatpush1.msra.mxu0 0.0
        %3021 = vmatprep.subr.mxu0 0.0
        %3022 = vmatpush1.msra.mxu0 0.0
        %3023 = vmatprep.subr.mxu0 0.0
        %3024 = vmatpush1.msra.mxu0 0.0
        %3025 = vmatprep.subr.mxu0 0.0
        %3026 = vmatpush1.msra.mxu0 0.0
        %3027 = vmatprep.subr.mxu0 0.0
        %3028 = vmatpush1.msra.mxu0 0.0
        %3029 = vmatprep.subr.mxu0 0.0
        %3030 = vmatpush1.msra.mxu0 0.0
        %3031 = vmatprep.subr.mxu0 0.0
        %3032 = vmatpush1.msra.mxu0 0.0
        %3033 = vmatprep.subr.mxu0 0.0
        %3034 = vmatpush1.msra.mxu0 0.0
        %3035 = vmatprep.subr.mxu0 0.0
        %3036 = vmatpush1.msra.mxu0 0.0
        %3037 = vmatprep.subr.mxu0 0.0
        %3038 = vmatpush1.msra.mxu0 0.0
        %3039 = vmatprep.subr.mxu0 0.0
        %3040 = vmatpush1.msra.mxu0 0.0
        %3041 = vmatprep.subr.mxu0 0.0
        %3042 = vmatpush1.msra.mxu0 0.0
        %3043 = vmatprep.subr.mxu0 0.0
        %3044 = vmatpush1.msra.mxu0 0.0
        %3045 = vmatprep.subr.mxu0 0.0
        %3046 = vmatpush1.msra.mxu0 0.0
        %3047 = vmatprep.subr.mxu0 0.0
        %3048 = vmatpush1.msra.mxu0 0.0
        %3049 = vmatprep.subr.mxu0 0.0
        %3050 = vmatpush1.msra.mxu0 0.0
        %3051 = vmatprep.subr.mxu0 0.0
        %3052 = vmatpush1.msra.mxu0 0.0
        %3053 = vmatprep.subr.mxu0 0.0
        %3054 = vmatpush1.msra.mxu0 0.0
        %3055 = vmatprep.subr.mxu0 0.0
        %3056 = vmatpush1.msra.mxu0 0.0
        %3057 = vmatprep.mubr.f32.mxu0 0.0
        %3058 = vmatmul.mubr.f32.gmra.mrb[0].mxu0 %v2911
        %v3059 = vpop.f32.mrb[0].mxu0
        %v3060 = vadd.f32 0.0, %v3059
        %v3061 = vpop.f32.mrb[0].mxu0
        %v3062 = vadd.f32 0.0, %v3061
        %3063 = vmatprep.mubr.f32.mxu0 0.0
        %3064 = vmatmul.mubr.f32.gmra.mrb[0].mxu0 %v2914
        %v3065 = vpop.f32.mrb[0].mxu0
        %v3066 = vadd.f32 0.0, %v3065
        %v3067 = vpop.f32.mrb[0].mxu0
        %v3068 = vadd.f32 0.0, %v3067
        %3069 = vdwg.mxu0
        %3070 = vmatprep.subr.mxu0 %v2861
        %3071 = vmatpush1.msra.mxu0 %v2860
        %3072 = vmatprep.subr.mxu0 %v2870
        %3073 = vmatpush1.msra.mxu0 %v2869
        %3074 = vmatprep.subr.mxu0 %v2879
        %3075 = vmatpush1.msra.mxu0 %v2878
        %3076 = vmatprep.subr.mxu0 0.0
        %3077 = vmatpush1.msra.mxu0 0.0
        %3078 = vmatprep.subr.mxu0 0.0
        %3079 = vmatpush1.msra.mxu0 0.0
        %3080 = vmatprep.subr.mxu0 0.0
        %3081 = vmatpush1.msra.mxu0 0.0
        %3082 = vmatprep.subr.mxu0 0.0
        %3083 = vmatpush1.msra.mxu0 0.0
        %3084 = vmatprep.subr.mxu0 0.0
        %3085 = vmatpush1.msra.mxu0 0.0
        %3086 = vmatprep.subr.mxu0 0.0
        %3087 = vmatpush1.msra.mxu0 0.0
        %3088 = vmatprep.subr.mxu0 0.0
        %3089 = vmatpush1.msra.mxu0 0.0
        %3090 = vmatprep.subr.mxu0 0.0
        %3091 = vmatpush1.msra.mxu0 0.0
        %3092 = vmatprep.subr.mxu0 0.0
        %3093 = vmatpush1.msra.mxu0 0.0
        %3094 = vmatprep.subr.mxu0 0.0
        %3095 = vmatpush1.msra.mxu0 0.0
        %3096 = vmatprep.subr.mxu0 0.0
        %3097 = vmatpush1.msra.mxu0 0.0
        %3098 = vmatprep.subr.mxu0 0.0
        %3099 = vmatpush1.msra.mxu0 0.0
        %3100 = vmatprep.subr.mxu0 0.0
        %3101 = vmatpush1.msra.mxu0 0.0
        %3102 = vmatprep.subr.mxu0 0.0
        %3103 = vmatpush1.msra.mxu0 0.0
        %3104 = vmatprep.subr.mxu0 0.0
        %3105 = vmatpush1.msra.mxu0 0.0
        %3106 = vmatprep.subr.mxu0 0.0
        %3107 = vmatpush1.msra.mxu0 0.0
        %3108 = vmatprep.subr.mxu0 0.0
        %3109 = vmatpush1.msra.mxu0 0.0
        %3110 = vmatprep.subr.mxu0 0.0
        %3111 = vmatpush1.msra.mxu0 0.0
        %3112 = vmatprep.subr.mxu0 0.0
        %3113 = vmatpush1.msra.mxu0 0.0
        %3114 = vmatprep.subr.mxu0 0.0
        %3115 = vmatpush1.msra.mxu0 0.0
        %3116 = vmatprep.subr.mxu0 0.0
        %3117 = vmatpush1.msra.mxu0 0.0
        %3118 = vmatprep.subr.mxu0 0.0
        %3119 = vmatpush1.msra.mxu0 0.0
        %3120 = vmatprep.subr.mxu0 0.0
        %3121 = vmatpush1.msra.mxu0 0.0
        %3122 = vmatprep.subr.mxu0 0.0
        %3123 = vmatpush1.msra.mxu0 0.0
        %3124 = vmatprep.subr.mxu0 0.0
        %3125 = vmatpush1.msra.mxu0 0.0
        %3126 = vmatprep.subr.mxu0 0.0
        %3127 = vmatpush1.msra.mxu0 0.0
        %3128 = vmatprep.subr.mxu0 0.0
        %3129 = vmatpush1.msra.mxu0 0.0
        %3130 = vmatprep.subr.mxu0 0.0
        %3131 = vmatpush1.msra.mxu0 0.0
        %3132 = vmatprep.subr.mxu0 0.0
        %3133 = vmatpush1.msra.mxu0 0.0
        %3134 = vmatprep.mubr.f32.mxu0 0.0
        %3135 = vmatmul.mubr.f32.gmra.mrb[0].mxu0 %v2911
        %v3136 = vpop.f32.mrb[0].mxu0
        %v3137 = vadd.f32 0.0, %v3136
        %v3138 = vpop.f32.mrb[0].mxu0
        %v3139 = vadd.f32 0.0, %v3138
        %3140 = vmatprep.mubr.f32.mxu0 0.0
        %3141 = vmatmul.mubr.f32.gmra.mrb[0].mxu0 %v2914
        %v3142 = vpop.f32.mrb[0].mxu0
        %v3143 = vadd.f32 0.0, %v3142
        %v3144 = vpop.f32.mrb[0].mxu0
        %v3145 = vadd.f32 0.0, %v3144
        %3146 = vdwg.mxu0
        %3147 = vmatprep.subr.mxu0 %v2863
        %3148 = vmatpush1.msra.mxu0 %v2862
        %3149 = vmatprep.subr.mxu0 %v2872
        %3150 = vmatpush1.msra.mxu0 %v2871
        %3151 = vmatprep.subr.mxu0 %v2881
        %3152 = vmatpush1.msra.mxu0 %v2880
        %3153 = vmatprep.subr.mxu0 0.0
        %3154 = vmatpush1.msra.mxu0 0.0
        %3155 = vmatprep.subr.mxu0 0.0
        %3156 = vmatpush1.msra.mxu0 0.0
        %3157 = vmatprep.subr.mxu0 0.0
        %3158 = vmatpush1.msra.mxu0 0.0
        %3159 = vmatprep.subr.mxu0 0.0
        %3160 = vmatpush1.msra.mxu0 0.0
        %3161 = vmatprep.subr.mxu0 0.0
        %3162 = vmatpush1.msra.mxu0 0.0
        %3163 = vmatprep.subr.mxu0 0.0
        %3164 = vmatpush1.msra.mxu0 0.0
        %3165 = vmatprep.subr.mxu0 0.0
        %3166 = vmatpush1.msra.mxu0 0.0
        %3167 = vmatprep.subr.mxu0 0.0
        %3168 = vmatpush1.msra.mxu0 0.0
        %3169 = vmatprep.subr.mxu0 0.0
        %3170 = vmatpush1.msra.mxu0 0.0
        %3171 = vmatprep.subr.mxu0 0.0
        %3172 = vmatpush1.msra.mxu0 0.0
        %3173 = vmatprep.subr.mxu0 0.0
        %3174 = vmatpush1.msra.mxu0 0.0
        %3175 = vmatprep.subr.mxu0 0.0
        %3176 = vmatpush1.msra.mxu0 0.0
        %3177 = vmatprep.subr.mxu0 0.0
        %3178 = vmatpush1.msra.mxu0 0.0
        %3179 = vmatprep.subr.mxu0 0.0
        %3180 = vmatpush1.msra.mxu0 0.0
        %3181 = vmatprep.subr.mxu0 0.0
        %3182 = vmatpush1.msra.mxu0 0.0
        %3183 = vmatprep.subr.mxu0 0.0
        %3184 = vmatpush1.msra.mxu0 0.0
        %3185 = vmatprep.subr.mxu0 0.0
        %3186 = vmatpush1.msra.mxu0 0.0
        %3187 = vmatprep.subr.mxu0 0.0
        %3188 = vmatpush1.msra.mxu0 0.0
        %3189 = vmatprep.subr.mxu0 0.0
        %3190 = vmatpush1.msra.mxu0 0.0
        %3191 = vmatprep.subr.mxu0 0.0
        %3192 = vmatpush1.msra.mxu0 0.0
        %3193 = vmatprep.subr.mxu0 0.0
        %3194 = vmatpush1.msra.mxu0 0.0
        %3195 = vmatprep.subr.mxu0 0.0
        %3196 = vmatpush1.msra.mxu0 0.0
        %3197 = vmatprep.subr.mxu0 0.0
        %3198 = vmatpush1.msra.mxu0 0.0
        %3199 = vmatprep.subr.mxu0 0.0
        %3200 = vmatpush1.msra.mxu0 0.0
        %3201 = vmatprep.subr.mxu0 0.0
        %3202 = vmatpush1.msra.mxu0 0.0
        %3203 = vmatprep.subr.mxu0 0.0
        %3204 = vmatpush1.msra.mxu0 0.0
        %3205 = vmatprep.subr.mxu0 0.0
        %3206 = vmatpush1.msra.mxu0 0.0
        %3207 = vmatprep.subr.mxu0 0.0
        %3208 = vmatpush1.msra.mxu0 0.0
        %3209 = vmatprep.subr.mxu0 0.0
        %3210 = vmatpush1.msra.mxu0 0.0
        %3211 = vmatprep.mubr.f32.mxu0 0.0
        %3212 = vmatmul.mubr.f32.gmra.mrb[0].mxu0 %v2911
        %v3213 = vpop.f32.mrb[0].mxu0
        %v3214 = vadd.f32 0.0, %v3213
        %v3215 = vpop.f32.mrb[0].mxu0
        %v3216 = vadd.f32 0.0, %v3215
        %3217 = vmatprep.mubr.f32.mxu0 0.0
        %3218 = vmatmul.mubr.f32.gmra.mrb[0].mxu0 %v2914
        %v3219 = vpop.f32.mrb[0].mxu0
        %v3220 = vadd.f32 0.0, %v3219
        %v3221 = vpop.f32.mrb[0].mxu0
        %v3222 = vadd.f32 0.0, %v3221
        %3223 = vdwg.mxu0
        %3224 = vmatprep.subr.mxu0 0.0
        %3225 = vmatpush1.msra.mxu0 %v2864
        %3226 = vmatprep.subr.mxu0 0.0
        %3227 = vmatpush1.msra.mxu0 %v2873
        %3228 = vmatprep.subr.mxu0 0.0
        %3229 = vmatpush1.msra.mxu0 %v2882
        %3230 = vmatprep.subr.mxu0 0.0
        %3231 = vmatpush1.msra.mxu0 0.0
        %3232 = vmatprep.subr.mxu0 0.0
        %3233 = vmatpush1.msra.mxu0 0.0
        %3234 = vmatprep.subr.mxu0 0.0
        %3235 = vmatpush1.msra.mxu0 0.0
        %3236 = vmatprep.subr.mxu0 0.0
        %3237 = vmatpush1.msra.mxu0 0.0
        %3238 = vmatprep.subr.mxu0 0.0
        %3239 = vmatpush1.msra.mxu0 0.0
        %3240 = vmatprep.subr.mxu0 0.0
        %3241 = vmatpush1.msra.mxu0 0.0
        %3242 = vmatprep.subr.mxu0 0.0
        %3243 = vmatpush1.msra.mxu0 0.0
        %3244 = vmatprep.subr.mxu0 0.0
        %3245 = vmatpush1.msra.mxu0 0.0
        %3246 = vmatprep.subr.mxu0 0.0
        %3247 = vmatpush1.msra.mxu0 0.0
        %3248 = vmatprep.subr.mxu0 0.0
        %3249 = vmatpush1.msra.mxu0 0.0
        %3250 = vmatprep.subr.mxu0 0.0
        %3251 = vmatpush1.msra.mxu0 0.0
        %3252 = vmatprep.subr.mxu0 0.0
        %3253 = vmatpush1.msra.mxu0 0.0
        %3254 = vmatprep.subr.mxu0 0.0
        %3255 = vmatpush1.msra.mxu0 0.0
        %3256 = vmatprep.subr.mxu0 0.0
        %3257 = vmatpush1.msra.mxu0 0.0
        %3258 = vmatprep.subr.mxu0 0.0
        %3259 = vmatpush1.msra.mxu0 0.0
        %3260 = vmatprep.subr.mxu0 0.0
        %3261 = vmatpush1.msra.mxu0 0.0
        %3262 = vmatprep.subr.mxu0 0.0
        %3263 = vmatpush1.msra.mxu0 0.0
        %3264 = vmatprep.subr.mxu0 0.0
        %3265 = vmatpush1.msra.mxu0 0.0
        %3266 = vmatprep.subr.mxu0 0.0
        %3267 = vmatpush1.msra.mxu0 0.0
        %3268 = vmatprep.subr.mxu0 0.0
        %3269 = vmatpush1.msra.mxu0 0.0
        %3270 = vmatprep.subr.mxu0 0.0
        %3271 = vmatpush1.msra.mxu0 0.0
        %3272 = vmatprep.subr.mxu0 0.0
        %3273 = vmatpush1.msra.mxu0 0.0
        %3274 = vmatprep.subr.mxu0 0.0
        %3275 = vmatpush1.msra.mxu0 0.0
        %3276 = vmatprep.subr.mxu0 0.0
        %3277 = vmatpush1.msra.mxu0 0.0
        %3278 = vmatprep.subr.mxu0 0.0
        %3279 = vmatpush1.msra.mxu0 0.0
        %3280 = vmatprep.subr.mxu0 0.0
        %3281 = vmatpush1.msra.mxu0 0.0
        %3282 = vmatprep.subr.mxu0 0.0
        %3283 = vmatpush1.msra.mxu0 0.0
        %3284 = vmatprep.subr.mxu0 0.0
        %3285 = vmatpush1.msra.mxu0 0.0
        %3286 = vmatprep.subr.mxu0 0.0
        %3287 = vmatpush1.msra.mxu0 0.0
        %3288 = vmatprep.mubr.f32.mxu0 0.0
        %3289 = vmatmul.mubr.f32.gmra.mrb[0].mxu0 %v2911
        %v3290 = vpop.f32.mrb[0].mxu0
        %v3291 = vadd.f32 0.0, %v3290
        %v3292 = vpop.f32.mrb[0].mxu0
        %3293 = vmatprep.mubr.f32.mxu0 0.0
        %3294 = vmatmul.mubr.f32.gmra.mrb[0].mxu0 %v2914
        %v3295 = vpop.f32.mrb[0].mxu0
        %v3296 = vadd.f32 0.0, %v3295
        %v3297 = vpop.f32.mrb[0].mxu0
        %3298 = vdwg.mxu0
        %v3299 = vadd.f32 %v2477, %v2983
        %v3300 = vadd.f32 %v2479, %v2985
        %v3301 = vadd.f32 %v2554, %v3060
        %v3302 = vadd.f32 %v2556, %v3062
        %v3303 = vadd.f32 %v2631, %v3137
        %v3304 = vadd.f32 %v2633, %v3139
        %v3305 = vadd.f32 %v2708, %v3214
        %v3306 = vadd.f32 %v2710, %v3216
        %v3307 = vadd.f32 %v2785, %v3291
        %v3308 = vadd.f32 %v2483, %v2989
        %v3309 = vadd.f32 %v2485, %v2991
        %v3310 = vadd.f32 %v2560, %v3066
        %v3311 = vadd.f32 %v2562, %v3068
        %v3312 = vadd.f32 %v2637, %v3143
        %v3313 = vadd.f32 %v2639, %v3145
        %v3314 = vadd.f32 %v2714, %v3220
        %v3315 = vadd.f32 %v2716, %v3222
        %v3316 = vadd.f32 %v2790, %v3296
        %s3317 = scalar_lea.vmem %s3, 48
        %v3318 = vld [vmem:[%s3317] sm:$0xff]
        %v3319 = vld [vmem:[%s3317 + $0x8] sm:$0xff]
        %3320 = vrot.lane.b32.xlu0 %v1801, 80
        %v3321 = vpop.permute.xlu0 %3320
        %3322 = vrot.lane.b32.xlu0 %v1802, 80
        %v3323 = vpop.permute.xlu0 %3322
        %3324 = vrot.lane.b32.xlu0 %v1803, 80
        %v3325 = vpop.permute.xlu0 %3324
        %3326 = vrot.lane.b32.xlu0 %v1804, 80
        %v3327 = vpop.permute.xlu0 %3326
        %3328 = vrot.lane.b32.xlu0 %v1805, 80
        %v3329 = vpop.permute.xlu0 %3328
        %3330 = vrot.lane.b32.xlu0 %v1806, 80
        %v3331 = vpop.permute.xlu0 %3330
        %3332 = vrot.lane.b32.xlu0 %v1807, 80
        %v3333 = vpop.permute.xlu0 %3332
        %3334 = vrot.lane.b32.xlu0 %v1808, 80
        %v3335 = vpop.permute.xlu0 %3334
        %3336 = vrot.lane.b32.xlu0 %v1809, 80
        %v3337 = vpop.permute.xlu0 %3336
        %3338 = vrot.lane.b32.xlu0 %v1810, 80
        %v3339 = vpop.permute.xlu0 %3338
        %3340 = vrot.lane.b32.xlu0 %v1841, 80
        %v3341 = vpop.permute.xlu0 %3340
        %3342 = vrot.lane.b32.xlu0 %v1842, 80
        %v3343 = vpop.permute.xlu0 %3342
        %3344 = vrot.lane.b32.xlu0 %v1843, 80
        %v3345 = vpop.permute.xlu0 %3344
        %3346 = vrot.lane.b32.xlu0 %v1844, 80
        %v3347 = vpop.permute.xlu0 %3346
        %3348 = vrot.lane.b32.xlu0 %v1845, 80
        %v3349 = vpop.permute.xlu0 %3348
        %3350 = vrot.lane.b32.xlu0 %v1846, 80
        %v3351 = vpop.permute.xlu0 %3350
        %3352 = vrot.lane.b32.xlu0 %v1847, 80
        %v3353 = vpop.permute.xlu0 %3352
        %3354 = vrot.lane.b32.xlu0 %v1848, 80
        %v3355 = vpop.permute.xlu0 %3354
        %3356 = vrot.lane.b32.xlu0 %v1849, 80
        %v3357 = vpop.permute.xlu0 %3356
        %3358 = vrot.lane.b32.xlu0 %v1840, 80
        %v3359 = vpop.permute.xlu0 %3358
        %3360 = vrot.lane.b32.xlu0 %v1879, 80
        %v3361 = vpop.permute.xlu0 %3360
        %3362 = vrot.lane.b32.xlu0 %v1880, 80
        %v3363 = vpop.permute.xlu0 %3362
        %3364 = vrot.lane.b32.xlu0 %v1881, 80
        %v3365 = vpop.permute.xlu0 %3364
        %3366 = vrot.lane.b32.xlu0 %v1882, 80
        %v3367 = vpop.permute.xlu0 %3366
        %3368 = vrot.lane.b32.xlu0 %v1883, 80
        %v3369 = vpop.permute.xlu0 %3368
        %3370 = vrot.lane.b32.xlu0 %v1884, 80
        %v3371 = vpop.permute.xlu0 %3370
        %3372 = vrot.lane.b32.xlu0 %v1885, 80
        %v3373 = vpop.permute.xlu0 %3372
        %3374 = vrot.lane.b32.xlu0 %v1886, 80
        %v3375 = vpop.permute.xlu0 %3374
        %3376 = vrot.lane.b32.xlu0 %v1887, 80
        %v3377 = vpop.permute.xlu0 %3376
        %3378 = vrot.lane.b32.xlu0 %v1878, 80
        %v3379 = vpop.permute.xlu0 %3378
        %v3380 = vsel %vm1419, %v3321, %v3323
        %v3381 = vsel %vm1419, %v3323, %v3325
        %v3382 = vsel %vm1419, %v3325, %v3327
        %v3383 = vsel %vm1419, %v3327, %v3329
        %v3384 = vsel %vm1419, %v3329, %v3331
        %v3385 = vsel %vm1419, %v3331, %v3333
        %v3386 = vsel %vm1419, %v3333, %v3335
        %v3387 = vsel %vm1419, %v3335, %v3337
        %v3388 = vsel %vm1419, %v3337, %v3339
        %v3389 = vsel %vm1419, %v3341, %v3343
        %v3390 = vsel %vm1419, %v3343, %v3345
        %v3391 = vsel %vm1419, %v3345, %v3347
        %v3392 = vsel %vm1419, %v3347, %v3349
        %v3393 = vsel %vm1419, %v3349, %v3351
        %v3394 = vsel %vm1419, %v3351, %v3353
        %v3395 = vsel %vm1419, %v3353, %v3355
        %v3396 = vsel %vm1419, %v3355, %v3357
        %v3397 = vsel %vm1419, %v3357, %v3359
        %v3398 = vsel %vm1419, %v3361, %v3363
        %v3399 = vsel %vm1419, %v3363, %v3365
        %v3400 = vsel %vm1419, %v3365, %v3367
        %v3401 = vsel %vm1419, %v3367, %v3369
        %v3402 = vsel %vm1419, %v3369, %v3371
        %v3403 = vsel %vm1419, %v3371, %v3373
        %v3404 = vsel %vm1419, %v3373, %v3375
        %v3405 = vsel %vm1419, %v3375, %v3377
        %v3406 = vsel %vm1419, %v3377, %v3379
        %v3435 = vsel %vm2014, %v3318, 0
        %v3438 = vsel %vm2014, %v3319, 0
        %3440 = vmatprep.subr.mxu0 %v3381
        %3441 = vmatpush1.msra.mxu0 %v3380
        %3442 = vmatprep.subr.mxu0 %v3390
        %3443 = vmatpush1.msra.mxu0 %v3389
        %3444 = vmatprep.subr.mxu0 %v3399
        %3445 = vmatpush1.msra.mxu0 %v3398
        %3446 = vmatprep.subr.mxu0 0.0
        %3447 = vmatpush1.msra.mxu0 0.0
        %3448 = vmatprep.subr.mxu0 0.0
        %3449 = vmatpush1.msra.mxu0 0.0
        %3450 = vmatprep.subr.mxu0 0.0
        %3451 = vmatpush1.msra.mxu0 0.0
        %3452 = vmatprep.subr.mxu0 0.0
        %3453 = vmatpush1.msra.mxu0 0.0
        %3454 = vmatprep.subr.mxu0 0.0
        %3455 = vmatpush1.msra.mxu0 0.0
        %3456 = vmatprep.subr.mxu0 0.0
        %3457 = vmatpush1.msra.mxu0 0.0
        %3458 = vmatprep.subr.mxu0 0.0
        %3459 = vmatpush1.msra.mxu0 0.0
        %3460 = vmatprep.subr.mxu0 0.0
        %3461 = vmatpush1.msra.mxu0 0.0
        %3462 = vmatprep.subr.mxu0 0.0
        %3463 = vmatpush1.msra.mxu0 0.0
        %3464 = vmatprep.subr.mxu0 0.0
        %3465 = vmatpush1.msra.mxu0 0.0
        %3466 = vmatprep.subr.mxu0 0.0
        %3467 = vmatpush1.msra.mxu0 0.0
        %3468 = vmatprep.subr.mxu0 0.0
        %3469 = vmatpush1.msra.mxu0 0.0
        %3470 = vmatprep.subr.mxu0 0.0
        %3471 = vmatpush1.msra.mxu0 0.0
        %3472 = vmatprep.subr.mxu0 0.0
        %3473 = vmatpush1.msra.mxu0 0.0
        %3474 = vmatprep.subr.mxu0 0.0
        %3475 = vmatpush1.msra.mxu0 0.0
        %3476 = vmatprep.subr.mxu0 0.0
        %3477 = vmatpush1.msra.mxu0 0.0
        %3478 = vmatprep.subr.mxu0 0.0
        %3479 = vmatpush1.msra.mxu0 0.0
        %3480 = vmatprep.subr.mxu0 0.0
        %3481 = vmatpush1.msra.mxu0 0.0
        %3482 = vmatprep.subr.mxu0 0.0
        %3483 = vmatpush1.msra.mxu0 0.0
        %3484 = vmatprep.subr.mxu0 0.0
        %3485 = vmatpush1.msra.mxu0 0.0
        %3486 = vmatprep.subr.mxu0 0.0
        %3487 = vmatpush1.msra.mxu0 0.0
        %3488 = vmatprep.subr.mxu0 0.0
        %3489 = vmatpush1.msra.mxu0 0.0
        %3490 = vmatprep.subr.mxu0 0.0
        %3491 = vmatpush1.msra.mxu0 0.0
        %3492 = vmatprep.subr.mxu0 0.0
        %3493 = vmatpush1.msra.mxu0 0.0
        %3494 = vmatprep.subr.mxu0 0.0
        %3495 = vmatpush1.msra.mxu0 0.0
        %3496 = vmatprep.subr.mxu0 0.0
        %3497 = vmatpush1.msra.mxu0 0.0
        %3498 = vmatprep.subr.mxu0 0.0
        %3499 = vmatpush1.msra.mxu0 0.0
        %3500 = vmatprep.subr.mxu0 0.0
        %3501 = vmatpush1.msra.mxu0 0.0
        %3502 = vmatprep.subr.mxu0 0.0
        %3503 = vmatpush1.msra.mxu0 0.0
        %3504 = vmatprep.mubr.f32.mxu0 0.0
        %3505 = vmatmul.mubr.f32.gmra.mrb[0].mxu0 %v3435
        %v3506 = vpop.f32.mrb[0].mxu0
        %v3507 = vadd.f32 0.0, %v3506
        %v3508 = vpop.f32.mrb[0].mxu0
        %v3509 = vadd.f32 0.0, %v3508
        %3510 = vmatprep.mubr.f32.mxu0 0.0
        %3511 = vmatmul.mubr.f32.gmra.mrb[0].mxu0 %v3438
        %v3512 = vpop.f32.mrb[0].mxu0
        %v3513 = vadd.f32 0.0, %v3512
        %v3514 = vpop.f32.mrb[0].mxu0
        %v3515 = vadd.f32 0.0, %v3514
        %3516 = vdwg.mxu0
        %3517 = vmatprep.subr.mxu0 %v3383
        %3518 = vmatpush1.msra.mxu0 %v3382
        %3519 = vmatprep.subr.mxu0 %v3392
        %3520 = vmatpush1.msra.mxu0 %v3391
        %3521 = vmatprep.subr.mxu0 %v3401
        %3522 = vmatpush1.msra.mxu0 %v3400
        %3523 = vmatprep.subr.mxu0 0.0
        %3524 = vmatpush1.msra.mxu0 0.0
        %3525 = vmatprep.subr.mxu0 0.0
        %3526 = vmatpush1.msra.mxu0 0.0
        %3527 = vmatprep.subr.mxu0 0.0
        %3528 = vmatpush1.msra.mxu0 0.0
        %3529 = vmatprep.subr.mxu0 0.0
        %3530 = vmatpush1.msra.mxu0 0.0
        %3531 = vmatprep.subr.mxu0 0.0
        %3532 = vmatpush1.msra.mxu0 0.0
        %3533 = vmatprep.subr.mxu0 0.0
        %3534 = vmatpush1.msra.mxu0 0.0
        %3535 = vmatprep.subr.mxu0 0.0
        %3536 = vmatpush1.msra.mxu0 0.0
        %3537 = vmatprep.subr.mxu0 0.0
        %3538 = vmatpush1.msra.mxu0 0.0
        %3539 = vmatprep.subr.mxu0 0.0
        %3540 = vmatpush1.msra.mxu0 0.0
        %3541 = vmatprep.subr.mxu0 0.0
        %3542 = vmatpush1.msra.mxu0 0.0
        %3543 = vmatprep.subr.mxu0 0.0
        %3544 = vmatpush1.msra.mxu0 0.0
        %3545 = vmatprep.subr.mxu0 0.0
        %3546 = vmatpush1.msra.mxu0 0.0
        %3547 = vmatprep.subr.mxu0 0.0
        %3548 = vmatpush1.msra.mxu0 0.0
        %3549 = vmatprep.subr.mxu0 0.0
        %3550 = vmatpush1.msra.mxu0 0.0
        %3551 = vmatprep.subr.mxu0 0.0
        %3552 = vmatpush1.msra.mxu0 0.0
        %3553 = vmatprep.subr.mxu0 0.0
        %3554 = vmatpush1.msra.mxu0 0.0
        %3555 = vmatprep.subr.mxu0 0.0
        %3556 = vmatpush1.msra.mxu0 0.0
        %3557 = vmatprep.subr.mxu0 0.0
        %3558 = vmatpush1.msra.mxu0 0.0
        %3559 = vmatprep.subr.mxu0 0.0
        %3560 = vmatpush1.msra.mxu0 0.0
        %3561 = vmatprep.subr.mxu0 0.0
        %3562 = vmatpush1.msra.mxu0 0.0
        %3563 = vmatprep.subr.mxu0 0.0
        %3564 = vmatpush1.msra.mxu0 0.0
        %3565 = vmatprep.subr.mxu0 0.0
        %3566 = vmatpush1.msra.mxu0 0.0
        %3567 = vmatprep.subr.mxu0 0.0
        %3568 = vmatpush1.msra.mxu0 0.0
        %3569 = vmatprep.subr.mxu0 0.0
        %3570 = vmatpush1.msra.mxu0 0.0
        %3571 = vmatprep.subr.mxu0 0.0
        %3572 = vmatpush1.msra.mxu0 0.0
        %3573 = vmatprep.subr.mxu0 0.0
        %3574 = vmatpush1.msra.mxu0 0.0
        %3575 = vmatprep.subr.mxu0 0.0
        %3576 = vmatpush1.msra.mxu0 0.0
        %3577 = vmatprep.subr.mxu0 0.0
        %3578 = vmatpush1.msra.mxu0 0.0
        %3579 = vmatprep.subr.mxu0 0.0
        %3580 = vmatpush1.msra.mxu0 0.0
        %3581 = vmatprep.mubr.f32.mxu0 0.0
        %3582 = vmatmul.mubr.f32.gmra.mrb[0].mxu0 %v3435
        %v3583 = vpop.f32.mrb[0].mxu0
        %v3584 = vadd.f32 0.0, %v3583
        %v3585 = vpop.f32.mrb[0].mxu0
        %v3586 = vadd.f32 0.0, %v3585
        %3587 = vmatprep.mubr.f32.mxu0 0.0
        %3588 = vmatmul.mubr.f32.gmra.mrb[0].mxu0 %v3438
        %v3589 = vpop.f32.mrb[0].mxu0
        %v3590 = vadd.f32 0.0, %v3589
        %v3591 = vpop.f32.mrb[0].mxu0
        %v3592 = vadd.f32 0.0, %v3591
        %3593 = vdwg.mxu0
        %3594 = vmatprep.subr.mxu0 %v3385
        %3595 = vmatpush1.msra.mxu0 %v3384
        %3596 = vmatprep.subr.mxu0 %v3394
        %3597 = vmatpush1.msra.mxu0 %v3393
        %3598 = vmatprep.subr.mxu0 %v3403
        %3599 = vmatpush1.msra.mxu0 %v3402
        %3600 = vmatprep.subr.mxu0 0.0
        %3601 = vmatpush1.msra.mxu0 0.0
        %3602 = vmatprep.subr.mxu0 0.0
        %3603 = vmatpush1.msra.mxu0 0.0
        %3604 = vmatprep.subr.mxu0 0.0
        %3605 = vmatpush1.msra.mxu0 0.0
        %3606 = vmatprep.subr.mxu0 0.0
        %3607 = vmatpush1.msra.mxu0 0.0
        %3608 = vmatprep.subr.mxu0 0.0
        %3609 = vmatpush1.msra.mxu0 0.0
        %3610 = vmatprep.subr.mxu0 0.0
        %3611 = vmatpush1.msra.mxu0 0.0
        %3612 = vmatprep.subr.mxu0 0.0
        %3613 = vmatpush1.msra.mxu0 0.0
        %3614 = vmatprep.subr.mxu0 0.0
        %3615 = vmatpush1.msra.mxu0 0.0
        %3616 = vmatprep.subr.mxu0 0.0
        %3617 = vmatpush1.msra.mxu0 0.0
        %3618 = vmatprep.subr.mxu0 0.0
        %3619 = vmatpush1.msra.mxu0 0.0
        %3620 = vmatprep.subr.mxu0 0.0
        %3621 = vmatpush1.msra.mxu0 0.0
        %3622 = vmatprep.subr.mxu0 0.0
        %3623 = vmatpush1.msra.mxu0 0.0
        %3624 = vmatprep.subr.mxu0 0.0
        %3625 = vmatpush1.msra.mxu0 0.0
        %3626 = vmatprep.subr.mxu0 0.0
        %3627 = vmatpush1.msra.mxu0 0.0
        %3628 = vmatprep.subr.mxu0 0.0
        %3629 = vmatpush1.msra.mxu0 0.0
        %3630 = vmatprep.subr.mxu0 0.0
        %3631 = vmatpush1.msra.mxu0 0.0
        %3632 = vmatprep.subr.mxu0 0.0
        %3633 = vmatpush1.msra.mxu0 0.0
        %3634 = vmatprep.subr.mxu0 0.0
        %3635 = vmatpush1.msra.mxu0 0.0
        %3636 = vmatprep.subr.mxu0 0.0
        %3637 = vmatpush1.msra.mxu0 0.0
        %3638 = vmatprep.subr.mxu0 0.0
        %3639 = vmatpush1.msra.mxu0 0.0
        %3640 = vmatprep.subr.mxu0 0.0
        %3641 = vmatpush1.msra.mxu0 0.0
        %3642 = vmatprep.subr.mxu0 0.0
        %3643 = vmatpush1.msra.mxu0 0.0
        %3644 = vmatprep.subr.mxu0 0.0
        %3645 = vmatpush1.msra.mxu0 0.0
        %3646 = vmatprep.subr.mxu0 0.0
        %3647 = vmatpush1.msra.mxu0 0.0
        %3648 = vmatprep.subr.mxu0 0.0
        %3649 = vmatpush1.msra.mxu0 0.0
        %3650 = vmatprep.subr.mxu0 0.0
        %3651 = vmatpush1.msra.mxu0 0.0
        %3652 = vmatprep.subr.mxu0 0.0
        %3653 = vmatpush1.msra.mxu0 0.0
        %3654 = vmatprep.subr.mxu0 0.0
        %3655 = vmatpush1.msra.mxu0 0.0
        %3656 = vmatprep.subr.mxu0 0.0
        %3657 = vmatpush1.msra.mxu0 0.0
        %3658 = vmatprep.mubr.f32.mxu0 0.0
        %3659 = vmatmul.mubr.f32.gmra.mrb[0].mxu0 %v3435
        %v3660 = vpop.f32.mrb[0].mxu0
        %v3661 = vadd.f32 0.0, %v3660
        %v3662 = vpop.f32.mrb[0].mxu0
        %v3663 = vadd.f32 0.0, %v3662
        %3664 = vmatprep.mubr.f32.mxu0 0.0
        %3665 = vmatmul.mubr.f32.gmra.mrb[0].mxu0 %v3438
        %v3666 = vpop.f32.mrb[0].mxu0
        %v3667 = vadd.f32 0.0, %v3666
        %v3668 = vpop.f32.mrb[0].mxu0
        %v3669 = vadd.f32 0.0, %v3668
        %3670 = vdwg.mxu0
        %3671 = vmatprep.subr.mxu0 %v3387
        %3672 = vmatpush1.msra.mxu0 %v3386
        %3673 = vmatprep.subr.mxu0 %v3396
        %3674 = vmatpush1.msra.mxu0 %v3395
        %3675 = vmatprep.subr.mxu0 %v3405
        %3676 = vmatpush1.msra.mxu0 %v3404
        %3677 = vmatprep.subr.mxu0 0.0
        %3678 = vmatpush1.msra.mxu0 0.0
        %3679 = vmatprep.subr.mxu0 0.0
        %3680 = vmatpush1.msra.mxu0 0.0
        %3681 = vmatprep.subr.mxu0 0.0
        %3682 = vmatpush1.msra.mxu0 0.0
        %3683 = vmatprep.subr.mxu0 0.0
        %3684 = vmatpush1.msra.mxu0 0.0
        %3685 = vmatprep.subr.mxu0 0.0
        %3686 = vmatpush1.msra.mxu0 0.0
        %3687 = vmatprep.subr.mxu0 0.0
        %3688 = vmatpush1.msra.mxu0 0.0
        %3689 = vmatprep.subr.mxu0 0.0
        %3690 = vmatpush1.msra.mxu0 0.0
        %3691 = vmatprep.subr.mxu0 0.0
        %3692 = vmatpush1.msra.mxu0 0.0
        %3693 = vmatprep.subr.mxu0 0.0
        %3694 = vmatpush1.msra.mxu0 0.0
        %3695 = vmatprep.subr.mxu0 0.0
        %3696 = vmatpush1.msra.mxu0 0.0
        %3697 = vmatprep.subr.mxu0 0.0
        %3698 = vmatpush1.msra.mxu0 0.0
        %3699 = vmatprep.subr.mxu0 0.0
        %3700 = vmatpush1.msra.mxu0 0.0
        %3701 = vmatprep.subr.mxu0 0.0
        %3702 = vmatpush1.msra.mxu0 0.0
        %3703 = vmatprep.subr.mxu0 0.0
        %3704 = vmatpush1.msra.mxu0 0.0
        %3705 = vmatprep.subr.mxu0 0.0
        %3706 = vmatpush1.msra.mxu0 0.0
        %3707 = vmatprep.subr.mxu0 0.0
        %3708 = vmatpush1.msra.mxu0 0.0
        %3709 = vmatprep.subr.mxu0 0.0
        %3710 = vmatpush1.msra.mxu0 0.0
        %3711 = vmatprep.subr.mxu0 0.0
        %3712 = vmatpush1.msra.mxu0 0.0
        %3713 = vmatprep.subr.mxu0 0.0
        %3714 = vmatpush1.msra.mxu0 0.0
        %3715 = vmatprep.subr.mxu0 0.0
        %3716 = vmatpush1.msra.mxu0 0.0
        %3717 = vmatprep.subr.mxu0 0.0
        %3718 = vmatpush1.msra.mxu0 0.0
        %3719 = vmatprep.subr.mxu0 0.0
        %3720 = vmatpush1.msra.mxu0 0.0
        %3721 = vmatprep.subr.mxu0 0.0
        %3722 = vmatpush1.msra.mxu0 0.0
        %3723 = vmatprep.subr.mxu0 0.0
        %3724 = vmatpush1.msra.mxu0 0.0
        %3725 = vmatprep.subr.mxu0 0.0
        %3726 = vmatpush1.msra.mxu0 0.0
        %3727 = vmatprep.subr.mxu0 0.0
        %3728 = vmatpush1.msra.mxu0 0.0
        %3729 = vmatprep.subr.mxu0 0.0
        %3730 = vmatpush1.msra.mxu0 0.0
        %3731 = vmatprep.subr.mxu0 0.0
        %3732 = vmatpush1.msra.mxu0 0.0
        %3733 = vmatprep.subr.mxu0 0.0
        %3734 = vmatpush1.msra.mxu0 0.0
        %3735 = vmatprep.mubr.f32.mxu0 0.0
        %3736 = vmatmul.mubr.f32.gmra.mrb[0].mxu0 %v3435
        %v3737 = vpop.f32.mrb[0].mxu0
        %v3738 = vadd.f32 0.0, %v3737
        %v3739 = vpop.f32.mrb[0].mxu0
        %v3740 = vadd.f32 0.0, %v3739
        %3741 = vmatprep.mubr.f32.mxu0 0.0
        %3742 = vmatmul.mubr.f32.gmra.mrb[0].mxu0 %v3438
        %v3743 = vpop.f32.mrb[0].mxu0
        %v3744 = vadd.f32 0.0, %v3743
        %v3745 = vpop.f32.mrb[0].mxu0
        %v3746 = vadd.f32 0.0, %v3745
        %3747 = vdwg.mxu0
        %3748 = vmatprep.subr.mxu0 0.0
        %3749 = vmatpush1.msra.mxu0 %v3388
        %3750 = vmatprep.subr.mxu0 0.0
        %3751 = vmatpush1.msra.mxu0 %v3397
        %3752 = vmatprep.subr.mxu0 0.0
        %3753 = vmatpush1.msra.mxu0 %v3406
        %3754 = vmatprep.subr.mxu0 0.0
        %3755 = vmatpush1.msra.mxu0 0.0
        %3756 = vmatprep.subr.mxu0 0.0
        %3757 = vmatpush1.msra.mxu0 0.0
        %3758 = vmatprep.subr.mxu0 0.0
        %3759 = vmatpush1.msra.mxu0 0.0
        %3760 = vmatprep.subr.mxu0 0.0
        %3761 = vmatpush1.msra.mxu0 0.0
        %3762 = vmatprep.subr.mxu0 0.0
        %3763 = vmatpush1.msra.mxu0 0.0
        %3764 = vmatprep.subr.mxu0 0.0
        %3765 = vmatpush1.msra.mxu0 0.0
        %3766 = vmatprep.subr.mxu0 0.0
        %3767 = vmatpush1.msra.mxu0 0.0
        %3768 = vmatprep.subr.mxu0 0.0
        %3769 = vmatpush1.msra.mxu0 0.0
        %3770 = vmatprep.subr.mxu0 0.0
        %3771 = vmatpush1.msra.mxu0 0.0
        %3772 = vmatprep.subr.mxu0 0.0
        %3773 = vmatpush1.msra.mxu0 0.0
        %3774 = vmatprep.subr.mxu0 0.0
        %3775 = vmatpush1.msra.mxu0 0.0
        %3776 = vmatprep.subr.mxu0 0.0
        %3777 = vmatpush1.msra.mxu0 0.0
        %3778 = vmatprep.subr.mxu0 0.0
        %3779 = vmatpush1.msra.mxu0 0.0
        %3780 = vmatprep.subr.mxu0 0.0
        %3781 = vmatpush1.msra.mxu0 0.0
        %3782 = vmatprep.subr.mxu0 0.0
        %3783 = vmatpush1.msra.mxu0 0.0
        %3784 = vmatprep.subr.mxu0 0.0
        %3785 = vmatpush1.msra.mxu0 0.0
        %3786 = vmatprep.subr.mxu0 0.0
        %3787 = vmatpush1.msra.mxu0 0.0
        %3788 = vmatprep.subr.mxu0 0.0
        %3789 = vmatpush1.msra.mxu0 0.0
        %3790 = vmatprep.subr.mxu0 0.0
        %3791 = vmatpush1.msra.mxu0 0.0
        %3792 = vmatprep.subr.mxu0 0.0
        %3793 = vmatpush1.msra.mxu0 0.0
        %3794 = vmatprep.subr.mxu0 0.0
        %3795 = vmatpush1.msra.mxu0 0.0
        %3796 = vmatprep.subr.mxu0 0.0
        %3797 = vmatpush1.msra.mxu0 0.0
        %3798 = vmatprep.subr.mxu0 0.0
        %3799 = vmatpush1.msra.mxu0 0.0
        %3800 = vmatprep.subr.mxu0 0.0
        %3801 = vmatpush1.msra.mxu0 0.0
        %3802 = vmatprep.subr.mxu0 0.0
        %3803 = vmatpush1.msra.mxu0 0.0
        %3804 = vmatprep.subr.mxu0 0.0
        %3805 = vmatpush1.msra.mxu0 0.0
        %3806 = vmatprep.subr.mxu0 0.0
        %3807 = vmatpush1.msra.mxu0 0.0
        %3808 = vmatprep.subr.mxu0 0.0
        %3809 = vmatpush1.msra.mxu0 0.0
        %3810 = vmatprep.subr.mxu0 0.0
        %3811 = vmatpush1.msra.mxu0 0.0
        %3812 = vmatprep.mubr.f32.mxu0 0.0
        %3813 = vmatmul.mubr.f32.gmra.mrb[0].mxu0 %v3435
        %v3814 = vpop.f32.mrb[0].mxu0
        %v3815 = vadd.f32 0.0, %v3814
        %v3816 = vpop.f32.mrb[0].mxu0
        %3817 = vmatprep.mubr.f32.mxu0 0.0
        %3818 = vmatmul.mubr.f32.gmra.mrb[0].mxu0 %v3438
        %v3819 = vpop.f32.mrb[0].mxu0
        %v3820 = vadd.f32 0.0, %v3819
        %v3821 = vpop.f32.mrb[0].mxu0
        %3822 = vdwg.mxu0
        %v3823 = vadd.f32 %v3299, %v3507
        %v3824 = vadd.f32 %v3300, %v3509
        %v3825 = vadd.f32 %v3301, %v3584
        %v3826 = vadd.f32 %v3302, %v3586
        %v3827 = vadd.f32 %v3303, %v3661
        %v3828 = vadd.f32 %v3304, %v3663
        %v3829 = vadd.f32 %v3305, %v3738
        %v3830 = vadd.f32 %v3306, %v3740
        %v3831 = vadd.f32 %v3307, %v3815
        %v3832 = vadd.f32 %v3308, %v3513
        %v3833 = vadd.f32 %v3309, %v3515
        %v3834 = vadd.f32 %v3310, %v3590
        %v3835 = vadd.f32 %v3311, %v3592
        %v3836 = vadd.f32 %v3312, %v3667
        %v3837 = vadd.f32 %v3313, %v3669
        %v3838 = vadd.f32 %v3314, %v3744
        %v3839 = vadd.f32 %v3315, %v3746
        %v3840 = vadd.f32 %v3316, %v3820
        %s3841 = scalar_lea.vmem %s3, 64
        %v3842 = vld [vmem:[%s3841] sm:$0xff]
        %v3843 = vld [vmem:[%s3841 + $0x8] sm:$0xff]
        %3844 = vrot.lane.b32.xlu0 %v1801, 64
        %v3845 = vpop.permute.xlu0 %3844
        %3846 = vrot.lane.b32.xlu0 %v1802, 64
        %v3847 = vpop.permute.xlu0 %3846
        %3848 = vrot.lane.b32.xlu0 %v1803, 64
        %v3849 = vpop.permute.xlu0 %3848
        %3850 = vrot.lane.b32.xlu0 %v1804, 64
        %v3851 = vpop.permute.xlu0 %3850
        %3852 = vrot.lane.b32.xlu0 %v1805, 64
        %v3853 = vpop.permute.xlu0 %3852
        %3854 = vrot.lane.b32.xlu0 %v1806, 64
        %v3855 = vpop.permute.xlu0 %3854
        %3856 = vrot.lane.b32.xlu0 %v1807, 64
        %v3857 = vpop.permute.xlu0 %3856
        %3858 = vrot.lane.b32.xlu0 %v1808, 64
        %v3859 = vpop.permute.xlu0 %3858
        %3860 = vrot.lane.b32.xlu0 %v1809, 64
        %v3861 = vpop.permute.xlu0 %3860
        %3862 = vrot.lane.b32.xlu0 %v1810, 64
        %v3863 = vpop.permute.xlu0 %3862
        %3864 = vrot.lane.b32.xlu0 %v1841, 64
        %v3865 = vpop.permute.xlu0 %3864
        %3866 = vrot.lane.b32.xlu0 %v1842, 64
        %v3867 = vpop.permute.xlu0 %3866
        %3868 = vrot.lane.b32.xlu0 %v1843, 64
        %v3869 = vpop.permute.xlu0 %3868
        %3870 = vrot.lane.b32.xlu0 %v1844, 64
        %v3871 = vpop.permute.xlu0 %3870
        %3872 = vrot.lane.b32.xlu0 %v1845, 64
        %v3873 = vpop.permute.xlu0 %3872
        %3874 = vrot.lane.b32.xlu0 %v1846, 64
        %v3875 = vpop.permute.xlu0 %3874
        %3876 = vrot.lane.b32.xlu0 %v1847, 64
        %v3877 = vpop.permute.xlu0 %3876
        %3878 = vrot.lane.b32.xlu0 %v1848, 64
        %v3879 = vpop.permute.xlu0 %3878
        %3880 = vrot.lane.b32.xlu0 %v1849, 64
        %v3881 = vpop.permute.xlu0 %3880
        %3882 = vrot.lane.b32.xlu0 %v1840, 64
        %v3883 = vpop.permute.xlu0 %3882
        %3884 = vrot.lane.b32.xlu0 %v1879, 64
        %v3885 = vpop.permute.xlu0 %3884
        %3886 = vrot.lane.b32.xlu0 %v1880, 64
        %v3887 = vpop.permute.xlu0 %3886
        %3888 = vrot.lane.b32.xlu0 %v1881, 64
        %v3889 = vpop.permute.xlu0 %3888
        %3890 = vrot.lane.b32.xlu0 %v1882, 64
        %v3891 = vpop.permute.xlu0 %3890
        %3892 = vrot.lane.b32.xlu0 %v1883, 64
        %v3893 = vpop.permute.xlu0 %3892
        %3894 = vrot.lane.b32.xlu0 %v1884, 64
        %v3895 = vpop.permute.xlu0 %3894
        %3896 = vrot.lane.b32.xlu0 %v1885, 64
        %v3897 = vpop.permute.xlu0 %3896
        %3898 = vrot.lane.b32.xlu0 %v1886, 64
        %v3899 = vpop.permute.xlu0 %3898
        %3900 = vrot.lane.b32.xlu0 %v1887, 64
        %v3901 = vpop.permute.xlu0 %3900
        %3902 = vrot.lane.b32.xlu0 %v1878, 64
        %v3903 = vpop.permute.xlu0 %3902
        %v3904 = vsel %vm1711, %v3845, %v3847
        %v3905 = vsel %vm1711, %v3847, %v3849
        %v3906 = vsel %vm1711, %v3849, %v3851
        %v3907 = vsel %vm1711, %v3851, %v3853
        %v3908 = vsel %vm1711, %v3853, %v3855
        %v3909 = vsel %vm1711, %v3855, %v3857
        %v3910 = vsel %vm1711, %v3857, %v3859
        %v3911 = vsel %vm1711, %v3859, %v3861
        %v3912 = vsel %vm1711, %v3861, %v3863
        %v3913 = vsel %vm1711, %v3865, %v3867
        %v3914 = vsel %vm1711, %v3867, %v3869
        %v3915 = vsel %vm1711, %v3869, %v3871
        %v3916 = vsel %vm1711, %v3871, %v3873
        %v3917 = vsel %vm1711, %v3873, %v3875
        %v3918 = vsel %vm1711, %v3875, %v3877
        %v3919 = vsel %vm1711, %v3877, %v3879
        %v3920 = vsel %vm1711, %v3879, %v3881
        %v3921 = vsel %vm1711, %v3881, %v3883
        %v3922 = vsel %vm1711, %v3885, %v3887
        %v3923 = vsel %vm1711, %v3887, %v3889
        %v3924 = vsel %vm1711, %v3889, %v3891
        %v3925 = vsel %vm1711, %v3891, %v3893
        %v3926 = vsel %vm1711, %v3893, %v3895
        %v3927 = vsel %vm1711, %v3895, %v3897
        %v3928 = vsel %vm1711, %v3897, %v3899
        %v3929 = vsel %vm1711, %v3899, %v3901
        %v3930 = vsel %vm1711, %v3901, %v3903
        %v3959 = vsel %vm2014, %v3842, 0
        %v3962 = vsel %vm2014, %v3843, 0
        %3964 = vmatprep.subr.mxu0 %v3905
        %3965 = vmatpush1.msra.mxu0 %v3904
        %3966 = vmatprep.subr.mxu0 %v3914
        %3967 = vmatpush1.msra.mxu0 %v3913
        %3968 = vmatprep.subr.mxu0 %v3923
        %3969 = vmatpush1.msra.mxu0 %v3922
        %3970 = vmatprep.subr.mxu0 0.0
        %3971 = vmatpush1.msra.mxu0 0.0
        %3972 = vmatprep.subr.mxu0 0.0
        %3973 = vmatpush1.msra.mxu0 0.0
        %3974 = vmatprep.subr.mxu0 0.0
        %3975 = vmatpush1.msra.mxu0 0.0
        %3976 = vmatprep.subr.mxu0 0.0
        %3977 = vmatpush1.msra.mxu0 0.0
        %3978 = vmatprep.subr.mxu0 0.0
        %3979 = vmatpush1.msra.mxu0 0.0
        %3980 = vmatprep.subr.mxu0 0.0
        %3981 = vmatpush1.msra.mxu0 0.0
        %3982 = vmatprep.subr.mxu0 0.0
        %3983 = vmatpush1.msra.mxu0 0.0
        %3984 = vmatprep.subr.mxu0 0.0
        %3985 = vmatpush1.msra.mxu0 0.0
        %3986 = vmatprep.subr.mxu0 0.0
        %3987 = vmatpush1.msra.mxu0 0.0
        %3988 = vmatprep.subr.mxu0 0.0
        %3989 = vmatpush1.msra.mxu0 0.0
        %3990 = vmatprep.subr.mxu0 0.0
        %3991 = vmatpush1.msra.mxu0 0.0
        %3992 = vmatprep.subr.mxu0 0.0
        %3993 = vmatpush1.msra.mxu0 0.0
        %3994 = vmatprep.subr.mxu0 0.0
        %3995 = vmatpush1.msra.mxu0 0.0
        %3996 = vmatprep.subr.mxu0 0.0
        %3997 = vmatpush1.msra.mxu0 0.0
        %3998 = vmatprep.subr.mxu0 0.0
        %3999 = vmatpush1.msra.mxu0 0.0
        %4000 = vmatprep.subr.mxu0 0.0
        %4001 = vmatpush1.msra.mxu0 0.0
        %4002 = vmatprep.subr.mxu0 0.0
        %4003 = vmatpush1.msra.mxu0 0.0
        %4004 = vmatprep.subr.mxu0 0.0
        %4005 = vmatpush1.msra.mxu0 0.0
        %4006 = vmatprep.subr.mxu0 0.0
        %4007 = vmatpush1.msra.mxu0 0.0
        %4008 = vmatprep.subr.mxu0 0.0
        %4009 = vmatpush1.msra.mxu0 0.0
        %4010 = vmatprep.subr.mxu0 0.0
        %4011 = vmatpush1.msra.mxu0 0.0
        %4012 = vmatprep.subr.mxu0 0.0
        %4013 = vmatpush1.msra.mxu0 0.0
        %4014 = vmatprep.subr.mxu0 0.0
        %4015 = vmatpush1.msra.mxu0 0.0
        %4016 = vmatprep.subr.mxu0 0.0
        %4017 = vmatpush1.msra.mxu0 0.0
        %4018 = vmatprep.subr.mxu0 0.0
        %4019 = vmatpush1.msra.mxu0 0.0
        %4020 = vmatprep.subr.mxu0 0.0
        %4021 = vmatpush1.msra.mxu0 0.0
        %4022 = vmatprep.subr.mxu0 0.0
        %4023 = vmatpush1.msra.mxu0 0.0
        %4024 = vmatprep.subr.mxu0 0.0
        %4025 = vmatpush1.msra.mxu0 0.0
        %4026 = vmatprep.subr.mxu0 0.0
        %4027 = vmatpush1.msra.mxu0 0.0
        %4028 = vmatprep.mubr.f32.mxu0 0.0
        %4029 = vmatmul.mubr.f32.gmra.mrb[0].mxu0 %v3959
        %v4030 = vpop.f32.mrb[0].mxu0
        %v4031 = vadd.f32 0.0, %v4030
        %v4032 = vpop.f32.mrb[0].mxu0
        %v4033 = vadd.f32 0.0, %v4032
        %4034 = vmatprep.mubr.f32.mxu0 0.0
        %4035 = vmatmul.mubr.f32.gmra.mrb[0].mxu0 %v3962
        %v4036 = vpop.f32.mrb[0].mxu0
        %v4037 = vadd.f32 0.0, %v4036
        %v4038 = vpop.f32.mrb[0].mxu0
        %v4039 = vadd.f32 0.0, %v4038
        %4040 = vdwg.mxu0
        %4041 = vmatprep.subr.mxu0 %v3907
        %4042 = vmatpush1.msra.mxu0 %v3906
        %4043 = vmatprep.subr.mxu0 %v3916
        %4044 = vmatpush1.msra.mxu0 %v3915
        %4045 = vmatprep.subr.mxu0 %v3925
        %4046 = vmatpush1.msra.mxu0 %v3924
        %4047 = vmatprep.subr.mxu0 0.0
        %4048 = vmatpush1.msra.mxu0 0.0
        %4049 = vmatprep.subr.mxu0 0.0
        %4050 = vmatpush1.msra.mxu0 0.0
        %4051 = vmatprep.subr.mxu0 0.0
        %4052 = vmatpush1.msra.mxu0 0.0
        %4053 = vmatprep.subr.mxu0 0.0
        %4054 = vmatpush1.msra.mxu0 0.0
        %4055 = vmatprep.subr.mxu0 0.0
        %4056 = vmatpush1.msra.mxu0 0.0
        %4057 = vmatprep.subr.mxu0 0.0
        %4058 = vmatpush1.msra.mxu0 0.0
        %4059 = vmatprep.subr.mxu0 0.0
        %4060 = vmatpush1.msra.mxu0 0.0
        %4061 = vmatprep.subr.mxu0 0.0
        %4062 = vmatpush1.msra.mxu0 0.0
        %4063 = vmatprep.subr.mxu0 0.0
        %4064 = vmatpush1.msra.mxu0 0.0
        %4065 = vmatprep.subr.mxu0 0.0
        %4066 = vmatpush1.msra.mxu0 0.0
        %4067 = vmatprep.subr.mxu0 0.0
        %4068 = vmatpush1.msra.mxu0 0.0
        %4069 = vmatprep.subr.mxu0 0.0
        %4070 = vmatpush1.msra.mxu0 0.0
        %4071 = vmatprep.subr.mxu0 0.0
        %4072 = vmatpush1.msra.mxu0 0.0
        %4073 = vmatprep.subr.mxu0 0.0
        %4074 = vmatpush1.msra.mxu0 0.0
        %4075 = vmatprep.subr.mxu0 0.0
        %4076 = vmatpush1.msra.mxu0 0.0
        %4077 = vmatprep.subr.mxu0 0.0
        %4078 = vmatpush1.msra.mxu0 0.0
        %4079 = vmatprep.subr.mxu0 0.0
        %4080 = vmatpush1.msra.mxu0 0.0
        %4081 = vmatprep.subr.mxu0 0.0
        %4082 = vmatpush1.msra.mxu0 0.0
        %4083 = vmatprep.subr.mxu0 0.0
        %4084 = vmatpush1.msra.mxu0 0.0
        %4085 = vmatprep.subr.mxu0 0.0
        %4086 = vmatpush1.msra.mxu0 0.0
        %4087 = vmatprep.subr.mxu0 0.0
        %4088 = vmatpush1.msra.mxu0 0.0
        %4089 = vmatprep.subr.mxu0 0.0
        %4090 = vmatpush1.msra.mxu0 0.0
        %4091 = vmatprep.subr.mxu0 0.0
        %4092 = vmatpush1.msra.mxu0 0.0
        %4093 = vmatprep.subr.mxu0 0.0
        %4094 = vmatpush1.msra.mxu0 0.0
        %4095 = vmatprep.subr.mxu0 0.0
        %4096 = vmatpush1.msra.mxu0 0.0
        %4097 = vmatprep.subr.mxu0 0.0
        %4098 = vmatpush1.msra.mxu0 0.0
        %4099 = vmatprep.subr.mxu0 0.0
        %4100 = vmatpush1.msra.mxu0 0.0
        %4101 = vmatprep.subr.mxu0 0.0
        %4102 = vmatpush1.msra.mxu0 0.0
        %4103 = vmatprep.subr.mxu0 0.0
        %4104 = vmatpush1.msra.mxu0 0.0
        %4105 = vmatprep.mubr.f32.mxu0 0.0
        %4106 = vmatmul.mubr.f32.gmra.mrb[0].mxu0 %v3959
        %v4107 = vpop.f32.mrb[0].mxu0
        %v4108 = vadd.f32 0.0, %v4107
        %v4109 = vpop.f32.mrb[0].mxu0
        %v4110 = vadd.f32 0.0, %v4109
        %4111 = vmatprep.mubr.f32.mxu0 0.0
        %4112 = vmatmul.mubr.f32.gmra.mrb[0].mxu0 %v3962
        %v4113 = vpop.f32.mrb[0].mxu0
        %v4114 = vadd.f32 0.0, %v4113
        %v4115 = vpop.f32.mrb[0].mxu0
        %v4116 = vadd.f32 0.0, %v4115
        %4117 = vdwg.mxu0
        %4118 = vmatprep.subr.mxu0 %v3909
        %4119 = vmatpush1.msra.mxu0 %v3908
        %4120 = vmatprep.subr.mxu0 %v3918
        %4121 = vmatpush1.msra.mxu0 %v3917
        %4122 = vmatprep.subr.mxu0 %v3927
        %4123 = vmatpush1.msra.mxu0 %v3926
        %4124 = vmatprep.subr.mxu0 0.0
        %4125 = vmatpush1.msra.mxu0 0.0
        %4126 = vmatprep.subr.mxu0 0.0
        %4127 = vmatpush1.msra.mxu0 0.0
        %4128 = vmatprep.subr.mxu0 0.0
        %4129 = vmatpush1.msra.mxu0 0.0
        %4130 = vmatprep.subr.mxu0 0.0
        %4131 = vmatpush1.msra.mxu0 0.0
        %4132 = vmatprep.subr.mxu0 0.0
        %4133 = vmatpush1.msra.mxu0 0.0
        %4134 = vmatprep.subr.mxu0 0.0
        %4135 = vmatpush1.msra.mxu0 0.0
        %4136 = vmatprep.subr.mxu0 0.0
        %4137 = vmatpush1.msra.mxu0 0.0
        %4138 = vmatprep.subr.mxu0 0.0
        %4139 = vmatpush1.msra.mxu0 0.0
        %4140 = vmatprep.subr.mxu0 0.0
        %4141 = vmatpush1.msra.mxu0 0.0
        %4142 = vmatprep.subr.mxu0 0.0
        %4143 = vmatpush1.msra.mxu0 0.0
        %4144 = vmatprep.subr.mxu0 0.0
        %4145 = vmatpush1.msra.mxu0 0.0
        %4146 = vmatprep.subr.mxu0 0.0
        %4147 = vmatpush1.msra.mxu0 0.0
        %4148 = vmatprep.subr.mxu0 0.0
        %4149 = vmatpush1.msra.mxu0 0.0
        %4150 = vmatprep.subr.mxu0 0.0
        %4151 = vmatpush1.msra.mxu0 0.0
        %4152 = vmatprep.subr.mxu0 0.0
        %4153 = vmatpush1.msra.mxu0 0.0
        %4154 = vmatprep.subr.mxu0 0.0
        %4155 = vmatpush1.msra.mxu0 0.0
        %4156 = vmatprep.subr.mxu0 0.0
        %4157 = vmatpush1.msra.mxu0 0.0
        %4158 = vmatprep.subr.mxu0 0.0
        %4159 = vmatpush1.msra.mxu0 0.0
        %4160 = vmatprep.subr.mxu0 0.0
        %4161 = vmatpush1.msra.mxu0 0.0
        %4162 = vmatprep.subr.mxu0 0.0
        %4163 = vmatpush1.msra.mxu0 0.0
        %4164 = vmatprep.subr.mxu0 0.0
        %4165 = vmatpush1.msra.mxu0 0.0
        %4166 = vmatprep.subr.mxu0 0.0
        %4167 = vmatpush1.msra.mxu0 0.0
        %4168 = vmatprep.subr.mxu0 0.0
        %4169 = vmatpush1.msra.mxu0 0.0
        %4170 = vmatprep.subr.mxu0 0.0
        %4171 = vmatpush1.msra.mxu0 0.0
        %4172 = vmatprep.subr.mxu0 0.0
        %4173 = vmatpush1.msra.mxu0 0.0
        %4174 = vmatprep.subr.mxu0 0.0
        %4175 = vmatpush1.msra.mxu0 0.0
        %4176 = vmatprep.subr.mxu0 0.0
        %4177 = vmatpush1.msra.mxu0 0.0
        %4178 = vmatprep.subr.mxu0 0.0
        %4179 = vmatpush1.msra.mxu0 0.0
        %4180 = vmatprep.subr.mxu0 0.0
        %4181 = vmatpush1.msra.mxu0 0.0
        %4182 = vmatprep.mubr.f32.mxu0 0.0
        %4183 = vmatmul.mubr.f32.gmra.mrb[0].mxu0 %v3959
        %v4184 = vpop.f32.mrb[0].mxu0
        %v4185 = vadd.f32 0.0, %v4184
        %v4186 = vpop.f32.mrb[0].mxu0
        %v4187 = vadd.f32 0.0, %v4186
        %4188 = vmatprep.mubr.f32.mxu0 0.0
        %4189 = vmatmul.mubr.f32.gmra.mrb[0].mxu0 %v3962
        %v4190 = vpop.f32.mrb[0].mxu0
        %v4191 = vadd.f32 0.0, %v4190
        %v4192 = vpop.f32.mrb[0].mxu0
        %v4193 = vadd.f32 0.0, %v4192
        %4194 = vdwg.mxu0
        %4195 = vmatprep.subr.mxu0 %v3911
        %4196 = vmatpush1.msra.mxu0 %v3910
        %4197 = vmatprep.subr.mxu0 %v3920
        %4198 = vmatpush1.msra.mxu0 %v3919
        %4199 = vmatprep.subr.mxu0 %v3929
        %4200 = vmatpush1.msra.mxu0 %v3928
        %4201 = vmatprep.subr.mxu0 0.0
        %4202 = vmatpush1.msra.mxu0 0.0
        %4203 = vmatprep.subr.mxu0 0.0
        %4204 = vmatpush1.msra.mxu0 0.0
        %4205 = vmatprep.subr.mxu0 0.0
        %4206 = vmatpush1.msra.mxu0 0.0
        %4207 = vmatprep.subr.mxu0 0.0
        %4208 = vmatpush1.msra.mxu0 0.0
        %4209 = vmatprep.subr.mxu0 0.0
        %4210 = vmatpush1.msra.mxu0 0.0
        %4211 = vmatprep.subr.mxu0 0.0
        %4212 = vmatpush1.msra.mxu0 0.0
        %4213 = vmatprep.subr.mxu0 0.0
        %4214 = vmatpush1.msra.mxu0 0.0
        %4215 = vmatprep.subr.mxu0 0.0
        %4216 = vmatpush1.msra.mxu0 0.0
        %4217 = vmatprep.subr.mxu0 0.0
        %4218 = vmatpush1.msra.mxu0 0.0
        %4219 = vmatprep.subr.mxu0 0.0
        %4220 = vmatpush1.msra.mxu0 0.0
        %4221 = vmatprep.subr.mxu0 0.0
        %4222 = vmatpush1.msra.mxu0 0.0
        %4223 = vmatprep.subr.mxu0 0.0
        %4224 = vmatpush1.msra.mxu0 0.0
        %4225 = vmatprep.subr.mxu0 0.0
        %4226 = vmatpush1.msra.mxu0 0.0
        %4227 = vmatprep.subr.mxu0 0.0
        %4228 = vmatpush1.msra.mxu0 0.0
        %4229 = vmatprep.subr.mxu0 0.0
        %4230 = vmatpush1.msra.mxu0 0.0
        %4231 = vmatprep.subr.mxu0 0.0
        %4232 = vmatpush1.msra.mxu0 0.0
        %4233 = vmatprep.subr.mxu0 0.0
        %4234 = vmatpush1.msra.mxu0 0.0
        %4235 = vmatprep.subr.mxu0 0.0
        %4236 = vmatpush1.msra.mxu0 0.0
        %4237 = vmatprep.subr.mxu0 0.0
        %4238 = vmatpush1.msra.mxu0 0.0
        %4239 = vmatprep.subr.mxu0 0.0
        %4240 = vmatpush1.msra.mxu0 0.0
        %4241 = vmatprep.subr.mxu0 0.0
        %4242 = vmatpush1.msra.mxu0 0.0
        %4243 = vmatprep.subr.mxu0 0.0
        %4244 = vmatpush1.msra.mxu0 0.0
        %4245 = vmatprep.subr.mxu0 0.0
        %4246 = vmatpush1.msra.mxu0 0.0
        %4247 = vmatprep.subr.mxu0 0.0
        %4248 = vmatpush1.msra.mxu0 0.0
        %4249 = vmatprep.subr.mxu0 0.0
        %4250 = vmatpush1.msra.mxu0 0.0
        %4251 = vmatprep.subr.mxu0 0.0
        %4252 = vmatpush1.msra.mxu0 0.0
        %4253 = vmatprep.subr.mxu0 0.0
        %4254 = vmatpush1.msra.mxu0 0.0
        %4255 = vmatprep.subr.mxu0 0.0
        %4256 = vmatpush1.msra.mxu0 0.0
        %4257 = vmatprep.subr.mxu0 0.0
        %4258 = vmatpush1.msra.mxu0 0.0
        %4259 = vmatprep.mubr.f32.mxu0 0.0
        %4260 = vmatmul.mubr.f32.gmra.mrb[0].mxu0 %v3959
        %v4261 = vpop.f32.mrb[0].mxu0
        %v4262 = vadd.f32 0.0, %v4261
        %v4263 = vpop.f32.mrb[0].mxu0
        %v4264 = vadd.f32 0.0, %v4263
        %4265 = vmatprep.mubr.f32.mxu0 0.0
        %4266 = vmatmul.mubr.f32.gmra.mrb[0].mxu0 %v3962
        %v4267 = vpop.f32.mrb[0].mxu0
        %v4268 = vadd.f32 0.0, %v4267
        %v4269 = vpop.f32.mrb[0].mxu0
        %v4270 = vadd.f32 0.0, %v4269
        %4271 = vdwg.mxu0
        %4272 = vmatprep.subr.mxu0 0.0
        %4273 = vmatpush1.msra.mxu0 %v3912
        %4274 = vmatprep.subr.mxu0 0.0
        %4275 = vmatpush1.msra.mxu0 %v3921
        %4276 = vmatprep.subr.mxu0 0.0
        %4277 = vmatpush1.msra.mxu0 %v3930
        %4278 = vmatprep.subr.mxu0 0.0
        %4279 = vmatpush1.msra.mxu0 0.0
        %4280 = vmatprep.subr.mxu0 0.0
        %4281 = vmatpush1.msra.mxu0 0.0
        %4282 = vmatprep.subr.mxu0 0.0
        %4283 = vmatpush1.msra.mxu0 0.0
        %4284 = vmatprep.subr.mxu0 0.0
        %4285 = vmatpush1.msra.mxu0 0.0
        %4286 = vmatprep.subr.mxu0 0.0
        %4287 = vmatpush1.msra.mxu0 0.0
        %4288 = vmatprep.subr.mxu0 0.0
        %4289 = vmatpush1.msra.mxu0 0.0
        %4290 = vmatprep.subr.mxu0 0.0
        %4291 = vmatpush1.msra.mxu0 0.0
        %4292 = vmatprep.subr.mxu0 0.0
        %4293 = vmatpush1.msra.mxu0 0.0
        %4294 = vmatprep.subr.mxu0 0.0
        %4295 = vmatpush1.msra.mxu0 0.0
        %4296 = vmatprep.subr.mxu0 0.0
        %4297 = vmatpush1.msra.mxu0 0.0
        %4298 = vmatprep.subr.mxu0 0.0
        %4299 = vmatpush1.msra.mxu0 0.0
        %4300 = vmatprep.subr.mxu0 0.0
        %4301 = vmatpush1.msra.mxu0 0.0
        %4302 = vmatprep.subr.mxu0 0.0
        %4303 = vmatpush1.msra.mxu0 0.0
        %4304 = vmatprep.subr.mxu0 0.0
        %4305 = vmatpush1.msra.mxu0 0.0
        %4306 = vmatprep.subr.mxu0 0.0
        %4307 = vmatpush1.msra.mxu0 0.0
        %4308 = vmatprep.subr.mxu0 0.0
        %4309 = vmatpush1.msra.mxu0 0.0
        %4310 = vmatprep.subr.mxu0 0.0
        %4311 = vmatpush1.msra.mxu0 0.0
        %4312 = vmatprep.subr.mxu0 0.0
        %4313 = vmatpush1.msra.mxu0 0.0
        %4314 = vmatprep.subr.mxu0 0.0
        %4315 = vmatpush1.msra.mxu0 0.0
        %4316 = vmatprep.subr.mxu0 0.0
        %4317 = vmatpush1.msra.mxu0 0.0
        %4318 = vmatprep.subr.mxu0 0.0
        %4319 = vmatpush1.msra.mxu0 0.0
        %4320 = vmatprep.subr.mxu0 0.0
        %4321 = vmatpush1.msra.mxu0 0.0
        %4322 = vmatprep.subr.mxu0 0.0
        %4323 = vmatpush1.msra.mxu0 0.0
        %4324 = vmatprep.subr.mxu0 0.0
        %4325 = vmatpush1.msra.mxu0 0.0
        %4326 = vmatprep.subr.mxu0 0.0
        %4327 = vmatpush1.msra.mxu0 0.0
        %4328 = vmatprep.subr.mxu0 0.0
        %4329 = vmatpush1.msra.mxu0 0.0
        %4330 = vmatprep.subr.mxu0 0.0
        %4331 = vmatpush1.msra.mxu0 0.0
        %4332 = vmatprep.subr.mxu0 0.0
        %4333 = vmatpush1.msra.mxu0 0.0
        %4334 = vmatprep.subr.mxu0 0.0
        %4335 = vmatpush1.msra.mxu0 0.0
        %4336 = vmatprep.mubr.f32.mxu0 0.0
        %4337 = vmatmul.mubr.f32.gmra.mrb[0].mxu0 %v3959
        %v4338 = vpop.f32.mrb[0].mxu0
        %v4339 = vadd.f32 0.0, %v4338
        %v4340 = vpop.f32.mrb[0].mxu0
        %4341 = vmatprep.mubr.f32.mxu0 0.0
        %4342 = vmatmul.mubr.f32.gmra.mrb[0].mxu0 %v3962
        %v4343 = vpop.f32.mrb[0].mxu0
        %v4344 = vadd.f32 0.0, %v4343
        %v4345 = vpop.f32.mrb[0].mxu0
        %4346 = vdwg.mxu0
        %v4347 = vadd.f32 %v3823, %v4031
        %v4348 = vadd.f32 %v3824, %v4033
        %v4349 = vadd.f32 %v3825, %v4108
        %v4350 = vadd.f32 %v3826, %v4110
        %v4351 = vadd.f32 %v3827, %v4185
        %v4352 = vadd.f32 %v3828, %v4187
        %v4353 = vadd.f32 %v3829, %v4262
        %v4354 = vadd.f32 %v3830, %v4264
        %v4355 = vadd.f32 %v3831, %v4339
        %v4356 = vadd.f32 %v3832, %v4037
        %v4357 = vadd.f32 %v3833, %v4039
        %v4358 = vadd.f32 %v3834, %v4114
        %v4359 = vadd.f32 %v3835, %v4116
        %v4360 = vadd.f32 %v3836, %v4191
        %v4361 = vadd.f32 %v3837, %v4193
        %v4362 = vadd.f32 %v3838, %v4268
        %v4363 = vadd.f32 %v3839, %v4270
        %v4364 = vadd.f32 %v3840, %v4344
        %v4365 = vld [vmem:[%s4] sm:$0xff]
        %v4366 = vld [vmem:[%s4 + $0x8] sm:$0xff]
        %4368 = vset.pattern.permute.xlu0 0
        %4369 = vperm.xlu0 %4368, %v4365
        %v4370 = vpop.permute.xlu0 %4369
        %4373 = vset.pattern.permute.xlu0 0
        %4374 = vperm.xlu0 %4373, %v4366
        %v4375 = vpop.permute.xlu0 %4374
        %v4377 = vadd.f32 %v4347, %v4370
        %v4378 = vadd.f32 %v4348, %v4370
        %v4379 = vadd.f32 %v4349, %v4370
        %v4380 = vadd.f32 %v4350, %v4370
        %v4381 = vadd.f32 %v4351, %v4370
        %v4382 = vadd.f32 %v4352, %v4370
        %v4383 = vadd.f32 %v4353, %v4370
        %v4384 = vadd.f32 %v4354, %v4370
        %v4385 = vadd.f32 %v4355, %v4370
        %v4386 = vadd.f32 %v4356, %v4375
        %v4387 = vadd.f32 %v4357, %v4375
        %v4388 = vadd.f32 %v4358, %v4375
        %v4389 = vadd.f32 %v4359, %v4375
        %v4390 = vadd.f32 %v4360, %v4375
        %v4391 = vadd.f32 %v4361, %v4375
        %v4392 = vadd.f32 %v4362, %v4375
        %v4393 = vadd.f32 %v4363, %v4375
        %v4394 = vadd.f32 %v4364, %v4375
        %vm4395 = vcmp.ge.f32.partialorder %v4377, 0.0
        %vm4396 = vcmp.ge.f32.partialorder %v4378, 0.0
        %vm4397 = vcmp.ge.f32.partialorder %v4379, 0.0
        %vm4398 = vcmp.ge.f32.partialorder %v4380, 0.0
        %vm4399 = vcmp.ge.f32.partialorder %v4381, 0.0
        %vm4400 = vcmp.ge.f32.partialorder %v4382, 0.0
        %vm4401 = vcmp.ge.f32.partialorder %v4383, 0.0
        %vm4402 = vcmp.ge.f32.partialorder %v4384, 0.0
        %vm4403 = vcmp.ge.f32.partialorder %v4385, 0.0
        %vm4404 = vcmp.ge.f32.partialorder %v4386, 0.0
        %vm4405 = vcmp.ge.f32.partialorder %v4387, 0.0
        %vm4406 = vcmp.ge.f32.partialorder %v4388, 0.0
        %vm4407 = vcmp.ge.f32.partialorder %v4389, 0.0
        %vm4408 = vcmp.ge.f32.partialorder %v4390, 0.0
        %vm4409 = vcmp.ge.f32.partialorder %v4391, 0.0
        %vm4410 = vcmp.ge.f32.partialorder %v4392, 0.0
        %vm4411 = vcmp.ge.f32.partialorder %v4393, 0.0
        %vm4412 = vcmp.ge.f32.partialorder %v4394, 0.0
        %v4413 = vmul.f32 %v4377, 0.2
        %v4414 = vmul.f32 %v4378, 0.2
        %v4415 = vmul.f32 %v4379, 0.2
        %v4416 = vmul.f32 %v4380, 0.2
        %v4417 = vmul.f32 %v4381, 0.2
        %v4418 = vmul.f32 %v4382, 0.2
        %v4419 = vmul.f32 %v4383, 0.2
        %v4420 = vmul.f32 %v4384, 0.2
        %v4421 = vmul.f32 %v4385, 0.2
        %v4422 = vmul.f32 %v4386, 0.2
        %v4423 = vmul.f32 %v4387, 0.2
        %v4424 = vmul.f32 %v4388, 0.2
        %v4425 = vmul.f32 %v4389, 0.2
        %v4426 = vmul.f32 %v4390, 0.2
        %v4427 = vmul.f32 %v4391, 0.2
        %v4428 = vmul.f32 %v4392, 0.2
        %v4429 = vmul.f32 %v4393, 0.2
        %v4430 = vmul.f32 %v4394, 0.2
        %v4431 = vsel %vm4395, %v4377, %v4413
        %v4432 = vsel %vm4396, %v4378, %v4414
        %v4433 = vsel %vm4397, %v4379, %v4415
        %v4434 = vsel %vm4398, %v4380, %v4416
        %v4435 = vsel %vm4399, %v4381, %v4417
        %v4436 = vsel %vm4400, %v4382, %v4418
        %v4437 = vsel %vm4401, %v4383, %v4419
        %v4438 = vsel %vm4402, %v4384, %v4420
        %v4439 = vsel %vm4403, %v4385, %v4421
        %v4440 = vsel %vm4404, %v4386, %v4422
        %v4441 = vsel %vm4405, %v4387, %v4423
        %v4442 = vsel %vm4406, %v4388, %v4424
        %v4443 = vsel %vm4407, %v4389, %v4425
        %v4444 = vsel %vm4408, %v4390, %v4426
        %v4445 = vsel %vm4409, %v4391, %v4427
        %v4446 = vsel %vm4410, %v4392, %v4428
        %v4447 = vsel %vm4411, %v4393, %v4429
        %v4448 = vsel %vm4412, %v4394, %v4430
        %4451 = vrot.lane.b32.xlu0 %v4431, 112
        %v4452 = vpop.permute.xlu0 %4451
        %4453 = vrot.lane.b32.xlu0 %v4440, 112
        %v4454 = vpop.permute.xlu0 %4453
        %4457 = vrot.lane.b32.xlu0 %v4431, 96
        %v4458 = vpop.permute.xlu0 %4457
        %4459 = vrot.lane.b32.xlu0 %v4440, 96
        %v4460 = vpop.permute.xlu0 %4459
        %4463 = vrot.lane.b32.xlu0 %v4431, 80
        %v4464 = vpop.permute.xlu0 %4463
        %4465 = vrot.lane.b32.xlu0 %v4440, 80
        %v4466 = vpop.permute.xlu0 %4465
        %4471 = vrot.lane.b32.xlu0 %v4432, 64
        %v4472 = vpop.permute.xlu0 %4471
        %4473 = vrot.lane.b32.xlu0 %v4441, 64
        %v4474 = vpop.permute.xlu0 %4473
        %4477 = vrot.lane.b32.xlu0 %v4432, 48
        %v4478 = vpop.permute.xlu0 %4477
        %4479 = vrot.lane.b32.xlu0 %v4441, 48
        %v4480 = vpop.permute.xlu0 %4479
        %4483 = vrot.lane.b32.xlu0 %v4432, 32
        %v4484 = vpop.permute.xlu0 %4483
        %4485 = vrot.lane.b32.xlu0 %v4441, 32
        %v4486 = vpop.permute.xlu0 %4485
        %4489 = vrot.lane.b32.xlu0 %v4432, 16
        %v4490 = vpop.permute.xlu0 %4489
        %4491 = vrot.lane.b32.xlu0 %v4441, 16
        %v4492 = vpop.permute.xlu0 %4491
        %4497 = vrot.lane.b32.xlu0 %v4433, 112
        %v4498 = vpop.permute.xlu0 %4497
        %4499 = vrot.lane.b32.xlu0 %v4442, 112
        %v4500 = vpop.permute.xlu0 %4499
        %4503 = vrot.lane.b32.xlu0 %v4433, 96
        %v4504 = vpop.permute.xlu0 %4503
        %4505 = vrot.lane.b32.xlu0 %v4442, 96
        %v4506 = vpop.permute.xlu0 %4505
        %4509 = vrot.lane.b32.xlu0 %v4433, 80
        %v4510 = vpop.permute.xlu0 %4509
        %4511 = vrot.lane.b32.xlu0 %v4442, 80
        %v4512 = vpop.permute.xlu0 %4511
        %4517 = vrot.lane.b32.xlu0 %v4434, 64
        %v4518 = vpop.permute.xlu0 %4517
        %4519 = vrot.lane.b32.xlu0 %v4443, 64
        %v4520 = vpop.permute.xlu0 %4519
        %4523 = vrot.lane.b32.xlu0 %v4434, 48
        %v4524 = vpop.permute.xlu0 %4523
        %4525 = vrot.lane.b32.xlu0 %v4443, 48
        %v4526 = vpop.permute.xlu0 %4525
        %4529 = vrot.lane.b32.xlu0 %v4434, 32
        %v4530 = vpop.permute.xlu0 %4529
        %4531 = vrot.lane.b32.xlu0 %v4443, 32
        %v4532 = vpop.permute.xlu0 %4531
        %4535 = vrot.lane.b32.xlu0 %v4434, 16
        %v4536 = vpop.permute.xlu0 %4535
        %4537 = vrot.lane.b32.xlu0 %v4443, 16
        %v4538 = vpop.permute.xlu0 %4537
        %vm4541 = vcmask 130048
        %v4542 = vsel %vm4541, %v4431, %v4452
        %v4543 = vsel %vm4541, %v4440, %v4454
        %vm4544 = vcmask 261120
        %v4545 = vsel %vm4544, %v4542, %v4458
        %v4546 = vsel %vm4544, %v4543, %v4460
        %vm4547 = vcmask 392192
        %v4548 = vsel %vm4547, %v4545, %v4464
        %v4549 = vsel %vm4547, %v4546, %v4466
        %v4550 = vsel %vm1711, %v4548, %v4472
        %v4551 = vsel %vm1711, %v4549, %v4474
        %v4552 = vsel %vm1419, %v4550, %v4478
        %v4553 = vsel %vm1419, %v4551, %v4480
        %v4554 = vsel %vm1196, %v4552, %v4484
        %v4555 = vsel %vm1196, %v4553, %v4486
        %v4556 = vsel %vm973, %v4554, %v4490
        %v4557 = vsel %vm973, %v4555, %v4492
        %v4558 = vsel %vm4541, %v4433, %v4498
        %v4559 = vsel %vm4541, %v4442, %v4500
        %v4560 = vsel %vm4544, %v4558, %v4504
        %v4561 = vsel %vm4544, %v4559, %v4506
        %v4562 = vsel %vm4547, %v4560, %v4510
        %v4563 = vsel %vm4547, %v4561, %v4512
        %v4564 = vsel %vm1711, %v4562, %v4518
        %v4565 = vsel %vm1711, %v4563, %v4520
        %v4566 = vsel %vm1419, %v4564, %v4524
        %v4567 = vsel %vm1419, %v4565, %v4526
        %v4568 = vsel %vm1196, %v4566, %v4530
        %v4569 = vsel %vm1196, %v4567, %v4532
        %v4570 = vsel %vm973, %v4568, %v4536
        %v4571 = vsel %vm973, %v4569, %v4538
        %4574 = vrot.lane.b32.xlu0 %v4435, 112
        %v4575 = vpop.permute.xlu0 %4574
        %4576 = vrot.lane.b32.xlu0 %v4444, 112
        %v4577 = vpop.permute.xlu0 %4576
        %4580 = vrot.lane.b32.xlu0 %v4435, 96
        %v4581 = vpop.permute.xlu0 %4580
        %4582 = vrot.lane.b32.xlu0 %v4444, 96
        %v4583 = vpop.permute.xlu0 %4582
        %4586 = vrot.lane.b32.xlu0 %v4435, 80
        %v4587 = vpop.permute.xlu0 %4586
        %4588 = vrot.lane.b32.xlu0 %v4444, 80
        %v4589 = vpop.permute.xlu0 %4588
        %4594 = vrot.lane.b32.xlu0 %v4436, 64
        %v4595 = vpop.permute.xlu0 %4594
        %4596 = vrot.lane.b32.xlu0 %v4445, 64
        %v4597 = vpop.permute.xlu0 %4596
        %4600 = vrot.lane.b32.xlu0 %v4436, 48
        %v4601 = vpop.permute.xlu0 %4600
        %4602 = vrot.lane.b32.xlu0 %v4445, 48
        %v4603 = vpop.permute.xlu0 %4602
        %4606 = vrot.lane.b32.xlu0 %v4436, 32
        %v4607 = vpop.permute.xlu0 %4606
        %4608 = vrot.lane.b32.xlu0 %v4445, 32
        %v4609 = vpop.permute.xlu0 %4608
        %4612 = vrot.lane.b32.xlu0 %v4436, 16
        %v4613 = vpop.permute.xlu0 %4612
        %4614 = vrot.lane.b32.xlu0 %v4445, 16
        %v4615 = vpop.permute.xlu0 %4614
        %4620 = vrot.lane.b32.xlu0 %v4437, 112
        %v4621 = vpop.permute.xlu0 %4620
        %4622 = vrot.lane.b32.xlu0 %v4446, 112
        %v4623 = vpop.permute.xlu0 %4622
        %4626 = vrot.lane.b32.xlu0 %v4437, 96
        %v4627 = vpop.permute.xlu0 %4626
        %4628 = vrot.lane.b32.xlu0 %v4446, 96
        %v4629 = vpop.permute.xlu0 %4628
        %4632 = vrot.lane.b32.xlu0 %v4437, 80
        %v4633 = vpop.permute.xlu0 %4632
        %4634 = vrot.lane.b32.xlu0 %v4446, 80
        %v4635 = vpop.permute.xlu0 %4634
        %4640 = vrot.lane.b32.xlu0 %v4438, 64
        %v4641 = vpop.permute.xlu0 %4640
        %4642 = vrot.lane.b32.xlu0 %v4447, 64
        %v4643 = vpop.permute.xlu0 %4642
        %4646 = vrot.lane.b32.xlu0 %v4438, 48
        %v4647 = vpop.permute.xlu0 %4646
        %4648 = vrot.lane.b32.xlu0 %v4447, 48
        %v4649 = vpop.permute.xlu0 %4648
        %4652 = vrot.lane.b32.xlu0 %v4438, 32
        %v4653 = vpop.permute.xlu0 %4652
        %4654 = vrot.lane.b32.xlu0 %v4447, 32
        %v4655 = vpop.permute.xlu0 %4654
        %4658 = vrot.lane.b32.xlu0 %v4438, 16
        %v4659 = vpop.permute.xlu0 %4658
        %4660 = vrot.lane.b32.xlu0 %v4447, 16
        %v4661 = vpop.permute.xlu0 %4660
        %v4664 = vsel %vm4541, %v4435, %v4575
        %v4665 = vsel %vm4541, %v4444, %v4577
        %v4666 = vsel %vm4544, %v4664, %v4581
        %v4667 = vsel %vm4544, %v4665, %v4583
        %v4668 = vsel %vm4547, %v4666, %v4587
        %v4669 = vsel %vm4547, %v4667, %v4589
        %v4670 = vsel %vm1711, %v4668, %v4595
        %v4671 = vsel %vm1711, %v4669, %v4597
        %v4672 = vsel %vm1419, %v4670, %v4601
        %v4673 = vsel %vm1419, %v4671, %v4603
        %v4674 = vsel %vm1196, %v4672, %v4607
        %v4675 = vsel %vm1196, %v4673, %v4609
        %v4676 = vsel %vm973, %v4674, %v4613
        %v4677 = vsel %vm973, %v4675, %v4615
        %v4678 = vsel %vm4541, %v4437, %v4621
        %v4679 = vsel %vm4541, %v4446, %v4623
        %v4680 = vsel %vm4544, %v4678, %v4627
        %v4681 = vsel %vm4544, %v4679, %v4629
        %v4682 = vsel %vm4547, %v4680, %v4633
        %v4683 = vsel %vm4547, %v4681, %v4635
        %v4684 = vsel %vm1711, %v4682, %v4641
        %v4685 = vsel %vm1711, %v4683, %v4643
        %v4686 = vsel %vm1419, %v4684, %v4647
        %v4687 = vsel %vm1419, %v4685, %v4649
        %v4688 = vsel %vm1196, %v4686, %v4653
        %v4689 = vsel %vm1196, %v4687, %v4655
        %v4690 = vsel %vm973, %v4688, %v4659
        %v4691 = vsel %vm973, %v4689, %v4661
        %4694 = vrot.lane.b32.xlu0 %v4439, 112
        %v4695 = vpop.permute.xlu0 %4694
        %4696 = vrot.lane.b32.xlu0 %v4448, 112
        %v4697 = vpop.permute.xlu0 %4696
        %4700 = vrot.lane.b32.xlu0 %v4439, 96
        %v4701 = vpop.permute.xlu0 %4700
        %4702 = vrot.lane.b32.xlu0 %v4448, 96
        %v4703 = vpop.permute.xlu0 %4702
        %4706 = vrot.lane.b32.xlu0 %v4439, 80
        %v4707 = vpop.permute.xlu0 %4706
        %4708 = vrot.lane.b32.xlu0 %v4448, 80
        %v4709 = vpop.permute.xlu0 %4708
        %v4712 = vsel %vm4541, %v4439, %v4695
        %v4713 = vsel %vm4541, %v4448, %v4697
        %v4714 = vsel %vm4544, %v4712, %v4701
        %v4715 = vsel %vm4544, %v4713, %v4703
        %v4716 = vsel %vm4547, %v4714, %v4707
        %v4717 = vsel %vm4547, %v4715, %v4709
        %4718 = vst [vmem:[%s541] sm:$0xff] %v4556
        %4719 = vst [vmem:[%s541 + $0x8] sm:$0xff] %v4570
        %4720 = vst [vmem:[%s541 + $0x10] sm:$0xff] %v4676
        %4721 = vst [vmem:[%s541 + $0x18] sm:$0xff] %v4690
        %4722 = vst.msk [vmem:[%s541 + $0x20] sm:$0xff] %vm1711, %v4716
        %4723 = vst [vmem:[%s541 + $0x28] sm:$0xff] %v4557
        %4724 = vst [vmem:[%s541 + $0x30] sm:$0xff] %v4571
        %4725 = vst [vmem:[%s541 + $0x38] sm:$0xff] %v4677
        %4726 = vst [vmem:[%s541 + $0x40] sm:$0xff] %v4691
        %4727 = vst.msk [vmem:[%s541 + $0x48] sm:$0xff] %vm1711, %v4717
        %4728 = vst.msk [vmem:[%s541 + $0x20] sm:$0xff] %vm1797, 0.0
        %4729 = vst.msk [vmem:[%s541 + $0x48] sm:$0xff] %vm1797, 0.0
        %v4730 = vld [vmem:[#allocation6] sm:$0xff]
        %v4731 = vld [vmem:[#allocation6 + $0x8] sm:$0xff]
        %v4732 = vld [vmem:[#allocation6 + $0x10] sm:$0xff]
        %v4733 = vld [vmem:[#allocation6 + $0x18] sm:$0xff]
        %v4734 = vld [vmem:[%s541] sm:$0xff]
        %v4735 = vld [vmem:[%s541 + $0x8] sm:$0xff]
        %v4736 = vld [vmem:[%s541 + $0x10] sm:$0xff]
        %v4737 = vld [vmem:[%s541 + $0x18] sm:$0xff]
        %v4738 = vld [vmem:[%s541 + $0x28] sm:$0xff]
        %v4739 = vld [vmem:[%s541 + $0x30] sm:$0xff]
        %v4740 = vld [vmem:[%s541 + $0x38] sm:$0xff]
        %v4741 = vld [vmem:[%s541 + $0x40] sm:$0xff]
        %v4742 = vld [vmem:[%s541 + $0x20] sm:$0xff]
        %v4743 = vld [vmem:[%s541 + $0x48] sm:$0xff]
        %4754 = vrot.lane.b32.xlu0 %v4734, 127
        %v4755 = vpop.permute.xlu0 %4754
        %4756 = vrot.lane.b32.xlu0 %v4735, 127
        %v4757 = vpop.permute.xlu0 %4756
        %4758 = vrot.lane.b32.xlu0 %v4736, 127
        %v4759 = vpop.permute.xlu0 %4758
        %4760 = vrot.lane.b32.xlu0 %v4737, 127
        %v4761 = vpop.permute.xlu0 %4760
        %4762 = vrot.lane.b32.xlu0 %v4742, 127
        %v4763 = vpop.permute.xlu0 %4762
        %4764 = vrot.lane.b32.xlu0 %v4738, 127
        %v4765 = vpop.permute.xlu0 %4764
        %4766 = vrot.lane.b32.xlu0 %v4739, 127
        %v4767 = vpop.permute.xlu0 %4766
        %4768 = vrot.lane.b32.xlu0 %v4740, 127
        %v4769 = vpop.permute.xlu0 %4768
        %4770 = vrot.lane.b32.xlu0 %v4741, 127
        %v4771 = vpop.permute.xlu0 %4770
        %4772 = vrot.lane.b32.xlu0 %v4743, 127
        %v4773 = vpop.permute.xlu0 %4772
        %v4774 = vsel %vm676, %v4755, %v4757
        %v4775 = vsel %vm676, %v4757, %v4759
        %v4776 = vsel %vm676, %v4759, %v4761
        %v4777 = vsel %vm676, %v4761, %v4763
        %v4778 = vsel %vm676, %v4765, %v4767
        %v4779 = vsel %vm676, %v4767, %v4769
        %v4780 = vsel %vm676, %v4769, %v4771
        %v4781 = vsel %vm676, %v4771, %v4773
        %4790 = vrot.lane.b32.xlu0 %v4734, 126
        %v4791 = vpop.permute.xlu0 %4790
        %4792 = vrot.lane.b32.xlu0 %v4735, 126
        %v4793 = vpop.permute.xlu0 %4792
        %4794 = vrot.lane.b32.xlu0 %v4736, 126
        %v4795 = vpop.permute.xlu0 %4794
        %4796 = vrot.lane.b32.xlu0 %v4737, 126
        %v4797 = vpop.permute.xlu0 %4796
        %4798 = vrot.lane.b32.xlu0 %v4742, 126
        %v4799 = vpop.permute.xlu0 %4798
        %4800 = vrot.lane.b32.xlu0 %v4738, 126
        %v4801 = vpop.permute.xlu0 %4800
        %4802 = vrot.lane.b32.xlu0 %v4739, 126
        %v4803 = vpop.permute.xlu0 %4802
        %4804 = vrot.lane.b32.xlu0 %v4740, 126
        %v4805 = vpop.permute.xlu0 %4804
        %4806 = vrot.lane.b32.xlu0 %v4741, 126
        %v4807 = vpop.permute.xlu0 %4806
        %4808 = vrot.lane.b32.xlu0 %v4743, 126
        %v4809 = vpop.permute.xlu0 %4808
        %v4810 = vsel %vm750, %v4791, %v4793
        %v4811 = vsel %vm750, %v4793, %v4795
        %v4812 = vsel %vm750, %v4795, %v4797
        %v4813 = vsel %vm750, %v4797, %v4799
        %v4814 = vsel %vm750, %v4801, %v4803
        %v4815 = vsel %vm750, %v4803, %v4805
        %v4816 = vsel %vm750, %v4805, %v4807
        %v4817 = vsel %vm750, %v4807, %v4809
        %s4826 = scalar_lea.vmem [#allocation6], 32
        %v4827 = vld [vmem:[%s4826] sm:$0xff]
        %v4828 = vld [vmem:[%s4826 + $0x8] sm:$0xff]
        %v4829 = vld [vmem:[%s4826 + $0x10] sm:$0xff]
        %v4830 = vld [vmem:[%s4826 + $0x18] sm:$0xff]
        %4831 = vrot.lane.b32.xlu0 %v4734, 112
        %v4832 = vpop.permute.xlu0 %4831
        %4833 = vrot.lane.b32.xlu0 %v4735, 112
        %v4834 = vpop.permute.xlu0 %4833
        %4835 = vrot.lane.b32.xlu0 %v4736, 112
        %v4836 = vpop.permute.xlu0 %4835
        %4837 = vrot.lane.b32.xlu0 %v4737, 112
        %v4838 = vpop.permute.xlu0 %4837
        %4839 = vrot.lane.b32.xlu0 %v4742, 112
        %v4840 = vpop.permute.xlu0 %4839
        %4841 = vrot.lane.b32.xlu0 %v4738, 112
        %v4842 = vpop.permute.xlu0 %4841
        %4843 = vrot.lane.b32.xlu0 %v4739, 112
        %v4844 = vpop.permute.xlu0 %4843
        %4845 = vrot.lane.b32.xlu0 %v4740, 112
        %v4846 = vpop.permute.xlu0 %4845
        %4847 = vrot.lane.b32.xlu0 %v4741, 112
        %v4848 = vpop.permute.xlu0 %4847
        %4849 = vrot.lane.b32.xlu0 %v4743, 112
        %v4850 = vpop.permute.xlu0 %4849
        %4851 = vrot.lane.b32.xlu0 %v4774, 112
        %v4852 = vpop.permute.xlu0 %4851
        %4853 = vrot.lane.b32.xlu0 %v4775, 112
        %v4854 = vpop.permute.xlu0 %4853
        %4855 = vrot.lane.b32.xlu0 %v4776, 112
        %v4856 = vpop.permute.xlu0 %4855
        %4857 = vrot.lane.b32.xlu0 %v4777, 112
        %v4858 = vpop.permute.xlu0 %4857
        %4859 = vrot.lane.b32.xlu0 %v4763, 112
        %v4860 = vpop.permute.xlu0 %4859
        %4861 = vrot.lane.b32.xlu0 %v4778, 112
        %v4862 = vpop.permute.xlu0 %4861
        %4863 = vrot.lane.b32.xlu0 %v4779, 112
        %v4864 = vpop.permute.xlu0 %4863
        %4865 = vrot.lane.b32.xlu0 %v4780, 112
        %v4866 = vpop.permute.xlu0 %4865
        %4867 = vrot.lane.b32.xlu0 %v4781, 112
        %v4868 = vpop.permute.xlu0 %4867
        %4869 = vrot.lane.b32.xlu0 %v4773, 112
        %v4870 = vpop.permute.xlu0 %4869
        %4871 = vrot.lane.b32.xlu0 %v4810, 112
        %v4872 = vpop.permute.xlu0 %4871
        %4873 = vrot.lane.b32.xlu0 %v4811, 112
        %v4874 = vpop.permute.xlu0 %4873
        %4875 = vrot.lane.b32.xlu0 %v4812, 112
        %v4876 = vpop.permute.xlu0 %4875
        %4877 = vrot.lane.b32.xlu0 %v4813, 112
        %v4878 = vpop.permute.xlu0 %4877
        %4879 = vrot.lane.b32.xlu0 %v4799, 112
        %v4880 = vpop.permute.xlu0 %4879
        %4881 = vrot.lane.b32.xlu0 %v4814, 112
        %v4882 = vpop.permute.xlu0 %4881
        %4883 = vrot.lane.b32.xlu0 %v4815, 112
        %v4884 = vpop.permute.xlu0 %4883
        %4885 = vrot.lane.b32.xlu0 %v4816, 112
        %v4886 = vpop.permute.xlu0 %4885
        %4887 = vrot.lane.b32.xlu0 %v4817, 112
        %v4888 = vpop.permute.xlu0 %4887
        %4889 = vrot.lane.b32.xlu0 %v4809, 112
        %v4890 = vpop.permute.xlu0 %4889
        %v4891 = vsel %vm973, %v4832, %v4834
        %v4892 = vsel %vm973, %v4834, %v4836
        %v4893 = vsel %vm973, %v4836, %v4838
        %v4894 = vsel %vm973, %v4838, %v4840
        %v4895 = vsel %vm973, %v4842, %v4844
        %v4896 = vsel %vm973, %v4844, %v4846
        %v4897 = vsel %vm973, %v4846, %v4848
        %v4898 = vsel %vm973, %v4848, %v4850
        %v4899 = vsel %vm973, %v4852, %v4854
        %v4900 = vsel %vm973, %v4854, %v4856
        %v4901 = vsel %vm973, %v4856, %v4858
        %v4902 = vsel %vm973, %v4858, %v4860
        %v4903 = vsel %vm973, %v4862, %v4864
        %v4904 = vsel %vm973, %v4864, %v4866
        %v4905 = vsel %vm973, %v4866, %v4868
        %v4906 = vsel %vm973, %v4868, %v4870
        %v4907 = vsel %vm973, %v4872, %v4874
        %v4908 = vsel %vm973, %v4874, %v4876
        %v4909 = vsel %vm973, %v4876, %v4878
        %v4910 = vsel %vm973, %v4878, %v4880
        %v4911 = vsel %vm973, %v4882, %v4884
        %v4912 = vsel %vm973, %v4884, %v4886
        %v4913 = vsel %vm973, %v4886, %v4888
        %v4914 = vsel %vm973, %v4888, %v4890
        %v4940 = vsel %vm4547, %v4827, 0
        %v4943 = vsel %vm4547, %v4828, 0
        %v4946 = vsel %vm4547, %v4829, 0
        %v4949 = vsel %vm4547, %v4830, 0
        %4951 = vmatprep.subr.mxu0 %v4892
        %4952 = vmatpush1.msra.mxu0 %v4891
        %4953 = vmatprep.subr.mxu0 %v4896
        %4954 = vmatpush1.msra.mxu0 %v4895
        %4955 = vmatprep.subr.mxu0 %v4900
        %4956 = vmatpush1.msra.mxu0 %v4899
        %4957 = vmatprep.subr.mxu0 %v4904
        %4958 = vmatpush1.msra.mxu0 %v4903
        %4959 = vmatprep.subr.mxu0 %v4908
        %4960 = vmatpush1.msra.mxu0 %v4907
        %4961 = vmatprep.subr.mxu0 %v4912
        %4962 = vmatpush1.msra.mxu0 %v4911
        %4963 = vmatprep.subr.mxu0 0.0
        %4964 = vmatpush1.msra.mxu0 0.0
        %4965 = vmatprep.subr.mxu0 0.0
        %4966 = vmatpush1.msra.mxu0 0.0
        %4967 = vmatprep.subr.mxu0 0.0
        %4968 = vmatpush1.msra.mxu0 0.0
        %4969 = vmatprep.subr.mxu0 0.0
        %4970 = vmatpush1.msra.mxu0 0.0
        %4971 = vmatprep.subr.mxu0 0.0
        %4972 = vmatpush1.msra.mxu0 0.0
        %4973 = vmatprep.subr.mxu0 0.0
        %4974 = vmatpush1.msra.mxu0 0.0
        %4975 = vmatprep.subr.mxu0 0.0
        %4976 = vmatpush1.msra.mxu0 0.0
        %4977 = vmatprep.subr.mxu0 0.0
        %4978 = vmatpush1.msra.mxu0 0.0
        %4979 = vmatprep.subr.mxu0 0.0
        %4980 = vmatpush1.msra.mxu0 0.0
        %4981 = vmatprep.subr.mxu0 0.0
        %4982 = vmatpush1.msra.mxu0 0.0
        %4983 = vmatprep.subr.mxu0 0.0
        %4984 = vmatpush1.msra.mxu0 0.0
        %4985 = vmatprep.subr.mxu0 0.0
        %4986 = vmatpush1.msra.mxu0 0.0
        %4987 = vmatprep.subr.mxu0 0.0
        %4988 = vmatpush1.msra.mxu0 0.0
        %4989 = vmatprep.subr.mxu0 0.0
        %4990 = vmatpush1.msra.mxu0 0.0
        %4991 = vmatprep.subr.mxu0 0.0
        %4992 = vmatpush1.msra.mxu0 0.0
        %4993 = vmatprep.subr.mxu0 0.0
        %4994 = vmatpush1.msra.mxu0 0.0
        %4995 = vmatprep.subr.mxu0 0.0
        %4996 = vmatpush1.msra.mxu0 0.0
        %4997 = vmatprep.subr.mxu0 0.0
        %4998 = vmatpush1.msra.mxu0 0.0
        %4999 = vmatprep.subr.mxu0 0.0
        %5000 = vmatpush1.msra.mxu0 0.0
        %5001 = vmatprep.subr.mxu0 0.0
        %5002 = vmatpush1.msra.mxu0 0.0
        %5003 = vmatprep.subr.mxu0 0.0
        %5004 = vmatpush1.msra.mxu0 0.0
        %5005 = vmatprep.subr.mxu0 0.0
        %5006 = vmatpush1.msra.mxu0 0.0
        %5007 = vmatprep.subr.mxu0 0.0
        %5008 = vmatpush1.msra.mxu0 0.0
        %5009 = vmatprep.subr.mxu0 0.0
        %5010 = vmatpush1.msra.mxu0 0.0
        %5011 = vmatprep.subr.mxu0 0.0
        %5012 = vmatpush1.msra.mxu0 0.0
        %5013 = vmatprep.subr.mxu0 0.0
        %5014 = vmatpush1.msra.mxu0 0.0
        %5015 = vmatprep.mubr.f32.mxu0 0.0
        %5016 = vmatmul.mubr.f32.gmra.mrb[0].mxu0 %v4940
        %v5017 = vpop.f32.mrb[0].mxu0
        %v5018 = vadd.f32 0.0, %v5017
        %v5019 = vpop.f32.mrb[0].mxu0
        %v5020 = vadd.f32 0.0, %v5019
        %5021 = vmatprep.mubr.f32.mxu0 0.0
        %5022 = vmatmul.mubr.f32.gmra.mrb[0].mxu0 %v4943
        %v5023 = vpop.f32.mrb[0].mxu0
        %v5024 = vadd.f32 0.0, %v5023
        %v5025 = vpop.f32.mrb[0].mxu0
        %v5026 = vadd.f32 0.0, %v5025
        %5027 = vmatprep.mubr.f32.mxu0 0.0
        %5028 = vmatmul.mubr.f32.gmra.mrb[0].mxu0 %v4946
        %v5029 = vpop.f32.mrb[0].mxu0
        %v5030 = vadd.f32 0.0, %v5029
        %v5031 = vpop.f32.mrb[0].mxu0
        %v5032 = vadd.f32 0.0, %v5031
        %5033 = vmatprep.mubr.f32.mxu0 0.0
        %5034 = vmatmul.mubr.f32.gmra.mrb[0].mxu0 %v4949
        %v5035 = vpop.f32.mrb[0].mxu0
        %v5036 = vadd.f32 0.0, %v5035
        %v5037 = vpop.f32.mrb[0].mxu0
        %v5038 = vadd.f32 0.0, %v5037
        %5039 = vdwg.mxu0
        %5040 = vmatprep.subr.mxu0 %v4894
        %5041 = vmatpush1.msra.mxu0 %v4893
        %5042 = vmatprep.subr.mxu0 %v4898
        %5043 = vmatpush1.msra.mxu0 %v4897
        %5044 = vmatprep.subr.mxu0 %v4902
        %5045 = vmatpush1.msra.mxu0 %v4901
        %5046 = vmatprep.subr.mxu0 %v4906
        %5047 = vmatpush1.msra.mxu0 %v4905
        %5048 = vmatprep.subr.mxu0 %v4910
        %5049 = vmatpush1.msra.mxu0 %v4909
        %5050 = vmatprep.subr.mxu0 %v4914
        %5051 = vmatpush1.msra.mxu0 %v4913
        %5052 = vmatprep.subr.mxu0 0.0
        %5053 = vmatpush1.msra.mxu0 0.0
        %5054 = vmatprep.subr.mxu0 0.0
        %5055 = vmatpush1.msra.mxu0 0.0
        %5056 = vmatprep.subr.mxu0 0.0
        %5057 = vmatpush1.msra.mxu0 0.0
        %5058 = vmatprep.subr.mxu0 0.0
        %5059 = vmatpush1.msra.mxu0 0.0
        %5060 = vmatprep.subr.mxu0 0.0
        %5061 = vmatpush1.msra.mxu0 0.0
        %5062 = vmatprep.subr.mxu0 0.0
        %5063 = vmatpush1.msra.mxu0 0.0
        %5064 = vmatprep.subr.mxu0 0.0
        %5065 = vmatpush1.msra.mxu0 0.0
        %5066 = vmatprep.subr.mxu0 0.0
        %5067 = vmatpush1.msra.mxu0 0.0
        %5068 = vmatprep.subr.mxu0 0.0
        %5069 = vmatpush1.msra.mxu0 0.0
        %5070 = vmatprep.subr.mxu0 0.0
        %5071 = vmatpush1.msra.mxu0 0.0
        %5072 = vmatprep.subr.mxu0 0.0
        %5073 = vmatpush1.msra.mxu0 0.0
        %5074 = vmatprep.subr.mxu0 0.0
        %5075 = vmatpush1.msra.mxu0 0.0
        %5076 = vmatprep.subr.mxu0 0.0
        %5077 = vmatpush1.msra.mxu0 0.0
        %5078 = vmatprep.subr.mxu0 0.0
        %5079 = vmatpush1.msra.mxu0 0.0
        %5080 = vmatprep.subr.mxu0 0.0
        %5081 = vmatpush1.msra.mxu0 0.0
        %5082 = vmatprep.subr.mxu0 0.0
        %5083 = vmatpush1.msra.mxu0 0.0
        %5084 = vmatprep.subr.mxu0 0.0
        %5085 = vmatpush1.msra.mxu0 0.0
        %5086 = vmatprep.subr.mxu0 0.0
        %5087 = vmatpush1.msra.mxu0 0.0
        %5088 = vmatprep.subr.mxu0 0.0
        %5089 = vmatpush1.msra.mxu0 0.0
        %5090 = vmatprep.subr.mxu0 0.0
        %5091 = vmatpush1.msra.mxu0 0.0
        %5092 = vmatprep.subr.mxu0 0.0
        %5093 = vmatpush1.msra.mxu0 0.0
        %5094 = vmatprep.subr.mxu0 0.0
        %5095 = vmatpush1.msra.mxu0 0.0
        %5096 = vmatprep.subr.mxu0 0.0
        %5097 = vmatpush1.msra.mxu0 0.0
        %5098 = vmatprep.subr.mxu0 0.0
        %5099 = vmatpush1.msra.mxu0 0.0
        %5100 = vmatprep.subr.mxu0 0.0
        %5101 = vmatpush1.msra.mxu0 0.0
        %5102 = vmatprep.subr.mxu0 0.0
        %5103 = vmatpush1.msra.mxu0 0.0
        %5104 = vmatprep.mubr.f32.mxu0 0.0
        %5105 = vmatmul.mubr.f32.gmra.mrb[0].mxu0 %v4940
        %v5106 = vpop.f32.mrb[0].mxu0
        %v5107 = vadd.f32 0.0, %v5106
        %v5108 = vpop.f32.mrb[0].mxu0
        %v5109 = vadd.f32 0.0, %v5108
        %5110 = vmatprep.mubr.f32.mxu0 0.0
        %5111 = vmatmul.mubr.f32.gmra.mrb[0].mxu0 %v4943
        %v5112 = vpop.f32.mrb[0].mxu0
        %v5113 = vadd.f32 0.0, %v5112
        %v5114 = vpop.f32.mrb[0].mxu0
        %v5115 = vadd.f32 0.0, %v5114
        %5116 = vmatprep.mubr.f32.mxu0 0.0
        %5117 = vmatmul.mubr.f32.gmra.mrb[0].mxu0 %v4946
        %v5118 = vpop.f32.mrb[0].mxu0
        %v5119 = vadd.f32 0.0, %v5118
        %v5120 = vpop.f32.mrb[0].mxu0
        %v5121 = vadd.f32 0.0, %v5120
        %5122 = vmatprep.mubr.f32.mxu0 0.0
        %5123 = vmatmul.mubr.f32.gmra.mrb[0].mxu0 %v4949
        %v5124 = vpop.f32.mrb[0].mxu0
        %v5125 = vadd.f32 0.0, %v5124
        %v5126 = vpop.f32.mrb[0].mxu0
        %v5127 = vadd.f32 0.0, %v5126
        %5128 = vdwg.mxu0
        %v5130 = vsel %vm4547, %v4730, 0
        %v5133 = vsel %vm4547, %v4731, 0
        %v5136 = vsel %vm4547, %v4732, 0
        %v5139 = vsel %vm4547, %v4733, 0
        %5141 = vmatprep.subr.mxu0 %v4735
        %5142 = vmatpush1.msra.mxu0 %v4734
        %5143 = vmatprep.subr.mxu0 %v4739
        %5144 = vmatpush1.msra.mxu0 %v4738
        %5145 = vmatprep.subr.mxu0 %v4775
        %5146 = vmatpush1.msra.mxu0 %v4774
        %5147 = vmatprep.subr.mxu0 %v4779
        %5148 = vmatpush1.msra.mxu0 %v4778
        %5149 = vmatprep.subr.mxu0 %v4811
        %5150 = vmatpush1.msra.mxu0 %v4810
        %5151 = vmatprep.subr.mxu0 %v4815
        %5152 = vmatpush1.msra.mxu0 %v4814
        %5153 = vmatprep.subr.mxu0 0.0
        %5154 = vmatpush1.msra.mxu0 0.0
        %5155 = vmatprep.subr.mxu0 0.0
        %5156 = vmatpush1.msra.mxu0 0.0
        %5157 = vmatprep.subr.mxu0 0.0
        %5158 = vmatpush1.msra.mxu0 0.0
        %5159 = vmatprep.subr.mxu0 0.0
        %5160 = vmatpush1.msra.mxu0 0.0
        %5161 = vmatprep.subr.mxu0 0.0
        %5162 = vmatpush1.msra.mxu0 0.0
        %5163 = vmatprep.subr.mxu0 0.0
        %5164 = vmatpush1.msra.mxu0 0.0
        %5165 = vmatprep.subr.mxu0 0.0
        %5166 = vmatpush1.msra.mxu0 0.0
        %5167 = vmatprep.subr.mxu0 0.0
        %5168 = vmatpush1.msra.mxu0 0.0
        %5169 = vmatprep.subr.mxu0 0.0
        %5170 = vmatpush1.msra.mxu0 0.0
        %5171 = vmatprep.subr.mxu0 0.0
        %5172 = vmatpush1.msra.mxu0 0.0
        %5173 = vmatprep.subr.mxu0 0.0
        %5174 = vmatpush1.msra.mxu0 0.0
        %5175 = vmatprep.subr.mxu0 0.0
        %5176 = vmatpush1.msra.mxu0 0.0
        %5177 = vmatprep.subr.mxu0 0.0
        %5178 = vmatpush1.msra.mxu0 0.0
        %5179 = vmatprep.subr.mxu0 0.0
        %5180 = vmatpush1.msra.mxu0 0.0
        %5181 = vmatprep.subr.mxu0 0.0
        %5182 = vmatpush1.msra.mxu0 0.0
        %5183 = vmatprep.subr.mxu0 0.0
        %5184 = vmatpush1.msra.mxu0 0.0
        %5185 = vmatprep.subr.mxu0 0.0
        %5186 = vmatpush1.msra.mxu0 0.0
        %5187 = vmatprep.subr.mxu0 0.0
        %5188 = vmatpush1.msra.mxu0 0.0
        %5189 = vmatprep.subr.mxu0 0.0
        %5190 = vmatpush1.msra.mxu0 0.0
        %5191 = vmatprep.subr.mxu0 0.0
        %5192 = vmatpush1.msra.mxu0 0.0
        %5193 = vmatprep.subr.mxu0 0.0
        %5194 = vmatpush1.msra.mxu0 0.0
        %5195 = vmatprep.subr.mxu0 0.0
        %5196 = vmatpush1.msra.mxu0 0.0
        %5197 = vmatprep.subr.mxu0 0.0
        %5198 = vmatpush1.msra.mxu0 0.0
        %5199 = vmatprep.subr.mxu0 0.0
        %5200 = vmatpush1.msra.mxu0 0.0
        %5201 = vmatprep.subr.mxu0 0.0
        %5202 = vmatpush1.msra.mxu0 0.0
        %5203 = vmatprep.subr.mxu0 0.0
        %5204 = vmatpush1.msra.mxu0 0.0
        %5205 = vmatprep.mubr.f32.mxu0 0.0
        %5206 = vmatmul.mubr.f32.gmra.mrb[0].mxu0 %v5130
        %v5207 = vpop.f32.mrb[0].mxu0
        %v5208 = vadd.f32 %v5018, %v5207
        %v5209 = vpop.f32.mrb[0].mxu0
        %v5210 = vadd.f32 %v5020, %v5209
        %5211 = vmatprep.mubr.f32.mxu0 0.0
        %5212 = vmatmul.mubr.f32.gmra.mrb[0].mxu0 %v5133
        %v5213 = vpop.f32.mrb[0].mxu0
        %v5214 = vadd.f32 %v5024, %v5213
        %v5215 = vpop.f32.mrb[0].mxu0
        %v5216 = vadd.f32 %v5026, %v5215
        %5217 = vmatprep.mubr.f32.mxu0 0.0
        %5218 = vmatmul.mubr.f32.gmra.mrb[0].mxu0 %v5136
        %v5219 = vpop.f32.mrb[0].mxu0
        %v5220 = vadd.f32 %v5030, %v5219
        %v5221 = vpop.f32.mrb[0].mxu0
        %v5222 = vadd.f32 %v5032, %v5221
        %5223 = vmatprep.mubr.f32.mxu0 0.0
        %5224 = vmatmul.mubr.f32.gmra.mrb[0].mxu0 %v5139
        %v5225 = vpop.f32.mrb[0].mxu0
        %v5226 = vadd.f32 %v5036, %v5225
        %v5227 = vpop.f32.mrb[0].mxu0
        %v5228 = vadd.f32 %v5038, %v5227
        %5229 = vdwg.mxu0
        %5230 = vmatprep.subr.mxu0 %v4737
        %5231 = vmatpush1.msra.mxu0 %v4736
        %5232 = vmatprep.subr.mxu0 %v4741
        %5233 = vmatpush1.msra.mxu0 %v4740
        %5234 = vmatprep.subr.mxu0 %v4777
        %5235 = vmatpush1.msra.mxu0 %v4776
        %5236 = vmatprep.subr.mxu0 %v4781
        %5237 = vmatpush1.msra.mxu0 %v4780
        %5238 = vmatprep.subr.mxu0 %v4813
        %5239 = vmatpush1.msra.mxu0 %v4812
        %5240 = vmatprep.subr.mxu0 %v4817
        %5241 = vmatpush1.msra.mxu0 %v4816
        %5242 = vmatprep.subr.mxu0 0.0
        %5243 = vmatpush1.msra.mxu0 0.0
        %5244 = vmatprep.subr.mxu0 0.0
        %5245 = vmatpush1.msra.mxu0 0.0
        %5246 = vmatprep.subr.mxu0 0.0
        %5247 = vmatpush1.msra.mxu0 0.0
        %5248 = vmatprep.subr.mxu0 0.0
        %5249 = vmatpush1.msra.mxu0 0.0
        %5250 = vmatprep.subr.mxu0 0.0
        %5251 = vmatpush1.msra.mxu0 0.0
        %5252 = vmatprep.subr.mxu0 0.0
        %5253 = vmatpush1.msra.mxu0 0.0
        %5254 = vmatprep.subr.mxu0 0.0
        %5255 = vmatpush1.msra.mxu0 0.0
        %5256 = vmatprep.subr.mxu0 0.0
        %5257 = vmatpush1.msra.mxu0 0.0
        %5258 = vmatprep.subr.mxu0 0.0
        %5259 = vmatpush1.msra.mxu0 0.0
        %5260 = vmatprep.subr.mxu0 0.0
        %5261 = vmatpush1.msra.mxu0 0.0
        %5262 = vmatprep.subr.mxu0 0.0
        %5263 = vmatpush1.msra.mxu0 0.0
        %5264 = vmatprep.subr.mxu0 0.0
        %5265 = vmatpush1.msra.mxu0 0.0
        %5266 = vmatprep.subr.mxu0 0.0
        %5267 = vmatpush1.msra.mxu0 0.0
        %5268 = vmatprep.subr.mxu0 0.0
        %5269 = vmatpush1.msra.mxu0 0.0
        %5270 = vmatprep.subr.mxu0 0.0
        %5271 = vmatpush1.msra.mxu0 0.0
        %5272 = vmatprep.subr.mxu0 0.0
        %5273 = vmatpush1.msra.mxu0 0.0
        %5274 = vmatprep.subr.mxu0 0.0
        %5275 = vmatpush1.msra.mxu0 0.0
        %5276 = vmatprep.subr.mxu0 0.0
        %5277 = vmatpush1.msra.mxu0 0.0
        %5278 = vmatprep.subr.mxu0 0.0
        %5279 = vmatpush1.msra.mxu0 0.0
        %5280 = vmatprep.subr.mxu0 0.0
        %5281 = vmatpush1.msra.mxu0 0.0
        %5282 = vmatprep.subr.mxu0 0.0
        %5283 = vmatpush1.msra.mxu0 0.0
        %5284 = vmatprep.subr.mxu0 0.0
        %5285 = vmatpush1.msra.mxu0 0.0
        %5286 = vmatprep.subr.mxu0 0.0
        %5287 = vmatpush1.msra.mxu0 0.0
        %5288 = vmatprep.subr.mxu0 0.0
        %5289 = vmatpush1.msra.mxu0 0.0
        %5290 = vmatprep.subr.mxu0 0.0
        %5291 = vmatpush1.msra.mxu0 0.0
        %5292 = vmatprep.subr.mxu0 0.0
        %5293 = vmatpush1.msra.mxu0 0.0
        %5294 = vmatprep.mubr.f32.mxu0 0.0
        %5295 = vmatmul.mubr.f32.gmra.mrb[0].mxu0 %v5130
        %v5296 = vpop.f32.mrb[0].mxu0
        %v5297 = vadd.f32 %v5107, %v5296
        %v5298 = vpop.f32.mrb[0].mxu0
        %v5299 = vadd.f32 %v5109, %v5298
        %5300 = vmatprep.mubr.f32.mxu0 0.0
        %5301 = vmatmul.mubr.f32.gmra.mrb[0].mxu0 %v5133
        %v5302 = vpop.f32.mrb[0].mxu0
        %v5303 = vadd.f32 %v5113, %v5302
        %v5304 = vpop.f32.mrb[0].mxu0
        %v5305 = vadd.f32 %v5115, %v5304
        %5306 = vmatprep.mubr.f32.mxu0 0.0
        %5307 = vmatmul.mubr.f32.gmra.mrb[0].mxu0 %v5136
        %v5308 = vpop.f32.mrb[0].mxu0
        %v5309 = vadd.f32 %v5119, %v5308
        %v5310 = vpop.f32.mrb[0].mxu0
        %v5311 = vadd.f32 %v5121, %v5310
        %5312 = vmatprep.mubr.f32.mxu0 0.0
        %5313 = vmatmul.mubr.f32.gmra.mrb[0].mxu0 %v5139
        %v5314 = vpop.f32.mrb[0].mxu0
        %v5315 = vadd.f32 %v5125, %v5314
        %v5316 = vpop.f32.mrb[0].mxu0
        %v5317 = vadd.f32 %v5127, %v5316
        %5318 = vdwg.mxu0
        %s5319 = scalar_lea.vmem [#allocation6], 64
        %v5320 = vld [vmem:[%s5319] sm:$0xff]
        %v5321 = vld [vmem:[%s5319 + $0x8] sm:$0xff]
        %v5322 = vld [vmem:[%s5319 + $0x10] sm:$0xff]
        %v5323 = vld [vmem:[%s5319 + $0x18] sm:$0xff]
        %5324 = vrot.lane.b32.xlu0 %v4734, 96
        %v5325 = vpop.permute.xlu0 %5324
        %5326 = vrot.lane.b32.xlu0 %v4735, 96
        %v5327 = vpop.permute.xlu0 %5326
        %5328 = vrot.lane.b32.xlu0 %v4736, 96
        %v5329 = vpop.permute.xlu0 %5328
        %5330 = vrot.lane.b32.xlu0 %v4737, 96
        %v5331 = vpop.permute.xlu0 %5330
        %5332 = vrot.lane.b32.xlu0 %v4742, 96
        %v5333 = vpop.permute.xlu0 %5332
        %5334 = vrot.lane.b32.xlu0 %v4738, 96
        %v5335 = vpop.permute.xlu0 %5334
        %5336 = vrot.lane.b32.xlu0 %v4739, 96
        %v5337 = vpop.permute.xlu0 %5336
        %5338 = vrot.lane.b32.xlu0 %v4740, 96
        %v5339 = vpop.permute.xlu0 %5338
        %5340 = vrot.lane.b32.xlu0 %v4741, 96
        %v5341 = vpop.permute.xlu0 %5340
        %5342 = vrot.lane.b32.xlu0 %v4743, 96
        %v5343 = vpop.permute.xlu0 %5342
        %5344 = vrot.lane.b32.xlu0 %v4774, 96
        %v5345 = vpop.permute.xlu0 %5344
        %5346 = vrot.lane.b32.xlu0 %v4775, 96
        %v5347 = vpop.permute.xlu0 %5346
        %5348 = vrot.lane.b32.xlu0 %v4776, 96
        %v5349 = vpop.permute.xlu0 %5348
        %5350 = vrot.lane.b32.xlu0 %v4777, 96
        %v5351 = vpop.permute.xlu0 %5350
        %5352 = vrot.lane.b32.xlu0 %v4763, 96
        %v5353 = vpop.permute.xlu0 %5352
        %5354 = vrot.lane.b32.xlu0 %v4778, 96
        %v5355 = vpop.permute.xlu0 %5354
        %5356 = vrot.lane.b32.xlu0 %v4779, 96
        %v5357 = vpop.permute.xlu0 %5356
        %5358 = vrot.lane.b32.xlu0 %v4780, 96
        %v5359 = vpop.permute.xlu0 %5358
        %5360 = vrot.lane.b32.xlu0 %v4781, 96
        %v5361 = vpop.permute.xlu0 %5360
        %5362 = vrot.lane.b32.xlu0 %v4773, 96
        %v5363 = vpop.permute.xlu0 %5362
        %5364 = vrot.lane.b32.xlu0 %v4810, 96
        %v5365 = vpop.permute.xlu0 %5364
        %5366 = vrot.lane.b32.xlu0 %v4811, 96
        %v5367 = vpop.permute.xlu0 %5366
        %5368 = vrot.lane.b32.xlu0 %v4812, 96
        %v5369 = vpop.permute.xlu0 %5368
        %5370 = vrot.lane.b32.xlu0 %v4813, 96
        %v5371 = vpop.permute.xlu0 %5370
        %5372 = vrot.lane.b32.xlu0 %v4799, 96
        %v5373 = vpop.permute.xlu0 %5372
        %5374 = vrot.lane.b32.xlu0 %v4814, 96
        %v5375 = vpop.permute.xlu0 %5374
        %5376 = vrot.lane.b32.xlu0 %v4815, 96
        %v5377 = vpop.permute.xlu0 %5376
        %5378 = vrot.lane.b32.xlu0 %v4816, 96
        %v5379 = vpop.permute.xlu0 %5378
        %5380 = vrot.lane.b32.xlu0 %v4817, 96
        %v5381 = vpop.permute.xlu0 %5380
        %5382 = vrot.lane.b32.xlu0 %v4809, 96
        %v5383 = vpop.permute.xlu0 %5382
        %v5384 = vsel %vm1196, %v5325, %v5327
        %v5385 = vsel %vm1196, %v5327, %v5329
        %v5386 = vsel %vm1196, %v5329, %v5331
        %v5387 = vsel %vm1196, %v5331, %v5333
        %v5388 = vsel %vm1196, %v5335, %v5337
        %v5389 = vsel %vm1196, %v5337, %v5339
        %v5390 = vsel %vm1196, %v5339, %v5341
        %v5391 = vsel %vm1196, %v5341, %v5343
        %v5392 = vsel %vm1196, %v5345, %v5347
        %v5393 = vsel %vm1196, %v5347, %v5349
        %v5394 = vsel %vm1196, %v5349, %v5351
        %v5395 = vsel %vm1196, %v5351, %v5353
        %v5396 = vsel %vm1196, %v5355, %v5357
        %v5397 = vsel %vm1196, %v5357, %v5359
        %v5398 = vsel %vm1196, %v5359, %v5361
        %v5399 = vsel %vm1196, %v5361, %v5363
        %v5400 = vsel %vm1196, %v5365, %v5367
        %v5401 = vsel %vm1196, %v5367, %v5369
        %v5402 = vsel %vm1196, %v5369, %v5371
        %v5403 = vsel %vm1196, %v5371, %v5373
        %v5404 = vsel %vm1196, %v5375, %v5377
        %v5405 = vsel %vm1196, %v5377, %v5379
        %v5406 = vsel %vm1196, %v5379, %v5381
        %v5407 = vsel %vm1196, %v5381, %v5383
        %v5433 = vsel %vm4547, %v5320, 0
        %v5436 = vsel %vm4547, %v5321, 0
        %v5439 = vsel %vm4547, %v5322, 0
        %v5442 = vsel %vm4547, %v5323, 0
        %5444 = vmatprep.subr.mxu0 %v5385
        %5445 = vmatpush1.msra.mxu0 %v5384
        %5446 = vmatprep.subr.mxu0 %v5389
        %5447 = vmatpush1.msra.mxu0 %v5388
        %5448 = vmatprep.subr.mxu0 %v5393
        %5449 = vmatpush1.msra.mxu0 %v5392
        %5450 = vmatprep.subr.mxu0 %v5397
        %5451 = vmatpush1.msra.mxu0 %v5396
        %5452 = vmatprep.subr.mxu0 %v5401
        %5453 = vmatpush1.msra.mxu0 %v5400
        %5454 = vmatprep.subr.mxu0 %v5405
        %5455 = vmatpush1.msra.mxu0 %v5404
        %5456 = vmatprep.subr.mxu0 0.0
        %5457 = vmatpush1.msra.mxu0 0.0
        %5458 = vmatprep.subr.mxu0 0.0
        %5459 = vmatpush1.msra.mxu0 0.0
        %5460 = vmatprep.subr.mxu0 0.0
        %5461 = vmatpush1.msra.mxu0 0.0
        %5462 = vmatprep.subr.mxu0 0.0
        %5463 = vmatpush1.msra.mxu0 0.0
        %5464 = vmatprep.subr.mxu0 0.0
        %5465 = vmatpush1.msra.mxu0 0.0
        %5466 = vmatprep.subr.mxu0 0.0
        %5467 = vmatpush1.msra.mxu0 0.0
        %5468 = vmatprep.subr.mxu0 0.0
        %5469 = vmatpush1.msra.mxu0 0.0
        %5470 = vmatprep.subr.mxu0 0.0
        %5471 = vmatpush1.msra.mxu0 0.0
        %5472 = vmatprep.subr.mxu0 0.0
        %5473 = vmatpush1.msra.mxu0 0.0
        %5474 = vmatprep.subr.mxu0 0.0
        %5475 = vmatpush1.msra.mxu0 0.0
        %5476 = vmatprep.subr.mxu0 0.0
        %5477 = vmatpush1.msra.mxu0 0.0
        %5478 = vmatprep.subr.mxu0 0.0
        %5479 = vmatpush1.msra.mxu0 0.0
        %5480 = vmatprep.subr.mxu0 0.0
        %5481 = vmatpush1.msra.mxu0 0.0
        %5482 = vmatprep.subr.mxu0 0.0
        %5483 = vmatpush1.msra.mxu0 0.0
        %5484 = vmatprep.subr.mxu0 0.0
        %5485 = vmatpush1.msra.mxu0 0.0
        %5486 = vmatprep.subr.mxu0 0.0
        %5487 = vmatpush1.msra.mxu0 0.0
        %5488 = vmatprep.subr.mxu0 0.0
        %5489 = vmatpush1.msra.mxu0 0.0
        %5490 = vmatprep.subr.mxu0 0.0
        %5491 = vmatpush1.msra.mxu0 0.0
        %5492 = vmatprep.subr.mxu0 0.0
        %5493 = vmatpush1.msra.mxu0 0.0
        %5494 = vmatprep.subr.mxu0 0.0
        %5495 = vmatpush1.msra.mxu0 0.0
        %5496 = vmatprep.subr.mxu0 0.0
        %5497 = vmatpush1.msra.mxu0 0.0
        %5498 = vmatprep.subr.mxu0 0.0
        %5499 = vmatpush1.msra.mxu0 0.0
        %5500 = vmatprep.subr.mxu0 0.0
        %5501 = vmatpush1.msra.mxu0 0.0
        %5502 = vmatprep.subr.mxu0 0.0
        %5503 = vmatpush1.msra.mxu0 0.0
        %5504 = vmatprep.subr.mxu0 0.0
        %5505 = vmatpush1.msra.mxu0 0.0
        %5506 = vmatprep.subr.mxu0 0.0
        %5507 = vmatpush1.msra.mxu0 0.0
        %5508 = vmatprep.mubr.f32.mxu0 0.0
        %5509 = vmatmul.mubr.f32.gmra.mrb[0].mxu0 %v5433
        %v5510 = vpop.f32.mrb[0].mxu0
        %v5511 = vadd.f32 0.0, %v5510
        %v5512 = vpop.f32.mrb[0].mxu0
        %v5513 = vadd.f32 0.0, %v5512
        %5514 = vmatprep.mubr.f32.mxu0 0.0
        %5515 = vmatmul.mubr.f32.gmra.mrb[0].mxu0 %v5436
        %v5516 = vpop.f32.mrb[0].mxu0
        %v5517 = vadd.f32 0.0, %v5516
        %v5518 = vpop.f32.mrb[0].mxu0
        %v5519 = vadd.f32 0.0, %v5518
        %5520 = vmatprep.mubr.f32.mxu0 0.0
        %5521 = vmatmul.mubr.f32.gmra.mrb[0].mxu0 %v5439
        %v5522 = vpop.f32.mrb[0].mxu0
        %v5523 = vadd.f32 0.0, %v5522
        %v5524 = vpop.f32.mrb[0].mxu0
        %v5525 = vadd.f32 0.0, %v5524
        %5526 = vmatprep.mubr.f32.mxu0 0.0
        %5527 = vmatmul.mubr.f32.gmra.mrb[0].mxu0 %v5442
        %v5528 = vpop.f32.mrb[0].mxu0
        %v5529 = vadd.f32 0.0, %v5528
        %v5530 = vpop.f32.mrb[0].mxu0
        %v5531 = vadd.f32 0.0, %v5530
        %5532 = vdwg.mxu0
        %5533 = vmatprep.subr.mxu0 %v5387
        %5534 = vmatpush1.msra.mxu0 %v5386
        %5535 = vmatprep.subr.mxu0 %v5391
        %5536 = vmatpush1.msra.mxu0 %v5390
        %5537 = vmatprep.subr.mxu0 %v5395
        %5538 = vmatpush1.msra.mxu0 %v5394
        %5539 = vmatprep.subr.mxu0 %v5399
        %5540 = vmatpush1.msra.mxu0 %v5398
        %5541 = vmatprep.subr.mxu0 %v5403
        %5542 = vmatpush1.msra.mxu0 %v5402
        %5543 = vmatprep.subr.mxu0 %v5407
        %5544 = vmatpush1.msra.mxu0 %v5406
        %5545 = vmatprep.subr.mxu0 0.0
        %5546 = vmatpush1.msra.mxu0 0.0
        %5547 = vmatprep.subr.mxu0 0.0
        %5548 = vmatpush1.msra.mxu0 0.0
        %5549 = vmatprep.subr.mxu0 0.0
        %5550 = vmatpush1.msra.mxu0 0.0
        %5551 = vmatprep.subr.mxu0 0.0
        %5552 = vmatpush1.msra.mxu0 0.0
        %5553 = vmatprep.subr.mxu0 0.0
        %5554 = vmatpush1.msra.mxu0 0.0
        %5555 = vmatprep.subr.mxu0 0.0
        %5556 = vmatpush1.msra.mxu0 0.0
        %5557 = vmatprep.subr.mxu0 0.0
        %5558 = vmatpush1.msra.mxu0 0.0
        %5559 = vmatprep.subr.mxu0 0.0
        %5560 = vmatpush1.msra.mxu0 0.0
        %5561 = vmatprep.subr.mxu0 0.0
        %5562 = vmatpush1.msra.mxu0 0.0
        %5563 = vmatprep.subr.mxu0 0.0
        %5564 = vmatpush1.msra.mxu0 0.0
        %5565 = vmatprep.subr.mxu0 0.0
        %5566 = vmatpush1.msra.mxu0 0.0
        %5567 = vmatprep.subr.mxu0 0.0
        %5568 = vmatpush1.msra.mxu0 0.0
        %5569 = vmatprep.subr.mxu0 0.0
        %5570 = vmatpush1.msra.mxu0 0.0
        %5571 = vmatprep.subr.mxu0 0.0
        %5572 = vmatpush1.msra.mxu0 0.0
        %5573 = vmatprep.subr.mxu0 0.0
        %5574 = vmatpush1.msra.mxu0 0.0
        %5575 = vmatprep.subr.mxu0 0.0
        %5576 = vmatpush1.msra.mxu0 0.0
        %5577 = vmatprep.subr.mxu0 0.0
        %5578 = vmatpush1.msra.mxu0 0.0
        %5579 = vmatprep.subr.mxu0 0.0
        %5580 = vmatpush1.msra.mxu0 0.0
        %5581 = vmatprep.subr.mxu0 0.0
        %5582 = vmatpush1.msra.mxu0 0.0
        %5583 = vmatprep.subr.mxu0 0.0
        %5584 = vmatpush1.msra.mxu0 0.0
        %5585 = vmatprep.subr.mxu0 0.0
        %5586 = vmatpush1.msra.mxu0 0.0
        %5587 = vmatprep.subr.mxu0 0.0
        %5588 = vmatpush1.msra.mxu0 0.0
        %5589 = vmatprep.subr.mxu0 0.0
        %5590 = vmatpush1.msra.mxu0 0.0
        %5591 = vmatprep.subr.mxu0 0.0
        %5592 = vmatpush1.msra.mxu0 0.0
        %5593 = vmatprep.subr.mxu0 0.0
        %5594 = vmatpush1.msra.mxu0 0.0
        %5595 = vmatprep.subr.mxu0 0.0
        %5596 = vmatpush1.msra.mxu0 0.0
        %5597 = vmatprep.mubr.f32.mxu0 0.0
        %5598 = vmatmul.mubr.f32.gmra.mrb[0].mxu0 %v5433
        %v5599 = vpop.f32.mrb[0].mxu0
        %v5600 = vadd.f32 0.0, %v5599
        %v5601 = vpop.f32.mrb[0].mxu0
        %v5602 = vadd.f32 0.0, %v5601
        %5603 = vmatprep.mubr.f32.mxu0 0.0
        %5604 = vmatmul.mubr.f32.gmra.mrb[0].mxu0 %v5436
        %v5605 = vpop.f32.mrb[0].mxu0
        %v5606 = vadd.f32 0.0, %v5605
        %v5607 = vpop.f32.mrb[0].mxu0
        %v5608 = vadd.f32 0.0, %v5607
        %5609 = vmatprep.mubr.f32.mxu0 0.0
        %5610 = vmatmul.mubr.f32.gmra.mrb[0].mxu0 %v5439
        %v5611 = vpop.f32.mrb[0].mxu0
        %v5612 = vadd.f32 0.0, %v5611
        %v5613 = vpop.f32.mrb[0].mxu0
        %v5614 = vadd.f32 0.0, %v5613
        %5615 = vmatprep.mubr.f32.mxu0 0.0
        %5616 = vmatmul.mubr.f32.gmra.mrb[0].mxu0 %v5442
        %v5617 = vpop.f32.mrb[0].mxu0
        %v5618 = vadd.f32 0.0, %v5617
        %v5619 = vpop.f32.mrb[0].mxu0
        %v5620 = vadd.f32 0.0, %v5619
        %5621 = vdwg.mxu0
        %v5622 = vadd.f32 %v5208, %v5511
        %v5623 = vadd.f32 %v5210, %v5513
        %v5624 = vadd.f32 %v5297, %v5600
        %v5625 = vadd.f32 %v5299, %v5602
        %v5626 = vadd.f32 %v5214, %v5517
        %v5627 = vadd.f32 %v5216, %v5519
        %v5628 = vadd.f32 %v5303, %v5606
        %v5629 = vadd.f32 %v5305, %v5608
        %v5630 = vadd.f32 %v5220, %v5523
        %v5631 = vadd.f32 %v5222, %v5525
        %v5632 = vadd.f32 %v5309, %v5612
        %v5633 = vadd.f32 %v5311, %v5614
        %v5634 = vadd.f32 %v5226, %v5529
        %v5635 = vadd.f32 %v5228, %v5531
        %v5636 = vadd.f32 %v5315, %v5618
        %v5637 = vadd.f32 %v5317, %v5620
        %s5638 = scalar_lea.vmem [#allocation6], 96
        %v5639 = vld [vmem:[%s5638] sm:$0xff]
        %v5640 = vld [vmem:[%s5638 + $0x8] sm:$0xff]
        %v5641 = vld [vmem:[%s5638 + $0x10] sm:$0xff]
        %v5642 = vld [vmem:[%s5638 + $0x18] sm:$0xff]
        %5643 = vrot.lane.b32.xlu0 %v4734, 80
        %v5644 = vpop.permute.xlu0 %5643
        %5645 = vrot.lane.b32.xlu0 %v4735, 80
        %v5646 = vpop.permute.xlu0 %5645
        %5647 = vrot.lane.b32.xlu0 %v4736, 80
        %v5648 = vpop.permute.xlu0 %5647
        %5649 = vrot.lane.b32.xlu0 %v4737, 80
        %v5650 = vpop.permute.xlu0 %5649
        %5651 = vrot.lane.b32.xlu0 %v4742, 80
        %v5652 = vpop.permute.xlu0 %5651
        %5653 = vrot.lane.b32.xlu0 %v4738, 80
        %v5654 = vpop.permute.xlu0 %5653
        %5655 = vrot.lane.b32.xlu0 %v4739, 80
        %v5656 = vpop.permute.xlu0 %5655
        %5657 = vrot.lane.b32.xlu0 %v4740, 80
        %v5658 = vpop.permute.xlu0 %5657
        %5659 = vrot.lane.b32.xlu0 %v4741, 80
        %v5660 = vpop.permute.xlu0 %5659
        %5661 = vrot.lane.b32.xlu0 %v4743, 80
        %v5662 = vpop.permute.xlu0 %5661
        %5663 = vrot.lane.b32.xlu0 %v4774, 80
        %v5664 = vpop.permute.xlu0 %5663
        %5665 = vrot.lane.b32.xlu0 %v4775, 80
        %v5666 = vpop.permute.xlu0 %5665
        %5667 = vrot.lane.b32.xlu0 %v4776, 80
        %v5668 = vpop.permute.xlu0 %5667
        %5669 = vrot.lane.b32.xlu0 %v4777, 80
        %v5670 = vpop.permute.xlu0 %5669
        %5671 = vrot.lane.b32.xlu0 %v4763, 80
        %v5672 = vpop.permute.xlu0 %5671
        %5673 = vrot.lane.b32.xlu0 %v4778, 80
        %v5674 = vpop.permute.xlu0 %5673
        %5675 = vrot.lane.b32.xlu0 %v4779, 80
        %v5676 = vpop.permute.xlu0 %5675
        %5677 = vrot.lane.b32.xlu0 %v4780, 80
        %v5678 = vpop.permute.xlu0 %5677
        %5679 = vrot.lane.b32.xlu0 %v4781, 80
        %v5680 = vpop.permute.xlu0 %5679
        %5681 = vrot.lane.b32.xlu0 %v4773, 80
        %v5682 = vpop.permute.xlu0 %5681
        %5683 = vrot.lane.b32.xlu0 %v4810, 80
        %v5684 = vpop.permute.xlu0 %5683
        %5685 = vrot.lane.b32.xlu0 %v4811, 80
        %v5686 = vpop.permute.xlu0 %5685
        %5687 = vrot.lane.b32.xlu0 %v4812, 80
        %v5688 = vpop.permute.xlu0 %5687
        %5689 = vrot.lane.b32.xlu0 %v4813, 80
        %v5690 = vpop.permute.xlu0 %5689
        %5691 = vrot.lane.b32.xlu0 %v4799, 80
        %v5692 = vpop.permute.xlu0 %5691
        %5693 = vrot.lane.b32.xlu0 %v4814, 80
        %v5694 = vpop.permute.xlu0 %5693
        %5695 = vrot.lane.b32.xlu0 %v4815, 80
        %v5696 = vpop.permute.xlu0 %5695
        %5697 = vrot.lane.b32.xlu0 %v4816, 80
        %v5698 = vpop.permute.xlu0 %5697
        %5699 = vrot.lane.b32.xlu0 %v4817, 80
        %v5700 = vpop.permute.xlu0 %5699
        %5701 = vrot.lane.b32.xlu0 %v4809, 80
        %v5702 = vpop.permute.xlu0 %5701
        %v5703 = vsel %vm1419, %v5644, %v5646
        %v5704 = vsel %vm1419, %v5646, %v5648
        %v5705 = vsel %vm1419, %v5648, %v5650
        %v5706 = vsel %vm1419, %v5650, %v5652
        %v5707 = vsel %vm1419, %v5654, %v5656
        %v5708 = vsel %vm1419, %v5656, %v5658
        %v5709 = vsel %vm1419, %v5658, %v5660
        %v5710 = vsel %vm1419, %v5660, %v5662
        %v5711 = vsel %vm1419, %v5664, %v5666
        %v5712 = vsel %vm1419, %v5666, %v5668
        %v5713 = vsel %vm1419, %v5668, %v5670
        %v5714 = vsel %vm1419, %v5670, %v5672
        %v5715 = vsel %vm1419, %v5674, %v5676
        %v5716 = vsel %vm1419, %v5676, %v5678
        %v5717 = vsel %vm1419, %v5678, %v5680
        %v5718 = vsel %vm1419, %v5680, %v5682
        %v5719 = vsel %vm1419, %v5684, %v5686
        %v5720 = vsel %vm1419, %v5686, %v5688
        %v5721 = vsel %vm1419, %v5688, %v5690
        %v5722 = vsel %vm1419, %v5690, %v5692
        %v5723 = vsel %vm1419, %v5694, %v5696
        %v5724 = vsel %vm1419, %v5696, %v5698
        %v5725 = vsel %vm1419, %v5698, %v5700
        %v5726 = vsel %vm1419, %v5700, %v5702
        %v5752 = vsel %vm4547, %v5639, 0
        %v5755 = vsel %vm4547, %v5640, 0
        %v5758 = vsel %vm4547, %v5641, 0
        %v5761 = vsel %vm4547, %v5642, 0
        %5763 = vmatprep.subr.mxu0 %v5704
        %5764 = vmatpush1.msra.mxu0 %v5703
        %5765 = vmatprep.subr.mxu0 %v5708
        %5766 = vmatpush1.msra.mxu0 %v5707
        %5767 = vmatprep.subr.mxu0 %v5712
        %5768 = vmatpush1.msra.mxu0 %v5711
        %5769 = vmatprep.subr.mxu0 %v5716
        %5770 = vmatpush1.msra.mxu0 %v5715
        %5771 = vmatprep.subr.mxu0 %v5720
        %5772 = vmatpush1.msra.mxu0 %v5719
        %5773 = vmatprep.subr.mxu0 %v5724
        %5774 = vmatpush1.msra.mxu0 %v5723
        %5775 = vmatprep.subr.mxu0 0.0
        %5776 = vmatpush1.msra.mxu0 0.0
        %5777 = vmatprep.subr.mxu0 0.0
        %5778 = vmatpush1.msra.mxu0 0.0
        %5779 = vmatprep.subr.mxu0 0.0
        %5780 = vmatpush1.msra.mxu0 0.0
        %5781 = vmatprep.subr.mxu0 0.0
        %5782 = vmatpush1.msra.mxu0 0.0
        %5783 = vmatprep.subr.mxu0 0.0
        %5784 = vmatpush1.msra.mxu0 0.0
        %5785 = vmatprep.subr.mxu0 0.0
        %5786 = vmatpush1.msra.mxu0 0.0
        %5787 = vmatprep.subr.mxu0 0.0
        %5788 = vmatpush1.msra.mxu0 0.0
        %5789 = vmatprep.subr.mxu0 0.0
        %5790 = vmatpush1.msra.mxu0 0.0
        %5791 = vmatprep.subr.mxu0 0.0
        %5792 = vmatpush1.msra.mxu0 0.0
        %5793 = vmatprep.subr.mxu0 0.0
        %5794 = vmatpush1.msra.mxu0 0.0
        %5795 = vmatprep.subr.mxu0 0.0
        %5796 = vmatpush1.msra.mxu0 0.0
        %5797 = vmatprep.subr.mxu0 0.0
        %5798 = vmatpush1.msra.mxu0 0.0
        %5799 = vmatprep.subr.mxu0 0.0
        %5800 = vmatpush1.msra.mxu0 0.0
        %5801 = vmatprep.subr.mxu0 0.0
        %5802 = vmatpush1.msra.mxu0 0.0
        %5803 = vmatprep.subr.mxu0 0.0
        %5804 = vmatpush1.msra.mxu0 0.0
        %5805 = vmatprep.subr.mxu0 0.0
        %5806 = vmatpush1.msra.mxu0 0.0
        %5807 = vmatprep.subr.mxu0 0.0
        %5808 = vmatpush1.msra.mxu0 0.0
        %5809 = vmatprep.subr.mxu0 0.0
        %5810 = vmatpush1.msra.mxu0 0.0
        %5811 = vmatprep.subr.mxu0 0.0
        %5812 = vmatpush1.msra.mxu0 0.0
        %5813 = vmatprep.subr.mxu0 0.0
        %5814 = vmatpush1.msra.mxu0 0.0
        %5815 = vmatprep.subr.mxu0 0.0
        %5816 = vmatpush1.msra.mxu0 0.0
        %5817 = vmatprep.subr.mxu0 0.0
        %5818 = vmatpush1.msra.mxu0 0.0
        %5819 = vmatprep.subr.mxu0 0.0
        %5820 = vmatpush1.msra.mxu0 0.0
        %5821 = vmatprep.subr.mxu0 0.0
        %5822 = vmatpush1.msra.mxu0 0.0
        %5823 = vmatprep.subr.mxu0 0.0
        %5824 = vmatpush1.msra.mxu0 0.0
        %5825 = vmatprep.subr.mxu0 0.0
        %5826 = vmatpush1.msra.mxu0 0.0
        %5827 = vmatprep.mubr.f32.mxu0 0.0
        %5828 = vmatmul.mubr.f32.gmra.mrb[0].mxu0 %v5752
        %v5829 = vpop.f32.mrb[0].mxu0
        %v5830 = vadd.f32 0.0, %v5829
        %v5831 = vpop.f32.mrb[0].mxu0
        %v5832 = vadd.f32 0.0, %v5831
        %5833 = vmatprep.mubr.f32.mxu0 0.0
        %5834 = vmatmul.mubr.f32.gmra.mrb[0].mxu0 %v5755
        %v5835 = vpop.f32.mrb[0].mxu0
        %v5836 = vadd.f32 0.0, %v5835
        %v5837 = vpop.f32.mrb[0].mxu0
        %v5838 = vadd.f32 0.0, %v5837
        %5839 = vmatprep.mubr.f32.mxu0 0.0
        %5840 = vmatmul.mubr.f32.gmra.mrb[0].mxu0 %v5758
        %v5841 = vpop.f32.mrb[0].mxu0
        %v5842 = vadd.f32 0.0, %v5841
        %v5843 = vpop.f32.mrb[0].mxu0
        %v5844 = vadd.f32 0.0, %v5843
        %5845 = vmatprep.mubr.f32.mxu0 0.0
        %5846 = vmatmul.mubr.f32.gmra.mrb[0].mxu0 %v5761
        %v5847 = vpop.f32.mrb[0].mxu0
        %v5848 = vadd.f32 0.0, %v5847
        %v5849 = vpop.f32.mrb[0].mxu0
        %v5850 = vadd.f32 0.0, %v5849
        %5851 = vdwg.mxu0
        %5852 = vmatprep.subr.mxu0 %v5706
        %5853 = vmatpush1.msra.mxu0 %v5705
        %5854 = vmatprep.subr.mxu0 %v5710
        %5855 = vmatpush1.msra.mxu0 %v5709
        %5856 = vmatprep.subr.mxu0 %v5714
        %5857 = vmatpush1.msra.mxu0 %v5713
        %5858 = vmatprep.subr.mxu0 %v5718
        %5859 = vmatpush1.msra.mxu0 %v5717
        %5860 = vmatprep.subr.mxu0 %v5722
        %5861 = vmatpush1.msra.mxu0 %v5721
        %5862 = vmatprep.subr.mxu0 %v5726
        %5863 = vmatpush1.msra.mxu0 %v5725
        %5864 = vmatprep.subr.mxu0 0.0
        %5865 = vmatpush1.msra.mxu0 0.0
        %5866 = vmatprep.subr.mxu0 0.0
        %5867 = vmatpush1.msra.mxu0 0.0
        %5868 = vmatprep.subr.mxu0 0.0
        %5869 = vmatpush1.msra.mxu0 0.0
        %5870 = vmatprep.subr.mxu0 0.0
        %5871 = vmatpush1.msra.mxu0 0.0
        %5872 = vmatprep.subr.mxu0 0.0
        %5873 = vmatpush1.msra.mxu0 0.0
        %5874 = vmatprep.subr.mxu0 0.0
        %5875 = vmatpush1.msra.mxu0 0.0
        %5876 = vmatprep.subr.mxu0 0.0
        %5877 = vmatpush1.msra.mxu0 0.0
        %5878 = vmatprep.subr.mxu0 0.0
        %5879 = vmatpush1.msra.mxu0 0.0
        %5880 = vmatprep.subr.mxu0 0.0
        %5881 = vmatpush1.msra.mxu0 0.0
        %5882 = vmatprep.subr.mxu0 0.0
        %5883 = vmatpush1.msra.mxu0 0.0
        %5884 = vmatprep.subr.mxu0 0.0
        %5885 = vmatpush1.msra.mxu0 0.0
        %5886 = vmatprep.subr.mxu0 0.0
        %5887 = vmatpush1.msra.mxu0 0.0
        %5888 = vmatprep.subr.mxu0 0.0
        %5889 = vmatpush1.msra.mxu0 0.0
        %5890 = vmatprep.subr.mxu0 0.0
        %5891 = vmatpush1.msra.mxu0 0.0
        %5892 = vmatprep.subr.mxu0 0.0
        %5893 = vmatpush1.msra.mxu0 0.0
        %5894 = vmatprep.subr.mxu0 0.0
        %5895 = vmatpush1.msra.mxu0 0.0
        %5896 = vmatprep.subr.mxu0 0.0
        %5897 = vmatpush1.msra.mxu0 0.0
        %5898 = vmatprep.subr.mxu0 0.0
        %5899 = vmatpush1.msra.mxu0 0.0
        %5900 = vmatprep.subr.mxu0 0.0
        %5901 = vmatpush1.msra.mxu0 0.0
        %5902 = vmatprep.subr.mxu0 0.0
        %5903 = vmatpush1.msra.mxu0 0.0
        %5904 = vmatprep.subr.mxu0 0.0
        %5905 = vmatpush1.msra.mxu0 0.0
        %5906 = vmatprep.subr.mxu0 0.0
        %5907 = vmatpush1.msra.mxu0 0.0
        %5908 = vmatprep.subr.mxu0 0.0
        %5909 = vmatpush1.msra.mxu0 0.0
        %5910 = vmatprep.subr.mxu0 0.0
        %5911 = vmatpush1.msra.mxu0 0.0
        %5912 = vmatprep.subr.mxu0 0.0
        %5913 = vmatpush1.msra.mxu0 0.0
        %5914 = vmatprep.subr.mxu0 0.0
        %5915 = vmatpush1.msra.mxu0 0.0
        %5916 = vmatprep.mubr.f32.mxu0 0.0
        %5917 = vmatmul.mubr.f32.gmra.mrb[0].mxu0 %v5752
        %v5918 = vpop.f32.mrb[0].mxu0
        %v5919 = vadd.f32 0.0, %v5918
        %v5920 = vpop.f32.mrb[0].mxu0
        %v5921 = vadd.f32 0.0, %v5920
        %5922 = vmatprep.mubr.f32.mxu0 0.0
        %5923 = vmatmul.mubr.f32.gmra.mrb[0].mxu0 %v5755
        %v5924 = vpop.f32.mrb[0].mxu0
        %v5925 = vadd.f32 0.0, %v5924
        %v5926 = vpop.f32.mrb[0].mxu0
        %v5927 = vadd.f32 0.0, %v5926
        %5928 = vmatprep.mubr.f32.mxu0 0.0
        %5929 = vmatmul.mubr.f32.gmra.mrb[0].mxu0 %v5758
        %v5930 = vpop.f32.mrb[0].mxu0
        %v5931 = vadd.f32 0.0, %v5930
        %v5932 = vpop.f32.mrb[0].mxu0
        %v5933 = vadd.f32 0.0, %v5932
        %5934 = vmatprep.mubr.f32.mxu0 0.0
        %5935 = vmatmul.mubr.f32.gmra.mrb[0].mxu0 %v5761
        %v5936 = vpop.f32.mrb[0].mxu0
        %v5937 = vadd.f32 0.0, %v5936
        %v5938 = vpop.f32.mrb[0].mxu0
        %v5939 = vadd.f32 0.0, %v5938
        %5940 = vdwg.mxu0
        %v5941 = vadd.f32 %v5622, %v5830
        %v5942 = vadd.f32 %v5623, %v5832
        %v5943 = vadd.f32 %v5624, %v5919
        %v5944 = vadd.f32 %v5625, %v5921
        %v5945 = vadd.f32 %v5626, %v5836
        %v5946 = vadd.f32 %v5627, %v5838
        %v5947 = vadd.f32 %v5628, %v5925
        %v5948 = vadd.f32 %v5629, %v5927
        %v5949 = vadd.f32 %v5630, %v5842
        %v5950 = vadd.f32 %v5631, %v5844
        %v5951 = vadd.f32 %v5632, %v5931
        %v5952 = vadd.f32 %v5633, %v5933
        %v5953 = vadd.f32 %v5634, %v5848
        %v5954 = vadd.f32 %v5635, %v5850
        %v5955 = vadd.f32 %v5636, %v5937
        %v5956 = vadd.f32 %v5637, %v5939
        %s5957 = scalar_lea.vmem [#allocation6], 128
        %v5958 = vld [vmem:[%s5957] sm:$0xff]
        %v5959 = vld [vmem:[%s5957 + $0x8] sm:$0xff]
        %v5960 = vld [vmem:[%s5957 + $0x10] sm:$0xff]
        %v5961 = vld [vmem:[%s5957 + $0x18] sm:$0xff]
        %5962 = vrot.lane.b32.xlu0 %v4734, 64
        %v5963 = vpop.permute.xlu0 %5962
        %5964 = vrot.lane.b32.xlu0 %v4735, 64
        %v5965 = vpop.permute.xlu0 %5964
        %5966 = vrot.lane.b32.xlu0 %v4736, 64
        %v5967 = vpop.permute.xlu0 %5966
        %5968 = vrot.lane.b32.xlu0 %v4737, 64
        %v5969 = vpop.permute.xlu0 %5968
        %5970 = vrot.lane.b32.xlu0 %v4742, 64
        %v5971 = vpop.permute.xlu0 %5970
        %5972 = vrot.lane.b32.xlu0 %v4738, 64
        %v5973 = vpop.permute.xlu0 %5972
        %5974 = vrot.lane.b32.xlu0 %v4739, 64
        %v5975 = vpop.permute.xlu0 %5974
        %5976 = vrot.lane.b32.xlu0 %v4740, 64
        %v5977 = vpop.permute.xlu0 %5976
        %5978 = vrot.lane.b32.xlu0 %v4741, 64
        %v5979 = vpop.permute.xlu0 %5978
        %5980 = vrot.lane.b32.xlu0 %v4743, 64
        %v5981 = vpop.permute.xlu0 %5980
        %5982 = vrot.lane.b32.xlu0 %v4774, 64
        %v5983 = vpop.permute.xlu0 %5982
        %5984 = vrot.lane.b32.xlu0 %v4775, 64
        %v5985 = vpop.permute.xlu0 %5984
        %5986 = vrot.lane.b32.xlu0 %v4776, 64
        %v5987 = vpop.permute.xlu0 %5986
        %5988 = vrot.lane.b32.xlu0 %v4777, 64
        %v5989 = vpop.permute.xlu0 %5988
        %5990 = vrot.lane.b32.xlu0 %v4763, 64
        %v5991 = vpop.permute.xlu0 %5990
        %5992 = vrot.lane.b32.xlu0 %v4778, 64
        %v5993 = vpop.permute.xlu0 %5992
        %5994 = vrot.lane.b32.xlu0 %v4779, 64
        %v5995 = vpop.permute.xlu0 %5994
        %5996 = vrot.lane.b32.xlu0 %v4780, 64
        %v5997 = vpop.permute.xlu0 %5996
        %5998 = vrot.lane.b32.xlu0 %v4781, 64
        %v5999 = vpop.permute.xlu0 %5998
        %6000 = vrot.lane.b32.xlu0 %v4773, 64
        %v6001 = vpop.permute.xlu0 %6000
        %6002 = vrot.lane.b32.xlu0 %v4810, 64
        %v6003 = vpop.permute.xlu0 %6002
        %6004 = vrot.lane.b32.xlu0 %v4811, 64
        %v6005 = vpop.permute.xlu0 %6004
        %6006 = vrot.lane.b32.xlu0 %v4812, 64
        %v6007 = vpop.permute.xlu0 %6006
        %6008 = vrot.lane.b32.xlu0 %v4813, 64
        %v6009 = vpop.permute.xlu0 %6008
        %6010 = vrot.lane.b32.xlu0 %v4799, 64
        %v6011 = vpop.permute.xlu0 %6010
        %6012 = vrot.lane.b32.xlu0 %v4814, 64
        %v6013 = vpop.permute.xlu0 %6012
        %6014 = vrot.lane.b32.xlu0 %v4815, 64
        %v6015 = vpop.permute.xlu0 %6014
        %6016 = vrot.lane.b32.xlu0 %v4816, 64
        %v6017 = vpop.permute.xlu0 %6016
        %6018 = vrot.lane.b32.xlu0 %v4817, 64
        %v6019 = vpop.permute.xlu0 %6018
        %6020 = vrot.lane.b32.xlu0 %v4809, 64
        %v6021 = vpop.permute.xlu0 %6020
        %v6022 = vsel %vm1711, %v5963, %v5965
        %v6023 = vsel %vm1711, %v5965, %v5967
        %v6024 = vsel %vm1711, %v5967, %v5969
        %v6025 = vsel %vm1711, %v5969, %v5971
        %v6026 = vsel %vm1711, %v5973, %v5975
        %v6027 = vsel %vm1711, %v5975, %v5977
        %v6028 = vsel %vm1711, %v5977, %v5979
        %v6029 = vsel %vm1711, %v5979, %v5981
        %v6030 = vsel %vm1711, %v5983, %v5985
        %v6031 = vsel %vm1711, %v5985, %v5987
        %v6032 = vsel %vm1711, %v5987, %v5989
        %v6033 = vsel %vm1711, %v5989, %v5991
        %v6034 = vsel %vm1711, %v5993, %v5995
        %v6035 = vsel %vm1711, %v5995, %v5997
        %v6036 = vsel %vm1711, %v5997, %v5999
        %v6037 = vsel %vm1711, %v5999, %v6001
        %v6038 = vsel %vm1711, %v6003, %v6005
        %v6039 = vsel %vm1711, %v6005, %v6007
        %v6040 = vsel %vm1711, %v6007, %v6009
        %v6041 = vsel %vm1711, %v6009, %v6011
        %v6042 = vsel %vm1711, %v6013, %v6015
        %v6043 = vsel %vm1711, %v6015, %v6017
        %v6044 = vsel %vm1711, %v6017, %v6019
        %v6045 = vsel %vm1711, %v6019, %v6021
        %v6071 = vsel %vm4547, %v5958, 0
        %v6074 = vsel %vm4547, %v5959, 0
        %v6077 = vsel %vm4547, %v5960, 0
        %v6080 = vsel %vm4547, %v5961, 0
        %6082 = vmatprep.subr.mxu0 %v6023
        %6083 = vmatpush1.msra.mxu0 %v6022
        %6084 = vmatprep.subr.mxu0 %v6027
        %6085 = vmatpush1.msra.mxu0 %v6026
        %6086 = vmatprep.subr.mxu0 %v6031
        %6087 = vmatpush1.msra.mxu0 %v6030
        %6088 = vmatprep.subr.mxu0 %v6035
        %6089 = vmatpush1.msra.mxu0 %v6034
        %6090 = vmatprep.subr.mxu0 %v6039
        %6091 = vmatpush1.msra.mxu0 %v6038
        %6092 = vmatprep.subr.mxu0 %v6043
        %6093 = vmatpush1.msra.mxu0 %v6042
        %6094 = vmatprep.subr.mxu0 0.0
        %6095 = vmatpush1.msra.mxu0 0.0
        %6096 = vmatprep.subr.mxu0 0.0
        %6097 = vmatpush1.msra.mxu0 0.0
        %6098 = vmatprep.subr.mxu0 0.0
        %6099 = vmatpush1.msra.mxu0 0.0
        %6100 = vmatprep.subr.mxu0 0.0
        %6101 = vmatpush1.msra.mxu0 0.0
        %6102 = vmatprep.subr.mxu0 0.0
        %6103 = vmatpush1.msra.mxu0 0.0
        %6104 = vmatprep.subr.mxu0 0.0
        %6105 = vmatpush1.msra.mxu0 0.0
        %6106 = vmatprep.subr.mxu0 0.0
        %6107 = vmatpush1.msra.mxu0 0.0
        %6108 = vmatprep.subr.mxu0 0.0
        %6109 = vmatpush1.msra.mxu0 0.0
        %6110 = vmatprep.subr.mxu0 0.0
        %6111 = vmatpush1.msra.mxu0 0.0
        %6112 = vmatprep.subr.mxu0 0.0
        %6113 = vmatpush1.msra.mxu0 0.0
        %6114 = vmatprep.subr.mxu0 0.0
        %6115 = vmatpush1.msra.mxu0 0.0
        %6116 = vmatprep.subr.mxu0 0.0
        %6117 = vmatpush1.msra.mxu0 0.0
        %6118 = vmatprep.subr.mxu0 0.0
        %6119 = vmatpush1.msra.mxu0 0.0
        %6120 = vmatprep.subr.mxu0 0.0
        %6121 = vmatpush1.msra.mxu0 0.0
        %6122 = vmatprep.subr.mxu0 0.0
        %6123 = vmatpush1.msra.mxu0 0.0
        %6124 = vmatprep.subr.mxu0 0.0
        %6125 = vmatpush1.msra.mxu0 0.0
        %6126 = vmatprep.subr.mxu0 0.0
        %6127 = vmatpush1.msra.mxu0 0.0
        %6128 = vmatprep.subr.mxu0 0.0
        %6129 = vmatpush1.msra.mxu0 0.0
        %6130 = vmatprep.subr.mxu0 0.0
        %6131 = vmatpush1.msra.mxu0 0.0
        %6132 = vmatprep.subr.mxu0 0.0
        %6133 = vmatpush1.msra.mxu0 0.0
        %6134 = vmatprep.subr.mxu0 0.0
        %6135 = vmatpush1.msra.mxu0 0.0
        %6136 = vmatprep.subr.mxu0 0.0
        %6137 = vmatpush1.msra.mxu0 0.0
        %6138 = vmatprep.subr.mxu0 0.0
        %6139 = vmatpush1.msra.mxu0 0.0
        %6140 = vmatprep.subr.mxu0 0.0
        %6141 = vmatpush1.msra.mxu0 0.0
        %6142 = vmatprep.subr.mxu0 0.0
        %6143 = vmatpush1.msra.mxu0 0.0
        %6144 = vmatprep.subr.mxu0 0.0
        %6145 = vmatpush1.msra.mxu0 0.0
        %6146 = vmatprep.mubr.f32.mxu0 0.0
        %6147 = vmatmul.mubr.f32.gmra.mrb[0].mxu0 %v6071
        %v6148 = vpop.f32.mrb[0].mxu0
        %v6149 = vadd.f32 0.0, %v6148
        %v6150 = vpop.f32.mrb[0].mxu0
        %v6151 = vadd.f32 0.0, %v6150
        %6152 = vmatprep.mubr.f32.mxu0 0.0
        %6153 = vmatmul.mubr.f32.gmra.mrb[0].mxu0 %v6074
        %v6154 = vpop.f32.mrb[0].mxu0
        %v6155 = vadd.f32 0.0, %v6154
        %v6156 = vpop.f32.mrb[0].mxu0
        %v6157 = vadd.f32 0.0, %v6156
        %6158 = vmatprep.mubr.f32.mxu0 0.0
        %6159 = vmatmul.mubr.f32.gmra.mrb[0].mxu0 %v6077
        %v6160 = vpop.f32.mrb[0].mxu0
        %v6161 = vadd.f32 0.0, %v6160
        %v6162 = vpop.f32.mrb[0].mxu0
        %v6163 = vadd.f32 0.0, %v6162
        %6164 = vmatprep.mubr.f32.mxu0 0.0
        %6165 = vmatmul.mubr.f32.gmra.mrb[0].mxu0 %v6080
        %v6166 = vpop.f32.mrb[0].mxu0
        %v6167 = vadd.f32 0.0, %v6166
        %v6168 = vpop.f32.mrb[0].mxu0
        %v6169 = vadd.f32 0.0, %v6168
        %6170 = vdwg.mxu0
        %6171 = vmatprep.subr.mxu0 %v6025
        %6172 = vmatpush1.msra.mxu0 %v6024
        %6173 = vmatprep.subr.mxu0 %v6029
        %6174 = vmatpush1.msra.mxu0 %v6028
        %6175 = vmatprep.subr.mxu0 %v6033
        %6176 = vmatpush1.msra.mxu0 %v6032
        %6177 = vmatprep.subr.mxu0 %v6037
        %6178 = vmatpush1.msra.mxu0 %v6036
        %6179 = vmatprep.subr.mxu0 %v6041
        %6180 = vmatpush1.msra.mxu0 %v6040
        %6181 = vmatprep.subr.mxu0 %v6045
        %6182 = vmatpush1.msra.mxu0 %v6044
        %6183 = vmatprep.subr.mxu0 0.0
        %6184 = vmatpush1.msra.mxu0 0.0
        %6185 = vmatprep.subr.mxu0 0.0
        %6186 = vmatpush1.msra.mxu0 0.0
        %6187 = vmatprep.subr.mxu0 0.0
        %6188 = vmatpush1.msra.mxu0 0.0
        %6189 = vmatprep.subr.mxu0 0.0
        %6190 = vmatpush1.msra.mxu0 0.0
        %6191 = vmatprep.subr.mxu0 0.0
        %6192 = vmatpush1.msra.mxu0 0.0
        %6193 = vmatprep.subr.mxu0 0.0
        %6194 = vmatpush1.msra.mxu0 0.0
        %6195 = vmatprep.subr.mxu0 0.0
        %6196 = vmatpush1.msra.mxu0 0.0
        %6197 = vmatprep.subr.mxu0 0.0
        %6198 = vmatpush1.msra.mxu0 0.0
        %6199 = vmatprep.subr.mxu0 0.0
        %6200 = vmatpush1.msra.mxu0 0.0
        %6201 = vmatprep.subr.mxu0 0.0
        %6202 = vmatpush1.msra.mxu0 0.0
        %6203 = vmatprep.subr.mxu0 0.0
        %6204 = vmatpush1.msra.mxu0 0.0
        %6205 = vmatprep.subr.mxu0 0.0
        %6206 = vmatpush1.msra.mxu0 0.0
        %6207 = vmatprep.subr.mxu0 0.0
        %6208 = vmatpush1.msra.mxu0 0.0
        %6209 = vmatprep.subr.mxu0 0.0
        %6210 = vmatpush1.msra.mxu0 0.0
        %6211 = vmatprep.subr.mxu0 0.0
        %6212 = vmatpush1.msra.mxu0 0.0
        %6213 = vmatprep.subr.mxu0 0.0
        %6214 = vmatpush1.msra.mxu0 0.0
        %6215 = vmatprep.subr.mxu0 0.0
        %6216 = vmatpush1.msra.mxu0 0.0
        %6217 = vmatprep.subr.mxu0 0.0
        %6218 = vmatpush1.msra.mxu0 0.0
        %6219 = vmatprep.subr.mxu0 0.0
        %6220 = vmatpush1.msra.mxu0 0.0
        %6221 = vmatprep.subr.mxu0 0.0
        %6222 = vmatpush1.msra.mxu0 0.0
        %6223 = vmatprep.subr.mxu0 0.0
        %6224 = vmatpush1.msra.mxu0 0.0
        %6225 = vmatprep.subr.mxu0 0.0
        %6226 = vmatpush1.msra.mxu0 0.0
        %6227 = vmatprep.subr.mxu0 0.0
        %6228 = vmatpush1.msra.mxu0 0.0
        %6229 = vmatprep.subr.mxu0 0.0
        %6230 = vmatpush1.msra.mxu0 0.0
        %6231 = vmatprep.subr.mxu0 0.0
        %6232 = vmatpush1.msra.mxu0 0.0
        %6233 = vmatprep.subr.mxu0 0.0
        %6234 = vmatpush1.msra.mxu0 0.0
        %6235 = vmatprep.mubr.f32.mxu0 0.0
        %6236 = vmatmul.mubr.f32.gmra.mrb[0].mxu0 %v6071
        %v6237 = vpop.f32.mrb[0].mxu0
        %v6238 = vadd.f32 0.0, %v6237
        %v6239 = vpop.f32.mrb[0].mxu0
        %v6240 = vadd.f32 0.0, %v6239
        %6241 = vmatprep.mubr.f32.mxu0 0.0
        %6242 = vmatmul.mubr.f32.gmra.mrb[0].mxu0 %v6074
        %v6243 = vpop.f32.mrb[0].mxu0
        %v6244 = vadd.f32 0.0, %v6243
        %v6245 = vpop.f32.mrb[0].mxu0
        %v6246 = vadd.f32 0.0, %v6245
        %6247 = vmatprep.mubr.f32.mxu0 0.0
        %6248 = vmatmul.mubr.f32.gmra.mrb[0].mxu0 %v6077
        %v6249 = vpop.f32.mrb[0].mxu0
        %v6250 = vadd.f32 0.0, %v6249
        %v6251 = vpop.f32.mrb[0].mxu0
        %v6252 = vadd.f32 0.0, %v6251
        %6253 = vmatprep.mubr.f32.mxu0 0.0
        %6254 = vmatmul.mubr.f32.gmra.mrb[0].mxu0 %v6080
        %v6255 = vpop.f32.mrb[0].mxu0
        %v6256 = vadd.f32 0.0, %v6255
        %v6257 = vpop.f32.mrb[0].mxu0
        %v6258 = vadd.f32 0.0, %v6257
        %6259 = vdwg.mxu0
        %v6260 = vadd.f32 %v5941, %v6149
        %v6261 = vadd.f32 %v5942, %v6151
        %v6262 = vadd.f32 %v5943, %v6238
        %v6263 = vadd.f32 %v5944, %v6240
        %v6264 = vadd.f32 %v5945, %v6155
        %v6265 = vadd.f32 %v5946, %v6157
        %v6266 = vadd.f32 %v5947, %v6244
        %v6267 = vadd.f32 %v5948, %v6246
        %v6268 = vadd.f32 %v5949, %v6161
        %v6269 = vadd.f32 %v5950, %v6163
        %v6270 = vadd.f32 %v5951, %v6250
        %v6271 = vadd.f32 %v5952, %v6252
        %v6272 = vadd.f32 %v5953, %v6167
        %v6273 = vadd.f32 %v5954, %v6169
        %v6274 = vadd.f32 %v5955, %v6256
        %v6275 = vadd.f32 %v5956, %v6258
        %v6276 = vld [vmem:[%s6] sm:$0xff]
        %v6277 = vld [vmem:[%s6 + $0x8] sm:$0xff]
        %v6278 = vld [vmem:[%s6 + $0x10] sm:$0xff]
        %v6279 = vld [vmem:[%s6 + $0x18] sm:$0xff]
        %6281 = vset.pattern.permute.xlu0 0
        %6282 = vperm.xlu0 %6281, %v6276
        %v6283 = vpop.permute.xlu0 %6282
        %6286 = vset.pattern.permute.xlu0 0
        %6287 = vperm.xlu0 %6286, %v6277
        %v6288 = vpop.permute.xlu0 %6287
        %6291 = vset.pattern.permute.xlu0 0
        %6292 = vperm.xlu0 %6291, %v6278
        %v6293 = vpop.permute.xlu0 %6292
        %6296 = vset.pattern.permute.xlu0 0
        %6297 = vperm.xlu0 %6296, %v6279
        %v6298 = vpop.permute.xlu0 %6297
        %v6300 = vadd.f32 %v6260, %v6283
        %v6301 = vadd.f32 %v6261, %v6283
        %v6302 = vadd.f32 %v6262, %v6283
        %v6303 = vadd.f32 %v6263, %v6283
        %v6304 = vadd.f32 %v6264, %v6288
        %v6305 = vadd.f32 %v6265, %v6288
        %v6306 = vadd.f32 %v6266, %v6288
        %v6307 = vadd.f32 %v6267, %v6288
        %v6308 = vadd.f32 %v6268, %v6293
        %v6309 = vadd.f32 %v6269, %v6293
        %v6310 = vadd.f32 %v6270, %v6293
        %v6311 = vadd.f32 %v6271, %v6293
        %v6312 = vadd.f32 %v6272, %v6298
        %v6313 = vadd.f32 %v6273, %v6298
        %v6314 = vadd.f32 %v6274, %v6298
        %v6315 = vadd.f32 %v6275, %v6298
        %vm6316 = vcmp.ge.f32.partialorder %v6300, 0.0
        %vm6317 = vcmp.ge.f32.partialorder %v6301, 0.0
        %vm6318 = vcmp.ge.f32.partialorder %v6302, 0.0
        %vm6319 = vcmp.ge.f32.partialorder %v6303, 0.0
        %vm6320 = vcmp.ge.f32.partialorder %v6304, 0.0
        %vm6321 = vcmp.ge.f32.partialorder %v6305, 0.0
        %vm6322 = vcmp.ge.f32.partialorder %v6306, 0.0
        %vm6323 = vcmp.ge.f32.partialorder %v6307, 0.0
        %vm6324 = vcmp.ge.f32.partialorder %v6308, 0.0
        %vm6325 = vcmp.ge.f32.partialorder %v6309, 0.0
        %vm6326 = vcmp.ge.f32.partialorder %v6310, 0.0
        %vm6327 = vcmp.ge.f32.partialorder %v6311, 0.0
        %vm6328 = vcmp.ge.f32.partialorder %v6312, 0.0
        %vm6329 = vcmp.ge.f32.partialorder %v6313, 0.0
        %vm6330 = vcmp.ge.f32.partialorder %v6314, 0.0
        %vm6331 = vcmp.ge.f32.partialorder %v6315, 0.0
        %v6332 = vmul.f32 %v6300, 0.2
        %v6333 = vmul.f32 %v6301, 0.2
        %v6334 = vmul.f32 %v6302, 0.2
        %v6335 = vmul.f32 %v6303, 0.2
        %v6336 = vmul.f32 %v6304, 0.2
        %v6337 = vmul.f32 %v6305, 0.2
        %v6338 = vmul.f32 %v6306, 0.2
        %v6339 = vmul.f32 %v6307, 0.2
        %v6340 = vmul.f32 %v6308, 0.2
        %v6341 = vmul.f32 %v6309, 0.2
        %v6342 = vmul.f32 %v6310, 0.2
        %v6343 = vmul.f32 %v6311, 0.2
        %v6344 = vmul.f32 %v6312, 0.2
        %v6345 = vmul.f32 %v6313, 0.2
        %v6346 = vmul.f32 %v6314, 0.2
        %v6347 = vmul.f32 %v6315, 0.2
        %v6348 = vsel %vm6316, %v6300, %v6332
        %v6349 = vsel %vm6317, %v6301, %v6333
        %v6350 = vsel %vm6318, %v6302, %v6334
        %v6351 = vsel %vm6319, %v6303, %v6335
        %v6352 = vsel %vm6320, %v6304, %v6336
        %v6353 = vsel %vm6321, %v6305, %v6337
        %v6354 = vsel %vm6322, %v6306, %v6338
        %v6355 = vsel %vm6323, %v6307, %v6339
        %v6356 = vsel %vm6324, %v6308, %v6340
        %v6357 = vsel %vm6325, %v6309, %v6341
        %v6358 = vsel %vm6326, %v6310, %v6342
        %v6359 = vsel %vm6327, %v6311, %v6343
        %v6360 = vsel %vm6328, %v6312, %v6344
        %v6361 = vsel %vm6329, %v6313, %v6345
        %v6362 = vsel %vm6330, %v6314, %v6346
        %v6363 = vsel %vm6331, %v6315, %v6347
        %6368 = vrot.lane.b32.xlu0 %v6348, 112
        %v6369 = vpop.permute.xlu0 %6368
        %6370 = vrot.lane.b32.xlu0 %v6352, 112
        %v6371 = vpop.permute.xlu0 %6370
        %6372 = vrot.lane.b32.xlu0 %v6356, 112
        %v6373 = vpop.permute.xlu0 %6372
        %6374 = vrot.lane.b32.xlu0 %v6360, 112
        %v6375 = vpop.permute.xlu0 %6374
        %6380 = vrot.lane.b32.xlu0 %v6348, 96
        %v6381 = vpop.permute.xlu0 %6380
        %6382 = vrot.lane.b32.xlu0 %v6352, 96
        %v6383 = vpop.permute.xlu0 %6382
        %6384 = vrot.lane.b32.xlu0 %v6356, 96
        %v6385 = vpop.permute.xlu0 %6384
        %6386 = vrot.lane.b32.xlu0 %v6360, 96
        %v6387 = vpop.permute.xlu0 %6386
        %6392 = vrot.lane.b32.xlu0 %v6348, 80
        %v6393 = vpop.permute.xlu0 %6392
        %6394 = vrot.lane.b32.xlu0 %v6352, 80
        %v6395 = vpop.permute.xlu0 %6394
        %6396 = vrot.lane.b32.xlu0 %v6356, 80
        %v6397 = vpop.permute.xlu0 %6396
        %6398 = vrot.lane.b32.xlu0 %v6360, 80
        %v6399 = vpop.permute.xlu0 %6398
        %6408 = vrot.lane.b32.xlu0 %v6349, 64
        %v6409 = vpop.permute.xlu0 %6408
        %6410 = vrot.lane.b32.xlu0 %v6353, 64
        %v6411 = vpop.permute.xlu0 %6410
        %6412 = vrot.lane.b32.xlu0 %v6357, 64
        %v6413 = vpop.permute.xlu0 %6412
        %6414 = vrot.lane.b32.xlu0 %v6361, 64
        %v6415 = vpop.permute.xlu0 %6414
        %6420 = vrot.lane.b32.xlu0 %v6349, 48
        %v6421 = vpop.permute.xlu0 %6420
        %6422 = vrot.lane.b32.xlu0 %v6353, 48
        %v6423 = vpop.permute.xlu0 %6422
        %6424 = vrot.lane.b32.xlu0 %v6357, 48
        %v6425 = vpop.permute.xlu0 %6424
        %6426 = vrot.lane.b32.xlu0 %v6361, 48
        %v6427 = vpop.permute.xlu0 %6426
        %6432 = vrot.lane.b32.xlu0 %v6349, 32
        %v6433 = vpop.permute.xlu0 %6432
        %6434 = vrot.lane.b32.xlu0 %v6353, 32
        %v6435 = vpop.permute.xlu0 %6434
        %6436 = vrot.lane.b32.xlu0 %v6357, 32
        %v6437 = vpop.permute.xlu0 %6436
        %6438 = vrot.lane.b32.xlu0 %v6361, 32
        %v6439 = vpop.permute.xlu0 %6438
        %6444 = vrot.lane.b32.xlu0 %v6349, 16
        %v6445 = vpop.permute.xlu0 %6444
        %6446 = vrot.lane.b32.xlu0 %v6353, 16
        %v6447 = vpop.permute.xlu0 %6446
        %6448 = vrot.lane.b32.xlu0 %v6357, 16
        %v6449 = vpop.permute.xlu0 %6448
        %6450 = vrot.lane.b32.xlu0 %v6361, 16
        %v6451 = vpop.permute.xlu0 %6450
        %6460 = vrot.lane.b32.xlu0 %v6350, 112
        %v6461 = vpop.permute.xlu0 %6460
        %6462 = vrot.lane.b32.xlu0 %v6354, 112
        %v6463 = vpop.permute.xlu0 %6462
        %6464 = vrot.lane.b32.xlu0 %v6358, 112
        %v6465 = vpop.permute.xlu0 %6464
        %6466 = vrot.lane.b32.xlu0 %v6362, 112
        %v6467 = vpop.permute.xlu0 %6466
        %6472 = vrot.lane.b32.xlu0 %v6350, 96
        %v6473 = vpop.permute.xlu0 %6472
        %6474 = vrot.lane.b32.xlu0 %v6354, 96
        %v6475 = vpop.permute.xlu0 %6474
        %6476 = vrot.lane.b32.xlu0 %v6358, 96
        %v6477 = vpop.permute.xlu0 %6476
        %6478 = vrot.lane.b32.xlu0 %v6362, 96
        %v6479 = vpop.permute.xlu0 %6478
        %6484 = vrot.lane.b32.xlu0 %v6350, 80
        %v6485 = vpop.permute.xlu0 %6484
        %6486 = vrot.lane.b32.xlu0 %v6354, 80
        %v6487 = vpop.permute.xlu0 %6486
        %6488 = vrot.lane.b32.xlu0 %v6358, 80
        %v6489 = vpop.permute.xlu0 %6488
        %6490 = vrot.lane.b32.xlu0 %v6362, 80
        %v6491 = vpop.permute.xlu0 %6490
        %6500 = vrot.lane.b32.xlu0 %v6351, 64
        %v6501 = vpop.permute.xlu0 %6500
        %6502 = vrot.lane.b32.xlu0 %v6355, 64
        %v6503 = vpop.permute.xlu0 %6502
        %6504 = vrot.lane.b32.xlu0 %v6359, 64
        %v6505 = vpop.permute.xlu0 %6504
        %6506 = vrot.lane.b32.xlu0 %v6363, 64
        %v6507 = vpop.permute.xlu0 %6506
        %6512 = vrot.lane.b32.xlu0 %v6351, 48
        %v6513 = vpop.permute.xlu0 %6512
        %6514 = vrot.lane.b32.xlu0 %v6355, 48
        %v6515 = vpop.permute.xlu0 %6514
        %6516 = vrot.lane.b32.xlu0 %v6359, 48
        %v6517 = vpop.permute.xlu0 %6516
        %6518 = vrot.lane.b32.xlu0 %v6363, 48
        %v6519 = vpop.permute.xlu0 %6518
        %6524 = vrot.lane.b32.xlu0 %v6351, 32
        %v6525 = vpop.permute.xlu0 %6524
        %6526 = vrot.lane.b32.xlu0 %v6355, 32
        %v6527 = vpop.permute.xlu0 %6526
        %6528 = vrot.lane.b32.xlu0 %v6359, 32
        %v6529 = vpop.permute.xlu0 %6528
        %6530 = vrot.lane.b32.xlu0 %v6363, 32
        %v6531 = vpop.permute.xlu0 %6530
        %6536 = vrot.lane.b32.xlu0 %v6351, 16
        %v6537 = vpop.permute.xlu0 %6536
        %6538 = vrot.lane.b32.xlu0 %v6355, 16
        %v6539 = vpop.permute.xlu0 %6538
        %6540 = vrot.lane.b32.xlu0 %v6359, 16
        %v6541 = vpop.permute.xlu0 %6540
        %6542 = vrot.lane.b32.xlu0 %v6363, 16
        %v6543 = vpop.permute.xlu0 %6542
        %v6548 = vsel %vm4541, %v6348, %v6369
        %v6549 = vsel %vm4541, %v6352, %v6371
        %v6550 = vsel %vm4541, %v6356, %v6373
        %v6551 = vsel %vm4541, %v6360, %v6375
        %v6552 = vsel %vm4544, %v6548, %v6381
        %v6553 = vsel %vm4544, %v6549, %v6383
        %v6554 = vsel %vm4544, %v6550, %v6385
        %v6555 = vsel %vm4544, %v6551, %v6387
        %v6556 = vsel %vm4547, %v6552, %v6393
        %v6557 = vsel %vm4547, %v6553, %v6395
        %v6558 = vsel %vm4547, %v6554, %v6397
        %v6559 = vsel %vm4547, %v6555, %v6399
        %v6560 = vsel %vm1711, %v6556, %v6409
        %v6561 = vsel %vm1711, %v6557, %v6411
        %v6562 = vsel %vm1711, %v6558, %v6413
        %v6563 = vsel %vm1711, %v6559, %v6415
        %v6564 = vsel %vm1419, %v6560, %v6421
        %v6565 = vsel %vm1419, %v6561, %v6423
        %v6566 = vsel %vm1419, %v6562, %v6425
        %v6567 = vsel %vm1419, %v6563, %v6427
        %v6568 = vsel %vm1196, %v6564, %v6433
        %v6569 = vsel %vm1196, %v6565, %v6435
        %v6570 = vsel %vm1196, %v6566, %v6437
        %v6571 = vsel %vm1196, %v6567, %v6439
        %v6572 = vsel %vm973, %v6568, %v6445
        %v6573 = vsel %vm973, %v6569, %v6447
        %v6574 = vsel %vm973, %v6570, %v6449
        %v6575 = vsel %vm973, %v6571, %v6451
        %v6576 = vsel %vm4541, %v6350, %v6461
        %v6577 = vsel %vm4541, %v6354, %v6463
        %v6578 = vsel %vm4541, %v6358, %v6465
        %v6579 = vsel %vm4541, %v6362, %v6467
        %v6580 = vsel %vm4544, %v6576, %v6473
        %v6581 = vsel %vm4544, %v6577, %v6475
        %v6582 = vsel %vm4544, %v6578, %v6477
        %v6583 = vsel %vm4544, %v6579, %v6479
        %v6584 = vsel %vm4547, %v6580, %v6485
        %v6585 = vsel %vm4547, %v6581, %v6487
        %v6586 = vsel %vm4547, %v6582, %v6489
        %v6587 = vsel %vm4547, %v6583, %v6491
        %v6588 = vsel %vm1711, %v6584, %v6501
        %v6589 = vsel %vm1711, %v6585, %v6503
        %v6590 = vsel %vm1711, %v6586, %v6505
        %v6591 = vsel %vm1711, %v6587, %v6507
        %v6592 = vsel %vm1419, %v6588, %v6513
        %v6593 = vsel %vm1419, %v6589, %v6515
        %v6594 = vsel %vm1419, %v6590, %v6517
        %v6595 = vsel %vm1419, %v6591, %v6519
        %v6596 = vsel %vm1196, %v6592, %v6525
        %v6597 = vsel %vm1196, %v6593, %v6527
        %v6598 = vsel %vm1196, %v6594, %v6529
        %v6599 = vsel %vm1196, %v6595, %v6531
        %v6600 = vsel %vm973, %v6596, %v6537
        %v6601 = vsel %vm973, %v6597, %v6539
        %v6602 = vsel %vm973, %v6598, %v6541
        %v6603 = vsel %vm973, %v6599, %v6543
        %6604 = vst [vmem:[%s548] sm:$0xff] %v6572
        %6605 = vst [vmem:[%s548 + $0x8] sm:$0xff] %v6600
        %6606 = vst [vmem:[%s548 + $0x18] sm:$0xff] %v6573
        %6607 = vst [vmem:[%s548 + $0x20] sm:$0xff] %v6601
        %6608 = vst [vmem:[%s548 + $0x30] sm:$0xff] %v6574
        %6609 = vst [vmem:[%s548 + $0x38] sm:$0xff] %v6602
        %6610 = vst [vmem:[%s548 + $0x48] sm:$0xff] %v6575
        %6611 = vst [vmem:[%s548 + $0x50] sm:$0xff] %v6603
        %6612 = vst.msk [vmem:[%s548 + $0x10] sm:$0xff] %vm4541, 0.0
        %6613 = vst.msk [vmem:[%s548 + $0x28] sm:$0xff] %vm4541, 0.0
        %6614 = vst.msk [vmem:[%s548 + $0x40] sm:$0xff] %vm4541, 0.0
        %6615 = vst.msk [vmem:[%s548 + $0x58] sm:$0xff] %vm4541, 0.0
        %v6616 = vld [vmem:[%s7] sm:$0xff]
        %v6617 = vld [vmem:[%s7 + $0x8] sm:$0xff]
        %v6618 = vld [vmem:[%s548] sm:$0xff]
        %v6619 = vld [vmem:[%s548 + $0x8] sm:$0xff]
        %v6620 = vld [vmem:[%s548 + $0x18] sm:$0xff]
        %v6621 = vld [vmem:[%s548 + $0x20] sm:$0xff]
        %v6622 = vld [vmem:[%s548 + $0x30] sm:$0xff]
        %v6623 = vld [vmem:[%s548 + $0x38] sm:$0xff]
        %v6624 = vld [vmem:[%s548 + $0x48] sm:$0xff]
        %v6625 = vld [vmem:[%s548 + $0x50] sm:$0xff]
        %6634 = vrot.lane.b32.xlu0 %v6618, 127
        %v6635 = vpop.permute.xlu0 %6634
        %6636 = vrot.lane.b32.xlu0 %v6619, 127
        %v6637 = vpop.permute.xlu0 %6636
        %6638 = vrot.lane.b32.xlu0 %v6620, 127
        %v6639 = vpop.permute.xlu0 %6638
        %6640 = vrot.lane.b32.xlu0 %v6621, 127
        %v6641 = vpop.permute.xlu0 %6640
        %6642 = vrot.lane.b32.xlu0 %v6622, 127
        %v6643 = vpop.permute.xlu0 %6642
        %6644 = vrot.lane.b32.xlu0 %v6623, 127
        %v6645 = vpop.permute.xlu0 %6644
        %6646 = vrot.lane.b32.xlu0 %v6624, 127
        %v6647 = vpop.permute.xlu0 %6646
        %6648 = vrot.lane.b32.xlu0 %v6625, 127
        %v6649 = vpop.permute.xlu0 %6648
        %v6650 = vsel %vm676, %v6635, %v6637
        %v6651 = vsel %vm676, %v6639, %v6641
        %v6652 = vsel %vm676, %v6643, %v6645
        %v6653 = vsel %vm676, %v6647, %v6649
        %6662 = vrot.lane.b32.xlu0 %v6618, 126
        %v6663 = vpop.permute.xlu0 %6662
        %6664 = vrot.lane.b32.xlu0 %v6619, 126
        %v6665 = vpop.permute.xlu0 %6664
        %6666 = vrot.lane.b32.xlu0 %v6620, 126
        %v6667 = vpop.permute.xlu0 %6666
        %6668 = vrot.lane.b32.xlu0 %v6621, 126
        %v6669 = vpop.permute.xlu0 %6668
        %6670 = vrot.lane.b32.xlu0 %v6622, 126
        %v6671 = vpop.permute.xlu0 %6670
        %6672 = vrot.lane.b32.xlu0 %v6623, 126
        %v6673 = vpop.permute.xlu0 %6672
        %6674 = vrot.lane.b32.xlu0 %v6624, 126
        %v6675 = vpop.permute.xlu0 %6674
        %6676 = vrot.lane.b32.xlu0 %v6625, 126
        %v6677 = vpop.permute.xlu0 %6676
        %v6678 = vsel %vm750, %v6663, %v6665
        %v6679 = vsel %vm750, %v6667, %v6669
        %v6680 = vsel %vm750, %v6671, %v6673
        %v6681 = vsel %vm750, %v6675, %v6677
        %s6690 = scalar_lea.vmem %s7, 16
        %v6691 = vld [vmem:[%s6690] sm:$0xff]
        %v6692 = vld [vmem:[%s6690 + $0x8] sm:$0xff]
        %6693 = vrot.lane.b32.xlu0 %v6618, 112
        %v6694 = vpop.permute.xlu0 %6693
        %6695 = vrot.lane.b32.xlu0 %v6619, 112
        %v6696 = vpop.permute.xlu0 %6695
        %6697 = vrot.lane.b32.xlu0 %v6620, 112
        %v6698 = vpop.permute.xlu0 %6697
        %6699 = vrot.lane.b32.xlu0 %v6621, 112
        %v6700 = vpop.permute.xlu0 %6699
        %6701 = vrot.lane.b32.xlu0 %v6622, 112
        %v6702 = vpop.permute.xlu0 %6701
        %6703 = vrot.lane.b32.xlu0 %v6623, 112
        %v6704 = vpop.permute.xlu0 %6703
        %6705 = vrot.lane.b32.xlu0 %v6624, 112
        %v6706 = vpop.permute.xlu0 %6705
        %6707 = vrot.lane.b32.xlu0 %v6625, 112
        %v6708 = vpop.permute.xlu0 %6707
        %6709 = vrot.lane.b32.xlu0 %v6650, 112
        %v6710 = vpop.permute.xlu0 %6709
        %6711 = vrot.lane.b32.xlu0 %v6637, 112
        %v6712 = vpop.permute.xlu0 %6711
        %6713 = vrot.lane.b32.xlu0 %v6651, 112
        %v6714 = vpop.permute.xlu0 %6713
        %6715 = vrot.lane.b32.xlu0 %v6641, 112
        %v6716 = vpop.permute.xlu0 %6715
        %6717 = vrot.lane.b32.xlu0 %v6652, 112
        %v6718 = vpop.permute.xlu0 %6717
        %6719 = vrot.lane.b32.xlu0 %v6645, 112
        %v6720 = vpop.permute.xlu0 %6719
        %6721 = vrot.lane.b32.xlu0 %v6653, 112
        %v6722 = vpop.permute.xlu0 %6721
        %6723 = vrot.lane.b32.xlu0 %v6649, 112
        %v6724 = vpop.permute.xlu0 %6723
        %6725 = vrot.lane.b32.xlu0 %v6678, 112
        %v6726 = vpop.permute.xlu0 %6725
        %6727 = vrot.lane.b32.xlu0 %v6665, 112
        %v6728 = vpop.permute.xlu0 %6727
        %6729 = vrot.lane.b32.xlu0 %v6679, 112
        %v6730 = vpop.permute.xlu0 %6729
        %6731 = vrot.lane.b32.xlu0 %v6669, 112
        %v6732 = vpop.permute.xlu0 %6731
        %6733 = vrot.lane.b32.xlu0 %v6680, 112
        %v6734 = vpop.permute.xlu0 %6733
        %6735 = vrot.lane.b32.xlu0 %v6673, 112
        %v6736 = vpop.permute.xlu0 %6735
        %6737 = vrot.lane.b32.xlu0 %v6681, 112
        %v6738 = vpop.permute.xlu0 %6737
        %6739 = vrot.lane.b32.xlu0 %v6677, 112
        %v6740 = vpop.permute.xlu0 %6739
        %v6741 = vsel %vm973, %v6694, %v6696
        %v6742 = vsel %vm973, %v6698, %v6700
        %v6743 = vsel %vm973, %v6702, %v6704
        %v6744 = vsel %vm973, %v6706, %v6708
        %v6745 = vsel %vm973, %v6710, %v6712
        %v6746 = vsel %vm973, %v6714, %v6716
        %v6747 = vsel %vm973, %v6718, %v6720
        %v6748 = vsel %vm973, %v6722, %v6724
        %v6749 = vsel %vm973, %v6726, %v6728
        %v6750 = vsel %vm973, %v6730, %v6732
        %v6751 = vsel %vm973, %v6734, %v6736
        %v6752 = vsel %vm973, %v6738, %v6740
        %v6778 = vsel %vm1196, %v6691, 0
        %v6781 = vsel %vm1196, %v6692, 0
        %6783 = vmatprep.subr.mxu0 %v6696
        %6784 = vmatpush1.msra.mxu0 %v6741
        %6785 = vmatprep.subr.mxu0 %v6700
        %6786 = vmatpush1.msra.mxu0 %v6742
        %6787 = vmatprep.subr.mxu0 %v6704
        %6788 = vmatpush1.msra.mxu0 %v6743
        %6789 = vmatprep.subr.mxu0 %v6708
        %6790 = vmatpush1.msra.mxu0 %v6744
        %6791 = vmatprep.subr.mxu0 %v6712
        %6792 = vmatpush1.msra.mxu0 %v6745
        %6793 = vmatprep.subr.mxu0 %v6716
        %6794 = vmatpush1.msra.mxu0 %v6746
        %6795 = vmatprep.subr.mxu0 %v6720
        %6796 = vmatpush1.msra.mxu0 %v6747
        %6797 = vmatprep.subr.mxu0 %v6724
        %6798 = vmatpush1.msra.mxu0 %v6748
        %6799 = vmatprep.subr.mxu0 %v6728
        %6800 = vmatpush1.msra.mxu0 %v6749
        %6801 = vmatprep.subr.mxu0 %v6732
        %6802 = vmatpush1.msra.mxu0 %v6750
        %6803 = vmatprep.subr.mxu0 %v6736
        %6804 = vmatpush1.msra.mxu0 %v6751
        %6805 = vmatprep.subr.mxu0 %v6740
        %6806 = vmatpush1.msra.mxu0 %v6752
        %6807 = vmatprep.subr.mxu0 0.0
        %6808 = vmatpush1.msra.mxu0 0.0
        %6809 = vmatprep.subr.mxu0 0.0
        %6810 = vmatpush1.msra.mxu0 0.0
        %6811 = vmatprep.subr.mxu0 0.0
        %6812 = vmatpush1.msra.mxu0 0.0
        %6813 = vmatprep.subr.mxu0 0.0
        %6814 = vmatpush1.msra.mxu0 0.0
        %6815 = vmatprep.subr.mxu0 0.0
        %6816 = vmatpush1.msra.mxu0 0.0
        %6817 = vmatprep.subr.mxu0 0.0
        %6818 = vmatpush1.msra.mxu0 0.0
        %6819 = vmatprep.subr.mxu0 0.0
        %6820 = vmatpush1.msra.mxu0 0.0
        %6821 = vmatprep.subr.mxu0 0.0
        %6822 = vmatpush1.msra.mxu0 0.0
        %6823 = vmatprep.subr.mxu0 0.0
        %6824 = vmatpush1.msra.mxu0 0.0
        %6825 = vmatprep.subr.mxu0 0.0
        %6826 = vmatpush1.msra.mxu0 0.0
        %6827 = vmatprep.subr.mxu0 0.0
        %6828 = vmatpush1.msra.mxu0 0.0
        %6829 = vmatprep.subr.mxu0 0.0
        %6830 = vmatpush1.msra.mxu0 0.0
        %6831 = vmatprep.subr.mxu0 0.0
        %6832 = vmatpush1.msra.mxu0 0.0
        %6833 = vmatprep.subr.mxu0 0.0
        %6834 = vmatpush1.msra.mxu0 0.0
        %6835 = vmatprep.subr.mxu0 0.0
        %6836 = vmatpush1.msra.mxu0 0.0
        %6837 = vmatprep.subr.mxu0 0.0
        %6838 = vmatpush1.msra.mxu0 0.0
        %6839 = vmatprep.subr.mxu0 0.0
        %6840 = vmatpush1.msra.mxu0 0.0
        %6841 = vmatprep.subr.mxu0 0.0
        %6842 = vmatpush1.msra.mxu0 0.0
        %6843 = vmatprep.subr.mxu0 0.0
        %6844 = vmatpush1.msra.mxu0 0.0
        %6845 = vmatprep.subr.mxu0 0.0
        %6846 = vmatpush1.msra.mxu0 0.0
        %6847 = vmatprep.mubr.f32.mxu0 0.0
        %6848 = vmatmul.mubr.f32.gmra.mrb[0].mxu0 %v6778
        %v6849 = vpop.f32.mrb[0].mxu0
        %v6850 = vadd.f32 0.0, %v6849
        %v6851 = vpop.f32.mrb[0].mxu0
        %v6852 = vadd.f32 0.0, %v6851
        %6853 = vmatprep.mubr.f32.mxu0 0.0
        %6854 = vmatmul.mubr.f32.gmra.mrb[0].mxu0 %v6781
        %v6855 = vpop.f32.mrb[0].mxu0
        %v6856 = vadd.f32 0.0, %v6855
        %v6857 = vpop.f32.mrb[0].mxu0
        %v6858 = vadd.f32 0.0, %v6857
        %6859 = vdwg.mxu0
        %v6861 = vsel %vm1196, %v6616, 0
        %v6864 = vsel %vm1196, %v6617, 0
        %6866 = vmatprep.subr.mxu0 %v6619
        %6867 = vmatpush1.msra.mxu0 %v6618
        %6868 = vmatprep.subr.mxu0 %v6621
        %6869 = vmatpush1.msra.mxu0 %v6620
        %6870 = vmatprep.subr.mxu0 %v6623
        %6871 = vmatpush1.msra.mxu0 %v6622
        %6872 = vmatprep.subr.mxu0 %v6625
        %6873 = vmatpush1.msra.mxu0 %v6624
        %6874 = vmatprep.subr.mxu0 %v6637
        %6875 = vmatpush1.msra.mxu0 %v6650
        %6876 = vmatprep.subr.mxu0 %v6641
        %6877 = vmatpush1.msra.mxu0 %v6651
        %6878 = vmatprep.subr.mxu0 %v6645
        %6879 = vmatpush1.msra.mxu0 %v6652
        %6880 = vmatprep.subr.mxu0 %v6649
        %6881 = vmatpush1.msra.mxu0 %v6653
        %6882 = vmatprep.subr.mxu0 %v6665
        %6883 = vmatpush1.msra.mxu0 %v6678
        %6884 = vmatprep.subr.mxu0 %v6669
        %6885 = vmatpush1.msra.mxu0 %v6679
        %6886 = vmatprep.subr.mxu0 %v6673
        %6887 = vmatpush1.msra.mxu0 %v6680
        %6888 = vmatprep.subr.mxu0 %v6677
        %6889 = vmatpush1.msra.mxu0 %v6681
        %6890 = vmatprep.subr.mxu0 0.0
        %6891 = vmatpush1.msra.mxu0 0.0
        %6892 = vmatprep.subr.mxu0 0.0
        %6893 = vmatpush1.msra.mxu0 0.0
        %6894 = vmatprep.subr.mxu0 0.0
        %6895 = vmatpush1.msra.mxu0 0.0
        %6896 = vmatprep.subr.mxu0 0.0
        %6897 = vmatpush1.msra.mxu0 0.0
        %6898 = vmatprep.subr.mxu0 0.0
        %6899 = vmatpush1.msra.mxu0 0.0
        %6900 = vmatprep.subr.mxu0 0.0
        %6901 = vmatpush1.msra.mxu0 0.0
        %6902 = vmatprep.subr.mxu0 0.0
        %6903 = vmatpush1.msra.mxu0 0.0
        %6904 = vmatprep.subr.mxu0 0.0
        %6905 = vmatpush1.msra.mxu0 0.0
        %6906 = vmatprep.subr.mxu0 0.0
        %6907 = vmatpush1.msra.mxu0 0.0
        %6908 = vmatprep.subr.mxu0 0.0
        %6909 = vmatpush1.msra.mxu0 0.0
        %6910 = vmatprep.subr.mxu0 0.0
        %6911 = vmatpush1.msra.mxu0 0.0
        %6912 = vmatprep.subr.mxu0 0.0
        %6913 = vmatpush1.msra.mxu0 0.0
        %6914 = vmatprep.subr.mxu0 0.0
        %6915 = vmatpush1.msra.mxu0 0.0
        %6916 = vmatprep.subr.mxu0 0.0
        %6917 = vmatpush1.msra.mxu0 0.0
        %6918 = vmatprep.subr.mxu0 0.0
        %6919 = vmatpush1.msra.mxu0 0.0
        %6920 = vmatprep.subr.mxu0 0.0
        %6921 = vmatpush1.msra.mxu0 0.0
        %6922 = vmatprep.subr.mxu0 0.0
        %6923 = vmatpush1.msra.mxu0 0.0
        %6924 = vmatprep.subr.mxu0 0.0
        %6925 = vmatpush1.msra.mxu0 0.0
        %6926 = vmatprep.subr.mxu0 0.0
        %6927 = vmatpush1.msra.mxu0 0.0
        %6928 = vmatprep.subr.mxu0 0.0
        %6929 = vmatpush1.msra.mxu0 0.0
        %6930 = vmatprep.mubr.f32.mxu0 0.0
        %6931 = vmatmul.mubr.f32.gmra.mrb[0].mxu0 %v6861
        %v6932 = vpop.f32.mrb[0].mxu0
        %v6933 = vadd.f32 %v6850, %v6932
        %v6934 = vpop.f32.mrb[0].mxu0
        %v6935 = vadd.f32 %v6852, %v6934
        %6936 = vmatprep.mubr.f32.mxu0 0.0
        %6937 = vmatmul.mubr.f32.gmra.mrb[0].mxu0 %v6864
        %v6938 = vpop.f32.mrb[0].mxu0
        %v6939 = vadd.f32 %v6856, %v6938
        %v6940 = vpop.f32.mrb[0].mxu0
        %v6941 = vadd.f32 %v6858, %v6940
        %6942 = vdwg.mxu0
        %s6943 = scalar_lea.vmem %s7, 32
        %v6944 = vld [vmem:[%s6943] sm:$0xff]
        %v6945 = vld [vmem:[%s6943 + $0x8] sm:$0xff]
        %6946 = vrot.lane.b32.xlu0 %v6618, 96
        %v6947 = vpop.permute.xlu0 %6946
        %6948 = vrot.lane.b32.xlu0 %v6619, 96
        %v6949 = vpop.permute.xlu0 %6948
        %6950 = vrot.lane.b32.xlu0 %v6620, 96
        %v6951 = vpop.permute.xlu0 %6950
        %6952 = vrot.lane.b32.xlu0 %v6621, 96
        %v6953 = vpop.permute.xlu0 %6952
        %6954 = vrot.lane.b32.xlu0 %v6622, 96
        %v6955 = vpop.permute.xlu0 %6954
        %6956 = vrot.lane.b32.xlu0 %v6623, 96
        %v6957 = vpop.permute.xlu0 %6956
        %6958 = vrot.lane.b32.xlu0 %v6624, 96
        %v6959 = vpop.permute.xlu0 %6958
        %6960 = vrot.lane.b32.xlu0 %v6625, 96
        %v6961 = vpop.permute.xlu0 %6960
        %6962 = vrot.lane.b32.xlu0 %v6650, 96
        %v6963 = vpop.permute.xlu0 %6962
        %6964 = vrot.lane.b32.xlu0 %v6637, 96
        %v6965 = vpop.permute.xlu0 %6964
        %6966 = vrot.lane.b32.xlu0 %v6651, 96
        %v6967 = vpop.permute.xlu0 %6966
        %6968 = vrot.lane.b32.xlu0 %v6641, 96
        %v6969 = vpop.permute.xlu0 %6968
        %6970 = vrot.lane.b32.xlu0 %v6652, 96
        %v6971 = vpop.permute.xlu0 %6970
        %6972 = vrot.lane.b32.xlu0 %v6645, 96
        %v6973 = vpop.permute.xlu0 %6972
        %6974 = vrot.lane.b32.xlu0 %v6653, 96
        %v6975 = vpop.permute.xlu0 %6974
        %6976 = vrot.lane.b32.xlu0 %v6649, 96
        %v6977 = vpop.permute.xlu0 %6976
        %6978 = vrot.lane.b32.xlu0 %v6678, 96
        %v6979 = vpop.permute.xlu0 %6978
        %6980 = vrot.lane.b32.xlu0 %v6665, 96
        %v6981 = vpop.permute.xlu0 %6980
        %6982 = vrot.lane.b32.xlu0 %v6679, 96
        %v6983 = vpop.permute.xlu0 %6982
        %6984 = vrot.lane.b32.xlu0 %v6669, 96
        %v6985 = vpop.permute.xlu0 %6984
        %6986 = vrot.lane.b32.xlu0 %v6680, 96
        %v6987 = vpop.permute.xlu0 %6986
        %6988 = vrot.lane.b32.xlu0 %v6673, 96
        %v6989 = vpop.permute.xlu0 %6988
        %6990 = vrot.lane.b32.xlu0 %v6681, 96
        %v6991 = vpop.permute.xlu0 %6990
        %6992 = vrot.lane.b32.xlu0 %v6677, 96
        %v6993 = vpop.permute.xlu0 %6992
        %v6994 = vsel %vm1196, %v6947, %v6949
        %v6995 = vsel %vm1196, %v6951, %v6953
        %v6996 = vsel %vm1196, %v6955, %v6957
        %v6997 = vsel %vm1196, %v6959, %v6961
        %v6998 = vsel %vm1196, %v6963, %v6965
        %v6999 = vsel %vm1196, %v6967, %v6969
        %v7000 = vsel %vm1196, %v6971, %v6973
        %v7001 = vsel %vm1196, %v6975, %v6977
        %v7002 = vsel %vm1196, %v6979, %v6981
        %v7003 = vsel %vm1196, %v6983, %v6985
        %v7004 = vsel %vm1196, %v6987, %v6989
        %v7005 = vsel %vm1196, %v6991, %v6993
        %v7031 = vsel %vm1196, %v6944, 0
        %v7034 = vsel %vm1196, %v6945, 0
        %7036 = vmatprep.subr.mxu0 %v6949
        %7037 = vmatpush1.msra.mxu0 %v6994
        %7038 = vmatprep.subr.mxu0 %v6953
        %7039 = vmatpush1.msra.mxu0 %v6995
        %7040 = vmatprep.subr.mxu0 %v6957
        %7041 = vmatpush1.msra.mxu0 %v6996
        %7042 = vmatprep.subr.mxu0 %v6961
        %7043 = vmatpush1.msra.mxu0 %v6997
        %7044 = vmatprep.subr.mxu0 %v6965
        %7045 = vmatpush1.msra.mxu0 %v6998
        %7046 = vmatprep.subr.mxu0 %v6969
        %7047 = vmatpush1.msra.mxu0 %v6999
        %7048 = vmatprep.subr.mxu0 %v6973
        %7049 = vmatpush1.msra.mxu0 %v7000
        %7050 = vmatprep.subr.mxu0 %v6977
        %7051 = vmatpush1.msra.mxu0 %v7001
        %7052 = vmatprep.subr.mxu0 %v6981
        %7053 = vmatpush1.msra.mxu0 %v7002
        %7054 = vmatprep.subr.mxu0 %v6985
        %7055 = vmatpush1.msra.mxu0 %v7003
        %7056 = vmatprep.subr.mxu0 %v6989
        %7057 = vmatpush1.msra.mxu0 %v7004
        %7058 = vmatprep.subr.mxu0 %v6993
        %7059 = vmatpush1.msra.mxu0 %v7005
        %7060 = vmatprep.subr.mxu0 0.0
        %7061 = vmatpush1.msra.mxu0 0.0
        %7062 = vmatprep.subr.mxu0 0.0
        %7063 = vmatpush1.msra.mxu0 0.0
        %7064 = vmatprep.subr.mxu0 0.0
        %7065 = vmatpush1.msra.mxu0 0.0
        %7066 = vmatprep.subr.mxu0 0.0
        %7067 = vmatpush1.msra.mxu0 0.0
        %7068 = vmatprep.subr.mxu0 0.0
        %7069 = vmatpush1.msra.mxu0 0.0
        %7070 = vmatprep.subr.mxu0 0.0
        %7071 = vmatpush1.msra.mxu0 0.0
        %7072 = vmatprep.subr.mxu0 0.0
        %7073 = vmatpush1.msra.mxu0 0.0
        %7074 = vmatprep.subr.mxu0 0.0
        %7075 = vmatpush1.msra.mxu0 0.0
        %7076 = vmatprep.subr.mxu0 0.0
        %7077 = vmatpush1.msra.mxu0 0.0
        %7078 = vmatprep.subr.mxu0 0.0
        %7079 = vmatpush1.msra.mxu0 0.0
        %7080 = vmatprep.subr.mxu0 0.0
        %7081 = vmatpush1.msra.mxu0 0.0
        %7082 = vmatprep.subr.mxu0 0.0
        %7083 = vmatpush1.msra.mxu0 0.0
        %7084 = vmatprep.subr.mxu0 0.0
        %7085 = vmatpush1.msra.mxu0 0.0
        %7086 = vmatprep.subr.mxu0 0.0
        %7087 = vmatpush1.msra.mxu0 0.0
        %7088 = vmatprep.subr.mxu0 0.0
        %7089 = vmatpush1.msra.mxu0 0.0
        %7090 = vmatprep.subr.mxu0 0.0
        %7091 = vmatpush1.msra.mxu0 0.0
        %7092 = vmatprep.subr.mxu0 0.0
        %7093 = vmatpush1.msra.mxu0 0.0
        %7094 = vmatprep.subr.mxu0 0.0
        %7095 = vmatpush1.msra.mxu0 0.0
        %7096 = vmatprep.subr.mxu0 0.0
        %7097 = vmatpush1.msra.mxu0 0.0
        %7098 = vmatprep.subr.mxu0 0.0
        %7099 = vmatpush1.msra.mxu0 0.0
        %7100 = vmatprep.mubr.f32.mxu0 0.0
        %7101 = vmatmul.mubr.f32.gmra.mrb[0].mxu0 %v7031
        %v7102 = vpop.f32.mrb[0].mxu0
        %v7103 = vadd.f32 0.0, %v7102
        %v7104 = vpop.f32.mrb[0].mxu0
        %v7105 = vadd.f32 0.0, %v7104
        %7106 = vmatprep.mubr.f32.mxu0 0.0
        %7107 = vmatmul.mubr.f32.gmra.mrb[0].mxu0 %v7034
        %v7108 = vpop.f32.mrb[0].mxu0
        %v7109 = vadd.f32 0.0, %v7108
        %v7110 = vpop.f32.mrb[0].mxu0
        %v7111 = vadd.f32 0.0, %v7110
        %7112 = vdwg.mxu0
        %v7113 = vadd.f32 %v6933, %v7103
        %v7114 = vadd.f32 %v6935, %v7105
        %v7115 = vadd.f32 %v6939, %v7109
        %v7116 = vadd.f32 %v6941, %v7111
        %s7117 = scalar_lea.vmem %s7, 48
        %v7118 = vld [vmem:[%s7117] sm:$0xff]
        %v7119 = vld [vmem:[%s7117 + $0x8] sm:$0xff]
        %7120 = vrot.lane.b32.xlu0 %v6618, 80
        %v7121 = vpop.permute.xlu0 %7120
        %7122 = vrot.lane.b32.xlu0 %v6619, 80
        %v7123 = vpop.permute.xlu0 %7122
        %7124 = vrot.lane.b32.xlu0 %v6620, 80
        %v7125 = vpop.permute.xlu0 %7124
        %7126 = vrot.lane.b32.xlu0 %v6621, 80
        %v7127 = vpop.permute.xlu0 %7126
        %7128 = vrot.lane.b32.xlu0 %v6622, 80
        %v7129 = vpop.permute.xlu0 %7128
        %7130 = vrot.lane.b32.xlu0 %v6623, 80
        %v7131 = vpop.permute.xlu0 %7130
        %7132 = vrot.lane.b32.xlu0 %v6624, 80
        %v7133 = vpop.permute.xlu0 %7132
        %7134 = vrot.lane.b32.xlu0 %v6625, 80
        %v7135 = vpop.permute.xlu0 %7134
        %7136 = vrot.lane.b32.xlu0 %v6650, 80
        %v7137 = vpop.permute.xlu0 %7136
        %7138 = vrot.lane.b32.xlu0 %v6637, 80
        %v7139 = vpop.permute.xlu0 %7138
        %7140 = vrot.lane.b32.xlu0 %v6651, 80
        %v7141 = vpop.permute.xlu0 %7140
        %7142 = vrot.lane.b32.xlu0 %v6641, 80
        %v7143 = vpop.permute.xlu0 %7142
        %7144 = vrot.lane.b32.xlu0 %v6652, 80
        %v7145 = vpop.permute.xlu0 %7144
        %7146 = vrot.lane.b32.xlu0 %v6645, 80
        %v7147 = vpop.permute.xlu0 %7146
        %7148 = vrot.lane.b32.xlu0 %v6653, 80
        %v7149 = vpop.permute.xlu0 %7148
        %7150 = vrot.lane.b32.xlu0 %v6649, 80
        %v7151 = vpop.permute.xlu0 %7150
        %7152 = vrot.lane.b32.xlu0 %v6678, 80
        %v7153 = vpop.permute.xlu0 %7152
        %7154 = vrot.lane.b32.xlu0 %v6665, 80
        %v7155 = vpop.permute.xlu0 %7154
        %7156 = vrot.lane.b32.xlu0 %v6679, 80
        %v7157 = vpop.permute.xlu0 %7156
        %7158 = vrot.lane.b32.xlu0 %v6669, 80
        %v7159 = vpop.permute.xlu0 %7158
        %7160 = vrot.lane.b32.xlu0 %v6680, 80
        %v7161 = vpop.permute.xlu0 %7160
        %7162 = vrot.lane.b32.xlu0 %v6673, 80
        %v7163 = vpop.permute.xlu0 %7162
        %7164 = vrot.lane.b32.xlu0 %v6681, 80
        %v7165 = vpop.permute.xlu0 %7164
        %7166 = vrot.lane.b32.xlu0 %v6677, 80
        %v7167 = vpop.permute.xlu0 %7166
        %v7168 = vsel %vm1419, %v7121, %v7123
        %v7169 = vsel %vm1419, %v7125, %v7127
        %v7170 = vsel %vm1419, %v7129, %v7131
        %v7171 = vsel %vm1419, %v7133, %v7135
        %v7172 = vsel %vm1419, %v7137, %v7139
        %v7173 = vsel %vm1419, %v7141, %v7143
        %v7174 = vsel %vm1419, %v7145, %v7147
        %v7175 = vsel %vm1419, %v7149, %v7151
        %v7176 = vsel %vm1419, %v7153, %v7155
        %v7177 = vsel %vm1419, %v7157, %v7159
        %v7178 = vsel %vm1419, %v7161, %v7163
        %v7179 = vsel %vm1419, %v7165, %v7167
        %v7205 = vsel %vm1196, %v7118, 0
        %v7208 = vsel %vm1196, %v7119, 0
        %7210 = vmatprep.subr.mxu0 %v7123
        %7211 = vmatpush1.msra.mxu0 %v7168
        %7212 = vmatprep.subr.mxu0 %v7127
        %7213 = vmatpush1.msra.mxu0 %v7169
        %7214 = vmatprep.subr.mxu0 %v7131
        %7215 = vmatpush1.msra.mxu0 %v7170
        %7216 = vmatprep.subr.mxu0 %v7135
        %7217 = vmatpush1.msra.mxu0 %v7171
        %7218 = vmatprep.subr.mxu0 %v7139
        %7219 = vmatpush1.msra.mxu0 %v7172
        %7220 = vmatprep.subr.mxu0 %v7143
        %7221 = vmatpush1.msra.mxu0 %v7173
        %7222 = vmatprep.subr.mxu0 %v7147
        %7223 = vmatpush1.msra.mxu0 %v7174
        %7224 = vmatprep.subr.mxu0 %v7151
        %7225 = vmatpush1.msra.mxu0 %v7175
        %7226 = vmatprep.subr.mxu0 %v7155
        %7227 = vmatpush1.msra.mxu0 %v7176
        %7228 = vmatprep.subr.mxu0 %v7159
        %7229 = vmatpush1.msra.mxu0 %v7177
        %7230 = vmatprep.subr.mxu0 %v7163
        %7231 = vmatpush1.msra.mxu0 %v7178
        %7232 = vmatprep.subr.mxu0 %v7167
        %7233 = vmatpush1.msra.mxu0 %v7179
        %7234 = vmatprep.subr.mxu0 0.0
        %7235 = vmatpush1.msra.mxu0 0.0
        %7236 = vmatprep.subr.mxu0 0.0
        %7237 = vmatpush1.msra.mxu0 0.0
        %7238 = vmatprep.subr.mxu0 0.0
        %7239 = vmatpush1.msra.mxu0 0.0
        %7240 = vmatprep.subr.mxu0 0.0
        %7241 = vmatpush1.msra.mxu0 0.0
        %7242 = vmatprep.subr.mxu0 0.0
        %7243 = vmatpush1.msra.mxu0 0.0
        %7244 = vmatprep.subr.mxu0 0.0
        %7245 = vmatpush1.msra.mxu0 0.0
        %7246 = vmatprep.subr.mxu0 0.0
        %7247 = vmatpush1.msra.mxu0 0.0
        %7248 = vmatprep.subr.mxu0 0.0
        %7249 = vmatpush1.msra.mxu0 0.0
        %7250 = vmatprep.subr.mxu0 0.0
        %7251 = vmatpush1.msra.mxu0 0.0
        %7252 = vmatprep.subr.mxu0 0.0
        %7253 = vmatpush1.msra.mxu0 0.0
        %7254 = vmatprep.subr.mxu0 0.0
        %7255 = vmatpush1.msra.mxu0 0.0
        %7256 = vmatprep.subr.mxu0 0.0
        %7257 = vmatpush1.msra.mxu0 0.0
        %7258 = vmatprep.subr.mxu0 0.0
        %7259 = vmatpush1.msra.mxu0 0.0
        %7260 = vmatprep.subr.mxu0 0.0
        %7261 = vmatpush1.msra.mxu0 0.0
        %7262 = vmatprep.subr.mxu0 0.0
        %7263 = vmatpush1.msra.mxu0 0.0
        %7264 = vmatprep.subr.mxu0 0.0
        %7265 = vmatpush1.msra.mxu0 0.0
        %7266 = vmatprep.subr.mxu0 0.0
        %7267 = vmatpush1.msra.mxu0 0.0
        %7268 = vmatprep.subr.mxu0 0.0
        %7269 = vmatpush1.msra.mxu0 0.0
        %7270 = vmatprep.subr.mxu0 0.0
        %7271 = vmatpush1.msra.mxu0 0.0
        %7272 = vmatprep.subr.mxu0 0.0
        %7273 = vmatpush1.msra.mxu0 0.0
        %7274 = vmatprep.mubr.f32.mxu0 0.0
        %7275 = vmatmul.mubr.f32.gmra.mrb[0].mxu0 %v7205
        %v7276 = vpop.f32.mrb[0].mxu0
        %v7277 = vadd.f32 0.0, %v7276
        %v7278 = vpop.f32.mrb[0].mxu0
        %v7279 = vadd.f32 0.0, %v7278
        %7280 = vmatprep.mubr.f32.mxu0 0.0
        %7281 = vmatmul.mubr.f32.gmra.mrb[0].mxu0 %v7208
        %v7282 = vpop.f32.mrb[0].mxu0
        %v7283 = vadd.f32 0.0, %v7282
        %v7284 = vpop.f32.mrb[0].mxu0
        %v7285 = vadd.f32 0.0, %v7284
        %7286 = vdwg.mxu0
        %v7287 = vadd.f32 %v7113, %v7277
        %v7288 = vadd.f32 %v7114, %v7279
        %v7289 = vadd.f32 %v7115, %v7283
        %v7290 = vadd.f32 %v7116, %v7285
        %s7291 = scalar_lea.vmem %s7, 64
        %v7292 = vld [vmem:[%s7291] sm:$0xff]
        %v7293 = vld [vmem:[%s7291 + $0x8] sm:$0xff]
        %v7294 = vld [vmem:[%s548] sm:$0xff]
        %v7295 = vld [vmem:[%s548 + $0x8] sm:$0xff]
        %v7296 = vld [vmem:[%s548 + $0x10] sm:$0xff]
        %v7297 = vld [vmem:[%s548 + $0x18] sm:$0xff]
        %v7298 = vld [vmem:[%s548 + $0x20] sm:$0xff]
        %v7299 = vld [vmem:[%s548 + $0x28] sm:$0xff]
        %v7300 = vld [vmem:[%s548 + $0x30] sm:$0xff]
        %v7301 = vld [vmem:[%s548 + $0x38] sm:$0xff]
        %v7302 = vld [vmem:[%s548 + $0x40] sm:$0xff]
        %v7303 = vld [vmem:[%s548 + $0x48] sm:$0xff]
        %v7304 = vld [vmem:[%s548 + $0x50] sm:$0xff]
        %v7305 = vld [vmem:[%s548 + $0x58] sm:$0xff]
        %7318 = vrot.lane.b32.xlu0 %v7294, 127
        %v7319 = vpop.permute.xlu0 %7318
        %7320 = vrot.lane.b32.xlu0 %v7295, 127
        %v7321 = vpop.permute.xlu0 %7320
        %7322 = vrot.lane.b32.xlu0 %v7296, 127
        %v7323 = vpop.permute.xlu0 %7322
        %7324 = vrot.lane.b32.xlu0 %v7297, 127
        %v7325 = vpop.permute.xlu0 %7324
        %7326 = vrot.lane.b32.xlu0 %v7298, 127
        %v7327 = vpop.permute.xlu0 %7326
        %7328 = vrot.lane.b32.xlu0 %v7299, 127
        %v7329 = vpop.permute.xlu0 %7328
        %7330 = vrot.lane.b32.xlu0 %v7300, 127
        %v7331 = vpop.permute.xlu0 %7330
        %7332 = vrot.lane.b32.xlu0 %v7301, 127
        %v7333 = vpop.permute.xlu0 %7332
        %7334 = vrot.lane.b32.xlu0 %v7302, 127
        %v7335 = vpop.permute.xlu0 %7334
        %7336 = vrot.lane.b32.xlu0 %v7303, 127
        %v7337 = vpop.permute.xlu0 %7336
        %7338 = vrot.lane.b32.xlu0 %v7304, 127
        %v7339 = vpop.permute.xlu0 %7338
        %7340 = vrot.lane.b32.xlu0 %v7305, 127
        %v7341 = vpop.permute.xlu0 %7340
        %v7342 = vsel %vm676, %v7319, %v7321
        %v7343 = vsel %vm676, %v7321, %v7323
        %v7344 = vsel %vm676, %v7325, %v7327
        %v7345 = vsel %vm676, %v7327, %v7329
        %v7346 = vsel %vm676, %v7331, %v7333
        %v7347 = vsel %vm676, %v7333, %v7335
        %v7348 = vsel %vm676, %v7337, %v7339
        %v7349 = vsel %vm676, %v7339, %v7341
        %7350 = vrot.lane.b32.xlu0 %v7294, 126
        %v7351 = vpop.permute.xlu0 %7350
        %7352 = vrot.lane.b32.xlu0 %v7295, 126
        %v7353 = vpop.permute.xlu0 %7352
        %7354 = vrot.lane.b32.xlu0 %v7296, 126
        %v7355 = vpop.permute.xlu0 %7354
        %7356 = vrot.lane.b32.xlu0 %v7297, 126
        %v7357 = vpop.permute.xlu0 %7356
        %7358 = vrot.lane.b32.xlu0 %v7298, 126
        %v7359 = vpop.permute.xlu0 %7358
        %7360 = vrot.lane.b32.xlu0 %v7299, 126
        %v7361 = vpop.permute.xlu0 %7360
        %7362 = vrot.lane.b32.xlu0 %v7300, 126
        %v7363 = vpop.permute.xlu0 %7362
        %7364 = vrot.lane.b32.xlu0 %v7301, 126
        %v7365 = vpop.permute.xlu0 %7364
        %7366 = vrot.lane.b32.xlu0 %v7302, 126
        %v7367 = vpop.permute.xlu0 %7366
        %7368 = vrot.lane.b32.xlu0 %v7303, 126
        %v7369 = vpop.permute.xlu0 %7368
        %7370 = vrot.lane.b32.xlu0 %v7304, 126
        %v7371 = vpop.permute.xlu0 %7370
        %7372 = vrot.lane.b32.xlu0 %v7305, 126
        %v7373 = vpop.permute.xlu0 %7372
        %v7374 = vsel %vm750, %v7351, %v7353
        %v7375 = vsel %vm750, %v7353, %v7355
        %v7376 = vsel %vm750, %v7357, %v7359
        %v7377 = vsel %vm750, %v7359, %v7361
        %v7378 = vsel %vm750, %v7363, %v7365
        %v7379 = vsel %vm750, %v7365, %v7367
        %v7380 = vsel %vm750, %v7369, %v7371
        %v7381 = vsel %vm750, %v7371, %v7373
        %7382 = vrot.lane.b32.xlu0 %v6618, 64
        %v7383 = vpop.permute.xlu0 %7382
        %7384 = vrot.lane.b32.xlu0 %v6619, 64
        %v7385 = vpop.permute.xlu0 %7384
        %7386 = vrot.lane.b32.xlu0 %v6620, 64
        %v7387 = vpop.permute.xlu0 %7386
        %7388 = vrot.lane.b32.xlu0 %v6621, 64
        %v7389 = vpop.permute.xlu0 %7388
        %7390 = vrot.lane.b32.xlu0 %v6622, 64
        %v7391 = vpop.permute.xlu0 %7390
        %7392 = vrot.lane.b32.xlu0 %v6623, 64
        %v7393 = vpop.permute.xlu0 %7392
        %7394 = vrot.lane.b32.xlu0 %v6624, 64
        %v7395 = vpop.permute.xlu0 %7394
        %7396 = vrot.lane.b32.xlu0 %v6625, 64
        %v7397 = vpop.permute.xlu0 %7396
        %7398 = vrot.lane.b32.xlu0 %v7342, 64
        %v7399 = vpop.permute.xlu0 %7398
        %7400 = vrot.lane.b32.xlu0 %v7343, 64
        %v7401 = vpop.permute.xlu0 %7400
        %7402 = vrot.lane.b32.xlu0 %v7344, 64
        %v7403 = vpop.permute.xlu0 %7402
        %7404 = vrot.lane.b32.xlu0 %v7345, 64
        %v7405 = vpop.permute.xlu0 %7404
        %7406 = vrot.lane.b32.xlu0 %v7346, 64
        %v7407 = vpop.permute.xlu0 %7406
        %7408 = vrot.lane.b32.xlu0 %v7347, 64
        %v7409 = vpop.permute.xlu0 %7408
        %7410 = vrot.lane.b32.xlu0 %v7348, 64
        %v7411 = vpop.permute.xlu0 %7410
        %7412 = vrot.lane.b32.xlu0 %v7349, 64
        %v7413 = vpop.permute.xlu0 %7412
        %7414 = vrot.lane.b32.xlu0 %v7374, 64
        %v7415 = vpop.permute.xlu0 %7414
        %7416 = vrot.lane.b32.xlu0 %v7375, 64
        %v7417 = vpop.permute.xlu0 %7416
        %7418 = vrot.lane.b32.xlu0 %v7376, 64
        %v7419 = vpop.permute.xlu0 %7418
        %7420 = vrot.lane.b32.xlu0 %v7377, 64
        %v7421 = vpop.permute.xlu0 %7420
        %7422 = vrot.lane.b32.xlu0 %v7378, 64
        %v7423 = vpop.permute.xlu0 %7422
        %7424 = vrot.lane.b32.xlu0 %v7379, 64
        %v7425 = vpop.permute.xlu0 %7424
        %7426 = vrot.lane.b32.xlu0 %v7380, 64
        %v7427 = vpop.permute.xlu0 %7426
        %7428 = vrot.lane.b32.xlu0 %v7381, 64
        %v7429 = vpop.permute.xlu0 %7428
        %v7430 = vsel %vm1711, %v7383, %v7385
        %v7431 = vsel %vm1711, %v7387, %v7389
        %v7432 = vsel %vm1711, %v7391, %v7393
        %v7433 = vsel %vm1711, %v7395, %v7397
        %v7434 = vsel %vm1711, %v7399, %v7401
        %v7435 = vsel %vm1711, %v7403, %v7405
        %v7436 = vsel %vm1711, %v7407, %v7409
        %v7437 = vsel %vm1711, %v7411, %v7413
        %v7438 = vsel %vm1711, %v7415, %v7417
        %v7439 = vsel %vm1711, %v7419, %v7421
        %v7440 = vsel %vm1711, %v7423, %v7425
        %v7441 = vsel %vm1711, %v7427, %v7429
        %v7467 = vsel %vm1196, %v7292, 0
        %v7470 = vsel %vm1196, %v7293, 0
        %7472 = vmatprep.subr.mxu0 %v7385
        %7473 = vmatpush1.msra.mxu0 %v7430
        %7474 = vmatprep.subr.mxu0 %v7389
        %7475 = vmatpush1.msra.mxu0 %v7431
        %7476 = vmatprep.subr.mxu0 %v7393
        %7477 = vmatpush1.msra.mxu0 %v7432
        %7478 = vmatprep.subr.mxu0 %v7397
        %7479 = vmatpush1.msra.mxu0 %v7433
        %7480 = vmatprep.subr.mxu0 %v7401
        %7481 = vmatpush1.msra.mxu0 %v7434
        %7482 = vmatprep.subr.mxu0 %v7405
        %7483 = vmatpush1.msra.mxu0 %v7435
        %7484 = vmatprep.subr.mxu0 %v7409
        %7485 = vmatpush1.msra.mxu0 %v7436
        %7486 = vmatprep.subr.mxu0 %v7413
        %7487 = vmatpush1.msra.mxu0 %v7437
        %7488 = vmatprep.subr.mxu0 %v7417
        %7489 = vmatpush1.msra.mxu0 %v7438
        %7490 = vmatprep.subr.mxu0 %v7421
        %7491 = vmatpush1.msra.mxu0 %v7439
        %7492 = vmatprep.subr.mxu0 %v7425
        %7493 = vmatpush1.msra.mxu0 %v7440
        %7494 = vmatprep.subr.mxu0 %v7429
        %7495 = vmatpush1.msra.mxu0 %v7441
        %7496 = vmatprep.subr.mxu0 0.0
        %7497 = vmatpush1.msra.mxu0 0.0
        %7498 = vmatprep.subr.mxu0 0.0
        %7499 = vmatpush1.msra.mxu0 0.0
        %7500 = vmatprep.subr.mxu0 0.0
        %7501 = vmatpush1.msra.mxu0 0.0
        %7502 = vmatprep.subr.mxu0 0.0
        %7503 = vmatpush1.msra.mxu0 0.0
        %7504 = vmatprep.subr.mxu0 0.0
        %7505 = vmatpush1.msra.mxu0 0.0
        %7506 = vmatprep.subr.mxu0 0.0
        %7507 = vmatpush1.msra.mxu0 0.0
        %7508 = vmatprep.subr.mxu0 0.0
        %7509 = vmatpush1.msra.mxu0 0.0
        %7510 = vmatprep.subr.mxu0 0.0
        %7511 = vmatpush1.msra.mxu0 0.0
        %7512 = vmatprep.subr.mxu0 0.0
        %7513 = vmatpush1.msra.mxu0 0.0
        %7514 = vmatprep.subr.mxu0 0.0
        %7515 = vmatpush1.msra.mxu0 0.0
        %7516 = vmatprep.subr.mxu0 0.0
        %7517 = vmatpush1.msra.mxu0 0.0
        %7518 = vmatprep.subr.mxu0 0.0
        %7519 = vmatpush1.msra.mxu0 0.0
        %7520 = vmatprep.subr.mxu0 0.0
        %7521 = vmatpush1.msra.mxu0 0.0
        %7522 = vmatprep.subr.mxu0 0.0
        %7523 = vmatpush1.msra.mxu0 0.0
        %7524 = vmatprep.subr.mxu0 0.0
        %7525 = vmatpush1.msra.mxu0 0.0
        %7526 = vmatprep.subr.mxu0 0.0
        %7527 = vmatpush1.msra.mxu0 0.0
        %7528 = vmatprep.subr.mxu0 0.0
        %7529 = vmatpush1.msra.mxu0 0.0
        %7530 = vmatprep.subr.mxu0 0.0
        %7531 = vmatpush1.msra.mxu0 0.0
        %7532 = vmatprep.subr.mxu0 0.0
        %7533 = vmatpush1.msra.mxu0 0.0
        %7534 = vmatprep.subr.mxu0 0.0
        %7535 = vmatpush1.msra.mxu0 0.0
        %7536 = vmatprep.mubr.f32.mxu0 0.0
        %7537 = vmatmul.mubr.f32.gmra.mrb[0].mxu0 %v7467
        %v7538 = vpop.f32.mrb[0].mxu0
        %v7539 = vadd.f32 0.0, %v7538
        %v7540 = vpop.f32.mrb[0].mxu0
        %v7541 = vadd.f32 0.0, %v7540
        %7542 = vmatprep.mubr.f32.mxu0 0.0
        %7543 = vmatmul.mubr.f32.gmra.mrb[0].mxu0 %v7470
        %v7544 = vpop.f32.mrb[0].mxu0
        %v7545 = vadd.f32 0.0, %v7544
        %v7546 = vpop.f32.mrb[0].mxu0
        %v7547 = vadd.f32 0.0, %v7546
        %7548 = vdwg.mxu0
        %v7549 = vadd.f32 %v7287, %v7539
        %v7550 = vadd.f32 %v7288, %v7541
        %v7551 = vadd.f32 %v7289, %v7545
        %v7552 = vadd.f32 %v7290, %v7547
        %v7553 = vld [vmem:[%s8] sm:$0xff]
        %v7554 = vld [vmem:[%s8 + $0x8] sm:$0xff]
        %7556 = vset.pattern.permute.xlu0 0
        %7557 = vperm.xlu0 %7556, %v7553
        %v7558 = vpop.permute.xlu0 %7557
        %7561 = vset.pattern.permute.xlu0 0
        %7562 = vperm.xlu0 %7561, %v7554
        %v7563 = vpop.permute.xlu0 %7562
        %v7565 = vadd.f32 %v7549, %v7558
        %v7566 = vadd.f32 %v7550, %v7558
        %v7567 = vadd.f32 %v7551, %v7563
        %v7568 = vadd.f32 %v7552, %v7563
        %vm7569 = vcmp.ge.f32.partialorder %v7565, 0.0
        %vm7570 = vcmp.ge.f32.partialorder %v7566, 0.0
        %vm7571 = vcmp.ge.f32.partialorder %v7567, 0.0
        %vm7572 = vcmp.ge.f32.partialorder %v7568, 0.0
        %v7573 = vmul.f32 %v7565, 0.2
        %v7574 = vmul.f32 %v7566, 0.2
        %v7575 = vmul.f32 %v7567, 0.2
        %v7576 = vmul.f32 %v7568, 0.2
        %v7577 = vsel %vm7569, %v7565, %v7573
        %v7578 = vsel %vm7570, %v7566, %v7574
        %v7579 = vsel %vm7571, %v7567, %v7575
        %v7580 = vsel %vm7572, %v7568, %v7576
        %7583 = vrot.lane.b32.xlu0 %v7577, 112
        %v7584 = vpop.permute.xlu0 %7583
        %7585 = vrot.lane.b32.xlu0 %v7579, 112
        %v7586 = vpop.permute.xlu0 %7585
        %7589 = vrot.lane.b32.xlu0 %v7577, 96
        %v7590 = vpop.permute.xlu0 %7589
        %7591 = vrot.lane.b32.xlu0 %v7579, 96
        %v7592 = vpop.permute.xlu0 %7591
        %7595 = vrot.lane.b32.xlu0 %v7577, 80
        %v7596 = vpop.permute.xlu0 %7595
        %7597 = vrot.lane.b32.xlu0 %v7579, 80
        %v7598 = vpop.permute.xlu0 %7597
        %7603 = vrot.lane.b32.xlu0 %v7578, 64
        %v7604 = vpop.permute.xlu0 %7603
        %7605 = vrot.lane.b32.xlu0 %v7580, 64
        %v7606 = vpop.permute.xlu0 %7605
        %7609 = vrot.lane.b32.xlu0 %v7578, 48
        %v7610 = vpop.permute.xlu0 %7609
        %7611 = vrot.lane.b32.xlu0 %v7580, 48
        %v7612 = vpop.permute.xlu0 %7611
        %v7615 = vsel %vm4541, %v7577, %v7584
        %v7616 = vsel %vm4541, %v7579, %v7586
        %v7617 = vsel %vm4544, %v7615, %v7590
        %v7618 = vsel %vm4544, %v7616, %v7592
        %v7619 = vsel %vm4547, %v7617, %v7596
        %v7620 = vsel %vm4547, %v7618, %v7598
        %v7621 = vsel %vm1711, %v7619, %v7604
        %v7622 = vsel %vm1711, %v7620, %v7606
        %v7623 = vsel %vm1419, %v7621, %v7610
        %v7624 = vsel %vm1419, %v7622, %v7612
        %7625 = vst.msk [vmem:[%s555] sm:$0xff] %vm1196, %v7623
        %7626 = vst.msk [vmem:[%s555 + $0x8] sm:$0xff] %vm1196, %v7624
        %vm7627 = vcmask 917248
        %7628 = vst.msk [vmem:[%s555] sm:$0xff] %vm7627, 0.0
        %7629 = vst.msk [vmem:[%s555 + $0x8] sm:$0xff] %vm7627, 0.0
        %v7630 = vld [vmem:[%s9] sm:$0x1]
        %v7631 = vld [vmem:[%s555] sm:$0xff]
        %v7632 = vld [vmem:[%s555 + $0x8] sm:$0xff]
        %7635 = vrot.lane.b32.xlu0 %v7631, 127
        %v7636 = vpop.permute.xlu0 %7635
        %7637 = vrot.lane.b32.xlu0 %v7632, 127
        %v7638 = vpop.permute.xlu0 %7637
        %7641 = vrot.lane.b32.xlu0 %v7631, 126
        %v7642 = vpop.permute.xlu0 %7641
        %7643 = vrot.lane.b32.xlu0 %v7632, 126
        %v7644 = vpop.permute.xlu0 %7643
        %s7647 = scalar_lea.vmem %s9, 1
        %v7648 = vld [vmem:[%s7647] sm:$0x1]
        %7649 = vrot.lane.b32.xlu0 %v7631, 112
        %v7650 = vpop.permute.xlu0 %7649
        %7651 = vrot.lane.b32.xlu0 %v7632, 112
        %v7652 = vpop.permute.xlu0 %7651
        %7653 = vrot.lane.b32.xlu0 %v7636, 112
        %v7654 = vpop.permute.xlu0 %7653
        %7655 = vrot.lane.b32.xlu0 %v7638, 112
        %v7656 = vpop.permute.xlu0 %7655
        %7657 = vrot.lane.b32.xlu0 %v7642, 112
        %v7658 = vpop.permute.xlu0 %7657
        %7659 = vrot.lane.b32.xlu0 %v7644, 112
        %v7660 = vpop.permute.xlu0 %7659
        %v7668 = vsel %vm4547, %v7648, 0
        %7670 = vmatprep.subr.mxu0 0.0
        %7671 = vmatpush1.msra.mxu0 %v7650
        %7672 = vmatprep.subr.mxu0 0.0
        %7673 = vmatpush1.msra.mxu0 %v7652
        %7674 = vmatprep.subr.mxu0 0.0
        %7675 = vmatpush1.msra.mxu0 %v7654
        %7676 = vmatprep.subr.mxu0 0.0
        %7677 = vmatpush1.msra.mxu0 %v7656
        %7678 = vmatprep.subr.mxu0 0.0
        %7679 = vmatpush1.msra.mxu0 %v7658
        %7680 = vmatprep.subr.mxu0 0.0
        %7681 = vmatpush1.msra.mxu0 %v7660
        %7682 = vmatprep.subr.mxu0 0.0
        %7683 = vmatpush1.msra.mxu0 0.0
        %7684 = vmatprep.subr.mxu0 0.0
        %7685 = vmatpush1.msra.mxu0 0.0
        %7686 = vmatprep.subr.mxu0 0.0
        %7687 = vmatpush1.msra.mxu0 0.0
        %7688 = vmatprep.subr.mxu0 0.0
        %7689 = vmatpush1.msra.mxu0 0.0
        %7690 = vmatprep.subr.mxu0 0.0
        %7691 = vmatpush1.msra.mxu0 0.0
        %7692 = vmatprep.subr.mxu0 0.0
        %7693 = vmatpush1.msra.mxu0 0.0
        %7694 = vmatprep.subr.mxu0 0.0
        %7695 = vmatpush1.msra.mxu0 0.0
        %7696 = vmatprep.subr.mxu0 0.0
        %7697 = vmatpush1.msra.mxu0 0.0
        %7698 = vmatprep.subr.mxu0 0.0
        %7699 = vmatpush1.msra.mxu0 0.0
        %7700 = vmatprep.subr.mxu0 0.0
        %7701 = vmatpush1.msra.mxu0 0.0
        %7702 = vmatprep.subr.mxu0 0.0
        %7703 = vmatpush1.msra.mxu0 0.0
        %7704 = vmatprep.subr.mxu0 0.0
        %7705 = vmatpush1.msra.mxu0 0.0
        %7706 = vmatprep.subr.mxu0 0.0
        %7707 = vmatpush1.msra.mxu0 0.0
        %7708 = vmatprep.subr.mxu0 0.0
        %7709 = vmatpush1.msra.mxu0 0.0
        %7710 = vmatprep.subr.mxu0 0.0
        %7711 = vmatpush1.msra.mxu0 0.0
        %7712 = vmatprep.subr.mxu0 0.0
        %7713 = vmatpush1.msra.mxu0 0.0
        %7714 = vmatprep.subr.mxu0 0.0
        %7715 = vmatpush1.msra.mxu0 0.0
        %7716 = vmatprep.subr.mxu0 0.0
        %7717 = vmatpush1.msra.mxu0 0.0
        %7718 = vmatprep.subr.mxu0 0.0
        %7719 = vmatpush1.msra.mxu0 0.0
        %7720 = vmatprep.subr.mxu0 0.0
        %7721 = vmatpush1.msra.mxu0 0.0
        %7722 = vmatprep.subr.mxu0 0.0
        %7723 = vmatpush1.msra.mxu0 0.0
        %7724 = vmatprep.subr.mxu0 0.0
        %7725 = vmatpush1.msra.mxu0 0.0
        %7726 = vmatprep.subr.mxu0 0.0
        %7727 = vmatpush1.msra.mxu0 0.0
        %7728 = vmatprep.subr.mxu0 0.0
        %7729 = vmatpush1.msra.mxu0 0.0
        %7730 = vmatprep.subr.mxu0 0.0
        %7731 = vmatpush1.msra.mxu0 0.0
        %7732 = vmatprep.subr.mxu0 0.0
        %7733 = vmatpush1.msra.mxu0 0.0
        %7734 = vmatprep.mubr.f32.mxu0 0.0
        %7735 = vmatmul.mubr.f32.gmra.mrb[0].mxu0 %v7668
        %v7736 = vpop.f32.mrb[0].mxu0
        %v7737 = vadd.f32 0.0, %v7736
        %v7738 = vpop.f32.mrb[0].mxu0
        %7739 = vdwg.mxu0
        %v7741 = vsel %vm4547, %v7630, 0
        %7743 = vmatprep.subr.mxu0 0.0
        %7744 = vmatpush1.msra.mxu0 %v7631
        %7745 = vmatprep.subr.mxu0 0.0
        %7746 = vmatpush1.msra.mxu0 %v7632
        %7747 = vmatprep.subr.mxu0 0.0
        %7748 = vmatpush1.msra.mxu0 %v7636
        %7749 = vmatprep.subr.mxu0 0.0
        %7750 = vmatpush1.msra.mxu0 %v7638
        %7751 = vmatprep.subr.mxu0 0.0
        %7752 = vmatpush1.msra.mxu0 %v7642
        %7753 = vmatprep.subr.mxu0 0.0
        %7754 = vmatpush1.msra.mxu0 %v7644
        %7755 = vmatprep.subr.mxu0 0.0
        %7756 = vmatpush1.msra.mxu0 0.0
        %7757 = vmatprep.subr.mxu0 0.0
        %7758 = vmatpush1.msra.mxu0 0.0
        %7759 = vmatprep.subr.mxu0 0.0
        %7760 = vmatpush1.msra.mxu0 0.0
        %7761 = vmatprep.subr.mxu0 0.0
        %7762 = vmatpush1.msra.mxu0 0.0
        %7763 = vmatprep.subr.mxu0 0.0
        %7764 = vmatpush1.msra.mxu0 0.0
        %7765 = vmatprep.subr.mxu0 0.0
        %7766 = vmatpush1.msra.mxu0 0.0
        %7767 = vmatprep.subr.mxu0 0.0
        %7768 = vmatpush1.msra.mxu0 0.0
        %7769 = vmatprep.subr.mxu0 0.0
        %7770 = vmatpush1.msra.mxu0 0.0
        %7771 = vmatprep.subr.mxu0 0.0
        %7772 = vmatpush1.msra.mxu0 0.0
        %7773 = vmatprep.subr.mxu0 0.0
        %7774 = vmatpush1.msra.mxu0 0.0
        %7775 = vmatprep.subr.mxu0 0.0
        %7776 = vmatpush1.msra.mxu0 0.0
        %7777 = vmatprep.subr.mxu0 0.0
        %7778 = vmatpush1.msra.mxu0 0.0
        %7779 = vmatprep.subr.mxu0 0.0
        %7780 = vmatpush1.msra.mxu0 0.0
        %7781 = vmatprep.subr.mxu0 0.0
        %7782 = vmatpush1.msra.mxu0 0.0
        %7783 = vmatprep.subr.mxu0 0.0
        %7784 = vmatpush1.msra.mxu0 0.0
        %7785 = vmatprep.subr.mxu0 0.0
        %7786 = vmatpush1.msra.mxu0 0.0
        %7787 = vmatprep.subr.mxu0 0.0
        %7788 = vmatpush1.msra.mxu0 0.0
        %7789 = vmatprep.subr.mxu0 0.0
        %7790 = vmatpush1.msra.mxu0 0.0
        %7791 = vmatprep.subr.mxu0 0.0
        %7792 = vmatpush1.msra.mxu0 0.0
        %7793 = vmatprep.subr.mxu0 0.0
        %7794 = vmatpush1.msra.mxu0 0.0
        %7795 = vmatprep.subr.mxu0 0.0
        %7796 = vmatpush1.msra.mxu0 0.0
        %7797 = vmatprep.subr.mxu0 0.0
        %7798 = vmatpush1.msra.mxu0 0.0
        %7799 = vmatprep.subr.mxu0 0.0
        %7800 = vmatpush1.msra.mxu0 0.0
        %7801 = vmatprep.subr.mxu0 0.0
        %7802 = vmatpush1.msra.mxu0 0.0
        %7803 = vmatprep.subr.mxu0 0.0
        %7804 = vmatpush1.msra.mxu0 0.0
        %7805 = vmatprep.subr.mxu0 0.0
        %7806 = vmatpush1.msra.mxu0 0.0
        %7807 = vmatprep.mubr.f32.mxu0 0.0
        %7808 = vmatmul.mubr.f32.gmra.mrb[0].mxu0 %v7741
        %v7809 = vpop.f32.mrb[0].mxu0
        %v7810 = vadd.f32 %v7737, %v7809
        %v7811 = vpop.f32.mrb[0].mxu0
        %7812 = vdwg.mxu0
        %s7813 = scalar_lea.vmem %s9, 2
        %v7814 = vld [vmem:[%s7813] sm:$0x1]
        %7815 = vrot.lane.b32.xlu0 %v7631, 96
        %v7816 = vpop.permute.xlu0 %7815
        %7817 = vrot.lane.b32.xlu0 %v7632, 96
        %v7818 = vpop.permute.xlu0 %7817
        %7819 = vrot.lane.b32.xlu0 %v7636, 96
        %v7820 = vpop.permute.xlu0 %7819
        %7821 = vrot.lane.b32.xlu0 %v7638, 96
        %v7822 = vpop.permute.xlu0 %7821
        %7823 = vrot.lane.b32.xlu0 %v7642, 96
        %v7824 = vpop.permute.xlu0 %7823
        %7825 = vrot.lane.b32.xlu0 %v7644, 96
        %v7826 = vpop.permute.xlu0 %7825
        %v7834 = vsel %vm4547, %v7814, 0
        %7836 = vmatprep.subr.mxu0 0.0
        %7837 = vmatpush1.msra.mxu0 %v7816
        %7838 = vmatprep.subr.mxu0 0.0
        %7839 = vmatpush1.msra.mxu0 %v7818
        %7840 = vmatprep.subr.mxu0 0.0
        %7841 = vmatpush1.msra.mxu0 %v7820
        %7842 = vmatprep.subr.mxu0 0.0
        %7843 = vmatpush1.msra.mxu0 %v7822
        %7844 = vmatprep.subr.mxu0 0.0
        %7845 = vmatpush1.msra.mxu0 %v7824
        %7846 = vmatprep.subr.mxu0 0.0
        %7847 = vmatpush1.msra.mxu0 %v7826
        %7848 = vmatprep.subr.mxu0 0.0
        %7849 = vmatpush1.msra.mxu0 0.0
        %7850 = vmatprep.subr.mxu0 0.0
        %7851 = vmatpush1.msra.mxu0 0.0
        %7852 = vmatprep.subr.mxu0 0.0
        %7853 = vmatpush1.msra.mxu0 0.0
        %7854 = vmatprep.subr.mxu0 0.0
        %7855 = vmatpush1.msra.mxu0 0.0
        %7856 = vmatprep.subr.mxu0 0.0
        %7857 = vmatpush1.msra.mxu0 0.0
        %7858 = vmatprep.subr.mxu0 0.0
        %7859 = vmatpush1.msra.mxu0 0.0
        %7860 = vmatprep.subr.mxu0 0.0
        %7861 = vmatpush1.msra.mxu0 0.0
        %7862 = vmatprep.subr.mxu0 0.0
        %7863 = vmatpush1.msra.mxu0 0.0
        %7864 = vmatprep.subr.mxu0 0.0
        %7865 = vmatpush1.msra.mxu0 0.0
        %7866 = vmatprep.subr.mxu0 0.0
        %7867 = vmatpush1.msra.mxu0 0.0
        %7868 = vmatprep.subr.mxu0 0.0
        %7869 = vmatpush1.msra.mxu0 0.0
        %7870 = vmatprep.subr.mxu0 0.0
        %7871 = vmatpush1.msra.mxu0 0.0
        %7872 = vmatprep.subr.mxu0 0.0
        %7873 = vmatpush1.msra.mxu0 0.0
        %7874 = vmatprep.subr.mxu0 0.0
        %7875 = vmatpush1.msra.mxu0 0.0
        %7876 = vmatprep.subr.mxu0 0.0
        %7877 = vmatpush1.msra.mxu0 0.0
        %7878 = vmatprep.subr.mxu0 0.0
        %7879 = vmatpush1.msra.mxu0 0.0
        %7880 = vmatprep.subr.mxu0 0.0
        %7881 = vmatpush1.msra.mxu0 0.0
        %7882 = vmatprep.subr.mxu0 0.0
        %7883 = vmatpush1.msra.mxu0 0.0
        %7884 = vmatprep.subr.mxu0 0.0
        %7885 = vmatpush1.msra.mxu0 0.0
        %7886 = vmatprep.subr.mxu0 0.0
        %7887 = vmatpush1.msra.mxu0 0.0
        %7888 = vmatprep.subr.mxu0 0.0
        %7889 = vmatpush1.msra.mxu0 0.0
        %7890 = vmatprep.subr.mxu0 0.0
        %7891 = vmatpush1.msra.mxu0 0.0
        %7892 = vmatprep.subr.mxu0 0.0
        %7893 = vmatpush1.msra.mxu0 0.0
        %7894 = vmatprep.subr.mxu0 0.0
        %7895 = vmatpush1.msra.mxu0 0.0
        %7896 = vmatprep.subr.mxu0 0.0
        %7897 = vmatpush1.msra.mxu0 0.0
        %7898 = vmatprep.subr.mxu0 0.0
        %7899 = vmatpush1.msra.mxu0 0.0
        %7900 = vmatprep.mubr.f32.mxu0 0.0
        %7901 = vmatmul.mubr.f32.gmra.mrb[0].mxu0 %v7834
        %v7902 = vpop.f32.mrb[0].mxu0
        %v7903 = vadd.f32 0.0, %v7902
        %v7904 = vpop.f32.mrb[0].mxu0
        %7905 = vdwg.mxu0
        %v7906 = vadd.f32 %v7810, %v7903
        %s7907 = scalar_lea.vmem %s9, 3
        %v7908 = vld [vmem:[%s7907] sm:$0x1]
        %7909 = vrot.lane.b32.xlu0 %v7631, 80
        %v7910 = vpop.permute.xlu0 %7909
        %7911 = vrot.lane.b32.xlu0 %v7632, 80
        %v7912 = vpop.permute.xlu0 %7911
        %7913 = vrot.lane.b32.xlu0 %v7636, 80
        %v7914 = vpop.permute.xlu0 %7913
        %7915 = vrot.lane.b32.xlu0 %v7638, 80
        %v7916 = vpop.permute.xlu0 %7915
        %7917 = vrot.lane.b32.xlu0 %v7642, 80
        %v7918 = vpop.permute.xlu0 %7917
        %7919 = vrot.lane.b32.xlu0 %v7644, 80
        %v7920 = vpop.permute.xlu0 %7919
        %v7928 = vsel %vm4547, %v7908, 0
        %7930 = vmatprep.subr.mxu0 0.0
        %7931 = vmatpush1.msra.mxu0 %v7910
        %7932 = vmatprep.subr.mxu0 0.0
        %7933 = vmatpush1.msra.mxu0 %v7912
        %7934 = vmatprep.subr.mxu0 0.0
        %7935 = vmatpush1.msra.mxu0 %v7914
        %7936 = vmatprep.subr.mxu0 0.0
        %7937 = vmatpush1.msra.mxu0 %v7916
        %7938 = vmatprep.subr.mxu0 0.0
        %7939 = vmatpush1.msra.mxu0 %v7918
        %7940 = vmatprep.subr.mxu0 0.0
        %7941 = vmatpush1.msra.mxu0 %v7920
        %7942 = vmatprep.subr.mxu0 0.0
        %7943 = vmatpush1.msra.mxu0 0.0
        %7944 = vmatprep.subr.mxu0 0.0
        %7945 = vmatpush1.msra.mxu0 0.0
        %7946 = vmatprep.subr.mxu0 0.0
        %7947 = vmatpush1.msra.mxu0 0.0
        %7948 = vmatprep.subr.mxu0 0.0
        %7949 = vmatpush1.msra.mxu0 0.0
        %7950 = vmatprep.subr.mxu0 0.0
        %7951 = vmatpush1.msra.mxu0 0.0
        %7952 = vmatprep.subr.mxu0 0.0
        %7953 = vmatpush1.msra.mxu0 0.0
        %7954 = vmatprep.subr.mxu0 0.0
        %7955 = vmatpush1.msra.mxu0 0.0
        %7956 = vmatprep.subr.mxu0 0.0
        %7957 = vmatpush1.msra.mxu0 0.0
        %7958 = vmatprep.subr.mxu0 0.0
        %7959 = vmatpush1.msra.mxu0 0.0
        %7960 = vmatprep.subr.mxu0 0.0
        %7961 = vmatpush1.msra.mxu0 0.0
        %7962 = vmatprep.subr.mxu0 0.0
        %7963 = vmatpush1.msra.mxu0 0.0
        %7964 = vmatprep.subr.mxu0 0.0
        %7965 = vmatpush1.msra.mxu0 0.0
        %7966 = vmatprep.subr.mxu0 0.0
        %7967 = vmatpush1.msra.mxu0 0.0
        %7968 = vmatprep.subr.mxu0 0.0
        %7969 = vmatpush1.msra.mxu0 0.0
        %7970 = vmatprep.subr.mxu0 0.0
        %7971 = vmatpush1.msra.mxu0 0.0
        %7972 = vmatprep.subr.mxu0 0.0
        %7973 = vmatpush1.msra.mxu0 0.0
        %7974 = vmatprep.subr.mxu0 0.0
        %7975 = vmatpush1.msra.mxu0 0.0
        %7976 = vmatprep.subr.mxu0 0.0
        %7977 = vmatpush1.msra.mxu0 0.0
        %7978 = vmatprep.subr.mxu0 0.0
        %7979 = vmatpush1.msra.mxu0 0.0
        %7980 = vmatprep.subr.mxu0 0.0
        %7981 = vmatpush1.msra.mxu0 0.0
        %7982 = vmatprep.subr.mxu0 0.0
        %7983 = vmatpush1.msra.mxu0 0.0
        %7984 = vmatprep.subr.mxu0 0.0
        %7985 = vmatpush1.msra.mxu0 0.0
        %7986 = vmatprep.subr.mxu0 0.0
        %7987 = vmatpush1.msra.mxu0 0.0
        %7988 = vmatprep.subr.mxu0 0.0
        %7989 = vmatpush1.msra.mxu0 0.0
        %7990 = vmatprep.subr.mxu0 0.0
        %7991 = vmatpush1.msra.mxu0 0.0
        %7992 = vmatprep.subr.mxu0 0.0
        %7993 = vmatpush1.msra.mxu0 0.0
        %7994 = vmatprep.mubr.f32.mxu0 0.0
        %7995 = vmatmul.mubr.f32.gmra.mrb[0].mxu0 %v7928
        %v7996 = vpop.f32.mrb[0].mxu0
        %v7997 = vadd.f32 0.0, %v7996
        %v7998 = vpop.f32.mrb[0].mxu0
        %7999 = vdwg.mxu0
        %v8000 = vadd.f32 %v7906, %v7997
        %s8001 = scalar_lea.vmem %s9, 4
        %v8002 = vld [vmem:[%s8001] sm:$0x1]
        %8003 = vrot.lane.b32.xlu0 %v7631, 64
        %v8004 = vpop.permute.xlu0 %8003
        %8005 = vrot.lane.b32.xlu0 %v7632, 64
        %v8006 = vpop.permute.xlu0 %8005
        %8007 = vrot.lane.b32.xlu0 %v7636, 64
        %v8008 = vpop.permute.xlu0 %8007
        %8009 = vrot.lane.b32.xlu0 %v7638, 64
        %v8010 = vpop.permute.xlu0 %8009
        %8011 = vrot.lane.b32.xlu0 %v7642, 64
        %v8012 = vpop.permute.xlu0 %8011
        %8013 = vrot.lane.b32.xlu0 %v7644, 64
        %v8014 = vpop.permute.xlu0 %8013
        %v8022 = vsel %vm4547, %v8002, 0
        %8024 = vmatprep.subr.mxu0 0.0
        %8025 = vmatpush1.msra.mxu0 %v8004
        %8026 = vmatprep.subr.mxu0 0.0
        %8027 = vmatpush1.msra.mxu0 %v8006
        %8028 = vmatprep.subr.mxu0 0.0
        %8029 = vmatpush1.msra.mxu0 %v8008
        %8030 = vmatprep.subr.mxu0 0.0
        %8031 = vmatpush1.msra.mxu0 %v8010
        %8032 = vmatprep.subr.mxu0 0.0
        %8033 = vmatpush1.msra.mxu0 %v8012
        %8034 = vmatprep.subr.mxu0 0.0
        %8035 = vmatpush1.msra.mxu0 %v8014
        %8036 = vmatprep.subr.mxu0 0.0
        %8037 = vmatpush1.msra.mxu0 0.0
        %8038 = vmatprep.subr.mxu0 0.0
        %8039 = vmatpush1.msra.mxu0 0.0
        %8040 = vmatprep.subr.mxu0 0.0
        %8041 = vmatpush1.msra.mxu0 0.0
        %8042 = vmatprep.subr.mxu0 0.0
        %8043 = vmatpush1.msra.mxu0 0.0
        %8044 = vmatprep.subr.mxu0 0.0
        %8045 = vmatpush1.msra.mxu0 0.0
        %8046 = vmatprep.subr.mxu0 0.0
        %8047 = vmatpush1.msra.mxu0 0.0
        %8048 = vmatprep.subr.mxu0 0.0
        %8049 = vmatpush1.msra.mxu0 0.0
        %8050 = vmatprep.subr.mxu0 0.0
        %8051 = vmatpush1.msra.mxu0 0.0
        %8052 = vmatprep.subr.mxu0 0.0
        %8053 = vmatpush1.msra.mxu0 0.0
        %8054 = vmatprep.subr.mxu0 0.0
        %8055 = vmatpush1.msra.mxu0 0.0
        %8056 = vmatprep.subr.mxu0 0.0
        %8057 = vmatpush1.msra.mxu0 0.0
        %8058 = vmatprep.subr.mxu0 0.0
        %8059 = vmatpush1.msra.mxu0 0.0
        %8060 = vmatprep.subr.mxu0 0.0
        %8061 = vmatpush1.msra.mxu0 0.0
        %8062 = vmatprep.subr.mxu0 0.0
        %8063 = vmatpush1.msra.mxu0 0.0
        %8064 = vmatprep.subr.mxu0 0.0
        %8065 = vmatpush1.msra.mxu0 0.0
        %8066 = vmatprep.subr.mxu0 0.0
        %8067 = vmatpush1.msra.mxu0 0.0
        %8068 = vmatprep.subr.mxu0 0.0
        %8069 = vmatpush1.msra.mxu0 0.0
        %8070 = vmatprep.subr.mxu0 0.0
        %8071 = vmatpush1.msra.mxu0 0.0
        %8072 = vmatprep.subr.mxu0 0.0
        %8073 = vmatpush1.msra.mxu0 0.0
        %8074 = vmatprep.subr.mxu0 0.0
        %8075 = vmatpush1.msra.mxu0 0.0
        %8076 = vmatprep.subr.mxu0 0.0
        %8077 = vmatpush1.msra.mxu0 0.0
        %8078 = vmatprep.subr.mxu0 0.0
        %8079 = vmatpush1.msra.mxu0 0.0
        %8080 = vmatprep.subr.mxu0 0.0
        %8081 = vmatpush1.msra.mxu0 0.0
        %8082 = vmatprep.subr.mxu0 0.0
        %8083 = vmatpush1.msra.mxu0 0.0
        %8084 = vmatprep.subr.mxu0 0.0
        %8085 = vmatpush1.msra.mxu0 0.0
        %8086 = vmatprep.subr.mxu0 0.0
        %8087 = vmatpush1.msra.mxu0 0.0
        %8088 = vmatprep.mubr.f32.mxu0 0.0
        %8089 = vmatmul.mubr.f32.gmra.mrb[0].mxu0 %v8022
        %v8090 = vpop.f32.mrb[0].mxu0
        %v8091 = vadd.f32 0.0, %v8090
        %v8092 = vpop.f32.mrb[0].mxu0
        %8093 = vdwg.mxu0
        %v8094 = vadd.f32 %v8000, %v8091
        %v8095 = vld [vmem:[#allocation2] sm:$0x1]
        %8097 = vset.pattern.permute.xlu0 0
        %8098 = vperm.xlu0 %8097, %v8095
        %v8099 = vpop.permute.xlu0 %8098
        %v8101 = vlaneseq
        %v8102 = vshrl.u32 %v8101, 7
        %v8103 = vsub.s32 0, %v8102
        %v8104 = vrot.slane %v8099, %v8103
        %v8105 = vadd.f32 %v8094, %v8104
        %vm8106 = vcmask 253952
        %8107 = vst.msk [vmem:[%s561] sm:$0x1] %vm8106, %v8105
        %s8108 = sand.u32 %s286, 1
        %s8109 = scalar_lea.sflag [#allocation5], %s8108
        %s8110 = sand.u32 %s286, 1
        %s8111 = smul.addr %s8110, 80
        %s8112 = scalar_lea.vmem [#allocation8], %s8111
        %s8113 = sand.u32 %s42, 1
        %s8114 = scalar_lea.sflag [#allocation10], %s8113
        %s8115 = sand.u32 %s312, 1
        %s8116 = smul.addr %s8115, 80
        %s8117 = scalar_lea.vmem [#allocation9], %s8116
        %s8118 = sand.u32 %s42, 1
        %s8119 = scalar_lea.sflag [#allocation10], %s8118
        %s8120 = sand.u32 %s338, 1
        %s8121 = smul.addr %s8120, 96
        %s8122 = scalar_lea.vmem [#allocation11], %s8121
        %s8123 = sand.u32 %s42, 1
        %s8124 = scalar_lea.sflag [#allocation13], %s8123
        %s8125 = sand.u32 %s364, 1
        %s8126 = smul.addr %s8125, 16
        %s8127 = scalar_lea.vmem [#allocation12], %s8126
        %s8128 = sand.u32 %s42, 1
        %s8129 = scalar_lea.sflag [#allocation13], %s8128
        %s8130 = sand.u32 %s390, 1
        %s8131 = scalar_lea.vmem [#allocation14], %s8130
        // Predicated region
        $region73: #{tpu_custom_call.1} parent=63 // pred_check
          %p8132 = pneg %p296
        $region74: #{tpu_custom_call.1} parent=63 // pred_check_branch
          %8134 = sbr.rel (%p8132) target = $region76
        $region75: #{tpu_custom_call.1} parent=63 // pred_region
          %s8136 = ssub.s32 1280, 1280
          %8137 = vsyncadd %s8109, %s8136
          %s8138 = smul.addr %s42, 10
          %s8139 = smul.addr %s8138, 128
          %s8140 = scalar_lea.hbm %s11, %s8139
          %s8142 = sshll.u32 %s8112, 4
          %s8143 = int_to_ptr.vmem [resolvable:$true] %s8142
          %8145 = dma.vmem_to_hbm [thread:$0]  %s8143, 1280, %s8140, %s8109
        $region76: #{tpu_custom_call.1} parent=63 // pred_fallthru
          _
        // Predicated region
        $region77: #{tpu_custom_call.1} parent=63 // pred_check
          %p8146 = pneg %p322
        $region78: #{tpu_custom_call.1} parent=63 // pred_check_branch
          %8148 = sbr.rel (%p8146) target = $region80
        $region79: #{tpu_custom_call.1} parent=63 // pred_region
          %s8150 = ssub.s32 1280, 1280
          %8151 = vsyncadd %s8114, %s8150
          %s8152 = smul.addr %s42, 10
          %s8153 = smul.addr %s8152, 128
          %s8154 = scalar_lea.hbm %s12, %s8153
          %s8155 = sshll.u32 %s8117, 4
          %s8156 = int_to_ptr.vmem [resolvable:$true] %s8155
          %8161 = dma.vmem_to_hbm [thread:$0]  %s8156, 1280, %s8154, %s8114, 640, 640, 40
        $region80: #{tpu_custom_call.1} parent=63 // pred_fallthru
          _
        // Predicated region
        $region81: #{tpu_custom_call.1} parent=63 // pred_check
          %p8162 = pneg %p348
        $region82: #{tpu_custom_call.1} parent=63 // pred_check_branch
          %8164 = sbr.rel (%p8162) target = $region84
        $region83: #{tpu_custom_call.1} parent=63 // pred_region
          %s8166 = ssub.s32 1536, 1536
          %8167 = vsyncadd %s8119, %s8166
          %s8168 = smul.addr %s42, 12
          %s8169 = smul.addr %s8168, 128
          %s8170 = scalar_lea.hbm %s13, %s8169
          %s8171 = sshll.u32 %s8122, 4
          %s8172 = int_to_ptr.vmem [resolvable:$true] %s8171
          %8177 = dma.vmem_to_hbm [thread:$0]  %s8172, 1536, %s8170, %s8119, 384, 384, 24
        $region84: #{tpu_custom_call.1} parent=63 // pred_fallthru
          _
        // Predicated region
        $region85: #{tpu_custom_call.1} parent=63 // pred_check
          %p8178 = pneg %p374
        $region86: #{tpu_custom_call.1} parent=63 // pred_check_branch
          %8180 = sbr.rel (%p8178) target = $region88
        $region87: #{tpu_custom_call.1} parent=63 // pred_region
          %s8182 = ssub.s32 256, 256
          %8183 = vsyncadd %s8124, %s8182
          %s8184 = smul.addr %s42, 2
          %s8185 = smul.addr %s8184, 128
          %s8186 = scalar_lea.hbm %s14, %s8185
          %s8187 = sshll.u32 %s8127, 4
          %s8188 = int_to_ptr.vmem [resolvable:$true] %s8187
          %8193 = dma.vmem_to_hbm [thread:$0]  %s8188, 256, %s8186, %s8124, 128, 128, 8
        $region88: #{tpu_custom_call.1} parent=63 // pred_fallthru
          _
        // Predicated region
        $region89: #{tpu_custom_call.1} parent=63 // pred_check
          %p8194 = pneg %p400
        $region90: #{tpu_custom_call.1} parent=63 // pred_check_branch
          %8196 = sbr.rel (%p8194) target = $region92
        $region91: #{tpu_custom_call.1} parent=63 // pred_region
          %s8198 = ssub.s32 16, 16
          %8199 = vsyncadd %s8129, %s8198
          %s8200 = smul.addr %s42, 16
          %s8201 = scalar_lea.hbm %s15, %s8200
          %s8203 = sshll.u32 %s8131, 4
          %s8204 = int_to_ptr.vmem [resolvable:$true] %s8203
          %8206 = dma.vmem_to_hbm [thread:$0]  %s8204, 16, %s8201, %s8129
        $region92: #{tpu_custom_call.1} parent=63 // pred_fallthru
          _
      $region64: #{tpu_custom_call.1} parent=5 // pred_fallthru
        _
      %p8207 = scmp.le.s32.totalorder 2, %s37
      // Predicated region
      $region93: #{tpu_custom_call.1} parent=5 // pred_check
        %p8208 = pneg %p8207
      $region94: #{tpu_custom_call.1} parent=5 // pred_check_branch
        %8210 = sbr.rel (%p8208) target = $region96
      $region95: #{tpu_custom_call.1} parent=5 // pred_region
        %s8211 = ssub.s32 %s37, 2
        // Predicated region
        $region97: #{tpu_custom_call.1} parent=95 // pred_check
          %p8212 = pneg %p302
        $region98: #{tpu_custom_call.1} parent=95 // pred_check_branch
          %8214 = sbr.rel (%p8212) target = $region100
        $region99: #{tpu_custom_call.1} parent=95 // pred_region
          %s8215 = sand.u32 %s287, 1
          %s8216 = scalar_lea.sflag [#allocation5], %s8215
          %s8217 = sand.u32 %s287, 1
          %s8218 = smul.addr %s8217, 80
          %s8219 = scalar_lea.vmem [#allocation8], %s8218
          %8220 = dma.done %s8216, 1280
        $region100: #{tpu_custom_call.1} parent=95 // pred_fallthru
          _
        // Predicated region
        $region101: #{tpu_custom_call.1} parent=95 // pred_check
          %p8221 = pneg %p328
        $region102: #{tpu_custom_call.1} parent=95 // pred_check_branch
          %8223 = sbr.rel (%p8221) target = $region104
        $region103: #{tpu_custom_call.1} parent=95 // pred_region
          %s8224 = sand.u32 %s43, 1
          %s8225 = scalar_lea.sflag [#allocation10], %s8224
          %s8226 = sand.u32 %s313, 1
          %s8227 = smul.addr %s8226, 80
          %s8228 = scalar_lea.vmem [#allocation9], %s8227
          %8229 = dma.done %s8225, 1280
        $region104: #{tpu_custom_call.1} parent=95 // pred_fallthru
          _
        // Predicated region
        $region105: #{tpu_custom_call.1} parent=95 // pred_check
          %p8230 = pneg %p354
        $region106: #{tpu_custom_call.1} parent=95 // pred_check_branch
          %8232 = sbr.rel (%p8230) target = $region108
        $region107: #{tpu_custom_call.1} parent=95 // pred_region
          %s8233 = sand.u32 %s43, 1
          %s8234 = scalar_lea.sflag [#allocation10], %s8233
          %s8235 = sand.u32 %s339, 1
          %s8236 = smul.addr %s8235, 96
          %s8237 = scalar_lea.vmem [#allocation11], %s8236
          %8238 = dma.done %s8234, 1536
        $region108: #{tpu_custom_call.1} parent=95 // pred_fallthru
          _
        // Predicated region
        $region109: #{tpu_custom_call.1} parent=95 // pred_check
          %p8239 = pneg %p380
        $region110: #{tpu_custom_call.1} parent=95 // pred_check_branch
          %8241 = sbr.rel (%p8239) target = $region112
        $region111: #{tpu_custom_call.1} parent=95 // pred_region
          %s8242 = sand.u32 %s43, 1
          %s8243 = scalar_lea.sflag [#allocation13], %s8242
          %s8244 = sand.u32 %s365, 1
          %s8245 = smul.addr %s8244, 16
          %s8246 = scalar_lea.vmem [#allocation12], %s8245
          %8247 = dma.done %s8243, 256
        $region112: #{tpu_custom_call.1} parent=95 // pred_fallthru
          _
        // Predicated region
        $region113: #{tpu_custom_call.1} parent=95 // pred_check
          %p8248 = pneg %p406
        $region114: #{tpu_custom_call.1} parent=95 // pred_check_branch
          %8250 = sbr.rel (%p8248) target = $region116
        $region115: #{tpu_custom_call.1} parent=95 // pred_region
          %s8251 = sand.u32 %s43, 1
          %s8252 = scalar_lea.sflag [#allocation13], %s8251
          %s8253 = sand.u32 %s391, 1
          %s8254 = scalar_lea.vmem [#allocation14], %s8253
          %8255 = dma.done %s8252, 16
        $region116: #{tpu_custom_call.1} parent=95 // pred_fallthru
          _
      $region96: #{tpu_custom_call.1} parent=5 // pred_fallthru
        _
    $region6: #{tpu_custom_call.1} parent=1 // loop_footer
      %s41 = sadd.s32 1, %s37
    $region7: #{tpu_custom_call.1} parent=1 // loop_footer_branch
      %36 = sbr.rel target = $region3
    $region8: #{tpu_custom_call.1} parent=1 // loop_exit
      _
    %8256 = vsyncpa [#allocation4], 1
    %s8257 = scalar_lea.sflag [#allocation4], 1
    %8258 = vsyncpa %s8257, 1
    %8259 = vsyncpa [#allocation7], 1
    %8260 = vsyncpa [#allocation5], 1
    %s8261 = scalar_lea.sflag [#allocation5], 1
    %8262 = vsyncpa %s8261, 1
    %8263 = vsyncpa [#allocation10], 1
    %s8264 = scalar_lea.sflag [#allocation10], 1
    %8265 = vsyncpa %s8264, 1
    %8266 = vsyncpa [#allocation13], 1
    %s8267 = scalar_lea.sflag [#allocation13], 1
    %8268 = vsyncpa %s8267, 1

</llo_original>
